<compile_context>
chip_gen: v7x
topology: tpu7x:2x2x1
jax: 0.10.0
libtpu: 0.0.40
codegen_flags: <defaults>
</compile_context>

<pallas_src>
import jax
import jax.numpy as jnp
from jax.experimental import pallas as pl
from jax.experimental.pallas import tpu as pltpu

IN_FEATURES = 196608   # 3 * 256 * 256, fixed by the PyTorch module
OUT_FEATURES = 10


def linear_kernel(x_ref, w_ref, b_ref, o_ref):
    """One (split, k) grid step of y = x @ W.T + b.

    x_ref: (B, tk)  lane-dense activation tile
    w_ref: (N, tk)  lane-dense weight tile (original PyTorch (N, K) layout)
    b_ref: (1, N)   bias (resident)
    o_ref: (B, N)   f32 partial sum for this K-split (accumulated in place)
    """
    k = pl.program_id(1)

    @pl.when(k == 0)
    def _():
        o_ref[...] = jnp.zeros_like(o_ref)

    # Contract over the last (lane) dim of both operands: (B, tk) x (N, tk) -> (B, N)
    o_ref[...] += jax.lax.dot_general(
        x_ref[...],
        w_ref[...],
        dimension_numbers=(((1,), (1,)), ((), ())),
        preferred_element_type=jnp.float32,
    )

    # Add the bias exactly once: last K step of split 0.
    @pl.when((k == pl.num_programs(1) - 1) & (pl.program_id(0) == 0))
    def _():
        o_ref[...] += b_ref[...]


def linear_pallas(x, weight, bias, *, tk=32768, num_splits=2,
                  compute_dtype=jnp.bfloat16):
    """PyTorch-style Linear: y = x @ weight.T + bias.

    x:      (B, K) float32
    weight: (N, K) float32  (original PyTorch layout -- no host-side transpose)
    bias:   (N,)   float32
    """
    B, K = x.shape
    N, K_w = weight.shape
    assert K == K_w and bias.shape == (N,)
    assert K % (tk * num_splits) == 0, "K must divide tk * num_splits"
    k_steps = K // (tk * num_splits)

    # bf16 halves HBM traffic of the dominant weight stream; MXU accumulates
    # in f32 (preferred_element_type) so the long K reduction stays accurate.
    x_c = x.astype(compute_dtype)
    w_c = weight.astype(compute_dtype)
    b2d = bias.reshape(1, N).astype(jnp.float32)

    itemsize = jnp.dtype(compute_dtype).itemsize
    partial = pl.pallas_call(
        linear_kernel,
        out_shape=jax.ShapeDtypeStruct((num_splits, B, N), jnp.float32),
        grid_spec=pltpu.PrefetchScalarGridSpec(
            num_scalar_prefetch=0,
            grid=(num_splits, k_steps),
            in_specs=[
                pl.BlockSpec((B, tk), lambda c, k: (0, c * k_steps + k)),  # x
                pl.BlockSpec((N, tk), lambda c, k: (0, c * k_steps + k)),  # W (N, K)
                pl.BlockSpec((1, N), lambda c, k: (0, 0)),                 # bias
            ],
            out_specs=pl.BlockSpec((None, B, N), lambda c, k: (c, 0, 0)),
        ),
        compiler_params=pltpu.CompilerParams(
            # Leading K-split axis can be sharded across TensorCores (v7x);
            # the inner K axis is a sequential reduction into the output block.
            dimension_semantics=("parallel", "arbitrary"),
        ),
        cost_estimate=pl.CostEstimate(
            flops=2 * B * K * N,
            transcendentals=0,
            bytes_accessed=(B * K + N * K) * itemsize + N * 4
            + num_splits * B * N * 4,
        ),
    )(x_c, w_c, b2d)

    # Combine per-split partial sums (bias was already added to split 0).
    return partial.sum(axis=0)


if __name__ == "__main__":
    key = jax.random.PRNGKey(0)
    kx, kw, kb = jax.random.split(key, 3)

    B = 2
    # Deterministic "PyTorch-like" init: uniform(-1/sqrt(fan_in), 1/sqrt(fan_in))
    bound = 1.0 / jnp.sqrt(jnp.float32(IN_FEATURES))
    weight = jax.random.uniform(
        kw, (OUT_FEATURES, IN_FEATURES), jnp.float32, -bound, bound
    )
    bias = jax.random.uniform(kb, (OUT_FEATURES,), jnp.float32, -bound, bound)
    x = jax.random.normal(kx, (B, IN_FEATURES), jnp.float32)

    # Full-precision path (exact module semantics).
    out_f32 = jax.block_until_ready(
        linear_pallas(x, weight, bias, compute_dtype=jnp.float32)
    )
    ref_f32 = x @ weight.T + bias
    assert out_f32.shape == (B, OUT_FEATURES)
    assert jnp.allclose(out_f32, ref_f32, atol=1e-3, rtol=1e-3)

    # Default fast path: bf16 operand stream, f32 accumulation.
    out_bf16 = jax.block_until_ready(linear_pallas(x, weight, bias))
    ref_bf16 = (
        x.astype(jnp.bfloat16).astype(jnp.float32)
        @ weight.astype(jnp.bfloat16).astype(jnp.float32).T
        + bias
    )
    assert out_bf16.shape == (B, OUT_FEATURES)
    assert jnp.allclose(out_bf16, ref_bf16, atol=1e-3, rtol=1e-3)
    assert jnp.allclose(out_bf16, ref_f32, atol=2e-2, rtol=2e-2)

    print("KERNEL_OK")
</pallas_src>

<mosaic_0001>
module attributes {stable_mosaic.version = 11 : i64} {
  func.func @linear_kernel(%arg0: i32, %arg1: i32, %arg2: memref<2x32768xf32, #tpu.memory_space<vmem>>, %arg3: memref<10x32768xf32, #tpu.memory_space<vmem>>, %arg4: memref<1x10xf32, #tpu.memory_space<vmem>>, %arg5: memref<1x2x10xf32, #tpu.memory_space<vmem>>) attributes {dimension_semantics = [#tpu.dimension_semantics<parallel>, #tpu.dimension_semantics<arbitrary>], iteration_bounds = array<i64: 2, 3>, scalar_prefetch = 0 : i64, scratch_operands = 0 : i64, tpu.core_type = #tpu.core_type<tc>, window_params = [{transform_indices = @transform_0, window_bounds = array<i64: 2, 32768>}, {transform_indices = @transform_1, window_bounds = array<i64: 10, 32768>}, {pipeline_mode = #tpu.pipeline_mode<synchronous>, transform_indices = @transform_2, window_bounds = array<i64: 1, 10>}, {transform_indices = @transform_3, window_bounds = array<i64: 1, 2, 10>}]} {
    %c0_i32 = arith.constant 0 : i32
    %0 = arith.cmpi eq, %arg1, %c0_i32 : i32
    %1 = arith.extui %0 : i1 to i32
    %c0_i32_0 = arith.constant 0 : i32
    %2 = arith.cmpi ne, %1, %c0_i32_0 : i32
    scf.if %2 {
      %cst_12 = arith.constant 0.000000e+00 : f32
      %17 = vector.broadcast %cst_12 : f32 to vector<2x10xf32>
      %c0_13 = arith.constant 0 : index
      %c0_14 = arith.constant 0 : index
      %c0_15 = arith.constant 0 : index
      %18 = vector.load %arg5[%c0_13, %c0_14, %c0_15] : memref<1x2x10xf32, #tpu.memory_space<vmem>>, vector<1x2x10xf32>
      %19 = vector.shape_cast %18 : vector<1x2x10xf32> to vector<2x10xf32>
      %20 = vector.shape_cast %17 : vector<2x10xf32> to vector<1x2x10xf32>
      tpu.vector_store %arg5[%c0_13, %c0_14, %c0_15], %20 {strides = array<i32>} : memref<1x2x10xf32, #tpu.memory_space<vmem>>, vector<1x2x10xf32>,
    } else {
    }
    %c0 = arith.constant 0 : index
    %c0_1 = arith.constant 0 : index
    %c0_2 = arith.constant 0 : index
    %3 = vector.load %arg5[%c0, %c0_1, %c0_2] : memref<1x2x10xf32, #tpu.memory_space<vmem>>, vector<1x2x10xf32>
    %4 = vector.shape_cast %3 : vector<1x2x10xf32> to vector<2x10xf32>
    %c0_3 = arith.constant 0 : index
    %c0_4 = arith.constant 0 : index
    %5 = vector.load %arg2[%c0_3, %c0_4] : memref<2x32768xf32, #tpu.memory_space<vmem>>, vector<2x32768xf32>
    %c0_5 = arith.constant 0 : index
    %c0_6 = arith.constant 0 : index
    %6 = vector.load %arg3[%c0_5, %c0_6] : memref<10x32768xf32, #tpu.memory_space<vmem>>, vector<10x32768xf32>
    %cst = arith.constant dense<0.000000e+00> : vector<2x10xf32>
    %7 = tpu.matmul %5, %6, %cst {dimension_numbers = #tpu.dot_dimension_numbers<[1], [1], [0], [0], [0, 0, 1, 0], [], []>} : vector<2x32768xf32>, vector<10x32768xf32>, vector<2x10xf32> -> vector<2x10xf32>
    %8 = arith.addf %4, %7 : vector<2x10xf32>
    %c0_7 = arith.constant 0 : index
    %c0_8 = arith.constant 0 : index
    %c0_9 = arith.constant 0 : index
    %9 = vector.load %arg5[%c0_7, %c0_8, %c0_9] : memref<1x2x10xf32, #tpu.memory_space<vmem>>, vector<1x2x10xf32>
    %10 = vector.shape_cast %9 : vector<1x2x10xf32> to vector<2x10xf32>
    %11 = vector.shape_cast %8 : vector<2x10xf32> to vector<1x2x10xf32>
    tpu.vector_store %arg5[%c0_7, %c0_8, %c0_9], %11 {strides = array<i32>} : memref<1x2x10xf32, #tpu.memory_space<vmem>>, vector<1x2x10xf32>,
    %c2_i32 = arith.constant 2 : i32
    %12 = arith.cmpi eq, %arg1, %c2_i32 : i32
    %c0_i32_10 = arith.constant 0 : i32
    %13 = arith.cmpi eq, %arg0, %c0_i32_10 : i32
    %14 = arith.andi %12, %13 : i1
    %15 = arith.extui %14 : i1 to i32
    %c0_i32_11 = arith.constant 0 : i32
    %16 = arith.cmpi ne, %15, %c0_i32_11 : i32
    scf.if %16 {
      %c0_12 = arith.constant 0 : index
      %c0_13 = arith.constant 0 : index
      %c0_14 = arith.constant 0 : index
      %17 = vector.load %arg5[%c0_12, %c0_13, %c0_14] : memref<1x2x10xf32, #tpu.memory_space<vmem>>, vector<1x2x10xf32>
      %18 = vector.shape_cast %17 : vector<1x2x10xf32> to vector<2x10xf32>
      %c0_15 = arith.constant 0 : index
      %c0_16 = arith.constant 0 : index
      %19 = vector.load %arg4[%c0_15, %c0_16] : memref<1x10xf32, #tpu.memory_space<vmem>>, vector<1x10xf32>
      %20 = vector.broadcast %19 : vector<1x10xf32> to vector<2x10xf32>
      %21 = arith.addf %18, %20 : vector<2x10xf32>
      %c0_17 = arith.constant 0 : index
      %c0_18 = arith.constant 0 : index
      %c0_19 = arith.constant 0 : index
      %22 = vector.load %arg5[%c0_17, %c0_18, %c0_19] : memref<1x2x10xf32, #tpu.memory_space<vmem>>, vector<1x2x10xf32>
      %23 = vector.shape_cast %22 : vector<1x2x10xf32> to vector<2x10xf32>
      %24 = vector.shape_cast %21 : vector<2x10xf32> to vector<1x2x10xf32>
      tpu.vector_store %arg5[%c0_17, %c0_18, %c0_19], %24 {strides = array<i32>} : memref<1x2x10xf32, #tpu.memory_space<vmem>>, vector<1x2x10xf32>,
    } else {
    }
    return
  }
  func.func @transform_0(%arg0: i32, %arg1: i32) -> (i32, i32) {
    %c3_i32 = arith.constant 3 : i32
    %0 = arith.muli %arg0, %c3_i32 : i32
    %1 = arith.addi %0, %arg1 : i32
    %c0_i32 = arith.constant 0 : i32
    %c0_i32_0 = arith.constant 0 : i32
    return %c0_i32, %1 : i32, i32
  }
  func.func @transform_1(%arg0: i32, %arg1: i32) -> (i32, i32) {
    %c3_i32 = arith.constant 3 : i32
    %0 = arith.muli %arg0, %c3_i32 : i32
    %1 = arith.addi %0, %arg1 : i32
    %c0_i32 = arith.constant 0 : i32
    %c0_i32_0 = arith.constant 0 : i32
    return %c0_i32, %1 : i32, i32
  }
  func.func @transform_2(%arg0: i32, %arg1: i32) -> (i32, i32) {
    %c0_i32 = arith.constant 0 : i32
    %c0_i32_0 = arith.constant 0 : i32
    %c0_i32_1 = arith.constant 0 : i32
    return %c0_i32, %c0_i32_0 : i32, i32
  }
  func.func @transform_3(%arg0: i32, %arg1: i32) -> (i32, i32, i32) {
    %c0_i32 = arith.constant 0 : i32
    %c0_i32_0 = arith.constant 0 : i32
    %c0_i32_1 = arith.constant 0 : i32
    return %arg0, %c0_i32, %c0_i32_0 : i32, i32, i32
  }
}

</mosaic_0001>

<llo_original>
// kernel: tpu_custom_call.1
$region0: #{tpu_custom_call.1}
  #allocation0 [shape = 'u32[]', space=smem, size = 0x4, offset = 0x4, fixed_abs, tag = 'smem constant byte address 0x4 - core index']
  #allocation1 [shape = 'u32[144,128]{1,0:T(1,128)}', space=vmem, size = 0x12000, scoped, tag = 'internal scratch']
  %s0 = inlined_call_operand.hbm [shape: f32[2,196608], index: 0, kind: input, shape index: {}]
  %s1 = inlined_call_operand.hbm [shape: f32[10,196608], index: 1, kind: input, shape index: {}]
  %s2 = inlined_call_operand.hbm [shape: f32[1,10], index: 2, kind: input, shape index: {}]
  %s3 = inlined_call_operand.hbm [shape: f32[2,2,10], index: 3, kind: output, shape index: {}]
  %s4 = sld [smem:[#allocation0]]
  $region65: #{tpu_custom_call.1} parent=0
    _
  %s6 = ssub.s32 1, %s4
  %s7 = scalar_select 0, %s6, %s4
  $region1: #{tpu_custom_call.1} parent=0
    #allocation2 [shape = 'u8[524288]{0}', space=vmem, size = 0x80000, scoped, tag = 'input window, operand 0']
    #allocation3 [shape = 's32[2]{0}', space=sflag, size = 0x8, scoped, tag = 'scoped memory for tpu_custom_call.1']
    #allocation4 [shape = 's32[2]{0}', space=sflag, size = 0x8, scoped, tag = 'scoped memory for tpu_custom_call.1']
    #allocation5 [shape = 'u8[4194304]{0}', space=vmem, size = 0x400000, scoped, tag = 'input window, operand 1']
    #allocation6 [shape = 's32[2]{0}', space=sflag, size = 0x8, scoped, tag = 'scoped memory for tpu_custom_call.1']
    #allocation7 [shape = 'u8[512]{0}', space=vmem, size = 0x400, scoped, tag = 'input window, operand 2, single buffered']
    #allocation8 [shape = 'u8[2048]{0}', space=vmem, size = 0x800, scoped, tag = 'output window, operand 0']
    %8 = vsyncpa [#allocation3], 0
    %s9 = scalar_lea.sflag [#allocation3], 1
    %10 = vsyncpa %s9, 0
    %11 = vsyncpa [#allocation6], 0
    %s12 = scalar_lea.sflag [#allocation6], 1
    %13 = vsyncpa %s12, 0
    %14 = vsyncpa [#allocation4], 0
    %s15 = scalar_lea.sflag [#allocation4], 1
    %16 = vsyncpa %s15, 0
    loop: start=0, step=1, limit=8
    $region2: #{tpu_custom_call.1} parent=1 // loop_pre_header
      _
    $region3: #{tpu_custom_call.1} parent=1 // loop_header
      %s18 = sphi 0, %s22
      %p19 = scmp.ge.s32.totalorder %s18, 8
      %s25 = sphi 0, %s37
      %s26 = sphi 0, %s33
      %s27 = sphi 0, %s25
      %s28 = sphi 0, %s26
      %s29 = sphi 0, %s27
      %s30 = sphi 0, %s28
      %s44 = sphi 0, %s46
      %s47 = sphi 0, %s44
      %s48 = sphi 0, %s47
      %s64 = sphi 0, %s48
      %s74 = sphi 0, %s76
      %s77 = sphi 0, %s74
      %s78 = sphi 0, %s77
      %s94 = sphi 0, %s78
      %s98 = sphi 0, %s98
      %s100 = sphi 0, %s98
      %s101 = sphi 0, %s100
      %s115 = sphi 0, %s101
      %s121 = sphi 0, %s123
      %s124 = sphi 0, %s121
      %s125 = sphi 0, %s124
      %s141 = sphi 0, %s125
    $region4: #{tpu_custom_call.1} parent=1 // loop_header_branch
      %21 = sbr.rel (%p19) target = $region8
    $region5: #{tpu_custom_call.1} parent=1 // loop_body
      %s23 = ssub.s32 %s18, 1
      %s24 = ssub.s32 %s18, 2
      %s31 = sadd.s32 1, %s26
      %p32 = scmp.ge.s32.totalorder %s31, 3
      %s33 = scalar_select %p32, 0, %s31
      %s34 = sadd.s32 1, %s25
      %s35 = scalar_select %p32, %s34, %s25
      %p36 = scmp.ge.s32.totalorder %s35, 2
      %s37 = scalar_select %p36, 0, %s35
      %s38 = smul.u32 %s25, 3
      %s39 = sadd.s32 %s38, %s26
      %s40 = smul.u32 %s37, 3
      %s41 = sadd.s32 %s40, %s33
      %s42 = ssub.s32 %s39, %s41
      %p43 = scmp.eq.s32.totalorder %s42, 0
      %s45 = sadd.s32 %s44, 1
      %s46 = scalar_select %p43, %s44, %s45
      %p49 = pneg %p43
      %p50 = scmp.eq.s32.totalorder %s18, 5
      %p51 = por %p49, %p50
      %p52 = scmp.ne.s32.totalorder %s44, %s47
      %p53 = scmp.eq.s32.totalorder %s18, 0
      %p54 = por %p52, %p53
      %p55 = scmp.ne.s32.totalorder %s44, %s47
      %p56 = scmp.eq.s32.totalorder %s23, 5
      %p57 = por %p55, %p56
      %p58 = scmp.ne.s32.totalorder %s47, %s48
      %p59 = scmp.eq.s32.totalorder %s23, 0
      %p60 = por %p58, %p59
      %p61 = scmp.ne.s32.totalorder %s47, %s48
      %p62 = scmp.eq.s32.totalorder %s24, 5
      %p63 = por %p61, %p62
      %p65 = scmp.ne.s32.totalorder %s48, %s64
      %p66 = scmp.eq.s32.totalorder %s24, 0
      %p67 = por %p65, %p66
      %s68 = smul.u32 %s25, 3
      %s69 = sadd.s32 %s68, %s26
      %s70 = smul.u32 %s37, 3
      %s71 = sadd.s32 %s70, %s33
      %s72 = ssub.s32 %s69, %s71
      %p73 = scmp.eq.s32.totalorder %s72, 0
      %s75 = sadd.s32 %s74, 1
      %s76 = scalar_select %p73, %s74, %s75
      %p79 = pneg %p73
      %p80 = scmp.eq.s32.totalorder %s18, 5
      %p81 = por %p79, %p80
      %p82 = scmp.ne.s32.totalorder %s74, %s77
      %p83 = scmp.eq.s32.totalorder %s18, 0
      %p84 = por %p82, %p83
      %p85 = scmp.ne.s32.totalorder %s74, %s77
      %p86 = scmp.eq.s32.totalorder %s23, 5
      %p87 = por %p85, %p86
      %p88 = scmp.ne.s32.totalorder %s77, %s78
      %p89 = scmp.eq.s32.totalorder %s23, 0
      %p90 = por %p88, %p89
      %p91 = scmp.ne.s32.totalorder %s77, %s78
      %p92 = scmp.eq.s32.totalorder %s24, 5
      %p93 = por %p91, %p92
      %p95 = scmp.ne.s32.totalorder %s78, %s94
      %p96 = scmp.eq.s32.totalorder %s24, 0
      %p97 = por %p95, %p96
      %s99 = sadd.s32 %s98, 1
      %p102 = scmp.eq.s32.totalorder %s18, 5
      %p103 = scmp.ne.s32.totalorder %s98, %s100
      %p104 = scmp.eq.s32.totalorder %s18, 0
      %p105 = por %p103, %p104
      %p106 = scmp.ne.s32.totalorder %s98, %s100
      %p107 = scmp.eq.s32.totalorder %s23, 5
      %p108 = por %p106, %p107
      %p109 = scmp.ne.s32.totalorder %s100, %s101
      %p110 = scmp.eq.s32.totalorder %s23, 0
      %p111 = por %p109, %p110
      %p112 = scmp.ne.s32.totalorder %s100, %s101
      %p113 = scmp.eq.s32.totalorder %s24, 5
      %p114 = por %p112, %p113
      %p116 = scmp.ne.s32.totalorder %s101, %s115
      %p117 = scmp.eq.s32.totalorder %s24, 0
      %p118 = por %p116, %p117
      %s119 = ssub.s32 %s25, %s37
      %p120 = scmp.eq.s32.totalorder %s119, 0
      %s122 = sadd.s32 %s121, 1
      %s123 = scalar_select %p120, %s121, %s122
      %p126 = pneg %p120
      %p127 = scmp.eq.s32.totalorder %s18, 5
      %p128 = por %p126, %p127
      %p129 = scmp.ne.s32.totalorder %s121, %s124
      %p130 = scmp.eq.s32.totalorder %s18, 0
      %p131 = por %p129, %p130
      %p132 = scmp.ne.s32.totalorder %s121, %s124
      %p133 = scmp.eq.s32.totalorder %s23, 5
      %p134 = por %p132, %p133
      %p135 = scmp.ne.s32.totalorder %s124, %s125
      %p136 = scmp.eq.s32.totalorder %s23, 0
      %p137 = por %p135, %p136
      %p138 = scmp.ne.s32.totalorder %s124, %s125
      %p139 = scmp.eq.s32.totalorder %s24, 5
      %p140 = por %p138, %p139
      %p142 = scmp.ne.s32.totalorder %s125, %s141
      %p143 = scmp.eq.s32.totalorder %s24, 0
      %p144 = por %p142, %p143
      %p145 = scmp.le.s32.totalorder 1, %s18
      %p146 = scmp.lt.s32.totalorder %s18, 7
      %p147 = pnand %p145, %p146
      %p148 = pneg %p147
      // Predicated region
      $region9: #{tpu_custom_call.1} parent=5 // pred_check
        _
      $region10: #{tpu_custom_call.1} parent=5 // pred_check_branch
        %150 = sbr.rel (%p147) target = $region12
      $region11: #{tpu_custom_call.1} parent=5 // pred_region
        %s151 = ssub.s32 %s18, 1
        // Predicated region
        $region13: #{tpu_custom_call.1} parent=11 // pred_check
          %p152 = pneg %p111
        $region14: #{tpu_custom_call.1} parent=11 // pred_check_branch
          %154 = sbr.rel (%p152) target = $region16
        $region15: #{tpu_custom_call.1} parent=11 // pred_region
          %s156 = ssub.s32 16, 16
          %157 = vsyncadd [#allocation6], %s156
          %s159 = sshll.u32 [#allocation7], 4
          %s160 = int_to_ptr.vmem [resolvable:$true] %s159
          %162 = dma.hbm_to_vmem [thread:$0]  %s2, 16, %s160, [#allocation6]
        $region16: #{tpu_custom_call.1} parent=11 // pred_fallthru
          _
      $region12: #{tpu_custom_call.1} parent=5 // pred_fallthru
        _
      %p163 = scmp.lt.s32.totalorder %s18, 6
      // Predicated region
      $region17: #{tpu_custom_call.1} parent=5 // pred_check
        %p164 = pneg %p163
      $region18: #{tpu_custom_call.1} parent=5 // pred_check_branch
        %166 = sbr.rel (%p164) target = $region20
      $region19: #{tpu_custom_call.1} parent=5 // pred_region
        // Predicated region
        $region21: #{tpu_custom_call.1} parent=19 // pred_check
          %p167 = pneg %p54
        $region22: #{tpu_custom_call.1} parent=19 // pred_check_branch
          %169 = sbr.rel (%p167) target = $region24
        $region23: #{tpu_custom_call.1} parent=19 // pred_region
          %s170 = sand.u32 %s44, 1
          %s171 = scalar_lea.sflag [#allocation3], %s170
          %s172 = sand.u32 %s44, 1
          %s173 = smul.addr %s172, 512
          %s174 = scalar_lea.vmem [#allocation2], %s173
          %s175 = smul.u32 %s25, 3
          %s176 = sadd.s32 %s175, %s26
          %s177 = smul.u32 256, %s176
          %s179 = ssub.s32 8192, 8192
          %180 = vsyncadd %s171, %s179
          %s181 = smul.addr %s177, 32
          %s182 = scalar_lea.hbm %s0, %s181
          %s184 = sshll.u32 %s174, 4
          %s185 = int_to_ptr.vmem [resolvable:$true] %s184
          %187 = dma.hbm_to_vmem [thread:$0]  %s182, 8192, %s185, %s171
        $region24: #{tpu_custom_call.1} parent=19 // pred_fallthru
          _
        // Predicated region
        $region25: #{tpu_custom_call.1} parent=19 // pred_check
          %p188 = pneg %p84
        $region26: #{tpu_custom_call.1} parent=19 // pred_check_branch
          %190 = sbr.rel (%p188) target = $region28
        $region27: #{tpu_custom_call.1} parent=19 // pred_region
          %s191 = sand.u32 %s18, 1
          %s192 = scalar_lea.sflag [#allocation6], %s191
          %s193 = sand.u32 %s74, 1
          %s194 = smul.addr %s193, 4096
          %s195 = scalar_lea.vmem [#allocation5], %s194
          %s196 = smul.u32 %s25, 3
          %s197 = sadd.s32 %s196, %s26
          %s198 = smul.u32 256, %s197
          %s200 = ssub.s32 65536, 65536
          %201 = vsyncadd %s192, %s200
          %s202 = smul.addr %s198, 128
          %s203 = scalar_lea.hbm %s1, %s202
          %s204 = sshll.u32 %s195, 4
          %s205 = int_to_ptr.vmem [resolvable:$true] %s204
          %210 = dma.hbm_to_vmem [thread:$0]  %s203, 65536, %s205, %s192, 196608, 32768, 2048
        $region28: #{tpu_custom_call.1} parent=19 // pred_fallthru
          _
      $region20: #{tpu_custom_call.1} parent=5 // pred_fallthru
        _
      %p211 = scmp.le.s32.totalorder 1, %s18
      %p212 = scmp.lt.s32.totalorder %s18, 7
      %p213 = pnand %p211, %p212
      %p214 = pneg %p213
      // Predicated region
      $region29: #{tpu_custom_call.1} parent=5 // pred_check
        _
      $region30: #{tpu_custom_call.1} parent=5 // pred_check_branch
        %216 = sbr.rel (%p213) target = $region32
      $region31: #{tpu_custom_call.1} parent=5 // pred_region
        %s217 = ssub.s32 %s18, 1
        %s218 = sand.u32 %s47, 1
        %s219 = scalar_lea.sflag [#allocation3], %s218
        %s220 = sand.u32 %s47, 1
        %s221 = smul.addr %s220, 512
        %s222 = scalar_lea.vmem [#allocation2], %s221
        // Predicated region
        $region33: #{tpu_custom_call.1} parent=31 // pred_check
          %p223 = pneg %p60
        $region34: #{tpu_custom_call.1} parent=31 // pred_check_branch
          %225 = sbr.rel (%p223) target = $region36
        $region35: #{tpu_custom_call.1} parent=31 // pred_region
          %226 = dma.done %s219, 8192
        $region36: #{tpu_custom_call.1} parent=31 // pred_fallthru
          _
        %s227 = sand.u32 %s23, 1
        %s228 = scalar_lea.sflag [#allocation6], %s227
        %s229 = sand.u32 %s77, 1
        %s230 = smul.addr %s229, 4096
        %s231 = scalar_lea.vmem [#allocation5], %s230
        // Predicated region
        $region37: #{tpu_custom_call.1} parent=31 // pred_check
          %p232 = pneg %p90
        $region38: #{tpu_custom_call.1} parent=31 // pred_check_branch
          %234 = sbr.rel (%p232) target = $region40
        $region39: #{tpu_custom_call.1} parent=31 // pred_region
          %235 = dma.done %s228, 65536
        $region40: #{tpu_custom_call.1} parent=31 // pred_fallthru
          _
        // Predicated region
        $region41: #{tpu_custom_call.1} parent=31 // pred_check
          %p236 = pneg %p111
        $region42: #{tpu_custom_call.1} parent=31 // pred_check_branch
          %238 = sbr.rel (%p236) target = $region44
        $region43: #{tpu_custom_call.1} parent=31 // pred_region
          %239 = dma.done [#allocation6], 16
        $region44: #{tpu_custom_call.1} parent=31 // pred_fallthru
          _
        %s240 = sand.u32 %s47, 1
        %s241 = scalar_lea.sflag [#allocation3], %s240
        %s242 = sand.u32 %s47, 1
        %s243 = smul.addr %s242, 512
        %s244 = scalar_lea.vmem [#allocation2], %s243
        %p245 = pneg %p60
        %p246 = pneg %p57
        %s247 = sand.u32 %s23, 1
        %s248 = scalar_lea.sflag [#allocation6], %s247
        %s249 = sand.u32 %s77, 1
        %s250 = smul.addr %s249, 4096
        %s251 = scalar_lea.vmem [#allocation5], %s250
        %p252 = pneg %p90
        %p253 = pneg %p87
        %p254 = pneg %p111
        %p255 = pneg %p108
        %p256 = pneg %p137
        %p257 = pneg %p134
        %s258 = sand.u32 %s124, 1
        %s259 = scalar_lea.sflag [#allocation4], %s258
        %s260 = sand.u32 %s124, 1
        %s261 = smul.addr %s260, 2
        %s262 = scalar_lea.vmem [#allocation8], %s261
        %s263 = smul.u32 %s27, 3
        %s264 = sadd.s32 %s263, %s28
        %s265 = smul.u32 256, %s264
        %s266 = smul.u32 %s27, 3
        %s267 = sadd.s32 %s266, %s28
        %s268 = smul.u32 256, %s267
        %p269 = scmp.eq.s32.totalorder %s28, 0
        // Predicated region
        $region45: #{tpu_custom_call.1} parent=31 // pred_check
          %p270 = pneg %p269
        $region46: #{tpu_custom_call.1} parent=31 // pred_check_branch
          %272 = sbr.rel (%p270) target = $region48
        $region47: #{tpu_custom_call.1} parent=31 // pred_region
          %vm273 = vcmask 74752
          %274 = vst.msk [vmem:[%s262] sm:$0x3] %vm273, 0.0
        $region48: #{tpu_custom_call.1} parent=31 // pred_fallthru
          _
        %v275 = vld [vmem:[%s262] sm:$0x3]
        %v276 = vld [vmem:[%s222] sm:$0xff]
        %v277 = vld [vmem:[%s222 + $0x8] sm:$0xff]
        %v278 = vld [vmem:[%s222 + $0x10] sm:$0xff]
        %v279 = vld [vmem:[%s222 + $0x18] sm:$0xff]
        %v280 = vld [vmem:[%s222 + $0x20] sm:$0xff]
        %v281 = vld [vmem:[%s222 + $0x28] sm:$0xff]
        %v282 = vld [vmem:[%s222 + $0x30] sm:$0xff]
        %v283 = vld [vmem:[%s222 + $0x38] sm:$0xff]
        %v284 = vld [vmem:[%s222 + $0x40] sm:$0xff]
        %v285 = vld [vmem:[%s222 + $0x48] sm:$0xff]
        %v286 = vld [vmem:[%s222 + $0x50] sm:$0xff]
        %v287 = vld [vmem:[%s222 + $0x58] sm:$0xff]
        %v288 = vld [vmem:[%s222 + $0x60] sm:$0xff]
        %v289 = vld [vmem:[%s222 + $0x68] sm:$0xff]
        %v290 = vld [vmem:[%s222 + $0x70] sm:$0xff]
        %v291 = vld [vmem:[%s222 + $0x78] sm:$0xff]
        %v292 = vld [vmem:[%s222 + $0x80] sm:$0xff]
        %v293 = vld [vmem:[%s222 + $0x88] sm:$0xff]
        %v294 = vld [vmem:[%s222 + $0x90] sm:$0xff]
        %v295 = vld [vmem:[%s222 + $0x98] sm:$0xff]
        %v296 = vld [vmem:[%s222 + $0xa0] sm:$0xff]
        %v297 = vld [vmem:[%s222 + $0xa8] sm:$0xff]
        %v298 = vld [vmem:[%s222 + $0xb0] sm:$0xff]
        %v299 = vld [vmem:[%s222 + $0xb8] sm:$0xff]
        %v300 = vld [vmem:[%s222 + $0xc0] sm:$0xff]
        %v301 = vld [vmem:[%s222 + $0xc8] sm:$0xff]
        %v302 = vld [vmem:[%s222 + $0xd0] sm:$0xff]
        %v303 = vld [vmem:[%s222 + $0xd8] sm:$0xff]
        %v304 = vld [vmem:[%s222 + $0xe0] sm:$0xff]
        %v305 = vld [vmem:[%s222 + $0xe8] sm:$0xff]
        %v306 = vld [vmem:[%s222 + $0xf0] sm:$0xff]
        %v307 = vld [vmem:[%s222 + $0xf8] sm:$0xff]
        %v308 = vld [vmem:[%s222 + $0x100] sm:$0xff]
        %v309 = vld [vmem:[%s222 + $0x108] sm:$0xff]
        %v310 = vld [vmem:[%s222 + $0x110] sm:$0xff]
        %v311 = vld [vmem:[%s222 + $0x118] sm:$0xff]
        %v312 = vld [vmem:[%s222 + $0x120] sm:$0xff]
        %v313 = vld [vmem:[%s222 + $0x128] sm:$0xff]
        %v314 = vld [vmem:[%s222 + $0x130] sm:$0xff]
        %v315 = vld [vmem:[%s222 + $0x138] sm:$0xff]
        %v316 = vld [vmem:[%s222 + $0x140] sm:$0xff]
        %v317 = vld [vmem:[%s222 + $0x148] sm:$0xff]
        %v318 = vld [vmem:[%s222 + $0x150] sm:$0xff]
        %v319 = vld [vmem:[%s222 + $0x158] sm:$0xff]
        %v320 = vld [vmem:[%s222 + $0x160] sm:$0xff]
        %v321 = vld [vmem:[%s222 + $0x168] sm:$0xff]
        %v322 = vld [vmem:[%s222 + $0x170] sm:$0xff]
        %v323 = vld [vmem:[%s222 + $0x178] sm:$0xff]
        %v324 = vld [vmem:[%s222 + $0x180] sm:$0xff]
        %v325 = vld [vmem:[%s222 + $0x188] sm:$0xff]
        %v326 = vld [vmem:[%s222 + $0x190] sm:$0xff]
        %v327 = vld [vmem:[%s222 + $0x198] sm:$0xff]
        %v328 = vld [vmem:[%s222 + $0x1a0] sm:$0xff]
        %v329 = vld [vmem:[%s222 + $0x1a8] sm:$0xff]
        %v330 = vld [vmem:[%s222 + $0x1b0] sm:$0xff]
        %v331 = vld [vmem:[%s222 + $0x1b8] sm:$0xff]
        %v332 = vld [vmem:[%s222 + $0x1c0] sm:$0xff]
        %v333 = vld [vmem:[%s222 + $0x1c8] sm:$0xff]
        %v334 = vld [vmem:[%s222 + $0x1d0] sm:$0xff]
        %v335 = vld [vmem:[%s222 + $0x1d8] sm:$0xff]
        %v336 = vld [vmem:[%s222 + $0x1e0] sm:$0xff]
        %v337 = vld [vmem:[%s222 + $0x1e8] sm:$0xff]
        %v338 = vld [vmem:[%s222 + $0x1f0] sm:$0xff]
        %v339 = vld [vmem:[%s222 + $0x1f8] sm:$0xff]
        %v340 = vld [vmem:[%s231] sm:$0xff]
        %v341 = vld [vmem:[%s231 + $0x8] sm:$0xff]
        %v342 = vld [vmem:[%s231 + $0x10] sm:$0xff]
        %v343 = vld [vmem:[%s231 + $0x18] sm:$0xff]
        %v344 = vld [vmem:[%s231 + $0x20] sm:$0xff]
        %v345 = vld [vmem:[%s231 + $0x28] sm:$0xff]
        %v346 = vld [vmem:[%s231 + $0x30] sm:$0xff]
        %v347 = vld [vmem:[%s231 + $0x38] sm:$0xff]
        %v348 = vld [vmem:[%s231 + $0x40] sm:$0xff]
        %v349 = vld [vmem:[%s231 + $0x48] sm:$0xff]
        %v350 = vld [vmem:[%s231 + $0x50] sm:$0xff]
        %v351 = vld [vmem:[%s231 + $0x58] sm:$0xff]
        %v352 = vld [vmem:[%s231 + $0x60] sm:$0xff]
        %v353 = vld [vmem:[%s231 + $0x68] sm:$0xff]
        %v354 = vld [vmem:[%s231 + $0x70] sm:$0xff]
        %v355 = vld [vmem:[%s231 + $0x78] sm:$0xff]
        %v356 = vld [vmem:[%s231 + $0x80] sm:$0xff]
        %v357 = vld [vmem:[%s231 + $0x88] sm:$0xff]
        %v358 = vld [vmem:[%s231 + $0x90] sm:$0xff]
        %v359 = vld [vmem:[%s231 + $0x98] sm:$0xff]
        %v360 = vld [vmem:[%s231 + $0xa0] sm:$0xff]
        %v361 = vld [vmem:[%s231 + $0xa8] sm:$0xff]
        %v362 = vld [vmem:[%s231 + $0xb0] sm:$0xff]
        %v363 = vld [vmem:[%s231 + $0xb8] sm:$0xff]
        %v364 = vld [vmem:[%s231 + $0xc0] sm:$0xff]
        %v365 = vld [vmem:[%s231 + $0xc8] sm:$0xff]
        %v366 = vld [vmem:[%s231 + $0xd0] sm:$0xff]
        %v367 = vld [vmem:[%s231 + $0xd8] sm:$0xff]
        %v368 = vld [vmem:[%s231 + $0xe0] sm:$0xff]
        %v369 = vld [vmem:[%s231 + $0xe8] sm:$0xff]
        %v370 = vld [vmem:[%s231 + $0xf0] sm:$0xff]
        %v371 = vld [vmem:[%s231 + $0xf8] sm:$0xff]
        %v372 = vld [vmem:[%s231 + $0x100] sm:$0xff]
        %v373 = vld [vmem:[%s231 + $0x108] sm:$0xff]
        %v374 = vld [vmem:[%s231 + $0x110] sm:$0xff]
        %v375 = vld [vmem:[%s231 + $0x118] sm:$0xff]
        %v376 = vld [vmem:[%s231 + $0x120] sm:$0xff]
        %v377 = vld [vmem:[%s231 + $0x128] sm:$0xff]
        %v378 = vld [vmem:[%s231 + $0x130] sm:$0xff]
        %v379 = vld [vmem:[%s231 + $0x138] sm:$0xff]
        %v380 = vld [vmem:[%s231 + $0x140] sm:$0xff]
        %v381 = vld [vmem:[%s231 + $0x148] sm:$0xff]
        %v382 = vld [vmem:[%s231 + $0x150] sm:$0xff]
        %v383 = vld [vmem:[%s231 + $0x158] sm:$0xff]
        %v384 = vld [vmem:[%s231 + $0x160] sm:$0xff]
        %v385 = vld [vmem:[%s231 + $0x168] sm:$0xff]
        %v386 = vld [vmem:[%s231 + $0x170] sm:$0xff]
        %v387 = vld [vmem:[%s231 + $0x178] sm:$0xff]
        %v388 = vld [vmem:[%s231 + $0x180] sm:$0xff]
        %v389 = vld [vmem:[%s231 + $0x188] sm:$0xff]
        %v390 = vld [vmem:[%s231 + $0x190] sm:$0xff]
        %v391 = vld [vmem:[%s231 + $0x198] sm:$0xff]
        %v392 = vld [vmem:[%s231 + $0x1a0] sm:$0xff]
        %v393 = vld [vmem:[%s231 + $0x1a8] sm:$0xff]
        %v394 = vld [vmem:[%s231 + $0x1b0] sm:$0xff]
        %v395 = vld [vmem:[%s231 + $0x1b8] sm:$0xff]
        %v396 = vld [vmem:[%s231 + $0x1c0] sm:$0xff]
        %v397 = vld [vmem:[%s231 + $0x1c8] sm:$0xff]
        %v398 = vld [vmem:[%s231 + $0x1d0] sm:$0xff]
        %v399 = vld [vmem:[%s231 + $0x1d8] sm:$0xff]
        %v400 = vld [vmem:[%s231 + $0x1e0] sm:$0xff]
        %v401 = vld [vmem:[%s231 + $0x1e8] sm:$0xff]
        %v402 = vld [vmem:[%s231 + $0x1f0] sm:$0xff]
        %v403 = vld [vmem:[%s231 + $0x1f8] sm:$0xff]
        %v404 = vld [vmem:[%s231 + $0x200] sm:$0xff]
        %v405 = vld [vmem:[%s231 + $0x208] sm:$0xff]
        %v406 = vld [vmem:[%s231 + $0x210] sm:$0xff]
        %v407 = vld [vmem:[%s231 + $0x218] sm:$0xff]
        %v408 = vld [vmem:[%s231 + $0x220] sm:$0xff]
        %v409 = vld [vmem:[%s231 + $0x228] sm:$0xff]
        %v410 = vld [vmem:[%s231 + $0x230] sm:$0xff]
        %v411 = vld [vmem:[%s231 + $0x238] sm:$0xff]
        %v412 = vld [vmem:[%s231 + $0x240] sm:$0xff]
        %v413 = vld [vmem:[%s231 + $0x248] sm:$0xff]
        %v414 = vld [vmem:[%s231 + $0x250] sm:$0xff]
        %v415 = vld [vmem:[%s231 + $0x258] sm:$0xff]
        %v416 = vld [vmem:[%s231 + $0x260] sm:$0xff]
        %v417 = vld [vmem:[%s231 + $0x268] sm:$0xff]
        %v418 = vld [vmem:[%s231 + $0x270] sm:$0xff]
        %v419 = vld [vmem:[%s231 + $0x278] sm:$0xff]
        %v420 = vld [vmem:[%s231 + $0x280] sm:$0xff]
        %v421 = vld [vmem:[%s231 + $0x288] sm:$0xff]
        %v422 = vld [vmem:[%s231 + $0x290] sm:$0xff]
        %v423 = vld [vmem:[%s231 + $0x298] sm:$0xff]
        %v424 = vld [vmem:[%s231 + $0x2a0] sm:$0xff]
        %v425 = vld [vmem:[%s231 + $0x2a8] sm:$0xff]
        %v426 = vld [vmem:[%s231 + $0x2b0] sm:$0xff]
        %v427 = vld [vmem:[%s231 + $0x2b8] sm:$0xff]
        %v428 = vld [vmem:[%s231 + $0x2c0] sm:$0xff]
        %v429 = vld [vmem:[%s231 + $0x2c8] sm:$0xff]
        %v430 = vld [vmem:[%s231 + $0x2d0] sm:$0xff]
        %v431 = vld [vmem:[%s231 + $0x2d8] sm:$0xff]
        %v432 = vld [vmem:[%s231 + $0x2e0] sm:$0xff]
        %v433 = vld [vmem:[%s231 + $0x2e8] sm:$0xff]
        %v434 = vld [vmem:[%s231 + $0x2f0] sm:$0xff]
        %v435 = vld [vmem:[%s231 + $0x2f8] sm:$0xff]
        %v436 = vld [vmem:[%s231 + $0x300] sm:$0xff]
        %v437 = vld [vmem:[%s231 + $0x308] sm:$0xff]
        %v438 = vld [vmem:[%s231 + $0x310] sm:$0xff]
        %v439 = vld [vmem:[%s231 + $0x318] sm:$0xff]
        %v440 = vld [vmem:[%s231 + $0x320] sm:$0xff]
        %v441 = vld [vmem:[%s231 + $0x328] sm:$0xff]
        %v442 = vld [vmem:[%s231 + $0x330] sm:$0xff]
        %v443 = vld [vmem:[%s231 + $0x338] sm:$0xff]
        %v444 = vld [vmem:[%s231 + $0x340] sm:$0xff]
        %v445 = vld [vmem:[%s231 + $0x348] sm:$0xff]
        %v446 = vld [vmem:[%s231 + $0x350] sm:$0xff]
        %v447 = vld [vmem:[%s231 + $0x358] sm:$0xff]
        %v448 = vld [vmem:[%s231 + $0x360] sm:$0xff]
        %v449 = vld [vmem:[%s231 + $0x368] sm:$0xff]
        %v450 = vld [vmem:[%s231 + $0x370] sm:$0xff]
        %v451 = vld [vmem:[%s231 + $0x378] sm:$0xff]
        %v452 = vld [vmem:[%s231 + $0x380] sm:$0xff]
        %v453 = vld [vmem:[%s231 + $0x388] sm:$0xff]
        %v454 = vld [vmem:[%s231 + $0x390] sm:$0xff]
        %v455 = vld [vmem:[%s231 + $0x398] sm:$0xff]
        %v456 = vld [vmem:[%s231 + $0x3a0] sm:$0xff]
        %v457 = vld [vmem:[%s231 + $0x3a8] sm:$0xff]
        %v458 = vld [vmem:[%s231 + $0x3b0] sm:$0xff]
        %v459 = vld [vmem:[%s231 + $0x3b8] sm:$0xff]
        %v460 = vld [vmem:[%s231 + $0x3c0] sm:$0xff]
        %v461 = vld [vmem:[%s231 + $0x3c8] sm:$0xff]
        %v462 = vld [vmem:[%s231 + $0x3d0] sm:$0xff]
        %v463 = vld [vmem:[%s231 + $0x3d8] sm:$0xff]
        %v464 = vld [vmem:[%s231 + $0x3e0] sm:$0xff]
        %v465 = vld [vmem:[%s231 + $0x3e8] sm:$0xff]
        %v466 = vld [vmem:[%s231 + $0x3f0] sm:$0xff]
        %v467 = vld [vmem:[%s231 + $0x3f8] sm:$0xff]
        %v468 = vld [vmem:[%s231 + $0x400] sm:$0xff]
        %v469 = vld [vmem:[%s231 + $0x408] sm:$0xff]
        %v470 = vld [vmem:[%s231 + $0x410] sm:$0xff]
        %v471 = vld [vmem:[%s231 + $0x418] sm:$0xff]
        %v472 = vld [vmem:[%s231 + $0x420] sm:$0xff]
        %v473 = vld [vmem:[%s231 + $0x428] sm:$0xff]
        %v474 = vld [vmem:[%s231 + $0x430] sm:$0xff]
        %v475 = vld [vmem:[%s231 + $0x438] sm:$0xff]
        %v476 = vld [vmem:[%s231 + $0x440] sm:$0xff]
        %v477 = vld [vmem:[%s231 + $0x448] sm:$0xff]
        %v478 = vld [vmem:[%s231 + $0x450] sm:$0xff]
        %v479 = vld [vmem:[%s231 + $0x458] sm:$0xff]
        %v480 = vld [vmem:[%s231 + $0x460] sm:$0xff]
        %v481 = vld [vmem:[%s231 + $0x468] sm:$0xff]
        %v482 = vld [vmem:[%s231 + $0x470] sm:$0xff]
        %v483 = vld [vmem:[%s231 + $0x478] sm:$0xff]
        %v484 = vld [vmem:[%s231 + $0x480] sm:$0xff]
        %v485 = vld [vmem:[%s231 + $0x488] sm:$0xff]
        %v486 = vld [vmem:[%s231 + $0x490] sm:$0xff]
        %v487 = vld [vmem:[%s231 + $0x498] sm:$0xff]
        %v488 = vld [vmem:[%s231 + $0x4a0] sm:$0xff]
        %v489 = vld [vmem:[%s231 + $0x4a8] sm:$0xff]
        %v490 = vld [vmem:[%s231 + $0x4b0] sm:$0xff]
        %v491 = vld [vmem:[%s231 + $0x4b8] sm:$0xff]
        %v492 = vld [vmem:[%s231 + $0x4c0] sm:$0xff]
        %v493 = vld [vmem:[%s231 + $0x4c8] sm:$0xff]
        %v494 = vld [vmem:[%s231 + $0x4d0] sm:$0xff]
        %v495 = vld [vmem:[%s231 + $0x4d8] sm:$0xff]
        %v496 = vld [vmem:[%s231 + $0x4e0] sm:$0xff]
        %v497 = vld [vmem:[%s231 + $0x4e8] sm:$0xff]
        %v498 = vld [vmem:[%s231 + $0x4f0] sm:$0xff]
        %v499 = vld [vmem:[%s231 + $0x4f8] sm:$0xff]
        %v500 = vld [vmem:[%s231 + $0x500] sm:$0xff]
        %v501 = vld [vmem:[%s231 + $0x508] sm:$0xff]
        %v502 = vld [vmem:[%s231 + $0x510] sm:$0xff]
        %v503 = vld [vmem:[%s231 + $0x518] sm:$0xff]
        %v504 = vld [vmem:[%s231 + $0x520] sm:$0xff]
        %v505 = vld [vmem:[%s231 + $0x528] sm:$0xff]
        %v506 = vld [vmem:[%s231 + $0x530] sm:$0xff]
        %v507 = vld [vmem:[%s231 + $0x538] sm:$0xff]
        %v508 = vld [vmem:[%s231 + $0x540] sm:$0xff]
        %v509 = vld [vmem:[%s231 + $0x548] sm:$0xff]
        %v510 = vld [vmem:[%s231 + $0x550] sm:$0xff]
        %v511 = vld [vmem:[%s231 + $0x558] sm:$0xff]
        %v512 = vld [vmem:[%s231 + $0x560] sm:$0xff]
        %v513 = vld [vmem:[%s231 + $0x568] sm:$0xff]
        %v514 = vld [vmem:[%s231 + $0x570] sm:$0xff]
        %v515 = vld [vmem:[%s231 + $0x578] sm:$0xff]
        %v516 = vld [vmem:[%s231 + $0x580] sm:$0xff]
        %v517 = vld [vmem:[%s231 + $0x588] sm:$0xff]
        %v518 = vld [vmem:[%s231 + $0x590] sm:$0xff]
        %v519 = vld [vmem:[%s231 + $0x598] sm:$0xff]
        %v520 = vld [vmem:[%s231 + $0x5a0] sm:$0xff]
        %v521 = vld [vmem:[%s231 + $0x5a8] sm:$0xff]
        %v522 = vld [vmem:[%s231 + $0x5b0] sm:$0xff]
        %v523 = vld [vmem:[%s231 + $0x5b8] sm:$0xff]
        %v524 = vld [vmem:[%s231 + $0x5c0] sm:$0xff]
        %v525 = vld [vmem:[%s231 + $0x5c8] sm:$0xff]
        %v526 = vld [vmem:[%s231 + $0x5d0] sm:$0xff]
        %v527 = vld [vmem:[%s231 + $0x5d8] sm:$0xff]
        %v528 = vld [vmem:[%s231 + $0x5e0] sm:$0xff]
        %v529 = vld [vmem:[%s231 + $0x5e8] sm:$0xff]
        %v530 = vld [vmem:[%s231 + $0x5f0] sm:$0xff]
        %v531 = vld [vmem:[%s231 + $0x5f8] sm:$0xff]
        %v532 = vld [vmem:[%s231 + $0x600] sm:$0xff]
        %v533 = vld [vmem:[%s231 + $0x608] sm:$0xff]
        %v534 = vld [vmem:[%s231 + $0x610] sm:$0xff]
        %v535 = vld [vmem:[%s231 + $0x618] sm:$0xff]
        %v536 = vld [vmem:[%s231 + $0x620] sm:$0xff]
        %v537 = vld [vmem:[%s231 + $0x628] sm:$0xff]
        %v538 = vld [vmem:[%s231 + $0x630] sm:$0xff]
        %v539 = vld [vmem:[%s231 + $0x638] sm:$0xff]
        %v540 = vld [vmem:[%s231 + $0x640] sm:$0xff]
        %v541 = vld [vmem:[%s231 + $0x648] sm:$0xff]
        %v542 = vld [vmem:[%s231 + $0x650] sm:$0xff]
        %v543 = vld [vmem:[%s231 + $0x658] sm:$0xff]
        %v544 = vld [vmem:[%s231 + $0x660] sm:$0xff]
        %v545 = vld [vmem:[%s231 + $0x668] sm:$0xff]
        %v546 = vld [vmem:[%s231 + $0x670] sm:$0xff]
        %v547 = vld [vmem:[%s231 + $0x678] sm:$0xff]
        %v548 = vld [vmem:[%s231 + $0x680] sm:$0xff]
        %v549 = vld [vmem:[%s231 + $0x688] sm:$0xff]
        %v550 = vld [vmem:[%s231 + $0x690] sm:$0xff]
        %v551 = vld [vmem:[%s231 + $0x698] sm:$0xff]
        %v552 = vld [vmem:[%s231 + $0x6a0] sm:$0xff]
        %v553 = vld [vmem:[%s231 + $0x6a8] sm:$0xff]
        %v554 = vld [vmem:[%s231 + $0x6b0] sm:$0xff]
        %v555 = vld [vmem:[%s231 + $0x6b8] sm:$0xff]
        %v556 = vld [vmem:[%s231 + $0x6c0] sm:$0xff]
        %v557 = vld [vmem:[%s231 + $0x6c8] sm:$0xff]
        %v558 = vld [vmem:[%s231 + $0x6d0] sm:$0xff]
        %v559 = vld [vmem:[%s231 + $0x6d8] sm:$0xff]
        %v560 = vld [vmem:[%s231 + $0x6e0] sm:$0xff]
        %v561 = vld [vmem:[%s231 + $0x6e8] sm:$0xff]
        %v562 = vld [vmem:[%s231 + $0x6f0] sm:$0xff]
        %v563 = vld [vmem:[%s231 + $0x6f8] sm:$0xff]
        %v564 = vld [vmem:[%s231 + $0x700] sm:$0xff]
        %v565 = vld [vmem:[%s231 + $0x708] sm:$0xff]
        %v566 = vld [vmem:[%s231 + $0x710] sm:$0xff]
        %v567 = vld [vmem:[%s231 + $0x718] sm:$0xff]
        %v568 = vld [vmem:[%s231 + $0x720] sm:$0xff]
        %v569 = vld [vmem:[%s231 + $0x728] sm:$0xff]
        %v570 = vld [vmem:[%s231 + $0x730] sm:$0xff]
        %v571 = vld [vmem:[%s231 + $0x738] sm:$0xff]
        %v572 = vld [vmem:[%s231 + $0x740] sm:$0xff]
        %v573 = vld [vmem:[%s231 + $0x748] sm:$0xff]
        %v574 = vld [vmem:[%s231 + $0x750] sm:$0xff]
        %v575 = vld [vmem:[%s231 + $0x758] sm:$0xff]
        %v576 = vld [vmem:[%s231 + $0x760] sm:$0xff]
        %v577 = vld [vmem:[%s231 + $0x768] sm:$0xff]
        %v578 = vld [vmem:[%s231 + $0x770] sm:$0xff]
        %v579 = vld [vmem:[%s231 + $0x778] sm:$0xff]
        %v580 = vld [vmem:[%s231 + $0x780] sm:$0xff]
        %v581 = vld [vmem:[%s231 + $0x788] sm:$0xff]
        %v582 = vld [vmem:[%s231 + $0x790] sm:$0xff]
        %v583 = vld [vmem:[%s231 + $0x798] sm:$0xff]
        %v584 = vld [vmem:[%s231 + $0x7a0] sm:$0xff]
        %v585 = vld [vmem:[%s231 + $0x7a8] sm:$0xff]
        %v586 = vld [vmem:[%s231 + $0x7b0] sm:$0xff]
        %v587 = vld [vmem:[%s231 + $0x7b8] sm:$0xff]
        %v588 = vld [vmem:[%s231 + $0x7c0] sm:$0xff]
        %v589 = vld [vmem:[%s231 + $0x7c8] sm:$0xff]
        %v590 = vld [vmem:[%s231 + $0x7d0] sm:$0xff]
        %v591 = vld [vmem:[%s231 + $0x7d8] sm:$0xff]
        %v592 = vld [vmem:[%s231 + $0x7e0] sm:$0xff]
        %v593 = vld [vmem:[%s231 + $0x7e8] sm:$0xff]
        %v594 = vld [vmem:[%s231 + $0x7f0] sm:$0xff]
        %v595 = vld [vmem:[%s231 + $0x7f8] sm:$0xff]
        %v596 = vld [vmem:[%s231 + $0x800] sm:$0x3]
        %v597 = vld [vmem:[%s231 + $0x808] sm:$0x3]
        %v598 = vld [vmem:[%s231 + $0x810] sm:$0x3]
        %v599 = vld [vmem:[%s231 + $0x818] sm:$0x3]
        %v600 = vld [vmem:[%s231 + $0x820] sm:$0x3]
        %v601 = vld [vmem:[%s231 + $0x828] sm:$0x3]
        %v602 = vld [vmem:[%s231 + $0x830] sm:$0x3]
        %v603 = vld [vmem:[%s231 + $0x838] sm:$0x3]
        %v604 = vld [vmem:[%s231 + $0x840] sm:$0x3]
        %v605 = vld [vmem:[%s231 + $0x848] sm:$0x3]
        %v606 = vld [vmem:[%s231 + $0x850] sm:$0x3]
        %v607 = vld [vmem:[%s231 + $0x858] sm:$0x3]
        %v608 = vld [vmem:[%s231 + $0x860] sm:$0x3]
        %v609 = vld [vmem:[%s231 + $0x868] sm:$0x3]
        %v610 = vld [vmem:[%s231 + $0x870] sm:$0x3]
        %v611 = vld [vmem:[%s231 + $0x878] sm:$0x3]
        %v612 = vld [vmem:[%s231 + $0x880] sm:$0x3]
        %v613 = vld [vmem:[%s231 + $0x888] sm:$0x3]
        %v614 = vld [vmem:[%s231 + $0x890] sm:$0x3]
        %v615 = vld [vmem:[%s231 + $0x898] sm:$0x3]
        %v616 = vld [vmem:[%s231 + $0x8a0] sm:$0x3]
        %v617 = vld [vmem:[%s231 + $0x8a8] sm:$0x3]
        %v618 = vld [vmem:[%s231 + $0x8b0] sm:$0x3]
        %v619 = vld [vmem:[%s231 + $0x8b8] sm:$0x3]
        %v620 = vld [vmem:[%s231 + $0x8c0] sm:$0x3]
        %v621 = vld [vmem:[%s231 + $0x8c8] sm:$0x3]
        %v622 = vld [vmem:[%s231 + $0x8d0] sm:$0x3]
        %v623 = vld [vmem:[%s231 + $0x8d8] sm:$0x3]
        %v624 = vld [vmem:[%s231 + $0x8e0] sm:$0x3]
        %v625 = vld [vmem:[%s231 + $0x8e8] sm:$0x3]
        %v626 = vld [vmem:[%s231 + $0x8f0] sm:$0x3]
        %v627 = vld [vmem:[%s231 + $0x8f8] sm:$0x3]
        %v628 = vld [vmem:[%s231 + $0x900] sm:$0x3]
        %v629 = vld [vmem:[%s231 + $0x908] sm:$0x3]
        %v630 = vld [vmem:[%s231 + $0x910] sm:$0x3]
        %v631 = vld [vmem:[%s231 + $0x918] sm:$0x3]
        %v632 = vld [vmem:[%s231 + $0x920] sm:$0x3]
        %v633 = vld [vmem:[%s231 + $0x928] sm:$0x3]
        %v634 = vld [vmem:[%s231 + $0x930] sm:$0x3]
        %v635 = vld [vmem:[%s231 + $0x938] sm:$0x3]
        %v636 = vld [vmem:[%s231 + $0x940] sm:$0x3]
        %v637 = vld [vmem:[%s231 + $0x948] sm:$0x3]
        %v638 = vld [vmem:[%s231 + $0x950] sm:$0x3]
        %v639 = vld [vmem:[%s231 + $0x958] sm:$0x3]
        %v640 = vld [vmem:[%s231 + $0x960] sm:$0x3]
        %v641 = vld [vmem:[%s231 + $0x968] sm:$0x3]
        %v642 = vld [vmem:[%s231 + $0x970] sm:$0x3]
        %v643 = vld [vmem:[%s231 + $0x978] sm:$0x3]
        %v644 = vld [vmem:[%s231 + $0x980] sm:$0x3]
        %v645 = vld [vmem:[%s231 + $0x988] sm:$0x3]
        %v646 = vld [vmem:[%s231 + $0x990] sm:$0x3]
        %v647 = vld [vmem:[%s231 + $0x998] sm:$0x3]
        %v648 = vld [vmem:[%s231 + $0x9a0] sm:$0x3]
        %v649 = vld [vmem:[%s231 + $0x9a8] sm:$0x3]
        %v650 = vld [vmem:[%s231 + $0x9b0] sm:$0x3]
        %v651 = vld [vmem:[%s231 + $0x9b8] sm:$0x3]
        %v652 = vld [vmem:[%s231 + $0x9c0] sm:$0x3]
        %v653 = vld [vmem:[%s231 + $0x9c8] sm:$0x3]
        %v654 = vld [vmem:[%s231 + $0x9d0] sm:$0x3]
        %v655 = vld [vmem:[%s231 + $0x9d8] sm:$0x3]
        %v656 = vld [vmem:[%s231 + $0x9e0] sm:$0x3]
        %v657 = vld [vmem:[%s231 + $0x9e8] sm:$0x3]
        %v658 = vld [vmem:[%s231 + $0x9f0] sm:$0x3]
        %v659 = vld [vmem:[%s231 + $0x9f8] sm:$0x3]
        %v660 = vld [vmem:[%s231 + $0xa00] sm:$0x3]
        %v661 = vld [vmem:[%s231 + $0xa08] sm:$0x3]
        %v662 = vld [vmem:[%s231 + $0xa10] sm:$0x3]
        %v663 = vld [vmem:[%s231 + $0xa18] sm:$0x3]
        %v664 = vld [vmem:[%s231 + $0xa20] sm:$0x3]
        %v665 = vld [vmem:[%s231 + $0xa28] sm:$0x3]
        %v666 = vld [vmem:[%s231 + $0xa30] sm:$0x3]
        %v667 = vld [vmem:[%s231 + $0xa38] sm:$0x3]
        %v668 = vld [vmem:[%s231 + $0xa40] sm:$0x3]
        %v669 = vld [vmem:[%s231 + $0xa48] sm:$0x3]
        %v670 = vld [vmem:[%s231 + $0xa50] sm:$0x3]
        %v671 = vld [vmem:[%s231 + $0xa58] sm:$0x3]
        %v672 = vld [vmem:[%s231 + $0xa60] sm:$0x3]
        %v673 = vld [vmem:[%s231 + $0xa68] sm:$0x3]
        %v674 = vld [vmem:[%s231 + $0xa70] sm:$0x3]
        %v675 = vld [vmem:[%s231 + $0xa78] sm:$0x3]
        %v676 = vld [vmem:[%s231 + $0xa80] sm:$0x3]
        %v677 = vld [vmem:[%s231 + $0xa88] sm:$0x3]
        %v678 = vld [vmem:[%s231 + $0xa90] sm:$0x3]
        %v679 = vld [vmem:[%s231 + $0xa98] sm:$0x3]
        %v680 = vld [vmem:[%s231 + $0xaa0] sm:$0x3]
        %v681 = vld [vmem:[%s231 + $0xaa8] sm:$0x3]
        %v682 = vld [vmem:[%s231 + $0xab0] sm:$0x3]
        %v683 = vld [vmem:[%s231 + $0xab8] sm:$0x3]
        %v684 = vld [vmem:[%s231 + $0xac0] sm:$0x3]
        %v685 = vld [vmem:[%s231 + $0xac8] sm:$0x3]
        %v686 = vld [vmem:[%s231 + $0xad0] sm:$0x3]
        %v687 = vld [vmem:[%s231 + $0xad8] sm:$0x3]
        %v688 = vld [vmem:[%s231 + $0xae0] sm:$0x3]
        %v689 = vld [vmem:[%s231 + $0xae8] sm:$0x3]
        %v690 = vld [vmem:[%s231 + $0xaf0] sm:$0x3]
        %v691 = vld [vmem:[%s231 + $0xaf8] sm:$0x3]
        %v692 = vld [vmem:[%s231 + $0xb00] sm:$0x3]
        %v693 = vld [vmem:[%s231 + $0xb08] sm:$0x3]
        %v694 = vld [vmem:[%s231 + $0xb10] sm:$0x3]
        %v695 = vld [vmem:[%s231 + $0xb18] sm:$0x3]
        %v696 = vld [vmem:[%s231 + $0xb20] sm:$0x3]
        %v697 = vld [vmem:[%s231 + $0xb28] sm:$0x3]
        %v698 = vld [vmem:[%s231 + $0xb30] sm:$0x3]
        %v699 = vld [vmem:[%s231 + $0xb38] sm:$0x3]
        %v700 = vld [vmem:[%s231 + $0xb40] sm:$0x3]
        %v701 = vld [vmem:[%s231 + $0xb48] sm:$0x3]
        %v702 = vld [vmem:[%s231 + $0xb50] sm:$0x3]
        %v703 = vld [vmem:[%s231 + $0xb58] sm:$0x3]
        %v704 = vld [vmem:[%s231 + $0xb60] sm:$0x3]
        %v705 = vld [vmem:[%s231 + $0xb68] sm:$0x3]
        %v706 = vld [vmem:[%s231 + $0xb70] sm:$0x3]
        %v707 = vld [vmem:[%s231 + $0xb78] sm:$0x3]
        %v708 = vld [vmem:[%s231 + $0xb80] sm:$0x3]
        %v709 = vld [vmem:[%s231 + $0xb88] sm:$0x3]
        %v710 = vld [vmem:[%s231 + $0xb90] sm:$0x3]
        %v711 = vld [vmem:[%s231 + $0xb98] sm:$0x3]
        %v712 = vld [vmem:[%s231 + $0xba0] sm:$0x3]
        %v713 = vld [vmem:[%s231 + $0xba8] sm:$0x3]
        %v714 = vld [vmem:[%s231 + $0xbb0] sm:$0x3]
        %v715 = vld [vmem:[%s231 + $0xbb8] sm:$0x3]
        %v716 = vld [vmem:[%s231 + $0xbc0] sm:$0x3]
        %v717 = vld [vmem:[%s231 + $0xbc8] sm:$0x3]
        %v718 = vld [vmem:[%s231 + $0xbd0] sm:$0x3]
        %v719 = vld [vmem:[%s231 + $0xbd8] sm:$0x3]
        %v720 = vld [vmem:[%s231 + $0xbe0] sm:$0x3]
        %v721 = vld [vmem:[%s231 + $0xbe8] sm:$0x3]
        %v722 = vld [vmem:[%s231 + $0xbf0] sm:$0x3]
        %v723 = vld [vmem:[%s231 + $0xbf8] sm:$0x3]
        %v724 = vld [vmem:[%s231 + $0xc00] sm:$0x3]
        %v725 = vld [vmem:[%s231 + $0xc08] sm:$0x3]
        %v726 = vld [vmem:[%s231 + $0xc10] sm:$0x3]
        %v727 = vld [vmem:[%s231 + $0xc18] sm:$0x3]
        %v728 = vld [vmem:[%s231 + $0xc20] sm:$0x3]
        %v729 = vld [vmem:[%s231 + $0xc28] sm:$0x3]
        %v730 = vld [vmem:[%s231 + $0xc30] sm:$0x3]
        %v731 = vld [vmem:[%s231 + $0xc38] sm:$0x3]
        %v732 = vld [vmem:[%s231 + $0xc40] sm:$0x3]
        %v733 = vld [vmem:[%s231 + $0xc48] sm:$0x3]
        %v734 = vld [vmem:[%s231 + $0xc50] sm:$0x3]
        %v735 = vld [vmem:[%s231 + $0xc58] sm:$0x3]
        %v736 = vld [vmem:[%s231 + $0xc60] sm:$0x3]
        %v737 = vld [vmem:[%s231 + $0xc68] sm:$0x3]
        %v738 = vld [vmem:[%s231 + $0xc70] sm:$0x3]
        %v739 = vld [vmem:[%s231 + $0xc78] sm:$0x3]
        %v740 = vld [vmem:[%s231 + $0xc80] sm:$0x3]
        %v741 = vld [vmem:[%s231 + $0xc88] sm:$0x3]
        %v742 = vld [vmem:[%s231 + $0xc90] sm:$0x3]
        %v743 = vld [vmem:[%s231 + $0xc98] sm:$0x3]
        %v744 = vld [vmem:[%s231 + $0xca0] sm:$0x3]
        %v745 = vld [vmem:[%s231 + $0xca8] sm:$0x3]
        %v746 = vld [vmem:[%s231 + $0xcb0] sm:$0x3]
        %v747 = vld [vmem:[%s231 + $0xcb8] sm:$0x3]
        %v748 = vld [vmem:[%s231 + $0xcc0] sm:$0x3]
        %v749 = vld [vmem:[%s231 + $0xcc8] sm:$0x3]
        %v750 = vld [vmem:[%s231 + $0xcd0] sm:$0x3]
        %v751 = vld [vmem:[%s231 + $0xcd8] sm:$0x3]
        %v752 = vld [vmem:[%s231 + $0xce0] sm:$0x3]
        %v753 = vld [vmem:[%s231 + $0xce8] sm:$0x3]
        %v754 = vld [vmem:[%s231 + $0xcf0] sm:$0x3]
        %v755 = vld [vmem:[%s231 + $0xcf8] sm:$0x3]
        %v756 = vld [vmem:[%s231 + $0xd00] sm:$0x3]
        %v757 = vld [vmem:[%s231 + $0xd08] sm:$0x3]
        %v758 = vld [vmem:[%s231 + $0xd10] sm:$0x3]
        %v759 = vld [vmem:[%s231 + $0xd18] sm:$0x3]
        %v760 = vld [vmem:[%s231 + $0xd20] sm:$0x3]
        %v761 = vld [vmem:[%s231 + $0xd28] sm:$0x3]
        %v762 = vld [vmem:[%s231 + $0xd30] sm:$0x3]
        %v763 = vld [vmem:[%s231 + $0xd38] sm:$0x3]
        %v764 = vld [vmem:[%s231 + $0xd40] sm:$0x3]
        %v765 = vld [vmem:[%s231 + $0xd48] sm:$0x3]
        %v766 = vld [vmem:[%s231 + $0xd50] sm:$0x3]
        %v767 = vld [vmem:[%s231 + $0xd58] sm:$0x3]
        %v768 = vld [vmem:[%s231 + $0xd60] sm:$0x3]
        %v769 = vld [vmem:[%s231 + $0xd68] sm:$0x3]
        %v770 = vld [vmem:[%s231 + $0xd70] sm:$0x3]
        %v771 = vld [vmem:[%s231 + $0xd78] sm:$0x3]
        %v772 = vld [vmem:[%s231 + $0xd80] sm:$0x3]
        %v773 = vld [vmem:[%s231 + $0xd88] sm:$0x3]
        %v774 = vld [vmem:[%s231 + $0xd90] sm:$0x3]
        %v775 = vld [vmem:[%s231 + $0xd98] sm:$0x3]
        %v776 = vld [vmem:[%s231 + $0xda0] sm:$0x3]
        %v777 = vld [vmem:[%s231 + $0xda8] sm:$0x3]
        %v778 = vld [vmem:[%s231 + $0xdb0] sm:$0x3]
        %v779 = vld [vmem:[%s231 + $0xdb8] sm:$0x3]
        %v780 = vld [vmem:[%s231 + $0xdc0] sm:$0x3]
        %v781 = vld [vmem:[%s231 + $0xdc8] sm:$0x3]
        %v782 = vld [vmem:[%s231 + $0xdd0] sm:$0x3]
        %v783 = vld [vmem:[%s231 + $0xdd8] sm:$0x3]
        %v784 = vld [vmem:[%s231 + $0xde0] sm:$0x3]
        %v785 = vld [vmem:[%s231 + $0xde8] sm:$0x3]
        %v786 = vld [vmem:[%s231 + $0xdf0] sm:$0x3]
        %v787 = vld [vmem:[%s231 + $0xdf8] sm:$0x3]
        %v788 = vld [vmem:[%s231 + $0xe00] sm:$0x3]
        %v789 = vld [vmem:[%s231 + $0xe08] sm:$0x3]
        %v790 = vld [vmem:[%s231 + $0xe10] sm:$0x3]
        %v791 = vld [vmem:[%s231 + $0xe18] sm:$0x3]
        %v792 = vld [vmem:[%s231 + $0xe20] sm:$0x3]
        %v793 = vld [vmem:[%s231 + $0xe28] sm:$0x3]
        %v794 = vld [vmem:[%s231 + $0xe30] sm:$0x3]
        %v795 = vld [vmem:[%s231 + $0xe38] sm:$0x3]
        %v796 = vld [vmem:[%s231 + $0xe40] sm:$0x3]
        %v797 = vld [vmem:[%s231 + $0xe48] sm:$0x3]
        %v798 = vld [vmem:[%s231 + $0xe50] sm:$0x3]
        %v799 = vld [vmem:[%s231 + $0xe58] sm:$0x3]
        %v800 = vld [vmem:[%s231 + $0xe60] sm:$0x3]
        %v801 = vld [vmem:[%s231 + $0xe68] sm:$0x3]
        %v802 = vld [vmem:[%s231 + $0xe70] sm:$0x3]
        %v803 = vld [vmem:[%s231 + $0xe78] sm:$0x3]
        %v804 = vld [vmem:[%s231 + $0xe80] sm:$0x3]
        %v805 = vld [vmem:[%s231 + $0xe88] sm:$0x3]
        %v806 = vld [vmem:[%s231 + $0xe90] sm:$0x3]
        %v807 = vld [vmem:[%s231 + $0xe98] sm:$0x3]
        %v808 = vld [vmem:[%s231 + $0xea0] sm:$0x3]
        %v809 = vld [vmem:[%s231 + $0xea8] sm:$0x3]
        %v810 = vld [vmem:[%s231 + $0xeb0] sm:$0x3]
        %v811 = vld [vmem:[%s231 + $0xeb8] sm:$0x3]
        %v812 = vld [vmem:[%s231 + $0xec0] sm:$0x3]
        %v813 = vld [vmem:[%s231 + $0xec8] sm:$0x3]
        %v814 = vld [vmem:[%s231 + $0xed0] sm:$0x3]
        %v815 = vld [vmem:[%s231 + $0xed8] sm:$0x3]
        %v816 = vld [vmem:[%s231 + $0xee0] sm:$0x3]
        %v817 = vld [vmem:[%s231 + $0xee8] sm:$0x3]
        %v818 = vld [vmem:[%s231 + $0xef0] sm:$0x3]
        %v819 = vld [vmem:[%s231 + $0xef8] sm:$0x3]
        %v820 = vld [vmem:[%s231 + $0xf00] sm:$0x3]
        %v821 = vld [vmem:[%s231 + $0xf08] sm:$0x3]
        %v822 = vld [vmem:[%s231 + $0xf10] sm:$0x3]
        %v823 = vld [vmem:[%s231 + $0xf18] sm:$0x3]
        %v824 = vld [vmem:[%s231 + $0xf20] sm:$0x3]
        %v825 = vld [vmem:[%s231 + $0xf28] sm:$0x3]
        %v826 = vld [vmem:[%s231 + $0xf30] sm:$0x3]
        %v827 = vld [vmem:[%s231 + $0xf38] sm:$0x3]
        %v828 = vld [vmem:[%s231 + $0xf40] sm:$0x3]
        %v829 = vld [vmem:[%s231 + $0xf48] sm:$0x3]
        %v830 = vld [vmem:[%s231 + $0xf50] sm:$0x3]
        %v831 = vld [vmem:[%s231 + $0xf58] sm:$0x3]
        %v832 = vld [vmem:[%s231 + $0xf60] sm:$0x3]
        %v833 = vld [vmem:[%s231 + $0xf68] sm:$0x3]
        %v834 = vld [vmem:[%s231 + $0xf70] sm:$0x3]
        %v835 = vld [vmem:[%s231 + $0xf78] sm:$0x3]
        %v836 = vld [vmem:[%s231 + $0xf80] sm:$0x3]
        %v837 = vld [vmem:[%s231 + $0xf88] sm:$0x3]
        %v838 = vld [vmem:[%s231 + $0xf90] sm:$0x3]
        %v839 = vld [vmem:[%s231 + $0xf98] sm:$0x3]
        %v840 = vld [vmem:[%s231 + $0xfa0] sm:$0x3]
        %v841 = vld [vmem:[%s231 + $0xfa8] sm:$0x3]
        %v842 = vld [vmem:[%s231 + $0xfb0] sm:$0x3]
        %v843 = vld [vmem:[%s231 + $0xfb8] sm:$0x3]
        %v844 = vld [vmem:[%s231 + $0xfc0] sm:$0x3]
        %v845 = vld [vmem:[%s231 + $0xfc8] sm:$0x3]
        %v846 = vld [vmem:[%s231 + $0xfd0] sm:$0x3]
        %v847 = vld [vmem:[%s231 + $0xfd8] sm:$0x3]
        %v848 = vld [vmem:[%s231 + $0xfe0] sm:$0x3]
        %v849 = vld [vmem:[%s231 + $0xfe8] sm:$0x3]
        %v850 = vld [vmem:[%s231 + $0xff0] sm:$0x3]
        %v851 = vld [vmem:[%s231 + $0xff8] sm:$0x3]
        %v916 = vcombine.high %v276, %v276
        %v918 = vunpack.c.l.s4 1983009808
        %v919 = vunpack.c.0.s8 %v918
        %v920 = vlaneseq
        %v921 = vshrl.u32 %v920, 7
        %v922 = vsub.s32 %v919, %v921
        %v923 = vrot.slane %v276, %v922
        %v925 = vunpack.c.l.s4 1983009808
        %v926 = vunpack.c.0.s8 %v925
        %v927 = vlaneseq
        %v928 = vshrl.u32 %v927, 7
        %v929 = vsub.s32 %v926, %v928
        %v930 = vrot.slane %v916, %v929
        %v931 = vcombine.high %v923, %v923
        %v932 = vcombine.high %v930, %v930
        %v933 = vcombine.high %v277, %v277
        %v935 = vunpack.c.l.s4 1983009808
        %v936 = vunpack.c.0.s8 %v935
        %v937 = vlaneseq
        %v938 = vshrl.u32 %v937, 7
        %v939 = vsub.s32 %v936, %v938
        %v940 = vrot.slane %v277, %v939
        %v942 = vunpack.c.l.s4 1983009808
        %v943 = vunpack.c.0.s8 %v942
        %v944 = vlaneseq
        %v945 = vshrl.u32 %v944, 7
        %v946 = vsub.s32 %v943, %v945
        %v947 = vrot.slane %v933, %v946
        %v948 = vcombine.high %v940, %v940
        %v949 = vcombine.high %v947, %v947
        %v950 = vcombine.high %v278, %v278
        %v952 = vunpack.c.l.s4 1983009808
        %v953 = vunpack.c.0.s8 %v952
        %v954 = vlaneseq
        %v955 = vshrl.u32 %v954, 7
        %v956 = vsub.s32 %v953, %v955
        %v957 = vrot.slane %v278, %v956
        %v959 = vunpack.c.l.s4 1983009808
        %v960 = vunpack.c.0.s8 %v959
        %v961 = vlaneseq
        %v962 = vshrl.u32 %v961, 7
        %v963 = vsub.s32 %v960, %v962
        %v964 = vrot.slane %v950, %v963
        %v965 = vcombine.high %v957, %v957
        %v966 = vcombine.high %v964, %v964
        %v967 = vcombine.high %v279, %v279
        %v969 = vunpack.c.l.s4 1983009808
        %v970 = vunpack.c.0.s8 %v969
        %v971 = vlaneseq
        %v972 = vshrl.u32 %v971, 7
        %v973 = vsub.s32 %v970, %v972
        %v974 = vrot.slane %v279, %v973
        %v976 = vunpack.c.l.s4 1983009808
        %v977 = vunpack.c.0.s8 %v976
        %v978 = vlaneseq
        %v979 = vshrl.u32 %v978, 7
        %v980 = vsub.s32 %v977, %v979
        %v981 = vrot.slane %v967, %v980
        %v982 = vcombine.high %v974, %v974
        %v983 = vcombine.high %v981, %v981
        %v984 = vcombine.high %v280, %v280
        %v986 = vunpack.c.l.s4 1983009808
        %v987 = vunpack.c.0.s8 %v986
        %v988 = vlaneseq
        %v989 = vshrl.u32 %v988, 7
        %v990 = vsub.s32 %v987, %v989
        %v991 = vrot.slane %v280, %v990
        %v993 = vunpack.c.l.s4 1983009808
        %v994 = vunpack.c.0.s8 %v993
        %v995 = vlaneseq
        %v996 = vshrl.u32 %v995, 7
        %v997 = vsub.s32 %v994, %v996
        %v998 = vrot.slane %v984, %v997
        %v999 = vcombine.high %v991, %v991
        %v1000 = vcombine.high %v998, %v998
        %v1001 = vcombine.high %v281, %v281
        %v1003 = vunpack.c.l.s4 1983009808
        %v1004 = vunpack.c.0.s8 %v1003
        %v1005 = vlaneseq
        %v1006 = vshrl.u32 %v1005, 7
        %v1007 = vsub.s32 %v1004, %v1006
        %v1008 = vrot.slane %v281, %v1007
        %v1010 = vunpack.c.l.s4 1983009808
        %v1011 = vunpack.c.0.s8 %v1010
        %v1012 = vlaneseq
        %v1013 = vshrl.u32 %v1012, 7
        %v1014 = vsub.s32 %v1011, %v1013
        %v1015 = vrot.slane %v1001, %v1014
        %v1016 = vcombine.high %v1008, %v1008
        %v1017 = vcombine.high %v1015, %v1015
        %v1018 = vcombine.high %v282, %v282
        %v1020 = vunpack.c.l.s4 1983009808
        %v1021 = vunpack.c.0.s8 %v1020
        %v1022 = vlaneseq
        %v1023 = vshrl.u32 %v1022, 7
        %v1024 = vsub.s32 %v1021, %v1023
        %v1025 = vrot.slane %v282, %v1024
        %v1027 = vunpack.c.l.s4 1983009808
        %v1028 = vunpack.c.0.s8 %v1027
        %v1029 = vlaneseq
        %v1030 = vshrl.u32 %v1029, 7
        %v1031 = vsub.s32 %v1028, %v1030
        %v1032 = vrot.slane %v1018, %v1031
        %v1033 = vcombine.high %v1025, %v1025
        %v1034 = vcombine.high %v1032, %v1032
        %v1035 = vcombine.high %v283, %v283
        %v1037 = vunpack.c.l.s4 1983009808
        %v1038 = vunpack.c.0.s8 %v1037
        %v1039 = vlaneseq
        %v1040 = vshrl.u32 %v1039, 7
        %v1041 = vsub.s32 %v1038, %v1040
        %v1042 = vrot.slane %v283, %v1041
        %v1044 = vunpack.c.l.s4 1983009808
        %v1045 = vunpack.c.0.s8 %v1044
        %v1046 = vlaneseq
        %v1047 = vshrl.u32 %v1046, 7
        %v1048 = vsub.s32 %v1045, %v1047
        %v1049 = vrot.slane %v1035, %v1048
        %v1050 = vcombine.high %v1042, %v1042
        %v1051 = vcombine.high %v1049, %v1049
        %v1052 = vcombine.high %v284, %v284
        %v1054 = vunpack.c.l.s4 1983009808
        %v1055 = vunpack.c.0.s8 %v1054
        %v1056 = vlaneseq
        %v1057 = vshrl.u32 %v1056, 7
        %v1058 = vsub.s32 %v1055, %v1057
        %v1059 = vrot.slane %v284, %v1058
        %v1061 = vunpack.c.l.s4 1983009808
        %v1062 = vunpack.c.0.s8 %v1061
        %v1063 = vlaneseq
        %v1064 = vshrl.u32 %v1063, 7
        %v1065 = vsub.s32 %v1062, %v1064
        %v1066 = vrot.slane %v1052, %v1065
        %v1067 = vcombine.high %v1059, %v1059
        %v1068 = vcombine.high %v1066, %v1066
        %v1069 = vcombine.high %v285, %v285
        %v1071 = vunpack.c.l.s4 1983009808
        %v1072 = vunpack.c.0.s8 %v1071
        %v1073 = vlaneseq
        %v1074 = vshrl.u32 %v1073, 7
        %v1075 = vsub.s32 %v1072, %v1074
        %v1076 = vrot.slane %v285, %v1075
        %v1078 = vunpack.c.l.s4 1983009808
        %v1079 = vunpack.c.0.s8 %v1078
        %v1080 = vlaneseq
        %v1081 = vshrl.u32 %v1080, 7
        %v1082 = vsub.s32 %v1079, %v1081
        %v1083 = vrot.slane %v1069, %v1082
        %v1084 = vcombine.high %v1076, %v1076
        %v1085 = vcombine.high %v1083, %v1083
        %v1086 = vcombine.high %v286, %v286
        %v1088 = vunpack.c.l.s4 1983009808
        %v1089 = vunpack.c.0.s8 %v1088
        %v1090 = vlaneseq
        %v1091 = vshrl.u32 %v1090, 7
        %v1092 = vsub.s32 %v1089, %v1091
        %v1093 = vrot.slane %v286, %v1092
        %v1095 = vunpack.c.l.s4 1983009808
        %v1096 = vunpack.c.0.s8 %v1095
        %v1097 = vlaneseq
        %v1098 = vshrl.u32 %v1097, 7
        %v1099 = vsub.s32 %v1096, %v1098
        %v1100 = vrot.slane %v1086, %v1099
        %v1101 = vcombine.high %v1093, %v1093
        %v1102 = vcombine.high %v1100, %v1100
        %v1103 = vcombine.high %v287, %v287
        %v1105 = vunpack.c.l.s4 1983009808
        %v1106 = vunpack.c.0.s8 %v1105
        %v1107 = vlaneseq
        %v1108 = vshrl.u32 %v1107, 7
        %v1109 = vsub.s32 %v1106, %v1108
        %v1110 = vrot.slane %v287, %v1109
        %v1112 = vunpack.c.l.s4 1983009808
        %v1113 = vunpack.c.0.s8 %v1112
        %v1114 = vlaneseq
        %v1115 = vshrl.u32 %v1114, 7
        %v1116 = vsub.s32 %v1113, %v1115
        %v1117 = vrot.slane %v1103, %v1116
        %v1118 = vcombine.high %v1110, %v1110
        %v1119 = vcombine.high %v1117, %v1117
        %v1120 = vcombine.high %v288, %v288
        %v1122 = vunpack.c.l.s4 1983009808
        %v1123 = vunpack.c.0.s8 %v1122
        %v1124 = vlaneseq
        %v1125 = vshrl.u32 %v1124, 7
        %v1126 = vsub.s32 %v1123, %v1125
        %v1127 = vrot.slane %v288, %v1126
        %v1129 = vunpack.c.l.s4 1983009808
        %v1130 = vunpack.c.0.s8 %v1129
        %v1131 = vlaneseq
        %v1132 = vshrl.u32 %v1131, 7
        %v1133 = vsub.s32 %v1130, %v1132
        %v1134 = vrot.slane %v1120, %v1133
        %v1135 = vcombine.high %v1127, %v1127
        %v1136 = vcombine.high %v1134, %v1134
        %v1137 = vcombine.high %v289, %v289
        %v1139 = vunpack.c.l.s4 1983009808
        %v1140 = vunpack.c.0.s8 %v1139
        %v1141 = vlaneseq
        %v1142 = vshrl.u32 %v1141, 7
        %v1143 = vsub.s32 %v1140, %v1142
        %v1144 = vrot.slane %v289, %v1143
        %v1146 = vunpack.c.l.s4 1983009808
        %v1147 = vunpack.c.0.s8 %v1146
        %v1148 = vlaneseq
        %v1149 = vshrl.u32 %v1148, 7
        %v1150 = vsub.s32 %v1147, %v1149
        %v1151 = vrot.slane %v1137, %v1150
        %v1152 = vcombine.high %v1144, %v1144
        %v1153 = vcombine.high %v1151, %v1151
        %v1154 = vcombine.high %v290, %v290
        %v1156 = vunpack.c.l.s4 1983009808
        %v1157 = vunpack.c.0.s8 %v1156
        %v1158 = vlaneseq
        %v1159 = vshrl.u32 %v1158, 7
        %v1160 = vsub.s32 %v1157, %v1159
        %v1161 = vrot.slane %v290, %v1160
        %v1163 = vunpack.c.l.s4 1983009808
        %v1164 = vunpack.c.0.s8 %v1163
        %v1165 = vlaneseq
        %v1166 = vshrl.u32 %v1165, 7
        %v1167 = vsub.s32 %v1164, %v1166
        %v1168 = vrot.slane %v1154, %v1167
        %v1169 = vcombine.high %v1161, %v1161
        %v1170 = vcombine.high %v1168, %v1168
        %v1171 = vcombine.high %v291, %v291
        %v1173 = vunpack.c.l.s4 1983009808
        %v1174 = vunpack.c.0.s8 %v1173
        %v1175 = vlaneseq
        %v1176 = vshrl.u32 %v1175, 7
        %v1177 = vsub.s32 %v1174, %v1176
        %v1178 = vrot.slane %v291, %v1177
        %v1180 = vunpack.c.l.s4 1983009808
        %v1181 = vunpack.c.0.s8 %v1180
        %v1182 = vlaneseq
        %v1183 = vshrl.u32 %v1182, 7
        %v1184 = vsub.s32 %v1181, %v1183
        %v1185 = vrot.slane %v1171, %v1184
        %v1186 = vcombine.high %v1178, %v1178
        %v1187 = vcombine.high %v1185, %v1185
        %v1188 = vcombine.high %v292, %v292
        %v1190 = vunpack.c.l.s4 1983009808
        %v1191 = vunpack.c.0.s8 %v1190
        %v1192 = vlaneseq
        %v1193 = vshrl.u32 %v1192, 7
        %v1194 = vsub.s32 %v1191, %v1193
        %v1195 = vrot.slane %v292, %v1194
        %v1197 = vunpack.c.l.s4 1983009808
        %v1198 = vunpack.c.0.s8 %v1197
        %v1199 = vlaneseq
        %v1200 = vshrl.u32 %v1199, 7
        %v1201 = vsub.s32 %v1198, %v1200
        %v1202 = vrot.slane %v1188, %v1201
        %v1203 = vcombine.high %v1195, %v1195
        %v1204 = vcombine.high %v1202, %v1202
        %v1205 = vcombine.high %v293, %v293
        %v1207 = vunpack.c.l.s4 1983009808
        %v1208 = vunpack.c.0.s8 %v1207
        %v1209 = vlaneseq
        %v1210 = vshrl.u32 %v1209, 7
        %v1211 = vsub.s32 %v1208, %v1210
        %v1212 = vrot.slane %v293, %v1211
        %v1214 = vunpack.c.l.s4 1983009808
        %v1215 = vunpack.c.0.s8 %v1214
        %v1216 = vlaneseq
        %v1217 = vshrl.u32 %v1216, 7
        %v1218 = vsub.s32 %v1215, %v1217
        %v1219 = vrot.slane %v1205, %v1218
        %v1220 = vcombine.high %v1212, %v1212
        %v1221 = vcombine.high %v1219, %v1219
        %v1222 = vcombine.high %v294, %v294
        %v1224 = vunpack.c.l.s4 1983009808
        %v1225 = vunpack.c.0.s8 %v1224
        %v1226 = vlaneseq
        %v1227 = vshrl.u32 %v1226, 7
        %v1228 = vsub.s32 %v1225, %v1227
        %v1229 = vrot.slane %v294, %v1228
        %v1231 = vunpack.c.l.s4 1983009808
        %v1232 = vunpack.c.0.s8 %v1231
        %v1233 = vlaneseq
        %v1234 = vshrl.u32 %v1233, 7
        %v1235 = vsub.s32 %v1232, %v1234
        %v1236 = vrot.slane %v1222, %v1235
        %v1237 = vcombine.high %v1229, %v1229
        %v1238 = vcombine.high %v1236, %v1236
        %v1239 = vcombine.high %v295, %v295
        %v1241 = vunpack.c.l.s4 1983009808
        %v1242 = vunpack.c.0.s8 %v1241
        %v1243 = vlaneseq
        %v1244 = vshrl.u32 %v1243, 7
        %v1245 = vsub.s32 %v1242, %v1244
        %v1246 = vrot.slane %v295, %v1245
        %v1248 = vunpack.c.l.s4 1983009808
        %v1249 = vunpack.c.0.s8 %v1248
        %v1250 = vlaneseq
        %v1251 = vshrl.u32 %v1250, 7
        %v1252 = vsub.s32 %v1249, %v1251
        %v1253 = vrot.slane %v1239, %v1252
        %v1254 = vcombine.high %v1246, %v1246
        %v1255 = vcombine.high %v1253, %v1253
        %v1256 = vcombine.high %v296, %v296
        %v1258 = vunpack.c.l.s4 1983009808
        %v1259 = vunpack.c.0.s8 %v1258
        %v1260 = vlaneseq
        %v1261 = vshrl.u32 %v1260, 7
        %v1262 = vsub.s32 %v1259, %v1261
        %v1263 = vrot.slane %v296, %v1262
        %v1265 = vunpack.c.l.s4 1983009808
        %v1266 = vunpack.c.0.s8 %v1265
        %v1267 = vlaneseq
        %v1268 = vshrl.u32 %v1267, 7
        %v1269 = vsub.s32 %v1266, %v1268
        %v1270 = vrot.slane %v1256, %v1269
        %v1271 = vcombine.high %v1263, %v1263
        %v1272 = vcombine.high %v1270, %v1270
        %v1273 = vcombine.high %v297, %v297
        %v1275 = vunpack.c.l.s4 1983009808
        %v1276 = vunpack.c.0.s8 %v1275
        %v1277 = vlaneseq
        %v1278 = vshrl.u32 %v1277, 7
        %v1279 = vsub.s32 %v1276, %v1278
        %v1280 = vrot.slane %v297, %v1279
        %v1282 = vunpack.c.l.s4 1983009808
        %v1283 = vunpack.c.0.s8 %v1282
        %v1284 = vlaneseq
        %v1285 = vshrl.u32 %v1284, 7
        %v1286 = vsub.s32 %v1283, %v1285
        %v1287 = vrot.slane %v1273, %v1286
        %v1288 = vcombine.high %v1280, %v1280
        %v1289 = vcombine.high %v1287, %v1287
        %v1290 = vcombine.high %v298, %v298
        %v1292 = vunpack.c.l.s4 1983009808
        %v1293 = vunpack.c.0.s8 %v1292
        %v1294 = vlaneseq
        %v1295 = vshrl.u32 %v1294, 7
        %v1296 = vsub.s32 %v1293, %v1295
        %v1297 = vrot.slane %v298, %v1296
        %v1299 = vunpack.c.l.s4 1983009808
        %v1300 = vunpack.c.0.s8 %v1299
        %v1301 = vlaneseq
        %v1302 = vshrl.u32 %v1301, 7
        %v1303 = vsub.s32 %v1300, %v1302
        %v1304 = vrot.slane %v1290, %v1303
        %v1305 = vcombine.high %v1297, %v1297
        %v1306 = vcombine.high %v1304, %v1304
        %v1307 = vcombine.high %v299, %v299
        %v1309 = vunpack.c.l.s4 1983009808
        %v1310 = vunpack.c.0.s8 %v1309
        %v1311 = vlaneseq
        %v1312 = vshrl.u32 %v1311, 7
        %v1313 = vsub.s32 %v1310, %v1312
        %v1314 = vrot.slane %v299, %v1313
        %v1316 = vunpack.c.l.s4 1983009808
        %v1317 = vunpack.c.0.s8 %v1316
        %v1318 = vlaneseq
        %v1319 = vshrl.u32 %v1318, 7
        %v1320 = vsub.s32 %v1317, %v1319
        %v1321 = vrot.slane %v1307, %v1320
        %v1322 = vcombine.high %v1314, %v1314
        %v1323 = vcombine.high %v1321, %v1321
        %v1324 = vcombine.high %v300, %v300
        %v1326 = vunpack.c.l.s4 1983009808
        %v1327 = vunpack.c.0.s8 %v1326
        %v1328 = vlaneseq
        %v1329 = vshrl.u32 %v1328, 7
        %v1330 = vsub.s32 %v1327, %v1329
        %v1331 = vrot.slane %v300, %v1330
        %v1333 = vunpack.c.l.s4 1983009808
        %v1334 = vunpack.c.0.s8 %v1333
        %v1335 = vlaneseq
        %v1336 = vshrl.u32 %v1335, 7
        %v1337 = vsub.s32 %v1334, %v1336
        %v1338 = vrot.slane %v1324, %v1337
        %v1339 = vcombine.high %v1331, %v1331
        %v1340 = vcombine.high %v1338, %v1338
        %v1341 = vcombine.high %v301, %v301
        %v1343 = vunpack.c.l.s4 1983009808
        %v1344 = vunpack.c.0.s8 %v1343
        %v1345 = vlaneseq
        %v1346 = vshrl.u32 %v1345, 7
        %v1347 = vsub.s32 %v1344, %v1346
        %v1348 = vrot.slane %v301, %v1347
        %v1350 = vunpack.c.l.s4 1983009808
        %v1351 = vunpack.c.0.s8 %v1350
        %v1352 = vlaneseq
        %v1353 = vshrl.u32 %v1352, 7
        %v1354 = vsub.s32 %v1351, %v1353
        %v1355 = vrot.slane %v1341, %v1354
        %v1356 = vcombine.high %v1348, %v1348
        %v1357 = vcombine.high %v1355, %v1355
        %v1358 = vcombine.high %v302, %v302
        %v1360 = vunpack.c.l.s4 1983009808
        %v1361 = vunpack.c.0.s8 %v1360
        %v1362 = vlaneseq
        %v1363 = vshrl.u32 %v1362, 7
        %v1364 = vsub.s32 %v1361, %v1363
        %v1365 = vrot.slane %v302, %v1364
        %v1367 = vunpack.c.l.s4 1983009808
        %v1368 = vunpack.c.0.s8 %v1367
        %v1369 = vlaneseq
        %v1370 = vshrl.u32 %v1369, 7
        %v1371 = vsub.s32 %v1368, %v1370
        %v1372 = vrot.slane %v1358, %v1371
        %v1373 = vcombine.high %v1365, %v1365
        %v1374 = vcombine.high %v1372, %v1372
        %v1375 = vcombine.high %v303, %v303
        %v1377 = vunpack.c.l.s4 1983009808
        %v1378 = vunpack.c.0.s8 %v1377
        %v1379 = vlaneseq
        %v1380 = vshrl.u32 %v1379, 7
        %v1381 = vsub.s32 %v1378, %v1380
        %v1382 = vrot.slane %v303, %v1381
        %v1384 = vunpack.c.l.s4 1983009808
        %v1385 = vunpack.c.0.s8 %v1384
        %v1386 = vlaneseq
        %v1387 = vshrl.u32 %v1386, 7
        %v1388 = vsub.s32 %v1385, %v1387
        %v1389 = vrot.slane %v1375, %v1388
        %v1390 = vcombine.high %v1382, %v1382
        %v1391 = vcombine.high %v1389, %v1389
        %v1392 = vcombine.high %v304, %v304
        %v1394 = vunpack.c.l.s4 1983009808
        %v1395 = vunpack.c.0.s8 %v1394
        %v1396 = vlaneseq
        %v1397 = vshrl.u32 %v1396, 7
        %v1398 = vsub.s32 %v1395, %v1397
        %v1399 = vrot.slane %v304, %v1398
        %v1401 = vunpack.c.l.s4 1983009808
        %v1402 = vunpack.c.0.s8 %v1401
        %v1403 = vlaneseq
        %v1404 = vshrl.u32 %v1403, 7
        %v1405 = vsub.s32 %v1402, %v1404
        %v1406 = vrot.slane %v1392, %v1405
        %v1407 = vcombine.high %v1399, %v1399
        %v1408 = vcombine.high %v1406, %v1406
        %v1409 = vcombine.high %v305, %v305
        %v1411 = vunpack.c.l.s4 1983009808
        %v1412 = vunpack.c.0.s8 %v1411
        %v1413 = vlaneseq
        %v1414 = vshrl.u32 %v1413, 7
        %v1415 = vsub.s32 %v1412, %v1414
        %v1416 = vrot.slane %v305, %v1415
        %v1418 = vunpack.c.l.s4 1983009808
        %v1419 = vunpack.c.0.s8 %v1418
        %v1420 = vlaneseq
        %v1421 = vshrl.u32 %v1420, 7
        %v1422 = vsub.s32 %v1419, %v1421
        %v1423 = vrot.slane %v1409, %v1422
        %v1424 = vcombine.high %v1416, %v1416
        %v1425 = vcombine.high %v1423, %v1423
        %v1426 = vcombine.high %v306, %v306
        %v1428 = vunpack.c.l.s4 1983009808
        %v1429 = vunpack.c.0.s8 %v1428
        %v1430 = vlaneseq
        %v1431 = vshrl.u32 %v1430, 7
        %v1432 = vsub.s32 %v1429, %v1431
        %v1433 = vrot.slane %v306, %v1432
        %v1435 = vunpack.c.l.s4 1983009808
        %v1436 = vunpack.c.0.s8 %v1435
        %v1437 = vlaneseq
        %v1438 = vshrl.u32 %v1437, 7
        %v1439 = vsub.s32 %v1436, %v1438
        %v1440 = vrot.slane %v1426, %v1439
        %v1441 = vcombine.high %v1433, %v1433
        %v1442 = vcombine.high %v1440, %v1440
        %v1443 = vcombine.high %v307, %v307
        %v1445 = vunpack.c.l.s4 1983009808
        %v1446 = vunpack.c.0.s8 %v1445
        %v1447 = vlaneseq
        %v1448 = vshrl.u32 %v1447, 7
        %v1449 = vsub.s32 %v1446, %v1448
        %v1450 = vrot.slane %v307, %v1449
        %v1452 = vunpack.c.l.s4 1983009808
        %v1453 = vunpack.c.0.s8 %v1452
        %v1454 = vlaneseq
        %v1455 = vshrl.u32 %v1454, 7
        %v1456 = vsub.s32 %v1453, %v1455
        %v1457 = vrot.slane %v1443, %v1456
        %v1458 = vcombine.high %v1450, %v1450
        %v1459 = vcombine.high %v1457, %v1457
        %v1460 = vcombine.high %v308, %v308
        %v1462 = vunpack.c.l.s4 1983009808
        %v1463 = vunpack.c.0.s8 %v1462
        %v1464 = vlaneseq
        %v1465 = vshrl.u32 %v1464, 7
        %v1466 = vsub.s32 %v1463, %v1465
        %v1467 = vrot.slane %v308, %v1466
        %v1469 = vunpack.c.l.s4 1983009808
        %v1470 = vunpack.c.0.s8 %v1469
        %v1471 = vlaneseq
        %v1472 = vshrl.u32 %v1471, 7
        %v1473 = vsub.s32 %v1470, %v1472
        %v1474 = vrot.slane %v1460, %v1473
        %v1475 = vcombine.high %v1467, %v1467
        %v1476 = vcombine.high %v1474, %v1474
        %v1477 = vcombine.high %v309, %v309
        %v1479 = vunpack.c.l.s4 1983009808
        %v1480 = vunpack.c.0.s8 %v1479
        %v1481 = vlaneseq
        %v1482 = vshrl.u32 %v1481, 7
        %v1483 = vsub.s32 %v1480, %v1482
        %v1484 = vrot.slane %v309, %v1483
        %v1486 = vunpack.c.l.s4 1983009808
        %v1487 = vunpack.c.0.s8 %v1486
        %v1488 = vlaneseq
        %v1489 = vshrl.u32 %v1488, 7
        %v1490 = vsub.s32 %v1487, %v1489
        %v1491 = vrot.slane %v1477, %v1490
        %v1492 = vcombine.high %v1484, %v1484
        %v1493 = vcombine.high %v1491, %v1491
        %v1494 = vcombine.high %v310, %v310
        %v1496 = vunpack.c.l.s4 1983009808
        %v1497 = vunpack.c.0.s8 %v1496
        %v1498 = vlaneseq
        %v1499 = vshrl.u32 %v1498, 7
        %v1500 = vsub.s32 %v1497, %v1499
        %v1501 = vrot.slane %v310, %v1500
        %v1503 = vunpack.c.l.s4 1983009808
        %v1504 = vunpack.c.0.s8 %v1503
        %v1505 = vlaneseq
        %v1506 = vshrl.u32 %v1505, 7
        %v1507 = vsub.s32 %v1504, %v1506
        %v1508 = vrot.slane %v1494, %v1507
        %v1509 = vcombine.high %v1501, %v1501
        %v1510 = vcombine.high %v1508, %v1508
        %v1511 = vcombine.high %v311, %v311
        %v1513 = vunpack.c.l.s4 1983009808
        %v1514 = vunpack.c.0.s8 %v1513
        %v1515 = vlaneseq
        %v1516 = vshrl.u32 %v1515, 7
        %v1517 = vsub.s32 %v1514, %v1516
        %v1518 = vrot.slane %v311, %v1517
        %v1520 = vunpack.c.l.s4 1983009808
        %v1521 = vunpack.c.0.s8 %v1520
        %v1522 = vlaneseq
        %v1523 = vshrl.u32 %v1522, 7
        %v1524 = vsub.s32 %v1521, %v1523
        %v1525 = vrot.slane %v1511, %v1524
        %v1526 = vcombine.high %v1518, %v1518
        %v1527 = vcombine.high %v1525, %v1525
        %v1528 = vcombine.high %v312, %v312
        %v1530 = vunpack.c.l.s4 1983009808
        %v1531 = vunpack.c.0.s8 %v1530
        %v1532 = vlaneseq
        %v1533 = vshrl.u32 %v1532, 7
        %v1534 = vsub.s32 %v1531, %v1533
        %v1535 = vrot.slane %v312, %v1534
        %v1537 = vunpack.c.l.s4 1983009808
        %v1538 = vunpack.c.0.s8 %v1537
        %v1539 = vlaneseq
        %v1540 = vshrl.u32 %v1539, 7
        %v1541 = vsub.s32 %v1538, %v1540
        %v1542 = vrot.slane %v1528, %v1541
        %v1543 = vcombine.high %v1535, %v1535
        %v1544 = vcombine.high %v1542, %v1542
        %v1545 = vcombine.high %v313, %v313
        %v1547 = vunpack.c.l.s4 1983009808
        %v1548 = vunpack.c.0.s8 %v1547
        %v1549 = vlaneseq
        %v1550 = vshrl.u32 %v1549, 7
        %v1551 = vsub.s32 %v1548, %v1550
        %v1552 = vrot.slane %v313, %v1551
        %v1554 = vunpack.c.l.s4 1983009808
        %v1555 = vunpack.c.0.s8 %v1554
        %v1556 = vlaneseq
        %v1557 = vshrl.u32 %v1556, 7
        %v1558 = vsub.s32 %v1555, %v1557
        %v1559 = vrot.slane %v1545, %v1558
        %v1560 = vcombine.high %v1552, %v1552
        %v1561 = vcombine.high %v1559, %v1559
        %v1562 = vcombine.high %v314, %v314
        %v1564 = vunpack.c.l.s4 1983009808
        %v1565 = vunpack.c.0.s8 %v1564
        %v1566 = vlaneseq
        %v1567 = vshrl.u32 %v1566, 7
        %v1568 = vsub.s32 %v1565, %v1567
        %v1569 = vrot.slane %v314, %v1568
        %v1571 = vunpack.c.l.s4 1983009808
        %v1572 = vunpack.c.0.s8 %v1571
        %v1573 = vlaneseq
        %v1574 = vshrl.u32 %v1573, 7
        %v1575 = vsub.s32 %v1572, %v1574
        %v1576 = vrot.slane %v1562, %v1575
        %v1577 = vcombine.high %v1569, %v1569
        %v1578 = vcombine.high %v1576, %v1576
        %v1579 = vcombine.high %v315, %v315
        %v1581 = vunpack.c.l.s4 1983009808
        %v1582 = vunpack.c.0.s8 %v1581
        %v1583 = vlaneseq
        %v1584 = vshrl.u32 %v1583, 7
        %v1585 = vsub.s32 %v1582, %v1584
        %v1586 = vrot.slane %v315, %v1585
        %v1588 = vunpack.c.l.s4 1983009808
        %v1589 = vunpack.c.0.s8 %v1588
        %v1590 = vlaneseq
        %v1591 = vshrl.u32 %v1590, 7
        %v1592 = vsub.s32 %v1589, %v1591
        %v1593 = vrot.slane %v1579, %v1592
        %v1594 = vcombine.high %v1586, %v1586
        %v1595 = vcombine.high %v1593, %v1593
        %v1596 = vcombine.high %v316, %v316
        %v1598 = vunpack.c.l.s4 1983009808
        %v1599 = vunpack.c.0.s8 %v1598
        %v1600 = vlaneseq
        %v1601 = vshrl.u32 %v1600, 7
        %v1602 = vsub.s32 %v1599, %v1601
        %v1603 = vrot.slane %v316, %v1602
        %v1605 = vunpack.c.l.s4 1983009808
        %v1606 = vunpack.c.0.s8 %v1605
        %v1607 = vlaneseq
        %v1608 = vshrl.u32 %v1607, 7
        %v1609 = vsub.s32 %v1606, %v1608
        %v1610 = vrot.slane %v1596, %v1609
        %v1611 = vcombine.high %v1603, %v1603
        %v1612 = vcombine.high %v1610, %v1610
        %v1613 = vcombine.high %v317, %v317
        %v1615 = vunpack.c.l.s4 1983009808
        %v1616 = vunpack.c.0.s8 %v1615
        %v1617 = vlaneseq
        %v1618 = vshrl.u32 %v1617, 7
        %v1619 = vsub.s32 %v1616, %v1618
        %v1620 = vrot.slane %v317, %v1619
        %v1622 = vunpack.c.l.s4 1983009808
        %v1623 = vunpack.c.0.s8 %v1622
        %v1624 = vlaneseq
        %v1625 = vshrl.u32 %v1624, 7
        %v1626 = vsub.s32 %v1623, %v1625
        %v1627 = vrot.slane %v1613, %v1626
        %v1628 = vcombine.high %v1620, %v1620
        %v1629 = vcombine.high %v1627, %v1627
        %v1630 = vcombine.high %v318, %v318
        %v1632 = vunpack.c.l.s4 1983009808
        %v1633 = vunpack.c.0.s8 %v1632
        %v1634 = vlaneseq
        %v1635 = vshrl.u32 %v1634, 7
        %v1636 = vsub.s32 %v1633, %v1635
        %v1637 = vrot.slane %v318, %v1636
        %v1639 = vunpack.c.l.s4 1983009808
        %v1640 = vunpack.c.0.s8 %v1639
        %v1641 = vlaneseq
        %v1642 = vshrl.u32 %v1641, 7
        %v1643 = vsub.s32 %v1640, %v1642
        %v1644 = vrot.slane %v1630, %v1643
        %v1645 = vcombine.high %v1637, %v1637
        %v1646 = vcombine.high %v1644, %v1644
        %v1647 = vcombine.high %v319, %v319
        %v1649 = vunpack.c.l.s4 1983009808
        %v1650 = vunpack.c.0.s8 %v1649
        %v1651 = vlaneseq
        %v1652 = vshrl.u32 %v1651, 7
        %v1653 = vsub.s32 %v1650, %v1652
        %v1654 = vrot.slane %v319, %v1653
        %v1656 = vunpack.c.l.s4 1983009808
        %v1657 = vunpack.c.0.s8 %v1656
        %v1658 = vlaneseq
        %v1659 = vshrl.u32 %v1658, 7
        %v1660 = vsub.s32 %v1657, %v1659
        %v1661 = vrot.slane %v1647, %v1660
        %v1662 = vcombine.high %v1654, %v1654
        %v1663 = vcombine.high %v1661, %v1661
        %v1664 = vcombine.high %v320, %v320
        %v1666 = vunpack.c.l.s4 1983009808
        %v1667 = vunpack.c.0.s8 %v1666
        %v1668 = vlaneseq
        %v1669 = vshrl.u32 %v1668, 7
        %v1670 = vsub.s32 %v1667, %v1669
        %v1671 = vrot.slane %v320, %v1670
        %v1673 = vunpack.c.l.s4 1983009808
        %v1674 = vunpack.c.0.s8 %v1673
        %v1675 = vlaneseq
        %v1676 = vshrl.u32 %v1675, 7
        %v1677 = vsub.s32 %v1674, %v1676
        %v1678 = vrot.slane %v1664, %v1677
        %v1679 = vcombine.high %v1671, %v1671
        %v1680 = vcombine.high %v1678, %v1678
        %v1681 = vcombine.high %v321, %v321
        %v1683 = vunpack.c.l.s4 1983009808
        %v1684 = vunpack.c.0.s8 %v1683
        %v1685 = vlaneseq
        %v1686 = vshrl.u32 %v1685, 7
        %v1687 = vsub.s32 %v1684, %v1686
        %v1688 = vrot.slane %v321, %v1687
        %v1690 = vunpack.c.l.s4 1983009808
        %v1691 = vunpack.c.0.s8 %v1690
        %v1692 = vlaneseq
        %v1693 = vshrl.u32 %v1692, 7
        %v1694 = vsub.s32 %v1691, %v1693
        %v1695 = vrot.slane %v1681, %v1694
        %v1696 = vcombine.high %v1688, %v1688
        %v1697 = vcombine.high %v1695, %v1695
        %v1698 = vcombine.high %v322, %v322
        %v1700 = vunpack.c.l.s4 1983009808
        %v1701 = vunpack.c.0.s8 %v1700
        %v1702 = vlaneseq
        %v1703 = vshrl.u32 %v1702, 7
        %v1704 = vsub.s32 %v1701, %v1703
        %v1705 = vrot.slane %v322, %v1704
        %v1707 = vunpack.c.l.s4 1983009808
        %v1708 = vunpack.c.0.s8 %v1707
        %v1709 = vlaneseq
        %v1710 = vshrl.u32 %v1709, 7
        %v1711 = vsub.s32 %v1708, %v1710
        %v1712 = vrot.slane %v1698, %v1711
        %v1713 = vcombine.high %v1705, %v1705
        %v1714 = vcombine.high %v1712, %v1712
        %v1715 = vcombine.high %v323, %v323
        %v1717 = vunpack.c.l.s4 1983009808
        %v1718 = vunpack.c.0.s8 %v1717
        %v1719 = vlaneseq
        %v1720 = vshrl.u32 %v1719, 7
        %v1721 = vsub.s32 %v1718, %v1720
        %v1722 = vrot.slane %v323, %v1721
        %v1724 = vunpack.c.l.s4 1983009808
        %v1725 = vunpack.c.0.s8 %v1724
        %v1726 = vlaneseq
        %v1727 = vshrl.u32 %v1726, 7
        %v1728 = vsub.s32 %v1725, %v1727
        %v1729 = vrot.slane %v1715, %v1728
        %v1730 = vcombine.high %v1722, %v1722
        %v1731 = vcombine.high %v1729, %v1729
        %v1732 = vcombine.high %v324, %v324
        %v1734 = vunpack.c.l.s4 1983009808
        %v1735 = vunpack.c.0.s8 %v1734
        %v1736 = vlaneseq
        %v1737 = vshrl.u32 %v1736, 7
        %v1738 = vsub.s32 %v1735, %v1737
        %v1739 = vrot.slane %v324, %v1738
        %v1741 = vunpack.c.l.s4 1983009808
        %v1742 = vunpack.c.0.s8 %v1741
        %v1743 = vlaneseq
        %v1744 = vshrl.u32 %v1743, 7
        %v1745 = vsub.s32 %v1742, %v1744
        %v1746 = vrot.slane %v1732, %v1745
        %v1747 = vcombine.high %v1739, %v1739
        %v1748 = vcombine.high %v1746, %v1746
        %v1749 = vcombine.high %v325, %v325
        %v1751 = vunpack.c.l.s4 1983009808
        %v1752 = vunpack.c.0.s8 %v1751
        %v1753 = vlaneseq
        %v1754 = vshrl.u32 %v1753, 7
        %v1755 = vsub.s32 %v1752, %v1754
        %v1756 = vrot.slane %v325, %v1755
        %v1758 = vunpack.c.l.s4 1983009808
        %v1759 = vunpack.c.0.s8 %v1758
        %v1760 = vlaneseq
        %v1761 = vshrl.u32 %v1760, 7
        %v1762 = vsub.s32 %v1759, %v1761
        %v1763 = vrot.slane %v1749, %v1762
        %v1764 = vcombine.high %v1756, %v1756
        %v1765 = vcombine.high %v1763, %v1763
        %v1766 = vcombine.high %v326, %v326
        %v1768 = vunpack.c.l.s4 1983009808
        %v1769 = vunpack.c.0.s8 %v1768
        %v1770 = vlaneseq
        %v1771 = vshrl.u32 %v1770, 7
        %v1772 = vsub.s32 %v1769, %v1771
        %v1773 = vrot.slane %v326, %v1772
        %v1775 = vunpack.c.l.s4 1983009808
        %v1776 = vunpack.c.0.s8 %v1775
        %v1777 = vlaneseq
        %v1778 = vshrl.u32 %v1777, 7
        %v1779 = vsub.s32 %v1776, %v1778
        %v1780 = vrot.slane %v1766, %v1779
        %v1781 = vcombine.high %v1773, %v1773
        %v1782 = vcombine.high %v1780, %v1780
        %v1783 = vcombine.high %v327, %v327
        %v1785 = vunpack.c.l.s4 1983009808
        %v1786 = vunpack.c.0.s8 %v1785
        %v1787 = vlaneseq
        %v1788 = vshrl.u32 %v1787, 7
        %v1789 = vsub.s32 %v1786, %v1788
        %v1790 = vrot.slane %v327, %v1789
        %v1792 = vunpack.c.l.s4 1983009808
        %v1793 = vunpack.c.0.s8 %v1792
        %v1794 = vlaneseq
        %v1795 = vshrl.u32 %v1794, 7
        %v1796 = vsub.s32 %v1793, %v1795
        %v1797 = vrot.slane %v1783, %v1796
        %v1798 = vcombine.high %v1790, %v1790
        %v1799 = vcombine.high %v1797, %v1797
        %v1800 = vcombine.high %v328, %v328
        %v1802 = vunpack.c.l.s4 1983009808
        %v1803 = vunpack.c.0.s8 %v1802
        %v1804 = vlaneseq
        %v1805 = vshrl.u32 %v1804, 7
        %v1806 = vsub.s32 %v1803, %v1805
        %v1807 = vrot.slane %v328, %v1806
        %v1809 = vunpack.c.l.s4 1983009808
        %v1810 = vunpack.c.0.s8 %v1809
        %v1811 = vlaneseq
        %v1812 = vshrl.u32 %v1811, 7
        %v1813 = vsub.s32 %v1810, %v1812
        %v1814 = vrot.slane %v1800, %v1813
        %v1815 = vcombine.high %v1807, %v1807
        %v1816 = vcombine.high %v1814, %v1814
        %v1817 = vcombine.high %v329, %v329
        %v1819 = vunpack.c.l.s4 1983009808
        %v1820 = vunpack.c.0.s8 %v1819
        %v1821 = vlaneseq
        %v1822 = vshrl.u32 %v1821, 7
        %v1823 = vsub.s32 %v1820, %v1822
        %v1824 = vrot.slane %v329, %v1823
        %v1826 = vunpack.c.l.s4 1983009808
        %v1827 = vunpack.c.0.s8 %v1826
        %v1828 = vlaneseq
        %v1829 = vshrl.u32 %v1828, 7
        %v1830 = vsub.s32 %v1827, %v1829
        %v1831 = vrot.slane %v1817, %v1830
        %v1832 = vcombine.high %v1824, %v1824
        %v1833 = vcombine.high %v1831, %v1831
        %v1834 = vcombine.high %v330, %v330
        %v1836 = vunpack.c.l.s4 1983009808
        %v1837 = vunpack.c.0.s8 %v1836
        %v1838 = vlaneseq
        %v1839 = vshrl.u32 %v1838, 7
        %v1840 = vsub.s32 %v1837, %v1839
        %v1841 = vrot.slane %v330, %v1840
        %v1843 = vunpack.c.l.s4 1983009808
        %v1844 = vunpack.c.0.s8 %v1843
        %v1845 = vlaneseq
        %v1846 = vshrl.u32 %v1845, 7
        %v1847 = vsub.s32 %v1844, %v1846
        %v1848 = vrot.slane %v1834, %v1847
        %v1849 = vcombine.high %v1841, %v1841
        %v1850 = vcombine.high %v1848, %v1848
        %v1851 = vcombine.high %v331, %v331
        %v1853 = vunpack.c.l.s4 1983009808
        %v1854 = vunpack.c.0.s8 %v1853
        %v1855 = vlaneseq
        %v1856 = vshrl.u32 %v1855, 7
        %v1857 = vsub.s32 %v1854, %v1856
        %v1858 = vrot.slane %v331, %v1857
        %v1860 = vunpack.c.l.s4 1983009808
        %v1861 = vunpack.c.0.s8 %v1860
        %v1862 = vlaneseq
        %v1863 = vshrl.u32 %v1862, 7
        %v1864 = vsub.s32 %v1861, %v1863
        %v1865 = vrot.slane %v1851, %v1864
        %v1866 = vcombine.high %v1858, %v1858
        %v1867 = vcombine.high %v1865, %v1865
        %v1868 = vcombine.high %v332, %v332
        %v1870 = vunpack.c.l.s4 1983009808
        %v1871 = vunpack.c.0.s8 %v1870
        %v1872 = vlaneseq
        %v1873 = vshrl.u32 %v1872, 7
        %v1874 = vsub.s32 %v1871, %v1873
        %v1875 = vrot.slane %v332, %v1874
        %v1877 = vunpack.c.l.s4 1983009808
        %v1878 = vunpack.c.0.s8 %v1877
        %v1879 = vlaneseq
        %v1880 = vshrl.u32 %v1879, 7
        %v1881 = vsub.s32 %v1878, %v1880
        %v1882 = vrot.slane %v1868, %v1881
        %v1883 = vcombine.high %v1875, %v1875
        %v1884 = vcombine.high %v1882, %v1882
        %v1885 = vcombine.high %v333, %v333
        %v1887 = vunpack.c.l.s4 1983009808
        %v1888 = vunpack.c.0.s8 %v1887
        %v1889 = vlaneseq
        %v1890 = vshrl.u32 %v1889, 7
        %v1891 = vsub.s32 %v1888, %v1890
        %v1892 = vrot.slane %v333, %v1891
        %v1894 = vunpack.c.l.s4 1983009808
        %v1895 = vunpack.c.0.s8 %v1894
        %v1896 = vlaneseq
        %v1897 = vshrl.u32 %v1896, 7
        %v1898 = vsub.s32 %v1895, %v1897
        %v1899 = vrot.slane %v1885, %v1898
        %v1900 = vcombine.high %v1892, %v1892
        %v1901 = vcombine.high %v1899, %v1899
        %v1902 = vcombine.high %v334, %v334
        %v1904 = vunpack.c.l.s4 1983009808
        %v1905 = vunpack.c.0.s8 %v1904
        %v1906 = vlaneseq
        %v1907 = vshrl.u32 %v1906, 7
        %v1908 = vsub.s32 %v1905, %v1907
        %v1909 = vrot.slane %v334, %v1908
        %v1911 = vunpack.c.l.s4 1983009808
        %v1912 = vunpack.c.0.s8 %v1911
        %v1913 = vlaneseq
        %v1914 = vshrl.u32 %v1913, 7
        %v1915 = vsub.s32 %v1912, %v1914
        %v1916 = vrot.slane %v1902, %v1915
        %v1917 = vcombine.high %v1909, %v1909
        %v1918 = vcombine.high %v1916, %v1916
        %v1919 = vcombine.high %v335, %v335
        %v1921 = vunpack.c.l.s4 1983009808
        %v1922 = vunpack.c.0.s8 %v1921
        %v1923 = vlaneseq
        %v1924 = vshrl.u32 %v1923, 7
        %v1925 = vsub.s32 %v1922, %v1924
        %v1926 = vrot.slane %v335, %v1925
        %v1928 = vunpack.c.l.s4 1983009808
        %v1929 = vunpack.c.0.s8 %v1928
        %v1930 = vlaneseq
        %v1931 = vshrl.u32 %v1930, 7
        %v1932 = vsub.s32 %v1929, %v1931
        %v1933 = vrot.slane %v1919, %v1932
        %v1934 = vcombine.high %v1926, %v1926
        %v1935 = vcombine.high %v1933, %v1933
        %v1936 = vcombine.high %v336, %v336
        %v1938 = vunpack.c.l.s4 1983009808
        %v1939 = vunpack.c.0.s8 %v1938
        %v1940 = vlaneseq
        %v1941 = vshrl.u32 %v1940, 7
        %v1942 = vsub.s32 %v1939, %v1941
        %v1943 = vrot.slane %v336, %v1942
        %v1945 = vunpack.c.l.s4 1983009808
        %v1946 = vunpack.c.0.s8 %v1945
        %v1947 = vlaneseq
        %v1948 = vshrl.u32 %v1947, 7
        %v1949 = vsub.s32 %v1946, %v1948
        %v1950 = vrot.slane %v1936, %v1949
        %v1951 = vcombine.high %v1943, %v1943
        %v1952 = vcombine.high %v1950, %v1950
        %v1953 = vcombine.high %v337, %v337
        %v1955 = vunpack.c.l.s4 1983009808
        %v1956 = vunpack.c.0.s8 %v1955
        %v1957 = vlaneseq
        %v1958 = vshrl.u32 %v1957, 7
        %v1959 = vsub.s32 %v1956, %v1958
        %v1960 = vrot.slane %v337, %v1959
        %v1962 = vunpack.c.l.s4 1983009808
        %v1963 = vunpack.c.0.s8 %v1962
        %v1964 = vlaneseq
        %v1965 = vshrl.u32 %v1964, 7
        %v1966 = vsub.s32 %v1963, %v1965
        %v1967 = vrot.slane %v1953, %v1966
        %v1968 = vcombine.high %v1960, %v1960
        %v1969 = vcombine.high %v1967, %v1967
        %v1970 = vcombine.high %v338, %v338
        %v1972 = vunpack.c.l.s4 1983009808
        %v1973 = vunpack.c.0.s8 %v1972
        %v1974 = vlaneseq
        %v1975 = vshrl.u32 %v1974, 7
        %v1976 = vsub.s32 %v1973, %v1975
        %v1977 = vrot.slane %v338, %v1976
        %v1979 = vunpack.c.l.s4 1983009808
        %v1980 = vunpack.c.0.s8 %v1979
        %v1981 = vlaneseq
        %v1982 = vshrl.u32 %v1981, 7
        %v1983 = vsub.s32 %v1980, %v1982
        %v1984 = vrot.slane %v1970, %v1983
        %v1985 = vcombine.high %v1977, %v1977
        %v1986 = vcombine.high %v1984, %v1984
        %v1987 = vcombine.high %v339, %v339
        %v1989 = vunpack.c.l.s4 1983009808
        %v1990 = vunpack.c.0.s8 %v1989
        %v1991 = vlaneseq
        %v1992 = vshrl.u32 %v1991, 7
        %v1993 = vsub.s32 %v1990, %v1992
        %v1994 = vrot.slane %v339, %v1993
        %v1996 = vunpack.c.l.s4 1983009808
        %v1997 = vunpack.c.0.s8 %v1996
        %v1998 = vlaneseq
        %v1999 = vshrl.u32 %v1998, 7
        %v2000 = vsub.s32 %v1997, %v1999
        %v2001 = vrot.slane %v1987, %v2000
        %v2002 = vcombine.high %v1994, %v1994
        %v2003 = vcombine.high %v2001, %v2001
        %2260 = vmatprep.subr.mxu0 %v341
        %2261 = vmatpush1.xpose.msra.mxu0 %v340
        %2262 = vmatprep.subr.mxu0 %v597
        %2263 = vmatpush1.xpose.msra.mxu0 %v596
        %2264 = vmatprep.subr.mxu0 0.0
        %2265 = vmatpush1.xpose.msra.mxu0 0.0
        %2266 = vmatprep.subr.mxu0 0.0
        %2267 = vmatpush1.xpose.msra.mxu0 0.0
        %2268 = vmatprep.subr.mxu0 0.0
        %2269 = vmatpush1.xpose.msra.mxu0 0.0
        %2270 = vmatprep.subr.mxu0 0.0
        %2271 = vmatpush1.xpose.msra.mxu0 0.0
        %2272 = vmatprep.subr.mxu0 0.0
        %2273 = vmatpush1.xpose.msra.mxu0 0.0
        %2274 = vmatprep.subr.mxu0 0.0
        %2275 = vmatpush1.xpose.msra.mxu0 0.0
        %2276 = vmatprep.subr.mxu0 0.0
        %2277 = vmatpush1.xpose.msra.mxu0 0.0
        %2278 = vmatprep.subr.mxu0 0.0
        %2279 = vmatpush1.xpose.msra.mxu0 0.0
        %2280 = vmatprep.subr.mxu0 0.0
        %2281 = vmatpush1.xpose.msra.mxu0 0.0
        %2282 = vmatprep.subr.mxu0 0.0
        %2283 = vmatpush1.xpose.msra.mxu0 0.0
        %2284 = vmatprep.subr.mxu0 0.0
        %2285 = vmatpush1.xpose.msra.mxu0 0.0
        %2286 = vmatprep.subr.mxu0 0.0
        %2287 = vmatpush1.xpose.msra.mxu0 0.0
        %2288 = vmatprep.subr.mxu0 0.0
        %2289 = vmatpush1.xpose.msra.mxu0 0.0
        %2290 = vmatprep.subr.mxu0 0.0
        %2291 = vmatpush1.xpose.msra.mxu0 0.0
        %2292 = vmatprep.subr.mxu0 0.0
        %2293 = vmatpush1.xpose.msra.mxu0 0.0
        %2294 = vmatprep.subr.mxu0 0.0
        %2295 = vmatpush1.xpose.msra.mxu0 0.0
        %2296 = vmatprep.subr.mxu0 0.0
        %2297 = vmatpush1.xpose.msra.mxu0 0.0
        %2298 = vmatprep.subr.mxu0 0.0
        %2299 = vmatpush1.xpose.msra.mxu0 0.0
        %2300 = vmatprep.subr.mxu0 0.0
        %2301 = vmatpush1.xpose.msra.mxu0 0.0
        %2302 = vmatprep.subr.mxu0 0.0
        %2303 = vmatpush1.xpose.msra.mxu0 0.0
        %2304 = vmatprep.subr.mxu0 0.0
        %2305 = vmatpush1.xpose.msra.mxu0 0.0
        %2306 = vmatprep.subr.mxu0 0.0
        %2307 = vmatpush1.xpose.msra.mxu0 0.0
        %2308 = vmatprep.subr.mxu0 0.0
        %2309 = vmatpush1.xpose.msra.mxu0 0.0
        %2310 = vmatprep.subr.mxu0 0.0
        %2311 = vmatpush1.xpose.msra.mxu0 0.0
        %2312 = vmatprep.subr.mxu0 0.0
        %2313 = vmatpush1.xpose.msra.mxu0 0.0
        %2314 = vmatprep.subr.mxu0 0.0
        %2315 = vmatpush1.xpose.msra.mxu0 0.0
        %2316 = vmatprep.subr.mxu0 0.0
        %2317 = vmatpush1.xpose.msra.mxu0 0.0
        %2318 = vmatprep.subr.mxu0 0.0
        %2319 = vmatpush1.xpose.msra.mxu0 0.0
        %2320 = vmatprep.subr.mxu0 0.0
        %2321 = vmatpush1.xpose.msra.mxu0 0.0
        %2322 = vmatprep.subr.mxu0 0.0
        %2323 = vmatpush1.xpose.msra.mxu0 0.0
        %2324 = vmatprep.mubr.f32.mxu0 %v931
        %2325 = vmatmul.mubr.f32.gmra.mrb[0].mxu0 %v923
        %v2326 = vpop.f32.mrb[0].mxu0
        %v2327 = vadd.f32 0.0, %v2326
        %v2328 = vpop.f32.mrb[0].mxu0
        %2329 = vdwg.mxu0
        %2330 = vmatprep.subr.mxu0 %v343
        %2331 = vmatpush1.xpose.msra.mxu0 %v342
        %2332 = vmatprep.subr.mxu0 %v599
        %2333 = vmatpush1.xpose.msra.mxu0 %v598
        %2334 = vmatprep.subr.mxu0 0.0
        %2335 = vmatpush1.xpose.msra.mxu0 0.0
        %2336 = vmatprep.subr.mxu0 0.0
        %2337 = vmatpush1.xpose.msra.mxu0 0.0
        %2338 = vmatprep.subr.mxu0 0.0
        %2339 = vmatpush1.xpose.msra.mxu0 0.0
        %2340 = vmatprep.subr.mxu0 0.0
        %2341 = vmatpush1.xpose.msra.mxu0 0.0
        %2342 = vmatprep.subr.mxu0 0.0
        %2343 = vmatpush1.xpose.msra.mxu0 0.0
        %2344 = vmatprep.subr.mxu0 0.0
        %2345 = vmatpush1.xpose.msra.mxu0 0.0
        %2346 = vmatprep.subr.mxu0 0.0
        %2347 = vmatpush1.xpose.msra.mxu0 0.0
        %2348 = vmatprep.subr.mxu0 0.0
        %2349 = vmatpush1.xpose.msra.mxu0 0.0
        %2350 = vmatprep.subr.mxu0 0.0
        %2351 = vmatpush1.xpose.msra.mxu0 0.0
        %2352 = vmatprep.subr.mxu0 0.0
        %2353 = vmatpush1.xpose.msra.mxu0 0.0
        %2354 = vmatprep.subr.mxu0 0.0
        %2355 = vmatpush1.xpose.msra.mxu0 0.0
        %2356 = vmatprep.subr.mxu0 0.0
        %2357 = vmatpush1.xpose.msra.mxu0 0.0
        %2358 = vmatprep.subr.mxu0 0.0
        %2359 = vmatpush1.xpose.msra.mxu0 0.0
        %2360 = vmatprep.subr.mxu0 0.0
        %2361 = vmatpush1.xpose.msra.mxu0 0.0
        %2362 = vmatprep.subr.mxu0 0.0
        %2363 = vmatpush1.xpose.msra.mxu0 0.0
        %2364 = vmatprep.subr.mxu0 0.0
        %2365 = vmatpush1.xpose.msra.mxu0 0.0
        %2366 = vmatprep.subr.mxu0 0.0
        %2367 = vmatpush1.xpose.msra.mxu0 0.0
        %2368 = vmatprep.subr.mxu0 0.0
        %2369 = vmatpush1.xpose.msra.mxu0 0.0
        %2370 = vmatprep.subr.mxu0 0.0
        %2371 = vmatpush1.xpose.msra.mxu0 0.0
        %2372 = vmatprep.subr.mxu0 0.0
        %2373 = vmatpush1.xpose.msra.mxu0 0.0
        %2374 = vmatprep.subr.mxu0 0.0
        %2375 = vmatpush1.xpose.msra.mxu0 0.0
        %2376 = vmatprep.subr.mxu0 0.0
        %2377 = vmatpush1.xpose.msra.mxu0 0.0
        %2378 = vmatprep.subr.mxu0 0.0
        %2379 = vmatpush1.xpose.msra.mxu0 0.0
        %2380 = vmatprep.subr.mxu0 0.0
        %2381 = vmatpush1.xpose.msra.mxu0 0.0
        %2382 = vmatprep.subr.mxu0 0.0
        %2383 = vmatpush1.xpose.msra.mxu0 0.0
        %2384 = vmatprep.subr.mxu0 0.0
        %2385 = vmatpush1.xpose.msra.mxu0 0.0
        %2386 = vmatprep.subr.mxu0 0.0
        %2387 = vmatpush1.xpose.msra.mxu0 0.0
        %2388 = vmatprep.subr.mxu0 0.0
        %2389 = vmatpush1.xpose.msra.mxu0 0.0
        %2390 = vmatprep.subr.mxu0 0.0
        %2391 = vmatpush1.xpose.msra.mxu0 0.0
        %2392 = vmatprep.subr.mxu0 0.0
        %2393 = vmatpush1.xpose.msra.mxu0 0.0
        %2394 = vmatprep.mubr.f32.mxu0 %v932
        %2395 = vmatmul.mubr.f32.gmra.mrb[0].mxu0 %v930
        %v2396 = vpop.f32.mrb[0].mxu0
        %v2397 = vadd.f32 %v2327, %v2396
        %v2398 = vpop.f32.mrb[0].mxu0
        %2399 = vdwg.mxu0
        %2400 = vmatprep.subr.mxu0 %v345
        %2401 = vmatpush1.xpose.msra.mxu0 %v344
        %2402 = vmatprep.subr.mxu0 %v601
        %2403 = vmatpush1.xpose.msra.mxu0 %v600
        %2404 = vmatprep.subr.mxu0 0.0
        %2405 = vmatpush1.xpose.msra.mxu0 0.0
        %2406 = vmatprep.subr.mxu0 0.0
        %2407 = vmatpush1.xpose.msra.mxu0 0.0
        %2408 = vmatprep.subr.mxu0 0.0
        %2409 = vmatpush1.xpose.msra.mxu0 0.0
        %2410 = vmatprep.subr.mxu0 0.0
        %2411 = vmatpush1.xpose.msra.mxu0 0.0
        %2412 = vmatprep.subr.mxu0 0.0
        %2413 = vmatpush1.xpose.msra.mxu0 0.0
        %2414 = vmatprep.subr.mxu0 0.0
        %2415 = vmatpush1.xpose.msra.mxu0 0.0
        %2416 = vmatprep.subr.mxu0 0.0
        %2417 = vmatpush1.xpose.msra.mxu0 0.0
        %2418 = vmatprep.subr.mxu0 0.0
        %2419 = vmatpush1.xpose.msra.mxu0 0.0
        %2420 = vmatprep.subr.mxu0 0.0
        %2421 = vmatpush1.xpose.msra.mxu0 0.0
        %2422 = vmatprep.subr.mxu0 0.0
        %2423 = vmatpush1.xpose.msra.mxu0 0.0
        %2424 = vmatprep.subr.mxu0 0.0
        %2425 = vmatpush1.xpose.msra.mxu0 0.0
        %2426 = vmatprep.subr.mxu0 0.0
        %2427 = vmatpush1.xpose.msra.mxu0 0.0
        %2428 = vmatprep.subr.mxu0 0.0
        %2429 = vmatpush1.xpose.msra.mxu0 0.0
        %2430 = vmatprep.subr.mxu0 0.0
        %2431 = vmatpush1.xpose.msra.mxu0 0.0
        %2432 = vmatprep.subr.mxu0 0.0
        %2433 = vmatpush1.xpose.msra.mxu0 0.0
        %2434 = vmatprep.subr.mxu0 0.0
        %2435 = vmatpush1.xpose.msra.mxu0 0.0
        %2436 = vmatprep.subr.mxu0 0.0
        %2437 = vmatpush1.xpose.msra.mxu0 0.0
        %2438 = vmatprep.subr.mxu0 0.0
        %2439 = vmatpush1.xpose.msra.mxu0 0.0
        %2440 = vmatprep.subr.mxu0 0.0
        %2441 = vmatpush1.xpose.msra.mxu0 0.0
        %2442 = vmatprep.subr.mxu0 0.0
        %2443 = vmatpush1.xpose.msra.mxu0 0.0
        %2444 = vmatprep.subr.mxu0 0.0
        %2445 = vmatpush1.xpose.msra.mxu0 0.0
        %2446 = vmatprep.subr.mxu0 0.0
        %2447 = vmatpush1.xpose.msra.mxu0 0.0
        %2448 = vmatprep.subr.mxu0 0.0
        %2449 = vmatpush1.xpose.msra.mxu0 0.0
        %2450 = vmatprep.subr.mxu0 0.0
        %2451 = vmatpush1.xpose.msra.mxu0 0.0
        %2452 = vmatprep.subr.mxu0 0.0
        %2453 = vmatpush1.xpose.msra.mxu0 0.0
        %2454 = vmatprep.subr.mxu0 0.0
        %2455 = vmatpush1.xpose.msra.mxu0 0.0
        %2456 = vmatprep.subr.mxu0 0.0
        %2457 = vmatpush1.xpose.msra.mxu0 0.0
        %2458 = vmatprep.subr.mxu0 0.0
        %2459 = vmatpush1.xpose.msra.mxu0 0.0
        %2460 = vmatprep.subr.mxu0 0.0
        %2461 = vmatpush1.xpose.msra.mxu0 0.0
        %2462 = vmatprep.subr.mxu0 0.0
        %2463 = vmatpush1.xpose.msra.mxu0 0.0
        %2464 = vmatprep.mubr.f32.mxu0 %v948
        %2465 = vmatmul.mubr.f32.gmra.mrb[0].mxu0 %v940
        %v2466 = vpop.f32.mrb[0].mxu0
        %v2467 = vadd.f32 %v2397, %v2466
        %v2468 = vpop.f32.mrb[0].mxu0
        %2469 = vdwg.mxu0
        %2470 = vmatprep.subr.mxu0 %v347
        %2471 = vmatpush1.xpose.msra.mxu0 %v346
        %2472 = vmatprep.subr.mxu0 %v603
        %2473 = vmatpush1.xpose.msra.mxu0 %v602
        %2474 = vmatprep.subr.mxu0 0.0
        %2475 = vmatpush1.xpose.msra.mxu0 0.0
        %2476 = vmatprep.subr.mxu0 0.0
        %2477 = vmatpush1.xpose.msra.mxu0 0.0
        %2478 = vmatprep.subr.mxu0 0.0
        %2479 = vmatpush1.xpose.msra.mxu0 0.0
        %2480 = vmatprep.subr.mxu0 0.0
        %2481 = vmatpush1.xpose.msra.mxu0 0.0
        %2482 = vmatprep.subr.mxu0 0.0
        %2483 = vmatpush1.xpose.msra.mxu0 0.0
        %2484 = vmatprep.subr.mxu0 0.0
        %2485 = vmatpush1.xpose.msra.mxu0 0.0
        %2486 = vmatprep.subr.mxu0 0.0
        %2487 = vmatpush1.xpose.msra.mxu0 0.0
        %2488 = vmatprep.subr.mxu0 0.0
        %2489 = vmatpush1.xpose.msra.mxu0 0.0
        %2490 = vmatprep.subr.mxu0 0.0
        %2491 = vmatpush1.xpose.msra.mxu0 0.0
        %2492 = vmatprep.subr.mxu0 0.0
        %2493 = vmatpush1.xpose.msra.mxu0 0.0
        %2494 = vmatprep.subr.mxu0 0.0
        %2495 = vmatpush1.xpose.msra.mxu0 0.0
        %2496 = vmatprep.subr.mxu0 0.0
        %2497 = vmatpush1.xpose.msra.mxu0 0.0
        %2498 = vmatprep.subr.mxu0 0.0
        %2499 = vmatpush1.xpose.msra.mxu0 0.0
        %2500 = vmatprep.subr.mxu0 0.0
        %2501 = vmatpush1.xpose.msra.mxu0 0.0
        %2502 = vmatprep.subr.mxu0 0.0
        %2503 = vmatpush1.xpose.msra.mxu0 0.0
        %2504 = vmatprep.subr.mxu0 0.0
        %2505 = vmatpush1.xpose.msra.mxu0 0.0
        %2506 = vmatprep.subr.mxu0 0.0
        %2507 = vmatpush1.xpose.msra.mxu0 0.0
        %2508 = vmatprep.subr.mxu0 0.0
        %2509 = vmatpush1.xpose.msra.mxu0 0.0
        %2510 = vmatprep.subr.mxu0 0.0
        %2511 = vmatpush1.xpose.msra.mxu0 0.0
        %2512 = vmatprep.subr.mxu0 0.0
        %2513 = vmatpush1.xpose.msra.mxu0 0.0
        %2514 = vmatprep.subr.mxu0 0.0
        %2515 = vmatpush1.xpose.msra.mxu0 0.0
        %2516 = vmatprep.subr.mxu0 0.0
        %2517 = vmatpush1.xpose.msra.mxu0 0.0
        %2518 = vmatprep.subr.mxu0 0.0
        %2519 = vmatpush1.xpose.msra.mxu0 0.0
        %2520 = vmatprep.subr.mxu0 0.0
        %2521 = vmatpush1.xpose.msra.mxu0 0.0
        %2522 = vmatprep.subr.mxu0 0.0
        %2523 = vmatpush1.xpose.msra.mxu0 0.0
        %2524 = vmatprep.subr.mxu0 0.0
        %2525 = vmatpush1.xpose.msra.mxu0 0.0
        %2526 = vmatprep.subr.mxu0 0.0
        %2527 = vmatpush1.xpose.msra.mxu0 0.0
        %2528 = vmatprep.subr.mxu0 0.0
        %2529 = vmatpush1.xpose.msra.mxu0 0.0
        %2530 = vmatprep.subr.mxu0 0.0
        %2531 = vmatpush1.xpose.msra.mxu0 0.0
        %2532 = vmatprep.subr.mxu0 0.0
        %2533 = vmatpush1.xpose.msra.mxu0 0.0
        %2534 = vmatprep.mubr.f32.mxu0 %v949
        %2535 = vmatmul.mubr.f32.gmra.mrb[0].mxu0 %v947
        %v2536 = vpop.f32.mrb[0].mxu0
        %v2537 = vadd.f32 %v2467, %v2536
        %v2538 = vpop.f32.mrb[0].mxu0
        %2539 = vdwg.mxu0
        %2540 = vmatprep.subr.mxu0 %v349
        %2541 = vmatpush1.xpose.msra.mxu0 %v348
        %2542 = vmatprep.subr.mxu0 %v605
        %2543 = vmatpush1.xpose.msra.mxu0 %v604
        %2544 = vmatprep.subr.mxu0 0.0
        %2545 = vmatpush1.xpose.msra.mxu0 0.0
        %2546 = vmatprep.subr.mxu0 0.0
        %2547 = vmatpush1.xpose.msra.mxu0 0.0
        %2548 = vmatprep.subr.mxu0 0.0
        %2549 = vmatpush1.xpose.msra.mxu0 0.0
        %2550 = vmatprep.subr.mxu0 0.0
        %2551 = vmatpush1.xpose.msra.mxu0 0.0
        %2552 = vmatprep.subr.mxu0 0.0
        %2553 = vmatpush1.xpose.msra.mxu0 0.0
        %2554 = vmatprep.subr.mxu0 0.0
        %2555 = vmatpush1.xpose.msra.mxu0 0.0
        %2556 = vmatprep.subr.mxu0 0.0
        %2557 = vmatpush1.xpose.msra.mxu0 0.0
        %2558 = vmatprep.subr.mxu0 0.0
        %2559 = vmatpush1.xpose.msra.mxu0 0.0
        %2560 = vmatprep.subr.mxu0 0.0
        %2561 = vmatpush1.xpose.msra.mxu0 0.0
        %2562 = vmatprep.subr.mxu0 0.0
        %2563 = vmatpush1.xpose.msra.mxu0 0.0
        %2564 = vmatprep.subr.mxu0 0.0
        %2565 = vmatpush1.xpose.msra.mxu0 0.0
        %2566 = vmatprep.subr.mxu0 0.0
        %2567 = vmatpush1.xpose.msra.mxu0 0.0
        %2568 = vmatprep.subr.mxu0 0.0
        %2569 = vmatpush1.xpose.msra.mxu0 0.0
        %2570 = vmatprep.subr.mxu0 0.0
        %2571 = vmatpush1.xpose.msra.mxu0 0.0
        %2572 = vmatprep.subr.mxu0 0.0
        %2573 = vmatpush1.xpose.msra.mxu0 0.0
        %2574 = vmatprep.subr.mxu0 0.0
        %2575 = vmatpush1.xpose.msra.mxu0 0.0
        %2576 = vmatprep.subr.mxu0 0.0
        %2577 = vmatpush1.xpose.msra.mxu0 0.0
        %2578 = vmatprep.subr.mxu0 0.0
        %2579 = vmatpush1.xpose.msra.mxu0 0.0
        %2580 = vmatprep.subr.mxu0 0.0
        %2581 = vmatpush1.xpose.msra.mxu0 0.0
        %2582 = vmatprep.subr.mxu0 0.0
        %2583 = vmatpush1.xpose.msra.mxu0 0.0
        %2584 = vmatprep.subr.mxu0 0.0
        %2585 = vmatpush1.xpose.msra.mxu0 0.0
        %2586 = vmatprep.subr.mxu0 0.0
        %2587 = vmatpush1.xpose.msra.mxu0 0.0
        %2588 = vmatprep.subr.mxu0 0.0
        %2589 = vmatpush1.xpose.msra.mxu0 0.0
        %2590 = vmatprep.subr.mxu0 0.0
        %2591 = vmatpush1.xpose.msra.mxu0 0.0
        %2592 = vmatprep.subr.mxu0 0.0
        %2593 = vmatpush1.xpose.msra.mxu0 0.0
        %2594 = vmatprep.subr.mxu0 0.0
        %2595 = vmatpush1.xpose.msra.mxu0 0.0
        %2596 = vmatprep.subr.mxu0 0.0
        %2597 = vmatpush1.xpose.msra.mxu0 0.0
        %2598 = vmatprep.subr.mxu0 0.0
        %2599 = vmatpush1.xpose.msra.mxu0 0.0
        %2600 = vmatprep.subr.mxu0 0.0
        %2601 = vmatpush1.xpose.msra.mxu0 0.0
        %2602 = vmatprep.subr.mxu0 0.0
        %2603 = vmatpush1.xpose.msra.mxu0 0.0
        %2604 = vmatprep.mubr.f32.mxu0 %v965
        %2605 = vmatmul.mubr.f32.gmra.mrb[0].mxu0 %v957
        %v2606 = vpop.f32.mrb[0].mxu0
        %v2607 = vadd.f32 %v2537, %v2606
        %v2608 = vpop.f32.mrb[0].mxu0
        %2609 = vdwg.mxu0
        %2610 = vmatprep.subr.mxu0 %v351
        %2611 = vmatpush1.xpose.msra.mxu0 %v350
        %2612 = vmatprep.subr.mxu0 %v607
        %2613 = vmatpush1.xpose.msra.mxu0 %v606
        %2614 = vmatprep.subr.mxu0 0.0
        %2615 = vmatpush1.xpose.msra.mxu0 0.0
        %2616 = vmatprep.subr.mxu0 0.0
        %2617 = vmatpush1.xpose.msra.mxu0 0.0
        %2618 = vmatprep.subr.mxu0 0.0
        %2619 = vmatpush1.xpose.msra.mxu0 0.0
        %2620 = vmatprep.subr.mxu0 0.0
        %2621 = vmatpush1.xpose.msra.mxu0 0.0
        %2622 = vmatprep.subr.mxu0 0.0
        %2623 = vmatpush1.xpose.msra.mxu0 0.0
        %2624 = vmatprep.subr.mxu0 0.0
        %2625 = vmatpush1.xpose.msra.mxu0 0.0
        %2626 = vmatprep.subr.mxu0 0.0
        %2627 = vmatpush1.xpose.msra.mxu0 0.0
        %2628 = vmatprep.subr.mxu0 0.0
        %2629 = vmatpush1.xpose.msra.mxu0 0.0
        %2630 = vmatprep.subr.mxu0 0.0
        %2631 = vmatpush1.xpose.msra.mxu0 0.0
        %2632 = vmatprep.subr.mxu0 0.0
        %2633 = vmatpush1.xpose.msra.mxu0 0.0
        %2634 = vmatprep.subr.mxu0 0.0
        %2635 = vmatpush1.xpose.msra.mxu0 0.0
        %2636 = vmatprep.subr.mxu0 0.0
        %2637 = vmatpush1.xpose.msra.mxu0 0.0
        %2638 = vmatprep.subr.mxu0 0.0
        %2639 = vmatpush1.xpose.msra.mxu0 0.0
        %2640 = vmatprep.subr.mxu0 0.0
        %2641 = vmatpush1.xpose.msra.mxu0 0.0
        %2642 = vmatprep.subr.mxu0 0.0
        %2643 = vmatpush1.xpose.msra.mxu0 0.0
        %2644 = vmatprep.subr.mxu0 0.0
        %2645 = vmatpush1.xpose.msra.mxu0 0.0
        %2646 = vmatprep.subr.mxu0 0.0
        %2647 = vmatpush1.xpose.msra.mxu0 0.0
        %2648 = vmatprep.subr.mxu0 0.0
        %2649 = vmatpush1.xpose.msra.mxu0 0.0
        %2650 = vmatprep.subr.mxu0 0.0
        %2651 = vmatpush1.xpose.msra.mxu0 0.0
        %2652 = vmatprep.subr.mxu0 0.0
        %2653 = vmatpush1.xpose.msra.mxu0 0.0
        %2654 = vmatprep.subr.mxu0 0.0
        %2655 = vmatpush1.xpose.msra.mxu0 0.0
        %2656 = vmatprep.subr.mxu0 0.0
        %2657 = vmatpush1.xpose.msra.mxu0 0.0
        %2658 = vmatprep.subr.mxu0 0.0
        %2659 = vmatpush1.xpose.msra.mxu0 0.0
        %2660 = vmatprep.subr.mxu0 0.0
        %2661 = vmatpush1.xpose.msra.mxu0 0.0
        %2662 = vmatprep.subr.mxu0 0.0
        %2663 = vmatpush1.xpose.msra.mxu0 0.0
        %2664 = vmatprep.subr.mxu0 0.0
        %2665 = vmatpush1.xpose.msra.mxu0 0.0
        %2666 = vmatprep.subr.mxu0 0.0
        %2667 = vmatpush1.xpose.msra.mxu0 0.0
        %2668 = vmatprep.subr.mxu0 0.0
        %2669 = vmatpush1.xpose.msra.mxu0 0.0
        %2670 = vmatprep.subr.mxu0 0.0
        %2671 = vmatpush1.xpose.msra.mxu0 0.0
        %2672 = vmatprep.subr.mxu0 0.0
        %2673 = vmatpush1.xpose.msra.mxu0 0.0
        %2674 = vmatprep.mubr.f32.mxu0 %v966
        %2675 = vmatmul.mubr.f32.gmra.mrb[0].mxu0 %v964
        %v2676 = vpop.f32.mrb[0].mxu0
        %v2677 = vadd.f32 %v2607, %v2676
        %v2678 = vpop.f32.mrb[0].mxu0
        %2679 = vdwg.mxu0
        %2680 = vmatprep.subr.mxu0 %v353
        %2681 = vmatpush1.xpose.msra.mxu0 %v352
        %2682 = vmatprep.subr.mxu0 %v609
        %2683 = vmatpush1.xpose.msra.mxu0 %v608
        %2684 = vmatprep.subr.mxu0 0.0
        %2685 = vmatpush1.xpose.msra.mxu0 0.0
        %2686 = vmatprep.subr.mxu0 0.0
        %2687 = vmatpush1.xpose.msra.mxu0 0.0
        %2688 = vmatprep.subr.mxu0 0.0
        %2689 = vmatpush1.xpose.msra.mxu0 0.0
        %2690 = vmatprep.subr.mxu0 0.0
        %2691 = vmatpush1.xpose.msra.mxu0 0.0
        %2692 = vmatprep.subr.mxu0 0.0
        %2693 = vmatpush1.xpose.msra.mxu0 0.0
        %2694 = vmatprep.subr.mxu0 0.0
        %2695 = vmatpush1.xpose.msra.mxu0 0.0
        %2696 = vmatprep.subr.mxu0 0.0
        %2697 = vmatpush1.xpose.msra.mxu0 0.0
        %2698 = vmatprep.subr.mxu0 0.0
        %2699 = vmatpush1.xpose.msra.mxu0 0.0
        %2700 = vmatprep.subr.mxu0 0.0
        %2701 = vmatpush1.xpose.msra.mxu0 0.0
        %2702 = vmatprep.subr.mxu0 0.0
        %2703 = vmatpush1.xpose.msra.mxu0 0.0
        %2704 = vmatprep.subr.mxu0 0.0
        %2705 = vmatpush1.xpose.msra.mxu0 0.0
        %2706 = vmatprep.subr.mxu0 0.0
        %2707 = vmatpush1.xpose.msra.mxu0 0.0
        %2708 = vmatprep.subr.mxu0 0.0
        %2709 = vmatpush1.xpose.msra.mxu0 0.0
        %2710 = vmatprep.subr.mxu0 0.0
        %2711 = vmatpush1.xpose.msra.mxu0 0.0
        %2712 = vmatprep.subr.mxu0 0.0
        %2713 = vmatpush1.xpose.msra.mxu0 0.0
        %2714 = vmatprep.subr.mxu0 0.0
        %2715 = vmatpush1.xpose.msra.mxu0 0.0
        %2716 = vmatprep.subr.mxu0 0.0
        %2717 = vmatpush1.xpose.msra.mxu0 0.0
        %2718 = vmatprep.subr.mxu0 0.0
        %2719 = vmatpush1.xpose.msra.mxu0 0.0
        %2720 = vmatprep.subr.mxu0 0.0
        %2721 = vmatpush1.xpose.msra.mxu0 0.0
        %2722 = vmatprep.subr.mxu0 0.0
        %2723 = vmatpush1.xpose.msra.mxu0 0.0
        %2724 = vmatprep.subr.mxu0 0.0
        %2725 = vmatpush1.xpose.msra.mxu0 0.0
        %2726 = vmatprep.subr.mxu0 0.0
        %2727 = vmatpush1.xpose.msra.mxu0 0.0
        %2728 = vmatprep.subr.mxu0 0.0
        %2729 = vmatpush1.xpose.msra.mxu0 0.0
        %2730 = vmatprep.subr.mxu0 0.0
        %2731 = vmatpush1.xpose.msra.mxu0 0.0
        %2732 = vmatprep.subr.mxu0 0.0
        %2733 = vmatpush1.xpose.msra.mxu0 0.0
        %2734 = vmatprep.subr.mxu0 0.0
        %2735 = vmatpush1.xpose.msra.mxu0 0.0
        %2736 = vmatprep.subr.mxu0 0.0
        %2737 = vmatpush1.xpose.msra.mxu0 0.0
        %2738 = vmatprep.subr.mxu0 0.0
        %2739 = vmatpush1.xpose.msra.mxu0 0.0
        %2740 = vmatprep.subr.mxu0 0.0
        %2741 = vmatpush1.xpose.msra.mxu0 0.0
        %2742 = vmatprep.subr.mxu0 0.0
        %2743 = vmatpush1.xpose.msra.mxu0 0.0
        %2744 = vmatprep.mubr.f32.mxu0 %v982
        %2745 = vmatmul.mubr.f32.gmra.mrb[0].mxu0 %v974
        %v2746 = vpop.f32.mrb[0].mxu0
        %v2747 = vadd.f32 %v2677, %v2746
        %v2748 = vpop.f32.mrb[0].mxu0
        %2749 = vdwg.mxu0
        %2750 = vmatprep.subr.mxu0 %v355
        %2751 = vmatpush1.xpose.msra.mxu0 %v354
        %2752 = vmatprep.subr.mxu0 %v611
        %2753 = vmatpush1.xpose.msra.mxu0 %v610
        %2754 = vmatprep.subr.mxu0 0.0
        %2755 = vmatpush1.xpose.msra.mxu0 0.0
        %2756 = vmatprep.subr.mxu0 0.0
        %2757 = vmatpush1.xpose.msra.mxu0 0.0
        %2758 = vmatprep.subr.mxu0 0.0
        %2759 = vmatpush1.xpose.msra.mxu0 0.0
        %2760 = vmatprep.subr.mxu0 0.0
        %2761 = vmatpush1.xpose.msra.mxu0 0.0
        %2762 = vmatprep.subr.mxu0 0.0
        %2763 = vmatpush1.xpose.msra.mxu0 0.0
        %2764 = vmatprep.subr.mxu0 0.0
        %2765 = vmatpush1.xpose.msra.mxu0 0.0
        %2766 = vmatprep.subr.mxu0 0.0
        %2767 = vmatpush1.xpose.msra.mxu0 0.0
        %2768 = vmatprep.subr.mxu0 0.0
        %2769 = vmatpush1.xpose.msra.mxu0 0.0
        %2770 = vmatprep.subr.mxu0 0.0
        %2771 = vmatpush1.xpose.msra.mxu0 0.0
        %2772 = vmatprep.subr.mxu0 0.0
        %2773 = vmatpush1.xpose.msra.mxu0 0.0
        %2774 = vmatprep.subr.mxu0 0.0
        %2775 = vmatpush1.xpose.msra.mxu0 0.0
        %2776 = vmatprep.subr.mxu0 0.0
        %2777 = vmatpush1.xpose.msra.mxu0 0.0
        %2778 = vmatprep.subr.mxu0 0.0
        %2779 = vmatpush1.xpose.msra.mxu0 0.0
        %2780 = vmatprep.subr.mxu0 0.0
        %2781 = vmatpush1.xpose.msra.mxu0 0.0
        %2782 = vmatprep.subr.mxu0 0.0
        %2783 = vmatpush1.xpose.msra.mxu0 0.0
        %2784 = vmatprep.subr.mxu0 0.0
        %2785 = vmatpush1.xpose.msra.mxu0 0.0
        %2786 = vmatprep.subr.mxu0 0.0
        %2787 = vmatpush1.xpose.msra.mxu0 0.0
        %2788 = vmatprep.subr.mxu0 0.0
        %2789 = vmatpush1.xpose.msra.mxu0 0.0
        %2790 = vmatprep.subr.mxu0 0.0
        %2791 = vmatpush1.xpose.msra.mxu0 0.0
        %2792 = vmatprep.subr.mxu0 0.0
        %2793 = vmatpush1.xpose.msra.mxu0 0.0
        %2794 = vmatprep.subr.mxu0 0.0
        %2795 = vmatpush1.xpose.msra.mxu0 0.0
        %2796 = vmatprep.subr.mxu0 0.0
        %2797 = vmatpush1.xpose.msra.mxu0 0.0
        %2798 = vmatprep.subr.mxu0 0.0
        %2799 = vmatpush1.xpose.msra.mxu0 0.0
        %2800 = vmatprep.subr.mxu0 0.0
        %2801 = vmatpush1.xpose.msra.mxu0 0.0
        %2802 = vmatprep.subr.mxu0 0.0
        %2803 = vmatpush1.xpose.msra.mxu0 0.0
        %2804 = vmatprep.subr.mxu0 0.0
        %2805 = vmatpush1.xpose.msra.mxu0 0.0
        %2806 = vmatprep.subr.mxu0 0.0
        %2807 = vmatpush1.xpose.msra.mxu0 0.0
        %2808 = vmatprep.subr.mxu0 0.0
        %2809 = vmatpush1.xpose.msra.mxu0 0.0
        %2810 = vmatprep.subr.mxu0 0.0
        %2811 = vmatpush1.xpose.msra.mxu0 0.0
        %2812 = vmatprep.subr.mxu0 0.0
        %2813 = vmatpush1.xpose.msra.mxu0 0.0
        %2814 = vmatprep.mubr.f32.mxu0 %v983
        %2815 = vmatmul.mubr.f32.gmra.mrb[0].mxu0 %v981
        %v2816 = vpop.f32.mrb[0].mxu0
        %v2817 = vadd.f32 %v2747, %v2816
        %v2818 = vpop.f32.mrb[0].mxu0
        %2819 = vdwg.mxu0
        %2820 = vmatprep.subr.mxu0 %v357
        %2821 = vmatpush1.xpose.msra.mxu0 %v356
        %2822 = vmatprep.subr.mxu0 %v613
        %2823 = vmatpush1.xpose.msra.mxu0 %v612
        %2824 = vmatprep.subr.mxu0 0.0
        %2825 = vmatpush1.xpose.msra.mxu0 0.0
        %2826 = vmatprep.subr.mxu0 0.0
        %2827 = vmatpush1.xpose.msra.mxu0 0.0
        %2828 = vmatprep.subr.mxu0 0.0
        %2829 = vmatpush1.xpose.msra.mxu0 0.0
        %2830 = vmatprep.subr.mxu0 0.0
        %2831 = vmatpush1.xpose.msra.mxu0 0.0
        %2832 = vmatprep.subr.mxu0 0.0
        %2833 = vmatpush1.xpose.msra.mxu0 0.0
        %2834 = vmatprep.subr.mxu0 0.0
        %2835 = vmatpush1.xpose.msra.mxu0 0.0
        %2836 = vmatprep.subr.mxu0 0.0
        %2837 = vmatpush1.xpose.msra.mxu0 0.0
        %2838 = vmatprep.subr.mxu0 0.0
        %2839 = vmatpush1.xpose.msra.mxu0 0.0
        %2840 = vmatprep.subr.mxu0 0.0
        %2841 = vmatpush1.xpose.msra.mxu0 0.0
        %2842 = vmatprep.subr.mxu0 0.0
        %2843 = vmatpush1.xpose.msra.mxu0 0.0
        %2844 = vmatprep.subr.mxu0 0.0
        %2845 = vmatpush1.xpose.msra.mxu0 0.0
        %2846 = vmatprep.subr.mxu0 0.0
        %2847 = vmatpush1.xpose.msra.mxu0 0.0
        %2848 = vmatprep.subr.mxu0 0.0
        %2849 = vmatpush1.xpose.msra.mxu0 0.0
        %2850 = vmatprep.subr.mxu0 0.0
        %2851 = vmatpush1.xpose.msra.mxu0 0.0
        %2852 = vmatprep.subr.mxu0 0.0
        %2853 = vmatpush1.xpose.msra.mxu0 0.0
        %2854 = vmatprep.subr.mxu0 0.0
        %2855 = vmatpush1.xpose.msra.mxu0 0.0
        %2856 = vmatprep.subr.mxu0 0.0
        %2857 = vmatpush1.xpose.msra.mxu0 0.0
        %2858 = vmatprep.subr.mxu0 0.0
        %2859 = vmatpush1.xpose.msra.mxu0 0.0
        %2860 = vmatprep.subr.mxu0 0.0
        %2861 = vmatpush1.xpose.msra.mxu0 0.0
        %2862 = vmatprep.subr.mxu0 0.0
        %2863 = vmatpush1.xpose.msra.mxu0 0.0
        %2864 = vmatprep.subr.mxu0 0.0
        %2865 = vmatpush1.xpose.msra.mxu0 0.0
        %2866 = vmatprep.subr.mxu0 0.0
        %2867 = vmatpush1.xpose.msra.mxu0 0.0
        %2868 = vmatprep.subr.mxu0 0.0
        %2869 = vmatpush1.xpose.msra.mxu0 0.0
        %2870 = vmatprep.subr.mxu0 0.0
        %2871 = vmatpush1.xpose.msra.mxu0 0.0
        %2872 = vmatprep.subr.mxu0 0.0
        %2873 = vmatpush1.xpose.msra.mxu0 0.0
        %2874 = vmatprep.subr.mxu0 0.0
        %2875 = vmatpush1.xpose.msra.mxu0 0.0
        %2876 = vmatprep.subr.mxu0 0.0
        %2877 = vmatpush1.xpose.msra.mxu0 0.0
        %2878 = vmatprep.subr.mxu0 0.0
        %2879 = vmatpush1.xpose.msra.mxu0 0.0
        %2880 = vmatprep.subr.mxu0 0.0
        %2881 = vmatpush1.xpose.msra.mxu0 0.0
        %2882 = vmatprep.subr.mxu0 0.0
        %2883 = vmatpush1.xpose.msra.mxu0 0.0
        %2884 = vmatprep.mubr.f32.mxu0 %v999
        %2885 = vmatmul.mubr.f32.gmra.mrb[0].mxu0 %v991
        %v2886 = vpop.f32.mrb[0].mxu0
        %v2887 = vadd.f32 %v2817, %v2886
        %v2888 = vpop.f32.mrb[0].mxu0
        %2889 = vdwg.mxu0
        %2890 = vmatprep.subr.mxu0 %v359
        %2891 = vmatpush1.xpose.msra.mxu0 %v358
        %2892 = vmatprep.subr.mxu0 %v615
        %2893 = vmatpush1.xpose.msra.mxu0 %v614
        %2894 = vmatprep.subr.mxu0 0.0
        %2895 = vmatpush1.xpose.msra.mxu0 0.0
        %2896 = vmatprep.subr.mxu0 0.0
        %2897 = vmatpush1.xpose.msra.mxu0 0.0
        %2898 = vmatprep.subr.mxu0 0.0
        %2899 = vmatpush1.xpose.msra.mxu0 0.0
        %2900 = vmatprep.subr.mxu0 0.0
        %2901 = vmatpush1.xpose.msra.mxu0 0.0
        %2902 = vmatprep.subr.mxu0 0.0
        %2903 = vmatpush1.xpose.msra.mxu0 0.0
        %2904 = vmatprep.subr.mxu0 0.0
        %2905 = vmatpush1.xpose.msra.mxu0 0.0
        %2906 = vmatprep.subr.mxu0 0.0
        %2907 = vmatpush1.xpose.msra.mxu0 0.0
        %2908 = vmatprep.subr.mxu0 0.0
        %2909 = vmatpush1.xpose.msra.mxu0 0.0
        %2910 = vmatprep.subr.mxu0 0.0
        %2911 = vmatpush1.xpose.msra.mxu0 0.0
        %2912 = vmatprep.subr.mxu0 0.0
        %2913 = vmatpush1.xpose.msra.mxu0 0.0
        %2914 = vmatprep.subr.mxu0 0.0
        %2915 = vmatpush1.xpose.msra.mxu0 0.0
        %2916 = vmatprep.subr.mxu0 0.0
        %2917 = vmatpush1.xpose.msra.mxu0 0.0
        %2918 = vmatprep.subr.mxu0 0.0
        %2919 = vmatpush1.xpose.msra.mxu0 0.0
        %2920 = vmatprep.subr.mxu0 0.0
        %2921 = vmatpush1.xpose.msra.mxu0 0.0
        %2922 = vmatprep.subr.mxu0 0.0
        %2923 = vmatpush1.xpose.msra.mxu0 0.0
        %2924 = vmatprep.subr.mxu0 0.0
        %2925 = vmatpush1.xpose.msra.mxu0 0.0
        %2926 = vmatprep.subr.mxu0 0.0
        %2927 = vmatpush1.xpose.msra.mxu0 0.0
        %2928 = vmatprep.subr.mxu0 0.0
        %2929 = vmatpush1.xpose.msra.mxu0 0.0
        %2930 = vmatprep.subr.mxu0 0.0
        %2931 = vmatpush1.xpose.msra.mxu0 0.0
        %2932 = vmatprep.subr.mxu0 0.0
        %2933 = vmatpush1.xpose.msra.mxu0 0.0
        %2934 = vmatprep.subr.mxu0 0.0
        %2935 = vmatpush1.xpose.msra.mxu0 0.0
        %2936 = vmatprep.subr.mxu0 0.0
        %2937 = vmatpush1.xpose.msra.mxu0 0.0
        %2938 = vmatprep.subr.mxu0 0.0
        %2939 = vmatpush1.xpose.msra.mxu0 0.0
        %2940 = vmatprep.subr.mxu0 0.0
        %2941 = vmatpush1.xpose.msra.mxu0 0.0
        %2942 = vmatprep.subr.mxu0 0.0
        %2943 = vmatpush1.xpose.msra.mxu0 0.0
        %2944 = vmatprep.subr.mxu0 0.0
        %2945 = vmatpush1.xpose.msra.mxu0 0.0
        %2946 = vmatprep.subr.mxu0 0.0
        %2947 = vmatpush1.xpose.msra.mxu0 0.0
        %2948 = vmatprep.subr.mxu0 0.0
        %2949 = vmatpush1.xpose.msra.mxu0 0.0
        %2950 = vmatprep.subr.mxu0 0.0
        %2951 = vmatpush1.xpose.msra.mxu0 0.0
        %2952 = vmatprep.subr.mxu0 0.0
        %2953 = vmatpush1.xpose.msra.mxu0 0.0
        %2954 = vmatprep.mubr.f32.mxu0 %v1000
        %2955 = vmatmul.mubr.f32.gmra.mrb[0].mxu0 %v998
        %v2956 = vpop.f32.mrb[0].mxu0
        %v2957 = vadd.f32 %v2887, %v2956
        %v2958 = vpop.f32.mrb[0].mxu0
        %2959 = vdwg.mxu0
        %2960 = vmatprep.subr.mxu0 %v361
        %2961 = vmatpush1.xpose.msra.mxu0 %v360
        %2962 = vmatprep.subr.mxu0 %v617
        %2963 = vmatpush1.xpose.msra.mxu0 %v616
        %2964 = vmatprep.subr.mxu0 0.0
        %2965 = vmatpush1.xpose.msra.mxu0 0.0
        %2966 = vmatprep.subr.mxu0 0.0
        %2967 = vmatpush1.xpose.msra.mxu0 0.0
        %2968 = vmatprep.subr.mxu0 0.0
        %2969 = vmatpush1.xpose.msra.mxu0 0.0
        %2970 = vmatprep.subr.mxu0 0.0
        %2971 = vmatpush1.xpose.msra.mxu0 0.0
        %2972 = vmatprep.subr.mxu0 0.0
        %2973 = vmatpush1.xpose.msra.mxu0 0.0
        %2974 = vmatprep.subr.mxu0 0.0
        %2975 = vmatpush1.xpose.msra.mxu0 0.0
        %2976 = vmatprep.subr.mxu0 0.0
        %2977 = vmatpush1.xpose.msra.mxu0 0.0
        %2978 = vmatprep.subr.mxu0 0.0
        %2979 = vmatpush1.xpose.msra.mxu0 0.0
        %2980 = vmatprep.subr.mxu0 0.0
        %2981 = vmatpush1.xpose.msra.mxu0 0.0
        %2982 = vmatprep.subr.mxu0 0.0
        %2983 = vmatpush1.xpose.msra.mxu0 0.0
        %2984 = vmatprep.subr.mxu0 0.0
        %2985 = vmatpush1.xpose.msra.mxu0 0.0
        %2986 = vmatprep.subr.mxu0 0.0
        %2987 = vmatpush1.xpose.msra.mxu0 0.0
        %2988 = vmatprep.subr.mxu0 0.0
        %2989 = vmatpush1.xpose.msra.mxu0 0.0
        %2990 = vmatprep.subr.mxu0 0.0
        %2991 = vmatpush1.xpose.msra.mxu0 0.0
        %2992 = vmatprep.subr.mxu0 0.0
        %2993 = vmatpush1.xpose.msra.mxu0 0.0
        %2994 = vmatprep.subr.mxu0 0.0
        %2995 = vmatpush1.xpose.msra.mxu0 0.0
        %2996 = vmatprep.subr.mxu0 0.0
        %2997 = vmatpush1.xpose.msra.mxu0 0.0
        %2998 = vmatprep.subr.mxu0 0.0
        %2999 = vmatpush1.xpose.msra.mxu0 0.0
        %3000 = vmatprep.subr.mxu0 0.0
        %3001 = vmatpush1.xpose.msra.mxu0 0.0
        %3002 = vmatprep.subr.mxu0 0.0
        %3003 = vmatpush1.xpose.msra.mxu0 0.0
        %3004 = vmatprep.subr.mxu0 0.0
        %3005 = vmatpush1.xpose.msra.mxu0 0.0
        %3006 = vmatprep.subr.mxu0 0.0
        %3007 = vmatpush1.xpose.msra.mxu0 0.0
        %3008 = vmatprep.subr.mxu0 0.0
        %3009 = vmatpush1.xpose.msra.mxu0 0.0
        %3010 = vmatprep.subr.mxu0 0.0
        %3011 = vmatpush1.xpose.msra.mxu0 0.0
        %3012 = vmatprep.subr.mxu0 0.0
        %3013 = vmatpush1.xpose.msra.mxu0 0.0
        %3014 = vmatprep.subr.mxu0 0.0
        %3015 = vmatpush1.xpose.msra.mxu0 0.0
        %3016 = vmatprep.subr.mxu0 0.0
        %3017 = vmatpush1.xpose.msra.mxu0 0.0
        %3018 = vmatprep.subr.mxu0 0.0
        %3019 = vmatpush1.xpose.msra.mxu0 0.0
        %3020 = vmatprep.subr.mxu0 0.0
        %3021 = vmatpush1.xpose.msra.mxu0 0.0
        %3022 = vmatprep.subr.mxu0 0.0
        %3023 = vmatpush1.xpose.msra.mxu0 0.0
        %3024 = vmatprep.mubr.f32.mxu0 %v1016
        %3025 = vmatmul.mubr.f32.gmra.mrb[0].mxu0 %v1008
        %v3026 = vpop.f32.mrb[0].mxu0
        %v3027 = vadd.f32 %v2957, %v3026
        %v3028 = vpop.f32.mrb[0].mxu0
        %3029 = vdwg.mxu0
        %3030 = vmatprep.subr.mxu0 %v363
        %3031 = vmatpush1.xpose.msra.mxu0 %v362
        %3032 = vmatprep.subr.mxu0 %v619
        %3033 = vmatpush1.xpose.msra.mxu0 %v618
        %3034 = vmatprep.subr.mxu0 0.0
        %3035 = vmatpush1.xpose.msra.mxu0 0.0
        %3036 = vmatprep.subr.mxu0 0.0
        %3037 = vmatpush1.xpose.msra.mxu0 0.0
        %3038 = vmatprep.subr.mxu0 0.0
        %3039 = vmatpush1.xpose.msra.mxu0 0.0
        %3040 = vmatprep.subr.mxu0 0.0
        %3041 = vmatpush1.xpose.msra.mxu0 0.0
        %3042 = vmatprep.subr.mxu0 0.0
        %3043 = vmatpush1.xpose.msra.mxu0 0.0
        %3044 = vmatprep.subr.mxu0 0.0
        %3045 = vmatpush1.xpose.msra.mxu0 0.0
        %3046 = vmatprep.subr.mxu0 0.0
        %3047 = vmatpush1.xpose.msra.mxu0 0.0
        %3048 = vmatprep.subr.mxu0 0.0
        %3049 = vmatpush1.xpose.msra.mxu0 0.0
        %3050 = vmatprep.subr.mxu0 0.0
        %3051 = vmatpush1.xpose.msra.mxu0 0.0
        %3052 = vmatprep.subr.mxu0 0.0
        %3053 = vmatpush1.xpose.msra.mxu0 0.0
        %3054 = vmatprep.subr.mxu0 0.0
        %3055 = vmatpush1.xpose.msra.mxu0 0.0
        %3056 = vmatprep.subr.mxu0 0.0
        %3057 = vmatpush1.xpose.msra.mxu0 0.0
        %3058 = vmatprep.subr.mxu0 0.0
        %3059 = vmatpush1.xpose.msra.mxu0 0.0
        %3060 = vmatprep.subr.mxu0 0.0
        %3061 = vmatpush1.xpose.msra.mxu0 0.0
        %3062 = vmatprep.subr.mxu0 0.0
        %3063 = vmatpush1.xpose.msra.mxu0 0.0
        %3064 = vmatprep.subr.mxu0 0.0
        %3065 = vmatpush1.xpose.msra.mxu0 0.0
        %3066 = vmatprep.subr.mxu0 0.0
        %3067 = vmatpush1.xpose.msra.mxu0 0.0
        %3068 = vmatprep.subr.mxu0 0.0
        %3069 = vmatpush1.xpose.msra.mxu0 0.0
        %3070 = vmatprep.subr.mxu0 0.0
        %3071 = vmatpush1.xpose.msra.mxu0 0.0
        %3072 = vmatprep.subr.mxu0 0.0
        %3073 = vmatpush1.xpose.msra.mxu0 0.0
        %3074 = vmatprep.subr.mxu0 0.0
        %3075 = vmatpush1.xpose.msra.mxu0 0.0
        %3076 = vmatprep.subr.mxu0 0.0
        %3077 = vmatpush1.xpose.msra.mxu0 0.0
        %3078 = vmatprep.subr.mxu0 0.0
        %3079 = vmatpush1.xpose.msra.mxu0 0.0
        %3080 = vmatprep.subr.mxu0 0.0
        %3081 = vmatpush1.xpose.msra.mxu0 0.0
        %3082 = vmatprep.subr.mxu0 0.0
        %3083 = vmatpush1.xpose.msra.mxu0 0.0
        %3084 = vmatprep.subr.mxu0 0.0
        %3085 = vmatpush1.xpose.msra.mxu0 0.0
        %3086 = vmatprep.subr.mxu0 0.0
        %3087 = vmatpush1.xpose.msra.mxu0 0.0
        %3088 = vmatprep.subr.mxu0 0.0
        %3089 = vmatpush1.xpose.msra.mxu0 0.0
        %3090 = vmatprep.subr.mxu0 0.0
        %3091 = vmatpush1.xpose.msra.mxu0 0.0
        %3092 = vmatprep.subr.mxu0 0.0
        %3093 = vmatpush1.xpose.msra.mxu0 0.0
        %3094 = vmatprep.mubr.f32.mxu0 %v1017
        %3095 = vmatmul.mubr.f32.gmra.mrb[0].mxu0 %v1015
        %v3096 = vpop.f32.mrb[0].mxu0
        %v3097 = vadd.f32 %v3027, %v3096
        %v3098 = vpop.f32.mrb[0].mxu0
        %3099 = vdwg.mxu0
        %3100 = vmatprep.subr.mxu0 %v365
        %3101 = vmatpush1.xpose.msra.mxu0 %v364
        %3102 = vmatprep.subr.mxu0 %v621
        %3103 = vmatpush1.xpose.msra.mxu0 %v620
        %3104 = vmatprep.subr.mxu0 0.0
        %3105 = vmatpush1.xpose.msra.mxu0 0.0
        %3106 = vmatprep.subr.mxu0 0.0
        %3107 = vmatpush1.xpose.msra.mxu0 0.0
        %3108 = vmatprep.subr.mxu0 0.0
        %3109 = vmatpush1.xpose.msra.mxu0 0.0
        %3110 = vmatprep.subr.mxu0 0.0
        %3111 = vmatpush1.xpose.msra.mxu0 0.0
        %3112 = vmatprep.subr.mxu0 0.0
        %3113 = vmatpush1.xpose.msra.mxu0 0.0
        %3114 = vmatprep.subr.mxu0 0.0
        %3115 = vmatpush1.xpose.msra.mxu0 0.0
        %3116 = vmatprep.subr.mxu0 0.0
        %3117 = vmatpush1.xpose.msra.mxu0 0.0
        %3118 = vmatprep.subr.mxu0 0.0
        %3119 = vmatpush1.xpose.msra.mxu0 0.0
        %3120 = vmatprep.subr.mxu0 0.0
        %3121 = vmatpush1.xpose.msra.mxu0 0.0
        %3122 = vmatprep.subr.mxu0 0.0
        %3123 = vmatpush1.xpose.msra.mxu0 0.0
        %3124 = vmatprep.subr.mxu0 0.0
        %3125 = vmatpush1.xpose.msra.mxu0 0.0
        %3126 = vmatprep.subr.mxu0 0.0
        %3127 = vmatpush1.xpose.msra.mxu0 0.0
        %3128 = vmatprep.subr.mxu0 0.0
        %3129 = vmatpush1.xpose.msra.mxu0 0.0
        %3130 = vmatprep.subr.mxu0 0.0
        %3131 = vmatpush1.xpose.msra.mxu0 0.0
        %3132 = vmatprep.subr.mxu0 0.0
        %3133 = vmatpush1.xpose.msra.mxu0 0.0
        %3134 = vmatprep.subr.mxu0 0.0
        %3135 = vmatpush1.xpose.msra.mxu0 0.0
        %3136 = vmatprep.subr.mxu0 0.0
        %3137 = vmatpush1.xpose.msra.mxu0 0.0
        %3138 = vmatprep.subr.mxu0 0.0
        %3139 = vmatpush1.xpose.msra.mxu0 0.0
        %3140 = vmatprep.subr.mxu0 0.0
        %3141 = vmatpush1.xpose.msra.mxu0 0.0
        %3142 = vmatprep.subr.mxu0 0.0
        %3143 = vmatpush1.xpose.msra.mxu0 0.0
        %3144 = vmatprep.subr.mxu0 0.0
        %3145 = vmatpush1.xpose.msra.mxu0 0.0
        %3146 = vmatprep.subr.mxu0 0.0
        %3147 = vmatpush1.xpose.msra.mxu0 0.0
        %3148 = vmatprep.subr.mxu0 0.0
        %3149 = vmatpush1.xpose.msra.mxu0 0.0
        %3150 = vmatprep.subr.mxu0 0.0
        %3151 = vmatpush1.xpose.msra.mxu0 0.0
        %3152 = vmatprep.subr.mxu0 0.0
        %3153 = vmatpush1.xpose.msra.mxu0 0.0
        %3154 = vmatprep.subr.mxu0 0.0
        %3155 = vmatpush1.xpose.msra.mxu0 0.0
        %3156 = vmatprep.subr.mxu0 0.0
        %3157 = vmatpush1.xpose.msra.mxu0 0.0
        %3158 = vmatprep.subr.mxu0 0.0
        %3159 = vmatpush1.xpose.msra.mxu0 0.0
        %3160 = vmatprep.subr.mxu0 0.0
        %3161 = vmatpush1.xpose.msra.mxu0 0.0
        %3162 = vmatprep.subr.mxu0 0.0
        %3163 = vmatpush1.xpose.msra.mxu0 0.0
        %3164 = vmatprep.mubr.f32.mxu0 %v1033
        %3165 = vmatmul.mubr.f32.gmra.mrb[0].mxu0 %v1025
        %v3166 = vpop.f32.mrb[0].mxu0
        %v3167 = vadd.f32 %v3097, %v3166
        %v3168 = vpop.f32.mrb[0].mxu0
        %3169 = vdwg.mxu0
        %3170 = vmatprep.subr.mxu0 %v367
        %3171 = vmatpush1.xpose.msra.mxu0 %v366
        %3172 = vmatprep.subr.mxu0 %v623
        %3173 = vmatpush1.xpose.msra.mxu0 %v622
        %3174 = vmatprep.subr.mxu0 0.0
        %3175 = vmatpush1.xpose.msra.mxu0 0.0
        %3176 = vmatprep.subr.mxu0 0.0
        %3177 = vmatpush1.xpose.msra.mxu0 0.0
        %3178 = vmatprep.subr.mxu0 0.0
        %3179 = vmatpush1.xpose.msra.mxu0 0.0
        %3180 = vmatprep.subr.mxu0 0.0
        %3181 = vmatpush1.xpose.msra.mxu0 0.0
        %3182 = vmatprep.subr.mxu0 0.0
        %3183 = vmatpush1.xpose.msra.mxu0 0.0
        %3184 = vmatprep.subr.mxu0 0.0
        %3185 = vmatpush1.xpose.msra.mxu0 0.0
        %3186 = vmatprep.subr.mxu0 0.0
        %3187 = vmatpush1.xpose.msra.mxu0 0.0
        %3188 = vmatprep.subr.mxu0 0.0
        %3189 = vmatpush1.xpose.msra.mxu0 0.0
        %3190 = vmatprep.subr.mxu0 0.0
        %3191 = vmatpush1.xpose.msra.mxu0 0.0
        %3192 = vmatprep.subr.mxu0 0.0
        %3193 = vmatpush1.xpose.msra.mxu0 0.0
        %3194 = vmatprep.subr.mxu0 0.0
        %3195 = vmatpush1.xpose.msra.mxu0 0.0
        %3196 = vmatprep.subr.mxu0 0.0
        %3197 = vmatpush1.xpose.msra.mxu0 0.0
        %3198 = vmatprep.subr.mxu0 0.0
        %3199 = vmatpush1.xpose.msra.mxu0 0.0
        %3200 = vmatprep.subr.mxu0 0.0
        %3201 = vmatpush1.xpose.msra.mxu0 0.0
        %3202 = vmatprep.subr.mxu0 0.0
        %3203 = vmatpush1.xpose.msra.mxu0 0.0
        %3204 = vmatprep.subr.mxu0 0.0
        %3205 = vmatpush1.xpose.msra.mxu0 0.0
        %3206 = vmatprep.subr.mxu0 0.0
        %3207 = vmatpush1.xpose.msra.mxu0 0.0
        %3208 = vmatprep.subr.mxu0 0.0
        %3209 = vmatpush1.xpose.msra.mxu0 0.0
        %3210 = vmatprep.subr.mxu0 0.0
        %3211 = vmatpush1.xpose.msra.mxu0 0.0
        %3212 = vmatprep.subr.mxu0 0.0
        %3213 = vmatpush1.xpose.msra.mxu0 0.0
        %3214 = vmatprep.subr.mxu0 0.0
        %3215 = vmatpush1.xpose.msra.mxu0 0.0
        %3216 = vmatprep.subr.mxu0 0.0
        %3217 = vmatpush1.xpose.msra.mxu0 0.0
        %3218 = vmatprep.subr.mxu0 0.0
        %3219 = vmatpush1.xpose.msra.mxu0 0.0
        %3220 = vmatprep.subr.mxu0 0.0
        %3221 = vmatpush1.xpose.msra.mxu0 0.0
        %3222 = vmatprep.subr.mxu0 0.0
        %3223 = vmatpush1.xpose.msra.mxu0 0.0
        %3224 = vmatprep.subr.mxu0 0.0
        %3225 = vmatpush1.xpose.msra.mxu0 0.0
        %3226 = vmatprep.subr.mxu0 0.0
        %3227 = vmatpush1.xpose.msra.mxu0 0.0
        %3228 = vmatprep.subr.mxu0 0.0
        %3229 = vmatpush1.xpose.msra.mxu0 0.0
        %3230 = vmatprep.subr.mxu0 0.0
        %3231 = vmatpush1.xpose.msra.mxu0 0.0
        %3232 = vmatprep.subr.mxu0 0.0
        %3233 = vmatpush1.xpose.msra.mxu0 0.0
        %3234 = vmatprep.mubr.f32.mxu0 %v1034
        %3235 = vmatmul.mubr.f32.gmra.mrb[0].mxu0 %v1032
        %v3236 = vpop.f32.mrb[0].mxu0
        %v3237 = vadd.f32 %v3167, %v3236
        %v3238 = vpop.f32.mrb[0].mxu0
        %3239 = vdwg.mxu0
        %3240 = vmatprep.subr.mxu0 %v369
        %3241 = vmatpush1.xpose.msra.mxu0 %v368
        %3242 = vmatprep.subr.mxu0 %v625
        %3243 = vmatpush1.xpose.msra.mxu0 %v624
        %3244 = vmatprep.subr.mxu0 0.0
        %3245 = vmatpush1.xpose.msra.mxu0 0.0
        %3246 = vmatprep.subr.mxu0 0.0
        %3247 = vmatpush1.xpose.msra.mxu0 0.0
        %3248 = vmatprep.subr.mxu0 0.0
        %3249 = vmatpush1.xpose.msra.mxu0 0.0
        %3250 = vmatprep.subr.mxu0 0.0
        %3251 = vmatpush1.xpose.msra.mxu0 0.0
        %3252 = vmatprep.subr.mxu0 0.0
        %3253 = vmatpush1.xpose.msra.mxu0 0.0
        %3254 = vmatprep.subr.mxu0 0.0
        %3255 = vmatpush1.xpose.msra.mxu0 0.0
        %3256 = vmatprep.subr.mxu0 0.0
        %3257 = vmatpush1.xpose.msra.mxu0 0.0
        %3258 = vmatprep.subr.mxu0 0.0
        %3259 = vmatpush1.xpose.msra.mxu0 0.0
        %3260 = vmatprep.subr.mxu0 0.0
        %3261 = vmatpush1.xpose.msra.mxu0 0.0
        %3262 = vmatprep.subr.mxu0 0.0
        %3263 = vmatpush1.xpose.msra.mxu0 0.0
        %3264 = vmatprep.subr.mxu0 0.0
        %3265 = vmatpush1.xpose.msra.mxu0 0.0
        %3266 = vmatprep.subr.mxu0 0.0
        %3267 = vmatpush1.xpose.msra.mxu0 0.0
        %3268 = vmatprep.subr.mxu0 0.0
        %3269 = vmatpush1.xpose.msra.mxu0 0.0
        %3270 = vmatprep.subr.mxu0 0.0
        %3271 = vmatpush1.xpose.msra.mxu0 0.0
        %3272 = vmatprep.subr.mxu0 0.0
        %3273 = vmatpush1.xpose.msra.mxu0 0.0
        %3274 = vmatprep.subr.mxu0 0.0
        %3275 = vmatpush1.xpose.msra.mxu0 0.0
        %3276 = vmatprep.subr.mxu0 0.0
        %3277 = vmatpush1.xpose.msra.mxu0 0.0
        %3278 = vmatprep.subr.mxu0 0.0
        %3279 = vmatpush1.xpose.msra.mxu0 0.0
        %3280 = vmatprep.subr.mxu0 0.0
        %3281 = vmatpush1.xpose.msra.mxu0 0.0
        %3282 = vmatprep.subr.mxu0 0.0
        %3283 = vmatpush1.xpose.msra.mxu0 0.0
        %3284 = vmatprep.subr.mxu0 0.0
        %3285 = vmatpush1.xpose.msra.mxu0 0.0
        %3286 = vmatprep.subr.mxu0 0.0
        %3287 = vmatpush1.xpose.msra.mxu0 0.0
        %3288 = vmatprep.subr.mxu0 0.0
        %3289 = vmatpush1.xpose.msra.mxu0 0.0
        %3290 = vmatprep.subr.mxu0 0.0
        %3291 = vmatpush1.xpose.msra.mxu0 0.0
        %3292 = vmatprep.subr.mxu0 0.0
        %3293 = vmatpush1.xpose.msra.mxu0 0.0
        %3294 = vmatprep.subr.mxu0 0.0
        %3295 = vmatpush1.xpose.msra.mxu0 0.0
        %3296 = vmatprep.subr.mxu0 0.0
        %3297 = vmatpush1.xpose.msra.mxu0 0.0
        %3298 = vmatprep.subr.mxu0 0.0
        %3299 = vmatpush1.xpose.msra.mxu0 0.0
        %3300 = vmatprep.subr.mxu0 0.0
        %3301 = vmatpush1.xpose.msra.mxu0 0.0
        %3302 = vmatprep.subr.mxu0 0.0
        %3303 = vmatpush1.xpose.msra.mxu0 0.0
        %3304 = vmatprep.mubr.f32.mxu0 %v1050
        %3305 = vmatmul.mubr.f32.gmra.mrb[0].mxu0 %v1042
        %v3306 = vpop.f32.mrb[0].mxu0
        %v3307 = vadd.f32 %v3237, %v3306
        %v3308 = vpop.f32.mrb[0].mxu0
        %3309 = vdwg.mxu0
        %3310 = vmatprep.subr.mxu0 %v371
        %3311 = vmatpush1.xpose.msra.mxu0 %v370
        %3312 = vmatprep.subr.mxu0 %v627
        %3313 = vmatpush1.xpose.msra.mxu0 %v626
        %3314 = vmatprep.subr.mxu0 0.0
        %3315 = vmatpush1.xpose.msra.mxu0 0.0
        %3316 = vmatprep.subr.mxu0 0.0
        %3317 = vmatpush1.xpose.msra.mxu0 0.0
        %3318 = vmatprep.subr.mxu0 0.0
        %3319 = vmatpush1.xpose.msra.mxu0 0.0
        %3320 = vmatprep.subr.mxu0 0.0
        %3321 = vmatpush1.xpose.msra.mxu0 0.0
        %3322 = vmatprep.subr.mxu0 0.0
        %3323 = vmatpush1.xpose.msra.mxu0 0.0
        %3324 = vmatprep.subr.mxu0 0.0
        %3325 = vmatpush1.xpose.msra.mxu0 0.0
        %3326 = vmatprep.subr.mxu0 0.0
        %3327 = vmatpush1.xpose.msra.mxu0 0.0
        %3328 = vmatprep.subr.mxu0 0.0
        %3329 = vmatpush1.xpose.msra.mxu0 0.0
        %3330 = vmatprep.subr.mxu0 0.0
        %3331 = vmatpush1.xpose.msra.mxu0 0.0
        %3332 = vmatprep.subr.mxu0 0.0
        %3333 = vmatpush1.xpose.msra.mxu0 0.0
        %3334 = vmatprep.subr.mxu0 0.0
        %3335 = vmatpush1.xpose.msra.mxu0 0.0
        %3336 = vmatprep.subr.mxu0 0.0
        %3337 = vmatpush1.xpose.msra.mxu0 0.0
        %3338 = vmatprep.subr.mxu0 0.0
        %3339 = vmatpush1.xpose.msra.mxu0 0.0
        %3340 = vmatprep.subr.mxu0 0.0
        %3341 = vmatpush1.xpose.msra.mxu0 0.0
        %3342 = vmatprep.subr.mxu0 0.0
        %3343 = vmatpush1.xpose.msra.mxu0 0.0
        %3344 = vmatprep.subr.mxu0 0.0
        %3345 = vmatpush1.xpose.msra.mxu0 0.0
        %3346 = vmatprep.subr.mxu0 0.0
        %3347 = vmatpush1.xpose.msra.mxu0 0.0
        %3348 = vmatprep.subr.mxu0 0.0
        %3349 = vmatpush1.xpose.msra.mxu0 0.0
        %3350 = vmatprep.subr.mxu0 0.0
        %3351 = vmatpush1.xpose.msra.mxu0 0.0
        %3352 = vmatprep.subr.mxu0 0.0
        %3353 = vmatpush1.xpose.msra.mxu0 0.0
        %3354 = vmatprep.subr.mxu0 0.0
        %3355 = vmatpush1.xpose.msra.mxu0 0.0
        %3356 = vmatprep.subr.mxu0 0.0
        %3357 = vmatpush1.xpose.msra.mxu0 0.0
        %3358 = vmatprep.subr.mxu0 0.0
        %3359 = vmatpush1.xpose.msra.mxu0 0.0
        %3360 = vmatprep.subr.mxu0 0.0
        %3361 = vmatpush1.xpose.msra.mxu0 0.0
        %3362 = vmatprep.subr.mxu0 0.0
        %3363 = vmatpush1.xpose.msra.mxu0 0.0
        %3364 = vmatprep.subr.mxu0 0.0
        %3365 = vmatpush1.xpose.msra.mxu0 0.0
        %3366 = vmatprep.subr.mxu0 0.0
        %3367 = vmatpush1.xpose.msra.mxu0 0.0
        %3368 = vmatprep.subr.mxu0 0.0
        %3369 = vmatpush1.xpose.msra.mxu0 0.0
        %3370 = vmatprep.subr.mxu0 0.0
        %3371 = vmatpush1.xpose.msra.mxu0 0.0
        %3372 = vmatprep.subr.mxu0 0.0
        %3373 = vmatpush1.xpose.msra.mxu0 0.0
        %3374 = vmatprep.mubr.f32.mxu0 %v1051
        %3375 = vmatmul.mubr.f32.gmra.mrb[0].mxu0 %v1049
        %v3376 = vpop.f32.mrb[0].mxu0
        %v3377 = vadd.f32 %v3307, %v3376
        %v3378 = vpop.f32.mrb[0].mxu0
        %3379 = vdwg.mxu0
        %3380 = vmatprep.subr.mxu0 %v373
        %3381 = vmatpush1.xpose.msra.mxu0 %v372
        %3382 = vmatprep.subr.mxu0 %v629
        %3383 = vmatpush1.xpose.msra.mxu0 %v628
        %3384 = vmatprep.subr.mxu0 0.0
        %3385 = vmatpush1.xpose.msra.mxu0 0.0
        %3386 = vmatprep.subr.mxu0 0.0
        %3387 = vmatpush1.xpose.msra.mxu0 0.0
        %3388 = vmatprep.subr.mxu0 0.0
        %3389 = vmatpush1.xpose.msra.mxu0 0.0
        %3390 = vmatprep.subr.mxu0 0.0
        %3391 = vmatpush1.xpose.msra.mxu0 0.0
        %3392 = vmatprep.subr.mxu0 0.0
        %3393 = vmatpush1.xpose.msra.mxu0 0.0
        %3394 = vmatprep.subr.mxu0 0.0
        %3395 = vmatpush1.xpose.msra.mxu0 0.0
        %3396 = vmatprep.subr.mxu0 0.0
        %3397 = vmatpush1.xpose.msra.mxu0 0.0
        %3398 = vmatprep.subr.mxu0 0.0
        %3399 = vmatpush1.xpose.msra.mxu0 0.0
        %3400 = vmatprep.subr.mxu0 0.0
        %3401 = vmatpush1.xpose.msra.mxu0 0.0
        %3402 = vmatprep.subr.mxu0 0.0
        %3403 = vmatpush1.xpose.msra.mxu0 0.0
        %3404 = vmatprep.subr.mxu0 0.0
        %3405 = vmatpush1.xpose.msra.mxu0 0.0
        %3406 = vmatprep.subr.mxu0 0.0
        %3407 = vmatpush1.xpose.msra.mxu0 0.0
        %3408 = vmatprep.subr.mxu0 0.0
        %3409 = vmatpush1.xpose.msra.mxu0 0.0
        %3410 = vmatprep.subr.mxu0 0.0
        %3411 = vmatpush1.xpose.msra.mxu0 0.0
        %3412 = vmatprep.subr.mxu0 0.0
        %3413 = vmatpush1.xpose.msra.mxu0 0.0
        %3414 = vmatprep.subr.mxu0 0.0
        %3415 = vmatpush1.xpose.msra.mxu0 0.0
        %3416 = vmatprep.subr.mxu0 0.0
        %3417 = vmatpush1.xpose.msra.mxu0 0.0
        %3418 = vmatprep.subr.mxu0 0.0
        %3419 = vmatpush1.xpose.msra.mxu0 0.0
        %3420 = vmatprep.subr.mxu0 0.0
        %3421 = vmatpush1.xpose.msra.mxu0 0.0
        %3422 = vmatprep.subr.mxu0 0.0
        %3423 = vmatpush1.xpose.msra.mxu0 0.0
        %3424 = vmatprep.subr.mxu0 0.0
        %3425 = vmatpush1.xpose.msra.mxu0 0.0
        %3426 = vmatprep.subr.mxu0 0.0
        %3427 = vmatpush1.xpose.msra.mxu0 0.0
        %3428 = vmatprep.subr.mxu0 0.0
        %3429 = vmatpush1.xpose.msra.mxu0 0.0
        %3430 = vmatprep.subr.mxu0 0.0
        %3431 = vmatpush1.xpose.msra.mxu0 0.0
        %3432 = vmatprep.subr.mxu0 0.0
        %3433 = vmatpush1.xpose.msra.mxu0 0.0
        %3434 = vmatprep.subr.mxu0 0.0
        %3435 = vmatpush1.xpose.msra.mxu0 0.0
        %3436 = vmatprep.subr.mxu0 0.0
        %3437 = vmatpush1.xpose.msra.mxu0 0.0
        %3438 = vmatprep.subr.mxu0 0.0
        %3439 = vmatpush1.xpose.msra.mxu0 0.0
        %3440 = vmatprep.subr.mxu0 0.0
        %3441 = vmatpush1.xpose.msra.mxu0 0.0
        %3442 = vmatprep.subr.mxu0 0.0
        %3443 = vmatpush1.xpose.msra.mxu0 0.0
        %3444 = vmatprep.mubr.f32.mxu0 %v1067
        %3445 = vmatmul.mubr.f32.gmra.mrb[0].mxu0 %v1059
        %v3446 = vpop.f32.mrb[0].mxu0
        %v3447 = vadd.f32 %v3377, %v3446
        %v3448 = vpop.f32.mrb[0].mxu0
        %3449 = vdwg.mxu0
        %3450 = vmatprep.subr.mxu0 %v375
        %3451 = vmatpush1.xpose.msra.mxu0 %v374
        %3452 = vmatprep.subr.mxu0 %v631
        %3453 = vmatpush1.xpose.msra.mxu0 %v630
        %3454 = vmatprep.subr.mxu0 0.0
        %3455 = vmatpush1.xpose.msra.mxu0 0.0
        %3456 = vmatprep.subr.mxu0 0.0
        %3457 = vmatpush1.xpose.msra.mxu0 0.0
        %3458 = vmatprep.subr.mxu0 0.0
        %3459 = vmatpush1.xpose.msra.mxu0 0.0
        %3460 = vmatprep.subr.mxu0 0.0
        %3461 = vmatpush1.xpose.msra.mxu0 0.0
        %3462 = vmatprep.subr.mxu0 0.0
        %3463 = vmatpush1.xpose.msra.mxu0 0.0
        %3464 = vmatprep.subr.mxu0 0.0
        %3465 = vmatpush1.xpose.msra.mxu0 0.0
        %3466 = vmatprep.subr.mxu0 0.0
        %3467 = vmatpush1.xpose.msra.mxu0 0.0
        %3468 = vmatprep.subr.mxu0 0.0
        %3469 = vmatpush1.xpose.msra.mxu0 0.0
        %3470 = vmatprep.subr.mxu0 0.0
        %3471 = vmatpush1.xpose.msra.mxu0 0.0
        %3472 = vmatprep.subr.mxu0 0.0
        %3473 = vmatpush1.xpose.msra.mxu0 0.0
        %3474 = vmatprep.subr.mxu0 0.0
        %3475 = vmatpush1.xpose.msra.mxu0 0.0
        %3476 = vmatprep.subr.mxu0 0.0
        %3477 = vmatpush1.xpose.msra.mxu0 0.0
        %3478 = vmatprep.subr.mxu0 0.0
        %3479 = vmatpush1.xpose.msra.mxu0 0.0
        %3480 = vmatprep.subr.mxu0 0.0
        %3481 = vmatpush1.xpose.msra.mxu0 0.0
        %3482 = vmatprep.subr.mxu0 0.0
        %3483 = vmatpush1.xpose.msra.mxu0 0.0
        %3484 = vmatprep.subr.mxu0 0.0
        %3485 = vmatpush1.xpose.msra.mxu0 0.0
        %3486 = vmatprep.subr.mxu0 0.0
        %3487 = vmatpush1.xpose.msra.mxu0 0.0
        %3488 = vmatprep.subr.mxu0 0.0
        %3489 = vmatpush1.xpose.msra.mxu0 0.0
        %3490 = vmatprep.subr.mxu0 0.0
        %3491 = vmatpush1.xpose.msra.mxu0 0.0
        %3492 = vmatprep.subr.mxu0 0.0
        %3493 = vmatpush1.xpose.msra.mxu0 0.0
        %3494 = vmatprep.subr.mxu0 0.0
        %3495 = vmatpush1.xpose.msra.mxu0 0.0
        %3496 = vmatprep.subr.mxu0 0.0
        %3497 = vmatpush1.xpose.msra.mxu0 0.0
        %3498 = vmatprep.subr.mxu0 0.0
        %3499 = vmatpush1.xpose.msra.mxu0 0.0
        %3500 = vmatprep.subr.mxu0 0.0
        %3501 = vmatpush1.xpose.msra.mxu0 0.0
        %3502 = vmatprep.subr.mxu0 0.0
        %3503 = vmatpush1.xpose.msra.mxu0 0.0
        %3504 = vmatprep.subr.mxu0 0.0
        %3505 = vmatpush1.xpose.msra.mxu0 0.0
        %3506 = vmatprep.subr.mxu0 0.0
        %3507 = vmatpush1.xpose.msra.mxu0 0.0
        %3508 = vmatprep.subr.mxu0 0.0
        %3509 = vmatpush1.xpose.msra.mxu0 0.0
        %3510 = vmatprep.subr.mxu0 0.0
        %3511 = vmatpush1.xpose.msra.mxu0 0.0
        %3512 = vmatprep.subr.mxu0 0.0
        %3513 = vmatpush1.xpose.msra.mxu0 0.0
        %3514 = vmatprep.mubr.f32.mxu0 %v1068
        %3515 = vmatmul.mubr.f32.gmra.mrb[0].mxu0 %v1066
        %v3516 = vpop.f32.mrb[0].mxu0
        %v3517 = vadd.f32 %v3447, %v3516
        %v3518 = vpop.f32.mrb[0].mxu0
        %3519 = vdwg.mxu0
        %3520 = vmatprep.subr.mxu0 %v377
        %3521 = vmatpush1.xpose.msra.mxu0 %v376
        %3522 = vmatprep.subr.mxu0 %v633
        %3523 = vmatpush1.xpose.msra.mxu0 %v632
        %3524 = vmatprep.subr.mxu0 0.0
        %3525 = vmatpush1.xpose.msra.mxu0 0.0
        %3526 = vmatprep.subr.mxu0 0.0
        %3527 = vmatpush1.xpose.msra.mxu0 0.0
        %3528 = vmatprep.subr.mxu0 0.0
        %3529 = vmatpush1.xpose.msra.mxu0 0.0
        %3530 = vmatprep.subr.mxu0 0.0
        %3531 = vmatpush1.xpose.msra.mxu0 0.0
        %3532 = vmatprep.subr.mxu0 0.0
        %3533 = vmatpush1.xpose.msra.mxu0 0.0
        %3534 = vmatprep.subr.mxu0 0.0
        %3535 = vmatpush1.xpose.msra.mxu0 0.0
        %3536 = vmatprep.subr.mxu0 0.0
        %3537 = vmatpush1.xpose.msra.mxu0 0.0
        %3538 = vmatprep.subr.mxu0 0.0
        %3539 = vmatpush1.xpose.msra.mxu0 0.0
        %3540 = vmatprep.subr.mxu0 0.0
        %3541 = vmatpush1.xpose.msra.mxu0 0.0
        %3542 = vmatprep.subr.mxu0 0.0
        %3543 = vmatpush1.xpose.msra.mxu0 0.0
        %3544 = vmatprep.subr.mxu0 0.0
        %3545 = vmatpush1.xpose.msra.mxu0 0.0
        %3546 = vmatprep.subr.mxu0 0.0
        %3547 = vmatpush1.xpose.msra.mxu0 0.0
        %3548 = vmatprep.subr.mxu0 0.0
        %3549 = vmatpush1.xpose.msra.mxu0 0.0
        %3550 = vmatprep.subr.mxu0 0.0
        %3551 = vmatpush1.xpose.msra.mxu0 0.0
        %3552 = vmatprep.subr.mxu0 0.0
        %3553 = vmatpush1.xpose.msra.mxu0 0.0
        %3554 = vmatprep.subr.mxu0 0.0
        %3555 = vmatpush1.xpose.msra.mxu0 0.0
        %3556 = vmatprep.subr.mxu0 0.0
        %3557 = vmatpush1.xpose.msra.mxu0 0.0
        %3558 = vmatprep.subr.mxu0 0.0
        %3559 = vmatpush1.xpose.msra.mxu0 0.0
        %3560 = vmatprep.subr.mxu0 0.0
        %3561 = vmatpush1.xpose.msra.mxu0 0.0
        %3562 = vmatprep.subr.mxu0 0.0
        %3563 = vmatpush1.xpose.msra.mxu0 0.0
        %3564 = vmatprep.subr.mxu0 0.0
        %3565 = vmatpush1.xpose.msra.mxu0 0.0
        %3566 = vmatprep.subr.mxu0 0.0
        %3567 = vmatpush1.xpose.msra.mxu0 0.0
        %3568 = vmatprep.subr.mxu0 0.0
        %3569 = vmatpush1.xpose.msra.mxu0 0.0
        %3570 = vmatprep.subr.mxu0 0.0
        %3571 = vmatpush1.xpose.msra.mxu0 0.0
        %3572 = vmatprep.subr.mxu0 0.0
        %3573 = vmatpush1.xpose.msra.mxu0 0.0
        %3574 = vmatprep.subr.mxu0 0.0
        %3575 = vmatpush1.xpose.msra.mxu0 0.0
        %3576 = vmatprep.subr.mxu0 0.0
        %3577 = vmatpush1.xpose.msra.mxu0 0.0
        %3578 = vmatprep.subr.mxu0 0.0
        %3579 = vmatpush1.xpose.msra.mxu0 0.0
        %3580 = vmatprep.subr.mxu0 0.0
        %3581 = vmatpush1.xpose.msra.mxu0 0.0
        %3582 = vmatprep.subr.mxu0 0.0
        %3583 = vmatpush1.xpose.msra.mxu0 0.0
        %3584 = vmatprep.mubr.f32.mxu0 %v1084
        %3585 = vmatmul.mubr.f32.gmra.mrb[0].mxu0 %v1076
        %v3586 = vpop.f32.mrb[0].mxu0
        %v3587 = vadd.f32 %v3517, %v3586
        %v3588 = vpop.f32.mrb[0].mxu0
        %3589 = vdwg.mxu0
        %3590 = vmatprep.subr.mxu0 %v379
        %3591 = vmatpush1.xpose.msra.mxu0 %v378
        %3592 = vmatprep.subr.mxu0 %v635
        %3593 = vmatpush1.xpose.msra.mxu0 %v634
        %3594 = vmatprep.subr.mxu0 0.0
        %3595 = vmatpush1.xpose.msra.mxu0 0.0
        %3596 = vmatprep.subr.mxu0 0.0
        %3597 = vmatpush1.xpose.msra.mxu0 0.0
        %3598 = vmatprep.subr.mxu0 0.0
        %3599 = vmatpush1.xpose.msra.mxu0 0.0
        %3600 = vmatprep.subr.mxu0 0.0
        %3601 = vmatpush1.xpose.msra.mxu0 0.0
        %3602 = vmatprep.subr.mxu0 0.0
        %3603 = vmatpush1.xpose.msra.mxu0 0.0
        %3604 = vmatprep.subr.mxu0 0.0
        %3605 = vmatpush1.xpose.msra.mxu0 0.0
        %3606 = vmatprep.subr.mxu0 0.0
        %3607 = vmatpush1.xpose.msra.mxu0 0.0
        %3608 = vmatprep.subr.mxu0 0.0
        %3609 = vmatpush1.xpose.msra.mxu0 0.0
        %3610 = vmatprep.subr.mxu0 0.0
        %3611 = vmatpush1.xpose.msra.mxu0 0.0
        %3612 = vmatprep.subr.mxu0 0.0
        %3613 = vmatpush1.xpose.msra.mxu0 0.0
        %3614 = vmatprep.subr.mxu0 0.0
        %3615 = vmatpush1.xpose.msra.mxu0 0.0
        %3616 = vmatprep.subr.mxu0 0.0
        %3617 = vmatpush1.xpose.msra.mxu0 0.0
        %3618 = vmatprep.subr.mxu0 0.0
        %3619 = vmatpush1.xpose.msra.mxu0 0.0
        %3620 = vmatprep.subr.mxu0 0.0
        %3621 = vmatpush1.xpose.msra.mxu0 0.0
        %3622 = vmatprep.subr.mxu0 0.0
        %3623 = vmatpush1.xpose.msra.mxu0 0.0
        %3624 = vmatprep.subr.mxu0 0.0
        %3625 = vmatpush1.xpose.msra.mxu0 0.0
        %3626 = vmatprep.subr.mxu0 0.0
        %3627 = vmatpush1.xpose.msra.mxu0 0.0
        %3628 = vmatprep.subr.mxu0 0.0
        %3629 = vmatpush1.xpose.msra.mxu0 0.0
        %3630 = vmatprep.subr.mxu0 0.0
        %3631 = vmatpush1.xpose.msra.mxu0 0.0
        %3632 = vmatprep.subr.mxu0 0.0
        %3633 = vmatpush1.xpose.msra.mxu0 0.0
        %3634 = vmatprep.subr.mxu0 0.0
        %3635 = vmatpush1.xpose.msra.mxu0 0.0
        %3636 = vmatprep.subr.mxu0 0.0
        %3637 = vmatpush1.xpose.msra.mxu0 0.0
        %3638 = vmatprep.subr.mxu0 0.0
        %3639 = vmatpush1.xpose.msra.mxu0 0.0
        %3640 = vmatprep.subr.mxu0 0.0
        %3641 = vmatpush1.xpose.msra.mxu0 0.0
        %3642 = vmatprep.subr.mxu0 0.0
        %3643 = vmatpush1.xpose.msra.mxu0 0.0
        %3644 = vmatprep.subr.mxu0 0.0
        %3645 = vmatpush1.xpose.msra.mxu0 0.0
        %3646 = vmatprep.subr.mxu0 0.0
        %3647 = vmatpush1.xpose.msra.mxu0 0.0
        %3648 = vmatprep.subr.mxu0 0.0
        %3649 = vmatpush1.xpose.msra.mxu0 0.0
        %3650 = vmatprep.subr.mxu0 0.0
        %3651 = vmatpush1.xpose.msra.mxu0 0.0
        %3652 = vmatprep.subr.mxu0 0.0
        %3653 = vmatpush1.xpose.msra.mxu0 0.0
        %3654 = vmatprep.mubr.f32.mxu0 %v1085
        %3655 = vmatmul.mubr.f32.gmra.mrb[0].mxu0 %v1083
        %v3656 = vpop.f32.mrb[0].mxu0
        %v3657 = vadd.f32 %v3587, %v3656
        %v3658 = vpop.f32.mrb[0].mxu0
        %3659 = vdwg.mxu0
        %3660 = vmatprep.subr.mxu0 %v381
        %3661 = vmatpush1.xpose.msra.mxu0 %v380
        %3662 = vmatprep.subr.mxu0 %v637
        %3663 = vmatpush1.xpose.msra.mxu0 %v636
        %3664 = vmatprep.subr.mxu0 0.0
        %3665 = vmatpush1.xpose.msra.mxu0 0.0
        %3666 = vmatprep.subr.mxu0 0.0
        %3667 = vmatpush1.xpose.msra.mxu0 0.0
        %3668 = vmatprep.subr.mxu0 0.0
        %3669 = vmatpush1.xpose.msra.mxu0 0.0
        %3670 = vmatprep.subr.mxu0 0.0
        %3671 = vmatpush1.xpose.msra.mxu0 0.0
        %3672 = vmatprep.subr.mxu0 0.0
        %3673 = vmatpush1.xpose.msra.mxu0 0.0
        %3674 = vmatprep.subr.mxu0 0.0
        %3675 = vmatpush1.xpose.msra.mxu0 0.0
        %3676 = vmatprep.subr.mxu0 0.0
        %3677 = vmatpush1.xpose.msra.mxu0 0.0
        %3678 = vmatprep.subr.mxu0 0.0
        %3679 = vmatpush1.xpose.msra.mxu0 0.0
        %3680 = vmatprep.subr.mxu0 0.0
        %3681 = vmatpush1.xpose.msra.mxu0 0.0
        %3682 = vmatprep.subr.mxu0 0.0
        %3683 = vmatpush1.xpose.msra.mxu0 0.0
        %3684 = vmatprep.subr.mxu0 0.0
        %3685 = vmatpush1.xpose.msra.mxu0 0.0
        %3686 = vmatprep.subr.mxu0 0.0
        %3687 = vmatpush1.xpose.msra.mxu0 0.0
        %3688 = vmatprep.subr.mxu0 0.0
        %3689 = vmatpush1.xpose.msra.mxu0 0.0
        %3690 = vmatprep.subr.mxu0 0.0
        %3691 = vmatpush1.xpose.msra.mxu0 0.0
        %3692 = vmatprep.subr.mxu0 0.0
        %3693 = vmatpush1.xpose.msra.mxu0 0.0
        %3694 = vmatprep.subr.mxu0 0.0
        %3695 = vmatpush1.xpose.msra.mxu0 0.0
        %3696 = vmatprep.subr.mxu0 0.0
        %3697 = vmatpush1.xpose.msra.mxu0 0.0
        %3698 = vmatprep.subr.mxu0 0.0
        %3699 = vmatpush1.xpose.msra.mxu0 0.0
        %3700 = vmatprep.subr.mxu0 0.0
        %3701 = vmatpush1.xpose.msra.mxu0 0.0
        %3702 = vmatprep.subr.mxu0 0.0
        %3703 = vmatpush1.xpose.msra.mxu0 0.0
        %3704 = vmatprep.subr.mxu0 0.0
        %3705 = vmatpush1.xpose.msra.mxu0 0.0
        %3706 = vmatprep.subr.mxu0 0.0
        %3707 = vmatpush1.xpose.msra.mxu0 0.0
        %3708 = vmatprep.subr.mxu0 0.0
        %3709 = vmatpush1.xpose.msra.mxu0 0.0
        %3710 = vmatprep.subr.mxu0 0.0
        %3711 = vmatpush1.xpose.msra.mxu0 0.0
        %3712 = vmatprep.subr.mxu0 0.0
        %3713 = vmatpush1.xpose.msra.mxu0 0.0
        %3714 = vmatprep.subr.mxu0 0.0
        %3715 = vmatpush1.xpose.msra.mxu0 0.0
        %3716 = vmatprep.subr.mxu0 0.0
        %3717 = vmatpush1.xpose.msra.mxu0 0.0
        %3718 = vmatprep.subr.mxu0 0.0
        %3719 = vmatpush1.xpose.msra.mxu0 0.0
        %3720 = vmatprep.subr.mxu0 0.0
        %3721 = vmatpush1.xpose.msra.mxu0 0.0
        %3722 = vmatprep.subr.mxu0 0.0
        %3723 = vmatpush1.xpose.msra.mxu0 0.0
        %3724 = vmatprep.mubr.f32.mxu0 %v1101
        %3725 = vmatmul.mubr.f32.gmra.mrb[0].mxu0 %v1093
        %v3726 = vpop.f32.mrb[0].mxu0
        %v3727 = vadd.f32 %v3657, %v3726
        %v3728 = vpop.f32.mrb[0].mxu0
        %3729 = vdwg.mxu0
        %3730 = vmatprep.subr.mxu0 %v383
        %3731 = vmatpush1.xpose.msra.mxu0 %v382
        %3732 = vmatprep.subr.mxu0 %v639
        %3733 = vmatpush1.xpose.msra.mxu0 %v638
        %3734 = vmatprep.subr.mxu0 0.0
        %3735 = vmatpush1.xpose.msra.mxu0 0.0
        %3736 = vmatprep.subr.mxu0 0.0
        %3737 = vmatpush1.xpose.msra.mxu0 0.0
        %3738 = vmatprep.subr.mxu0 0.0
        %3739 = vmatpush1.xpose.msra.mxu0 0.0
        %3740 = vmatprep.subr.mxu0 0.0
        %3741 = vmatpush1.xpose.msra.mxu0 0.0
        %3742 = vmatprep.subr.mxu0 0.0
        %3743 = vmatpush1.xpose.msra.mxu0 0.0
        %3744 = vmatprep.subr.mxu0 0.0
        %3745 = vmatpush1.xpose.msra.mxu0 0.0
        %3746 = vmatprep.subr.mxu0 0.0
        %3747 = vmatpush1.xpose.msra.mxu0 0.0
        %3748 = vmatprep.subr.mxu0 0.0
        %3749 = vmatpush1.xpose.msra.mxu0 0.0
        %3750 = vmatprep.subr.mxu0 0.0
        %3751 = vmatpush1.xpose.msra.mxu0 0.0
        %3752 = vmatprep.subr.mxu0 0.0
        %3753 = vmatpush1.xpose.msra.mxu0 0.0
        %3754 = vmatprep.subr.mxu0 0.0
        %3755 = vmatpush1.xpose.msra.mxu0 0.0
        %3756 = vmatprep.subr.mxu0 0.0
        %3757 = vmatpush1.xpose.msra.mxu0 0.0
        %3758 = vmatprep.subr.mxu0 0.0
        %3759 = vmatpush1.xpose.msra.mxu0 0.0
        %3760 = vmatprep.subr.mxu0 0.0
        %3761 = vmatpush1.xpose.msra.mxu0 0.0
        %3762 = vmatprep.subr.mxu0 0.0
        %3763 = vmatpush1.xpose.msra.mxu0 0.0
        %3764 = vmatprep.subr.mxu0 0.0
        %3765 = vmatpush1.xpose.msra.mxu0 0.0
        %3766 = vmatprep.subr.mxu0 0.0
        %3767 = vmatpush1.xpose.msra.mxu0 0.0
        %3768 = vmatprep.subr.mxu0 0.0
        %3769 = vmatpush1.xpose.msra.mxu0 0.0
        %3770 = vmatprep.subr.mxu0 0.0
        %3771 = vmatpush1.xpose.msra.mxu0 0.0
        %3772 = vmatprep.subr.mxu0 0.0
        %3773 = vmatpush1.xpose.msra.mxu0 0.0
        %3774 = vmatprep.subr.mxu0 0.0
        %3775 = vmatpush1.xpose.msra.mxu0 0.0
        %3776 = vmatprep.subr.mxu0 0.0
        %3777 = vmatpush1.xpose.msra.mxu0 0.0
        %3778 = vmatprep.subr.mxu0 0.0
        %3779 = vmatpush1.xpose.msra.mxu0 0.0
        %3780 = vmatprep.subr.mxu0 0.0
        %3781 = vmatpush1.xpose.msra.mxu0 0.0
        %3782 = vmatprep.subr.mxu0 0.0
        %3783 = vmatpush1.xpose.msra.mxu0 0.0
        %3784 = vmatprep.subr.mxu0 0.0
        %3785 = vmatpush1.xpose.msra.mxu0 0.0
        %3786 = vmatprep.subr.mxu0 0.0
        %3787 = vmatpush1.xpose.msra.mxu0 0.0
        %3788 = vmatprep.subr.mxu0 0.0
        %3789 = vmatpush1.xpose.msra.mxu0 0.0
        %3790 = vmatprep.subr.mxu0 0.0
        %3791 = vmatpush1.xpose.msra.mxu0 0.0
        %3792 = vmatprep.subr.mxu0 0.0
        %3793 = vmatpush1.xpose.msra.mxu0 0.0
        %3794 = vmatprep.mubr.f32.mxu0 %v1102
        %3795 = vmatmul.mubr.f32.gmra.mrb[0].mxu0 %v1100
        %v3796 = vpop.f32.mrb[0].mxu0
        %v3797 = vadd.f32 %v3727, %v3796
        %v3798 = vpop.f32.mrb[0].mxu0
        %3799 = vdwg.mxu0
        %3800 = vmatprep.subr.mxu0 %v385
        %3801 = vmatpush1.xpose.msra.mxu0 %v384
        %3802 = vmatprep.subr.mxu0 %v641
        %3803 = vmatpush1.xpose.msra.mxu0 %v640
        %3804 = vmatprep.subr.mxu0 0.0
        %3805 = vmatpush1.xpose.msra.mxu0 0.0
        %3806 = vmatprep.subr.mxu0 0.0
        %3807 = vmatpush1.xpose.msra.mxu0 0.0
        %3808 = vmatprep.subr.mxu0 0.0
        %3809 = vmatpush1.xpose.msra.mxu0 0.0
        %3810 = vmatprep.subr.mxu0 0.0
        %3811 = vmatpush1.xpose.msra.mxu0 0.0
        %3812 = vmatprep.subr.mxu0 0.0
        %3813 = vmatpush1.xpose.msra.mxu0 0.0
        %3814 = vmatprep.subr.mxu0 0.0
        %3815 = vmatpush1.xpose.msra.mxu0 0.0
        %3816 = vmatprep.subr.mxu0 0.0
        %3817 = vmatpush1.xpose.msra.mxu0 0.0
        %3818 = vmatprep.subr.mxu0 0.0
        %3819 = vmatpush1.xpose.msra.mxu0 0.0
        %3820 = vmatprep.subr.mxu0 0.0
        %3821 = vmatpush1.xpose.msra.mxu0 0.0
        %3822 = vmatprep.subr.mxu0 0.0
        %3823 = vmatpush1.xpose.msra.mxu0 0.0
        %3824 = vmatprep.subr.mxu0 0.0
        %3825 = vmatpush1.xpose.msra.mxu0 0.0
        %3826 = vmatprep.subr.mxu0 0.0
        %3827 = vmatpush1.xpose.msra.mxu0 0.0
        %3828 = vmatprep.subr.mxu0 0.0
        %3829 = vmatpush1.xpose.msra.mxu0 0.0
        %3830 = vmatprep.subr.mxu0 0.0
        %3831 = vmatpush1.xpose.msra.mxu0 0.0
        %3832 = vmatprep.subr.mxu0 0.0
        %3833 = vmatpush1.xpose.msra.mxu0 0.0
        %3834 = vmatprep.subr.mxu0 0.0
        %3835 = vmatpush1.xpose.msra.mxu0 0.0
        %3836 = vmatprep.subr.mxu0 0.0
        %3837 = vmatpush1.xpose.msra.mxu0 0.0
        %3838 = vmatprep.subr.mxu0 0.0
        %3839 = vmatpush1.xpose.msra.mxu0 0.0
        %3840 = vmatprep.subr.mxu0 0.0
        %3841 = vmatpush1.xpose.msra.mxu0 0.0
        %3842 = vmatprep.subr.mxu0 0.0
        %3843 = vmatpush1.xpose.msra.mxu0 0.0
        %3844 = vmatprep.subr.mxu0 0.0
        %3845 = vmatpush1.xpose.msra.mxu0 0.0
        %3846 = vmatprep.subr.mxu0 0.0
        %3847 = vmatpush1.xpose.msra.mxu0 0.0
        %3848 = vmatprep.subr.mxu0 0.0
        %3849 = vmatpush1.xpose.msra.mxu0 0.0
        %3850 = vmatprep.subr.mxu0 0.0
        %3851 = vmatpush1.xpose.msra.mxu0 0.0
        %3852 = vmatprep.subr.mxu0 0.0
        %3853 = vmatpush1.xpose.msra.mxu0 0.0
        %3854 = vmatprep.subr.mxu0 0.0
        %3855 = vmatpush1.xpose.msra.mxu0 0.0
        %3856 = vmatprep.subr.mxu0 0.0
        %3857 = vmatpush1.xpose.msra.mxu0 0.0
        %3858 = vmatprep.subr.mxu0 0.0
        %3859 = vmatpush1.xpose.msra.mxu0 0.0
        %3860 = vmatprep.subr.mxu0 0.0
        %3861 = vmatpush1.xpose.msra.mxu0 0.0
        %3862 = vmatprep.subr.mxu0 0.0
        %3863 = vmatpush1.xpose.msra.mxu0 0.0
        %3864 = vmatprep.mubr.f32.mxu0 %v1118
        %3865 = vmatmul.mubr.f32.gmra.mrb[0].mxu0 %v1110
        %v3866 = vpop.f32.mrb[0].mxu0
        %v3867 = vadd.f32 %v3797, %v3866
        %v3868 = vpop.f32.mrb[0].mxu0
        %3869 = vdwg.mxu0
        %3870 = vmatprep.subr.mxu0 %v387
        %3871 = vmatpush1.xpose.msra.mxu0 %v386
        %3872 = vmatprep.subr.mxu0 %v643
        %3873 = vmatpush1.xpose.msra.mxu0 %v642
        %3874 = vmatprep.subr.mxu0 0.0
        %3875 = vmatpush1.xpose.msra.mxu0 0.0
        %3876 = vmatprep.subr.mxu0 0.0
        %3877 = vmatpush1.xpose.msra.mxu0 0.0
        %3878 = vmatprep.subr.mxu0 0.0
        %3879 = vmatpush1.xpose.msra.mxu0 0.0
        %3880 = vmatprep.subr.mxu0 0.0
        %3881 = vmatpush1.xpose.msra.mxu0 0.0
        %3882 = vmatprep.subr.mxu0 0.0
        %3883 = vmatpush1.xpose.msra.mxu0 0.0
        %3884 = vmatprep.subr.mxu0 0.0
        %3885 = vmatpush1.xpose.msra.mxu0 0.0
        %3886 = vmatprep.subr.mxu0 0.0
        %3887 = vmatpush1.xpose.msra.mxu0 0.0
        %3888 = vmatprep.subr.mxu0 0.0
        %3889 = vmatpush1.xpose.msra.mxu0 0.0
        %3890 = vmatprep.subr.mxu0 0.0
        %3891 = vmatpush1.xpose.msra.mxu0 0.0
        %3892 = vmatprep.subr.mxu0 0.0
        %3893 = vmatpush1.xpose.msra.mxu0 0.0
        %3894 = vmatprep.subr.mxu0 0.0
        %3895 = vmatpush1.xpose.msra.mxu0 0.0
        %3896 = vmatprep.subr.mxu0 0.0
        %3897 = vmatpush1.xpose.msra.mxu0 0.0
        %3898 = vmatprep.subr.mxu0 0.0
        %3899 = vmatpush1.xpose.msra.mxu0 0.0
        %3900 = vmatprep.subr.mxu0 0.0
        %3901 = vmatpush1.xpose.msra.mxu0 0.0
        %3902 = vmatprep.subr.mxu0 0.0
        %3903 = vmatpush1.xpose.msra.mxu0 0.0
        %3904 = vmatprep.subr.mxu0 0.0
        %3905 = vmatpush1.xpose.msra.mxu0 0.0
        %3906 = vmatprep.subr.mxu0 0.0
        %3907 = vmatpush1.xpose.msra.mxu0 0.0
        %3908 = vmatprep.subr.mxu0 0.0
        %3909 = vmatpush1.xpose.msra.mxu0 0.0
        %3910 = vmatprep.subr.mxu0 0.0
        %3911 = vmatpush1.xpose.msra.mxu0 0.0
        %3912 = vmatprep.subr.mxu0 0.0
        %3913 = vmatpush1.xpose.msra.mxu0 0.0
        %3914 = vmatprep.subr.mxu0 0.0
        %3915 = vmatpush1.xpose.msra.mxu0 0.0
        %3916 = vmatprep.subr.mxu0 0.0
        %3917 = vmatpush1.xpose.msra.mxu0 0.0
        %3918 = vmatprep.subr.mxu0 0.0
        %3919 = vmatpush1.xpose.msra.mxu0 0.0
        %3920 = vmatprep.subr.mxu0 0.0
        %3921 = vmatpush1.xpose.msra.mxu0 0.0
        %3922 = vmatprep.subr.mxu0 0.0
        %3923 = vmatpush1.xpose.msra.mxu0 0.0
        %3924 = vmatprep.subr.mxu0 0.0
        %3925 = vmatpush1.xpose.msra.mxu0 0.0
        %3926 = vmatprep.subr.mxu0 0.0
        %3927 = vmatpush1.xpose.msra.mxu0 0.0
        %3928 = vmatprep.subr.mxu0 0.0
        %3929 = vmatpush1.xpose.msra.mxu0 0.0
        %3930 = vmatprep.subr.mxu0 0.0
        %3931 = vmatpush1.xpose.msra.mxu0 0.0
        %3932 = vmatprep.subr.mxu0 0.0
        %3933 = vmatpush1.xpose.msra.mxu0 0.0
        %3934 = vmatprep.mubr.f32.mxu0 %v1119
        %3935 = vmatmul.mubr.f32.gmra.mrb[0].mxu0 %v1117
        %v3936 = vpop.f32.mrb[0].mxu0
        %v3937 = vadd.f32 %v3867, %v3936
        %v3938 = vpop.f32.mrb[0].mxu0
        %3939 = vdwg.mxu0
        %3940 = vmatprep.subr.mxu0 %v389
        %3941 = vmatpush1.xpose.msra.mxu0 %v388
        %3942 = vmatprep.subr.mxu0 %v645
        %3943 = vmatpush1.xpose.msra.mxu0 %v644
        %3944 = vmatprep.subr.mxu0 0.0
        %3945 = vmatpush1.xpose.msra.mxu0 0.0
        %3946 = vmatprep.subr.mxu0 0.0
        %3947 = vmatpush1.xpose.msra.mxu0 0.0
        %3948 = vmatprep.subr.mxu0 0.0
        %3949 = vmatpush1.xpose.msra.mxu0 0.0
        %3950 = vmatprep.subr.mxu0 0.0
        %3951 = vmatpush1.xpose.msra.mxu0 0.0
        %3952 = vmatprep.subr.mxu0 0.0
        %3953 = vmatpush1.xpose.msra.mxu0 0.0
        %3954 = vmatprep.subr.mxu0 0.0
        %3955 = vmatpush1.xpose.msra.mxu0 0.0
        %3956 = vmatprep.subr.mxu0 0.0
        %3957 = vmatpush1.xpose.msra.mxu0 0.0
        %3958 = vmatprep.subr.mxu0 0.0
        %3959 = vmatpush1.xpose.msra.mxu0 0.0
        %3960 = vmatprep.subr.mxu0 0.0
        %3961 = vmatpush1.xpose.msra.mxu0 0.0
        %3962 = vmatprep.subr.mxu0 0.0
        %3963 = vmatpush1.xpose.msra.mxu0 0.0
        %3964 = vmatprep.subr.mxu0 0.0
        %3965 = vmatpush1.xpose.msra.mxu0 0.0
        %3966 = vmatprep.subr.mxu0 0.0
        %3967 = vmatpush1.xpose.msra.mxu0 0.0
        %3968 = vmatprep.subr.mxu0 0.0
        %3969 = vmatpush1.xpose.msra.mxu0 0.0
        %3970 = vmatprep.subr.mxu0 0.0
        %3971 = vmatpush1.xpose.msra.mxu0 0.0
        %3972 = vmatprep.subr.mxu0 0.0
        %3973 = vmatpush1.xpose.msra.mxu0 0.0
        %3974 = vmatprep.subr.mxu0 0.0
        %3975 = vmatpush1.xpose.msra.mxu0 0.0
        %3976 = vmatprep.subr.mxu0 0.0
        %3977 = vmatpush1.xpose.msra.mxu0 0.0
        %3978 = vmatprep.subr.mxu0 0.0
        %3979 = vmatpush1.xpose.msra.mxu0 0.0
        %3980 = vmatprep.subr.mxu0 0.0
        %3981 = vmatpush1.xpose.msra.mxu0 0.0
        %3982 = vmatprep.subr.mxu0 0.0
        %3983 = vmatpush1.xpose.msra.mxu0 0.0
        %3984 = vmatprep.subr.mxu0 0.0
        %3985 = vmatpush1.xpose.msra.mxu0 0.0
        %3986 = vmatprep.subr.mxu0 0.0
        %3987 = vmatpush1.xpose.msra.mxu0 0.0
        %3988 = vmatprep.subr.mxu0 0.0
        %3989 = vmatpush1.xpose.msra.mxu0 0.0
        %3990 = vmatprep.subr.mxu0 0.0
        %3991 = vmatpush1.xpose.msra.mxu0 0.0
        %3992 = vmatprep.subr.mxu0 0.0
        %3993 = vmatpush1.xpose.msra.mxu0 0.0
        %3994 = vmatprep.subr.mxu0 0.0
        %3995 = vmatpush1.xpose.msra.mxu0 0.0
        %3996 = vmatprep.subr.mxu0 0.0
        %3997 = vmatpush1.xpose.msra.mxu0 0.0
        %3998 = vmatprep.subr.mxu0 0.0
        %3999 = vmatpush1.xpose.msra.mxu0 0.0
        %4000 = vmatprep.subr.mxu0 0.0
        %4001 = vmatpush1.xpose.msra.mxu0 0.0
        %4002 = vmatprep.subr.mxu0 0.0
        %4003 = vmatpush1.xpose.msra.mxu0 0.0
        %4004 = vmatprep.mubr.f32.mxu0 %v1135
        %4005 = vmatmul.mubr.f32.gmra.mrb[0].mxu0 %v1127
        %v4006 = vpop.f32.mrb[0].mxu0
        %v4007 = vadd.f32 %v3937, %v4006
        %v4008 = vpop.f32.mrb[0].mxu0
        %4009 = vdwg.mxu0
        %4010 = vmatprep.subr.mxu0 %v391
        %4011 = vmatpush1.xpose.msra.mxu0 %v390
        %4012 = vmatprep.subr.mxu0 %v647
        %4013 = vmatpush1.xpose.msra.mxu0 %v646
        %4014 = vmatprep.subr.mxu0 0.0
        %4015 = vmatpush1.xpose.msra.mxu0 0.0
        %4016 = vmatprep.subr.mxu0 0.0
        %4017 = vmatpush1.xpose.msra.mxu0 0.0
        %4018 = vmatprep.subr.mxu0 0.0
        %4019 = vmatpush1.xpose.msra.mxu0 0.0
        %4020 = vmatprep.subr.mxu0 0.0
        %4021 = vmatpush1.xpose.msra.mxu0 0.0
        %4022 = vmatprep.subr.mxu0 0.0
        %4023 = vmatpush1.xpose.msra.mxu0 0.0
        %4024 = vmatprep.subr.mxu0 0.0
        %4025 = vmatpush1.xpose.msra.mxu0 0.0
        %4026 = vmatprep.subr.mxu0 0.0
        %4027 = vmatpush1.xpose.msra.mxu0 0.0
        %4028 = vmatprep.subr.mxu0 0.0
        %4029 = vmatpush1.xpose.msra.mxu0 0.0
        %4030 = vmatprep.subr.mxu0 0.0
        %4031 = vmatpush1.xpose.msra.mxu0 0.0
        %4032 = vmatprep.subr.mxu0 0.0
        %4033 = vmatpush1.xpose.msra.mxu0 0.0
        %4034 = vmatprep.subr.mxu0 0.0
        %4035 = vmatpush1.xpose.msra.mxu0 0.0
        %4036 = vmatprep.subr.mxu0 0.0
        %4037 = vmatpush1.xpose.msra.mxu0 0.0
        %4038 = vmatprep.subr.mxu0 0.0
        %4039 = vmatpush1.xpose.msra.mxu0 0.0
        %4040 = vmatprep.subr.mxu0 0.0
        %4041 = vmatpush1.xpose.msra.mxu0 0.0
        %4042 = vmatprep.subr.mxu0 0.0
        %4043 = vmatpush1.xpose.msra.mxu0 0.0
        %4044 = vmatprep.subr.mxu0 0.0
        %4045 = vmatpush1.xpose.msra.mxu0 0.0
        %4046 = vmatprep.subr.mxu0 0.0
        %4047 = vmatpush1.xpose.msra.mxu0 0.0
        %4048 = vmatprep.subr.mxu0 0.0
        %4049 = vmatpush1.xpose.msra.mxu0 0.0
        %4050 = vmatprep.subr.mxu0 0.0
        %4051 = vmatpush1.xpose.msra.mxu0 0.0
        %4052 = vmatprep.subr.mxu0 0.0
        %4053 = vmatpush1.xpose.msra.mxu0 0.0
        %4054 = vmatprep.subr.mxu0 0.0
        %4055 = vmatpush1.xpose.msra.mxu0 0.0
        %4056 = vmatprep.subr.mxu0 0.0
        %4057 = vmatpush1.xpose.msra.mxu0 0.0
        %4058 = vmatprep.subr.mxu0 0.0
        %4059 = vmatpush1.xpose.msra.mxu0 0.0
        %4060 = vmatprep.subr.mxu0 0.0
        %4061 = vmatpush1.xpose.msra.mxu0 0.0
        %4062 = vmatprep.subr.mxu0 0.0
        %4063 = vmatpush1.xpose.msra.mxu0 0.0
        %4064 = vmatprep.subr.mxu0 0.0
        %4065 = vmatpush1.xpose.msra.mxu0 0.0
        %4066 = vmatprep.subr.mxu0 0.0
        %4067 = vmatpush1.xpose.msra.mxu0 0.0
        %4068 = vmatprep.subr.mxu0 0.0
        %4069 = vmatpush1.xpose.msra.mxu0 0.0
        %4070 = vmatprep.subr.mxu0 0.0
        %4071 = vmatpush1.xpose.msra.mxu0 0.0
        %4072 = vmatprep.subr.mxu0 0.0
        %4073 = vmatpush1.xpose.msra.mxu0 0.0
        %4074 = vmatprep.mubr.f32.mxu0 %v1136
        %4075 = vmatmul.mubr.f32.gmra.mrb[0].mxu0 %v1134
        %v4076 = vpop.f32.mrb[0].mxu0
        %v4077 = vadd.f32 %v4007, %v4076
        %v4078 = vpop.f32.mrb[0].mxu0
        %4079 = vdwg.mxu0
        %4080 = vmatprep.subr.mxu0 %v393
        %4081 = vmatpush1.xpose.msra.mxu0 %v392
        %4082 = vmatprep.subr.mxu0 %v649
        %4083 = vmatpush1.xpose.msra.mxu0 %v648
        %4084 = vmatprep.subr.mxu0 0.0
        %4085 = vmatpush1.xpose.msra.mxu0 0.0
        %4086 = vmatprep.subr.mxu0 0.0
        %4087 = vmatpush1.xpose.msra.mxu0 0.0
        %4088 = vmatprep.subr.mxu0 0.0
        %4089 = vmatpush1.xpose.msra.mxu0 0.0
        %4090 = vmatprep.subr.mxu0 0.0
        %4091 = vmatpush1.xpose.msra.mxu0 0.0
        %4092 = vmatprep.subr.mxu0 0.0
        %4093 = vmatpush1.xpose.msra.mxu0 0.0
        %4094 = vmatprep.subr.mxu0 0.0
        %4095 = vmatpush1.xpose.msra.mxu0 0.0
        %4096 = vmatprep.subr.mxu0 0.0
        %4097 = vmatpush1.xpose.msra.mxu0 0.0
        %4098 = vmatprep.subr.mxu0 0.0
        %4099 = vmatpush1.xpose.msra.mxu0 0.0
        %4100 = vmatprep.subr.mxu0 0.0
        %4101 = vmatpush1.xpose.msra.mxu0 0.0
        %4102 = vmatprep.subr.mxu0 0.0
        %4103 = vmatpush1.xpose.msra.mxu0 0.0
        %4104 = vmatprep.subr.mxu0 0.0
        %4105 = vmatpush1.xpose.msra.mxu0 0.0
        %4106 = vmatprep.subr.mxu0 0.0
        %4107 = vmatpush1.xpose.msra.mxu0 0.0
        %4108 = vmatprep.subr.mxu0 0.0
        %4109 = vmatpush1.xpose.msra.mxu0 0.0
        %4110 = vmatprep.subr.mxu0 0.0
        %4111 = vmatpush1.xpose.msra.mxu0 0.0
        %4112 = vmatprep.subr.mxu0 0.0
        %4113 = vmatpush1.xpose.msra.mxu0 0.0
        %4114 = vmatprep.subr.mxu0 0.0
        %4115 = vmatpush1.xpose.msra.mxu0 0.0
        %4116 = vmatprep.subr.mxu0 0.0
        %4117 = vmatpush1.xpose.msra.mxu0 0.0
        %4118 = vmatprep.subr.mxu0 0.0
        %4119 = vmatpush1.xpose.msra.mxu0 0.0
        %4120 = vmatprep.subr.mxu0 0.0
        %4121 = vmatpush1.xpose.msra.mxu0 0.0
        %4122 = vmatprep.subr.mxu0 0.0
        %4123 = vmatpush1.xpose.msra.mxu0 0.0
        %4124 = vmatprep.subr.mxu0 0.0
        %4125 = vmatpush1.xpose.msra.mxu0 0.0
        %4126 = vmatprep.subr.mxu0 0.0
        %4127 = vmatpush1.xpose.msra.mxu0 0.0
        %4128 = vmatprep.subr.mxu0 0.0
        %4129 = vmatpush1.xpose.msra.mxu0 0.0
        %4130 = vmatprep.subr.mxu0 0.0
        %4131 = vmatpush1.xpose.msra.mxu0 0.0
        %4132 = vmatprep.subr.mxu0 0.0
        %4133 = vmatpush1.xpose.msra.mxu0 0.0
        %4134 = vmatprep.subr.mxu0 0.0
        %4135 = vmatpush1.xpose.msra.mxu0 0.0
        %4136 = vmatprep.subr.mxu0 0.0
        %4137 = vmatpush1.xpose.msra.mxu0 0.0
        %4138 = vmatprep.subr.mxu0 0.0
        %4139 = vmatpush1.xpose.msra.mxu0 0.0
        %4140 = vmatprep.subr.mxu0 0.0
        %4141 = vmatpush1.xpose.msra.mxu0 0.0
        %4142 = vmatprep.subr.mxu0 0.0
        %4143 = vmatpush1.xpose.msra.mxu0 0.0
        %4144 = vmatprep.mubr.f32.mxu0 %v1152
        %4145 = vmatmul.mubr.f32.gmra.mrb[0].mxu0 %v1144
        %v4146 = vpop.f32.mrb[0].mxu0
        %v4147 = vadd.f32 %v4077, %v4146
        %v4148 = vpop.f32.mrb[0].mxu0
        %4149 = vdwg.mxu0
        %4150 = vmatprep.subr.mxu0 %v395
        %4151 = vmatpush1.xpose.msra.mxu0 %v394
        %4152 = vmatprep.subr.mxu0 %v651
        %4153 = vmatpush1.xpose.msra.mxu0 %v650
        %4154 = vmatprep.subr.mxu0 0.0
        %4155 = vmatpush1.xpose.msra.mxu0 0.0
        %4156 = vmatprep.subr.mxu0 0.0
        %4157 = vmatpush1.xpose.msra.mxu0 0.0
        %4158 = vmatprep.subr.mxu0 0.0
        %4159 = vmatpush1.xpose.msra.mxu0 0.0
        %4160 = vmatprep.subr.mxu0 0.0
        %4161 = vmatpush1.xpose.msra.mxu0 0.0
        %4162 = vmatprep.subr.mxu0 0.0
        %4163 = vmatpush1.xpose.msra.mxu0 0.0
        %4164 = vmatprep.subr.mxu0 0.0
        %4165 = vmatpush1.xpose.msra.mxu0 0.0
        %4166 = vmatprep.subr.mxu0 0.0
        %4167 = vmatpush1.xpose.msra.mxu0 0.0
        %4168 = vmatprep.subr.mxu0 0.0
        %4169 = vmatpush1.xpose.msra.mxu0 0.0
        %4170 = vmatprep.subr.mxu0 0.0
        %4171 = vmatpush1.xpose.msra.mxu0 0.0
        %4172 = vmatprep.subr.mxu0 0.0
        %4173 = vmatpush1.xpose.msra.mxu0 0.0
        %4174 = vmatprep.subr.mxu0 0.0
        %4175 = vmatpush1.xpose.msra.mxu0 0.0
        %4176 = vmatprep.subr.mxu0 0.0
        %4177 = vmatpush1.xpose.msra.mxu0 0.0
        %4178 = vmatprep.subr.mxu0 0.0
        %4179 = vmatpush1.xpose.msra.mxu0 0.0
        %4180 = vmatprep.subr.mxu0 0.0
        %4181 = vmatpush1.xpose.msra.mxu0 0.0
        %4182 = vmatprep.subr.mxu0 0.0
        %4183 = vmatpush1.xpose.msra.mxu0 0.0
        %4184 = vmatprep.subr.mxu0 0.0
        %4185 = vmatpush1.xpose.msra.mxu0 0.0
        %4186 = vmatprep.subr.mxu0 0.0
        %4187 = vmatpush1.xpose.msra.mxu0 0.0
        %4188 = vmatprep.subr.mxu0 0.0
        %4189 = vmatpush1.xpose.msra.mxu0 0.0
        %4190 = vmatprep.subr.mxu0 0.0
        %4191 = vmatpush1.xpose.msra.mxu0 0.0
        %4192 = vmatprep.subr.mxu0 0.0
        %4193 = vmatpush1.xpose.msra.mxu0 0.0
        %4194 = vmatprep.subr.mxu0 0.0
        %4195 = vmatpush1.xpose.msra.mxu0 0.0
        %4196 = vmatprep.subr.mxu0 0.0
        %4197 = vmatpush1.xpose.msra.mxu0 0.0
        %4198 = vmatprep.subr.mxu0 0.0
        %4199 = vmatpush1.xpose.msra.mxu0 0.0
        %4200 = vmatprep.subr.mxu0 0.0
        %4201 = vmatpush1.xpose.msra.mxu0 0.0
        %4202 = vmatprep.subr.mxu0 0.0
        %4203 = vmatpush1.xpose.msra.mxu0 0.0
        %4204 = vmatprep.subr.mxu0 0.0
        %4205 = vmatpush1.xpose.msra.mxu0 0.0
        %4206 = vmatprep.subr.mxu0 0.0
        %4207 = vmatpush1.xpose.msra.mxu0 0.0
        %4208 = vmatprep.subr.mxu0 0.0
        %4209 = vmatpush1.xpose.msra.mxu0 0.0
        %4210 = vmatprep.subr.mxu0 0.0
        %4211 = vmatpush1.xpose.msra.mxu0 0.0
        %4212 = vmatprep.subr.mxu0 0.0
        %4213 = vmatpush1.xpose.msra.mxu0 0.0
        %4214 = vmatprep.mubr.f32.mxu0 %v1153
        %4215 = vmatmul.mubr.f32.gmra.mrb[0].mxu0 %v1151
        %v4216 = vpop.f32.mrb[0].mxu0
        %v4217 = vadd.f32 %v4147, %v4216
        %v4218 = vpop.f32.mrb[0].mxu0
        %4219 = vdwg.mxu0
        %4220 = vmatprep.subr.mxu0 %v397
        %4221 = vmatpush1.xpose.msra.mxu0 %v396
        %4222 = vmatprep.subr.mxu0 %v653
        %4223 = vmatpush1.xpose.msra.mxu0 %v652
        %4224 = vmatprep.subr.mxu0 0.0
        %4225 = vmatpush1.xpose.msra.mxu0 0.0
        %4226 = vmatprep.subr.mxu0 0.0
        %4227 = vmatpush1.xpose.msra.mxu0 0.0
        %4228 = vmatprep.subr.mxu0 0.0
        %4229 = vmatpush1.xpose.msra.mxu0 0.0
        %4230 = vmatprep.subr.mxu0 0.0
        %4231 = vmatpush1.xpose.msra.mxu0 0.0
        %4232 = vmatprep.subr.mxu0 0.0
        %4233 = vmatpush1.xpose.msra.mxu0 0.0
        %4234 = vmatprep.subr.mxu0 0.0
        %4235 = vmatpush1.xpose.msra.mxu0 0.0
        %4236 = vmatprep.subr.mxu0 0.0
        %4237 = vmatpush1.xpose.msra.mxu0 0.0
        %4238 = vmatprep.subr.mxu0 0.0
        %4239 = vmatpush1.xpose.msra.mxu0 0.0
        %4240 = vmatprep.subr.mxu0 0.0
        %4241 = vmatpush1.xpose.msra.mxu0 0.0
        %4242 = vmatprep.subr.mxu0 0.0
        %4243 = vmatpush1.xpose.msra.mxu0 0.0
        %4244 = vmatprep.subr.mxu0 0.0
        %4245 = vmatpush1.xpose.msra.mxu0 0.0
        %4246 = vmatprep.subr.mxu0 0.0
        %4247 = vmatpush1.xpose.msra.mxu0 0.0
        %4248 = vmatprep.subr.mxu0 0.0
        %4249 = vmatpush1.xpose.msra.mxu0 0.0
        %4250 = vmatprep.subr.mxu0 0.0
        %4251 = vmatpush1.xpose.msra.mxu0 0.0
        %4252 = vmatprep.subr.mxu0 0.0
        %4253 = vmatpush1.xpose.msra.mxu0 0.0
        %4254 = vmatprep.subr.mxu0 0.0
        %4255 = vmatpush1.xpose.msra.mxu0 0.0
        %4256 = vmatprep.subr.mxu0 0.0
        %4257 = vmatpush1.xpose.msra.mxu0 0.0
        %4258 = vmatprep.subr.mxu0 0.0
        %4259 = vmatpush1.xpose.msra.mxu0 0.0
        %4260 = vmatprep.subr.mxu0 0.0
        %4261 = vmatpush1.xpose.msra.mxu0 0.0
        %4262 = vmatprep.subr.mxu0 0.0
        %4263 = vmatpush1.xpose.msra.mxu0 0.0
        %4264 = vmatprep.subr.mxu0 0.0
        %4265 = vmatpush1.xpose.msra.mxu0 0.0
        %4266 = vmatprep.subr.mxu0 0.0
        %4267 = vmatpush1.xpose.msra.mxu0 0.0
        %4268 = vmatprep.subr.mxu0 0.0
        %4269 = vmatpush1.xpose.msra.mxu0 0.0
        %4270 = vmatprep.subr.mxu0 0.0
        %4271 = vmatpush1.xpose.msra.mxu0 0.0
        %4272 = vmatprep.subr.mxu0 0.0
        %4273 = vmatpush1.xpose.msra.mxu0 0.0
        %4274 = vmatprep.subr.mxu0 0.0
        %4275 = vmatpush1.xpose.msra.mxu0 0.0
        %4276 = vmatprep.subr.mxu0 0.0
        %4277 = vmatpush1.xpose.msra.mxu0 0.0
        %4278 = vmatprep.subr.mxu0 0.0
        %4279 = vmatpush1.xpose.msra.mxu0 0.0
        %4280 = vmatprep.subr.mxu0 0.0
        %4281 = vmatpush1.xpose.msra.mxu0 0.0
        %4282 = vmatprep.subr.mxu0 0.0
        %4283 = vmatpush1.xpose.msra.mxu0 0.0
        %4284 = vmatprep.mubr.f32.mxu0 %v1169
        %4285 = vmatmul.mubr.f32.gmra.mrb[0].mxu0 %v1161
        %v4286 = vpop.f32.mrb[0].mxu0
        %v4287 = vadd.f32 %v4217, %v4286
        %v4288 = vpop.f32.mrb[0].mxu0
        %4289 = vdwg.mxu0
        %4290 = vmatprep.subr.mxu0 %v399
        %4291 = vmatpush1.xpose.msra.mxu0 %v398
        %4292 = vmatprep.subr.mxu0 %v655
        %4293 = vmatpush1.xpose.msra.mxu0 %v654
        %4294 = vmatprep.subr.mxu0 0.0
        %4295 = vmatpush1.xpose.msra.mxu0 0.0
        %4296 = vmatprep.subr.mxu0 0.0
        %4297 = vmatpush1.xpose.msra.mxu0 0.0
        %4298 = vmatprep.subr.mxu0 0.0
        %4299 = vmatpush1.xpose.msra.mxu0 0.0
        %4300 = vmatprep.subr.mxu0 0.0
        %4301 = vmatpush1.xpose.msra.mxu0 0.0
        %4302 = vmatprep.subr.mxu0 0.0
        %4303 = vmatpush1.xpose.msra.mxu0 0.0
        %4304 = vmatprep.subr.mxu0 0.0
        %4305 = vmatpush1.xpose.msra.mxu0 0.0
        %4306 = vmatprep.subr.mxu0 0.0
        %4307 = vmatpush1.xpose.msra.mxu0 0.0
        %4308 = vmatprep.subr.mxu0 0.0
        %4309 = vmatpush1.xpose.msra.mxu0 0.0
        %4310 = vmatprep.subr.mxu0 0.0
        %4311 = vmatpush1.xpose.msra.mxu0 0.0
        %4312 = vmatprep.subr.mxu0 0.0
        %4313 = vmatpush1.xpose.msra.mxu0 0.0
        %4314 = vmatprep.subr.mxu0 0.0
        %4315 = vmatpush1.xpose.msra.mxu0 0.0
        %4316 = vmatprep.subr.mxu0 0.0
        %4317 = vmatpush1.xpose.msra.mxu0 0.0
        %4318 = vmatprep.subr.mxu0 0.0
        %4319 = vmatpush1.xpose.msra.mxu0 0.0
        %4320 = vmatprep.subr.mxu0 0.0
        %4321 = vmatpush1.xpose.msra.mxu0 0.0
        %4322 = vmatprep.subr.mxu0 0.0
        %4323 = vmatpush1.xpose.msra.mxu0 0.0
        %4324 = vmatprep.subr.mxu0 0.0
        %4325 = vmatpush1.xpose.msra.mxu0 0.0
        %4326 = vmatprep.subr.mxu0 0.0
        %4327 = vmatpush1.xpose.msra.mxu0 0.0
        %4328 = vmatprep.subr.mxu0 0.0
        %4329 = vmatpush1.xpose.msra.mxu0 0.0
        %4330 = vmatprep.subr.mxu0 0.0
        %4331 = vmatpush1.xpose.msra.mxu0 0.0
        %4332 = vmatprep.subr.mxu0 0.0
        %4333 = vmatpush1.xpose.msra.mxu0 0.0
        %4334 = vmatprep.subr.mxu0 0.0
        %4335 = vmatpush1.xpose.msra.mxu0 0.0
        %4336 = vmatprep.subr.mxu0 0.0
        %4337 = vmatpush1.xpose.msra.mxu0 0.0
        %4338 = vmatprep.subr.mxu0 0.0
        %4339 = vmatpush1.xpose.msra.mxu0 0.0
        %4340 = vmatprep.subr.mxu0 0.0
        %4341 = vmatpush1.xpose.msra.mxu0 0.0
        %4342 = vmatprep.subr.mxu0 0.0
        %4343 = vmatpush1.xpose.msra.mxu0 0.0
        %4344 = vmatprep.subr.mxu0 0.0
        %4345 = vmatpush1.xpose.msra.mxu0 0.0
        %4346 = vmatprep.subr.mxu0 0.0
        %4347 = vmatpush1.xpose.msra.mxu0 0.0
        %4348 = vmatprep.subr.mxu0 0.0
        %4349 = vmatpush1.xpose.msra.mxu0 0.0
        %4350 = vmatprep.subr.mxu0 0.0
        %4351 = vmatpush1.xpose.msra.mxu0 0.0
        %4352 = vmatprep.subr.mxu0 0.0
        %4353 = vmatpush1.xpose.msra.mxu0 0.0
        %4354 = vmatprep.mubr.f32.mxu0 %v1170
        %4355 = vmatmul.mubr.f32.gmra.mrb[0].mxu0 %v1168
        %v4356 = vpop.f32.mrb[0].mxu0
        %v4357 = vadd.f32 %v4287, %v4356
        %v4358 = vpop.f32.mrb[0].mxu0
        %4359 = vdwg.mxu0
        %4360 = vmatprep.subr.mxu0 %v401
        %4361 = vmatpush1.xpose.msra.mxu0 %v400
        %4362 = vmatprep.subr.mxu0 %v657
        %4363 = vmatpush1.xpose.msra.mxu0 %v656
        %4364 = vmatprep.subr.mxu0 0.0
        %4365 = vmatpush1.xpose.msra.mxu0 0.0
        %4366 = vmatprep.subr.mxu0 0.0
        %4367 = vmatpush1.xpose.msra.mxu0 0.0
        %4368 = vmatprep.subr.mxu0 0.0
        %4369 = vmatpush1.xpose.msra.mxu0 0.0
        %4370 = vmatprep.subr.mxu0 0.0
        %4371 = vmatpush1.xpose.msra.mxu0 0.0
        %4372 = vmatprep.subr.mxu0 0.0
        %4373 = vmatpush1.xpose.msra.mxu0 0.0
        %4374 = vmatprep.subr.mxu0 0.0
        %4375 = vmatpush1.xpose.msra.mxu0 0.0
        %4376 = vmatprep.subr.mxu0 0.0
        %4377 = vmatpush1.xpose.msra.mxu0 0.0
        %4378 = vmatprep.subr.mxu0 0.0
        %4379 = vmatpush1.xpose.msra.mxu0 0.0
        %4380 = vmatprep.subr.mxu0 0.0
        %4381 = vmatpush1.xpose.msra.mxu0 0.0
        %4382 = vmatprep.subr.mxu0 0.0
        %4383 = vmatpush1.xpose.msra.mxu0 0.0
        %4384 = vmatprep.subr.mxu0 0.0
        %4385 = vmatpush1.xpose.msra.mxu0 0.0
        %4386 = vmatprep.subr.mxu0 0.0
        %4387 = vmatpush1.xpose.msra.mxu0 0.0
        %4388 = vmatprep.subr.mxu0 0.0
        %4389 = vmatpush1.xpose.msra.mxu0 0.0
        %4390 = vmatprep.subr.mxu0 0.0
        %4391 = vmatpush1.xpose.msra.mxu0 0.0
        %4392 = vmatprep.subr.mxu0 0.0
        %4393 = vmatpush1.xpose.msra.mxu0 0.0
        %4394 = vmatprep.subr.mxu0 0.0
        %4395 = vmatpush1.xpose.msra.mxu0 0.0
        %4396 = vmatprep.subr.mxu0 0.0
        %4397 = vmatpush1.xpose.msra.mxu0 0.0
        %4398 = vmatprep.subr.mxu0 0.0
        %4399 = vmatpush1.xpose.msra.mxu0 0.0
        %4400 = vmatprep.subr.mxu0 0.0
        %4401 = vmatpush1.xpose.msra.mxu0 0.0
        %4402 = vmatprep.subr.mxu0 0.0
        %4403 = vmatpush1.xpose.msra.mxu0 0.0
        %4404 = vmatprep.subr.mxu0 0.0
        %4405 = vmatpush1.xpose.msra.mxu0 0.0
        %4406 = vmatprep.subr.mxu0 0.0
        %4407 = vmatpush1.xpose.msra.mxu0 0.0
        %4408 = vmatprep.subr.mxu0 0.0
        %4409 = vmatpush1.xpose.msra.mxu0 0.0
        %4410 = vmatprep.subr.mxu0 0.0
        %4411 = vmatpush1.xpose.msra.mxu0 0.0
        %4412 = vmatprep.subr.mxu0 0.0
        %4413 = vmatpush1.xpose.msra.mxu0 0.0
        %4414 = vmatprep.subr.mxu0 0.0
        %4415 = vmatpush1.xpose.msra.mxu0 0.0
        %4416 = vmatprep.subr.mxu0 0.0
        %4417 = vmatpush1.xpose.msra.mxu0 0.0
        %4418 = vmatprep.subr.mxu0 0.0
        %4419 = vmatpush1.xpose.msra.mxu0 0.0
        %4420 = vmatprep.subr.mxu0 0.0
        %4421 = vmatpush1.xpose.msra.mxu0 0.0
        %4422 = vmatprep.subr.mxu0 0.0
        %4423 = vmatpush1.xpose.msra.mxu0 0.0
        %4424 = vmatprep.mubr.f32.mxu0 %v1186
        %4425 = vmatmul.mubr.f32.gmra.mrb[0].mxu0 %v1178
        %v4426 = vpop.f32.mrb[0].mxu0
        %v4427 = vadd.f32 %v4357, %v4426
        %v4428 = vpop.f32.mrb[0].mxu0
        %4429 = vdwg.mxu0
        %4430 = vmatprep.subr.mxu0 %v403
        %4431 = vmatpush1.xpose.msra.mxu0 %v402
        %4432 = vmatprep.subr.mxu0 %v659
        %4433 = vmatpush1.xpose.msra.mxu0 %v658
        %4434 = vmatprep.subr.mxu0 0.0
        %4435 = vmatpush1.xpose.msra.mxu0 0.0
        %4436 = vmatprep.subr.mxu0 0.0
        %4437 = vmatpush1.xpose.msra.mxu0 0.0
        %4438 = vmatprep.subr.mxu0 0.0
        %4439 = vmatpush1.xpose.msra.mxu0 0.0
        %4440 = vmatprep.subr.mxu0 0.0
        %4441 = vmatpush1.xpose.msra.mxu0 0.0
        %4442 = vmatprep.subr.mxu0 0.0
        %4443 = vmatpush1.xpose.msra.mxu0 0.0
        %4444 = vmatprep.subr.mxu0 0.0
        %4445 = vmatpush1.xpose.msra.mxu0 0.0
        %4446 = vmatprep.subr.mxu0 0.0
        %4447 = vmatpush1.xpose.msra.mxu0 0.0
        %4448 = vmatprep.subr.mxu0 0.0
        %4449 = vmatpush1.xpose.msra.mxu0 0.0
        %4450 = vmatprep.subr.mxu0 0.0
        %4451 = vmatpush1.xpose.msra.mxu0 0.0
        %4452 = vmatprep.subr.mxu0 0.0
        %4453 = vmatpush1.xpose.msra.mxu0 0.0
        %4454 = vmatprep.subr.mxu0 0.0
        %4455 = vmatpush1.xpose.msra.mxu0 0.0
        %4456 = vmatprep.subr.mxu0 0.0
        %4457 = vmatpush1.xpose.msra.mxu0 0.0
        %4458 = vmatprep.subr.mxu0 0.0
        %4459 = vmatpush1.xpose.msra.mxu0 0.0
        %4460 = vmatprep.subr.mxu0 0.0
        %4461 = vmatpush1.xpose.msra.mxu0 0.0
        %4462 = vmatprep.subr.mxu0 0.0
        %4463 = vmatpush1.xpose.msra.mxu0 0.0
        %4464 = vmatprep.subr.mxu0 0.0
        %4465 = vmatpush1.xpose.msra.mxu0 0.0
        %4466 = vmatprep.subr.mxu0 0.0
        %4467 = vmatpush1.xpose.msra.mxu0 0.0
        %4468 = vmatprep.subr.mxu0 0.0
        %4469 = vmatpush1.xpose.msra.mxu0 0.0
        %4470 = vmatprep.subr.mxu0 0.0
        %4471 = vmatpush1.xpose.msra.mxu0 0.0
        %4472 = vmatprep.subr.mxu0 0.0
        %4473 = vmatpush1.xpose.msra.mxu0 0.0
        %4474 = vmatprep.subr.mxu0 0.0
        %4475 = vmatpush1.xpose.msra.mxu0 0.0
        %4476 = vmatprep.subr.mxu0 0.0
        %4477 = vmatpush1.xpose.msra.mxu0 0.0
        %4478 = vmatprep.subr.mxu0 0.0
        %4479 = vmatpush1.xpose.msra.mxu0 0.0
        %4480 = vmatprep.subr.mxu0 0.0
        %4481 = vmatpush1.xpose.msra.mxu0 0.0
        %4482 = vmatprep.subr.mxu0 0.0
        %4483 = vmatpush1.xpose.msra.mxu0 0.0
        %4484 = vmatprep.subr.mxu0 0.0
        %4485 = vmatpush1.xpose.msra.mxu0 0.0
        %4486 = vmatprep.subr.mxu0 0.0
        %4487 = vmatpush1.xpose.msra.mxu0 0.0
        %4488 = vmatprep.subr.mxu0 0.0
        %4489 = vmatpush1.xpose.msra.mxu0 0.0
        %4490 = vmatprep.subr.mxu0 0.0
        %4491 = vmatpush1.xpose.msra.mxu0 0.0
        %4492 = vmatprep.subr.mxu0 0.0
        %4493 = vmatpush1.xpose.msra.mxu0 0.0
        %4494 = vmatprep.mubr.f32.mxu0 %v1187
        %4495 = vmatmul.mubr.f32.gmra.mrb[0].mxu0 %v1185
        %v4496 = vpop.f32.mrb[0].mxu0
        %v4497 = vadd.f32 %v4427, %v4496
        %v4498 = vpop.f32.mrb[0].mxu0
        %4499 = vdwg.mxu0
        %4500 = vmatprep.subr.mxu0 %v405
        %4501 = vmatpush1.xpose.msra.mxu0 %v404
        %4502 = vmatprep.subr.mxu0 %v661
        %4503 = vmatpush1.xpose.msra.mxu0 %v660
        %4504 = vmatprep.subr.mxu0 0.0
        %4505 = vmatpush1.xpose.msra.mxu0 0.0
        %4506 = vmatprep.subr.mxu0 0.0
        %4507 = vmatpush1.xpose.msra.mxu0 0.0
        %4508 = vmatprep.subr.mxu0 0.0
        %4509 = vmatpush1.xpose.msra.mxu0 0.0
        %4510 = vmatprep.subr.mxu0 0.0
        %4511 = vmatpush1.xpose.msra.mxu0 0.0
        %4512 = vmatprep.subr.mxu0 0.0
        %4513 = vmatpush1.xpose.msra.mxu0 0.0
        %4514 = vmatprep.subr.mxu0 0.0
        %4515 = vmatpush1.xpose.msra.mxu0 0.0
        %4516 = vmatprep.subr.mxu0 0.0
        %4517 = vmatpush1.xpose.msra.mxu0 0.0
        %4518 = vmatprep.subr.mxu0 0.0
        %4519 = vmatpush1.xpose.msra.mxu0 0.0
        %4520 = vmatprep.subr.mxu0 0.0
        %4521 = vmatpush1.xpose.msra.mxu0 0.0
        %4522 = vmatprep.subr.mxu0 0.0
        %4523 = vmatpush1.xpose.msra.mxu0 0.0
        %4524 = vmatprep.subr.mxu0 0.0
        %4525 = vmatpush1.xpose.msra.mxu0 0.0
        %4526 = vmatprep.subr.mxu0 0.0
        %4527 = vmatpush1.xpose.msra.mxu0 0.0
        %4528 = vmatprep.subr.mxu0 0.0
        %4529 = vmatpush1.xpose.msra.mxu0 0.0
        %4530 = vmatprep.subr.mxu0 0.0
        %4531 = vmatpush1.xpose.msra.mxu0 0.0
        %4532 = vmatprep.subr.mxu0 0.0
        %4533 = vmatpush1.xpose.msra.mxu0 0.0
        %4534 = vmatprep.subr.mxu0 0.0
        %4535 = vmatpush1.xpose.msra.mxu0 0.0
        %4536 = vmatprep.subr.mxu0 0.0
        %4537 = vmatpush1.xpose.msra.mxu0 0.0
        %4538 = vmatprep.subr.mxu0 0.0
        %4539 = vmatpush1.xpose.msra.mxu0 0.0
        %4540 = vmatprep.subr.mxu0 0.0
        %4541 = vmatpush1.xpose.msra.mxu0 0.0
        %4542 = vmatprep.subr.mxu0 0.0
        %4543 = vmatpush1.xpose.msra.mxu0 0.0
        %4544 = vmatprep.subr.mxu0 0.0
        %4545 = vmatpush1.xpose.msra.mxu0 0.0
        %4546 = vmatprep.subr.mxu0 0.0
        %4547 = vmatpush1.xpose.msra.mxu0 0.0
        %4548 = vmatprep.subr.mxu0 0.0
        %4549 = vmatpush1.xpose.msra.mxu0 0.0
        %4550 = vmatprep.subr.mxu0 0.0
        %4551 = vmatpush1.xpose.msra.mxu0 0.0
        %4552 = vmatprep.subr.mxu0 0.0
        %4553 = vmatpush1.xpose.msra.mxu0 0.0
        %4554 = vmatprep.subr.mxu0 0.0
        %4555 = vmatpush1.xpose.msra.mxu0 0.0
        %4556 = vmatprep.subr.mxu0 0.0
        %4557 = vmatpush1.xpose.msra.mxu0 0.0
        %4558 = vmatprep.subr.mxu0 0.0
        %4559 = vmatpush1.xpose.msra.mxu0 0.0
        %4560 = vmatprep.subr.mxu0 0.0
        %4561 = vmatpush1.xpose.msra.mxu0 0.0
        %4562 = vmatprep.subr.mxu0 0.0
        %4563 = vmatpush1.xpose.msra.mxu0 0.0
        %4564 = vmatprep.mubr.f32.mxu0 %v1203
        %4565 = vmatmul.mubr.f32.gmra.mrb[0].mxu0 %v1195
        %v4566 = vpop.f32.mrb[0].mxu0
        %v4567 = vadd.f32 %v4497, %v4566
        %v4568 = vpop.f32.mrb[0].mxu0
        %4569 = vdwg.mxu0
        %4570 = vmatprep.subr.mxu0 %v407
        %4571 = vmatpush1.xpose.msra.mxu0 %v406
        %4572 = vmatprep.subr.mxu0 %v663
        %4573 = vmatpush1.xpose.msra.mxu0 %v662
        %4574 = vmatprep.subr.mxu0 0.0
        %4575 = vmatpush1.xpose.msra.mxu0 0.0
        %4576 = vmatprep.subr.mxu0 0.0
        %4577 = vmatpush1.xpose.msra.mxu0 0.0
        %4578 = vmatprep.subr.mxu0 0.0
        %4579 = vmatpush1.xpose.msra.mxu0 0.0
        %4580 = vmatprep.subr.mxu0 0.0
        %4581 = vmatpush1.xpose.msra.mxu0 0.0
        %4582 = vmatprep.subr.mxu0 0.0
        %4583 = vmatpush1.xpose.msra.mxu0 0.0
        %4584 = vmatprep.subr.mxu0 0.0
        %4585 = vmatpush1.xpose.msra.mxu0 0.0
        %4586 = vmatprep.subr.mxu0 0.0
        %4587 = vmatpush1.xpose.msra.mxu0 0.0
        %4588 = vmatprep.subr.mxu0 0.0
        %4589 = vmatpush1.xpose.msra.mxu0 0.0
        %4590 = vmatprep.subr.mxu0 0.0
        %4591 = vmatpush1.xpose.msra.mxu0 0.0
        %4592 = vmatprep.subr.mxu0 0.0
        %4593 = vmatpush1.xpose.msra.mxu0 0.0
        %4594 = vmatprep.subr.mxu0 0.0
        %4595 = vmatpush1.xpose.msra.mxu0 0.0
        %4596 = vmatprep.subr.mxu0 0.0
        %4597 = vmatpush1.xpose.msra.mxu0 0.0
        %4598 = vmatprep.subr.mxu0 0.0
        %4599 = vmatpush1.xpose.msra.mxu0 0.0
        %4600 = vmatprep.subr.mxu0 0.0
        %4601 = vmatpush1.xpose.msra.mxu0 0.0
        %4602 = vmatprep.subr.mxu0 0.0
        %4603 = vmatpush1.xpose.msra.mxu0 0.0
        %4604 = vmatprep.subr.mxu0 0.0
        %4605 = vmatpush1.xpose.msra.mxu0 0.0
        %4606 = vmatprep.subr.mxu0 0.0
        %4607 = vmatpush1.xpose.msra.mxu0 0.0
        %4608 = vmatprep.subr.mxu0 0.0
        %4609 = vmatpush1.xpose.msra.mxu0 0.0
        %4610 = vmatprep.subr.mxu0 0.0
        %4611 = vmatpush1.xpose.msra.mxu0 0.0
        %4612 = vmatprep.subr.mxu0 0.0
        %4613 = vmatpush1.xpose.msra.mxu0 0.0
        %4614 = vmatprep.subr.mxu0 0.0
        %4615 = vmatpush1.xpose.msra.mxu0 0.0
        %4616 = vmatprep.subr.mxu0 0.0
        %4617 = vmatpush1.xpose.msra.mxu0 0.0
        %4618 = vmatprep.subr.mxu0 0.0
        %4619 = vmatpush1.xpose.msra.mxu0 0.0
        %4620 = vmatprep.subr.mxu0 0.0
        %4621 = vmatpush1.xpose.msra.mxu0 0.0
        %4622 = vmatprep.subr.mxu0 0.0
        %4623 = vmatpush1.xpose.msra.mxu0 0.0
        %4624 = vmatprep.subr.mxu0 0.0
        %4625 = vmatpush1.xpose.msra.mxu0 0.0
        %4626 = vmatprep.subr.mxu0 0.0
        %4627 = vmatpush1.xpose.msra.mxu0 0.0
        %4628 = vmatprep.subr.mxu0 0.0
        %4629 = vmatpush1.xpose.msra.mxu0 0.0
        %4630 = vmatprep.subr.mxu0 0.0
        %4631 = vmatpush1.xpose.msra.mxu0 0.0
        %4632 = vmatprep.subr.mxu0 0.0
        %4633 = vmatpush1.xpose.msra.mxu0 0.0
        %4634 = vmatprep.mubr.f32.mxu0 %v1204
        %4635 = vmatmul.mubr.f32.gmra.mrb[0].mxu0 %v1202
        %v4636 = vpop.f32.mrb[0].mxu0
        %v4637 = vadd.f32 %v4567, %v4636
        %v4638 = vpop.f32.mrb[0].mxu0
        %4639 = vdwg.mxu0
        %4640 = vmatprep.subr.mxu0 %v409
        %4641 = vmatpush1.xpose.msra.mxu0 %v408
        %4642 = vmatprep.subr.mxu0 %v665
        %4643 = vmatpush1.xpose.msra.mxu0 %v664
        %4644 = vmatprep.subr.mxu0 0.0
        %4645 = vmatpush1.xpose.msra.mxu0 0.0
        %4646 = vmatprep.subr.mxu0 0.0
        %4647 = vmatpush1.xpose.msra.mxu0 0.0
        %4648 = vmatprep.subr.mxu0 0.0
        %4649 = vmatpush1.xpose.msra.mxu0 0.0
        %4650 = vmatprep.subr.mxu0 0.0
        %4651 = vmatpush1.xpose.msra.mxu0 0.0
        %4652 = vmatprep.subr.mxu0 0.0
        %4653 = vmatpush1.xpose.msra.mxu0 0.0
        %4654 = vmatprep.subr.mxu0 0.0
        %4655 = vmatpush1.xpose.msra.mxu0 0.0
        %4656 = vmatprep.subr.mxu0 0.0
        %4657 = vmatpush1.xpose.msra.mxu0 0.0
        %4658 = vmatprep.subr.mxu0 0.0
        %4659 = vmatpush1.xpose.msra.mxu0 0.0
        %4660 = vmatprep.subr.mxu0 0.0
        %4661 = vmatpush1.xpose.msra.mxu0 0.0
        %4662 = vmatprep.subr.mxu0 0.0
        %4663 = vmatpush1.xpose.msra.mxu0 0.0
        %4664 = vmatprep.subr.mxu0 0.0
        %4665 = vmatpush1.xpose.msra.mxu0 0.0
        %4666 = vmatprep.subr.mxu0 0.0
        %4667 = vmatpush1.xpose.msra.mxu0 0.0
        %4668 = vmatprep.subr.mxu0 0.0
        %4669 = vmatpush1.xpose.msra.mxu0 0.0
        %4670 = vmatprep.subr.mxu0 0.0
        %4671 = vmatpush1.xpose.msra.mxu0 0.0
        %4672 = vmatprep.subr.mxu0 0.0
        %4673 = vmatpush1.xpose.msra.mxu0 0.0
        %4674 = vmatprep.subr.mxu0 0.0
        %4675 = vmatpush1.xpose.msra.mxu0 0.0
        %4676 = vmatprep.subr.mxu0 0.0
        %4677 = vmatpush1.xpose.msra.mxu0 0.0
        %4678 = vmatprep.subr.mxu0 0.0
        %4679 = vmatpush1.xpose.msra.mxu0 0.0
        %4680 = vmatprep.subr.mxu0 0.0
        %4681 = vmatpush1.xpose.msra.mxu0 0.0
        %4682 = vmatprep.subr.mxu0 0.0
        %4683 = vmatpush1.xpose.msra.mxu0 0.0
        %4684 = vmatprep.subr.mxu0 0.0
        %4685 = vmatpush1.xpose.msra.mxu0 0.0
        %4686 = vmatprep.subr.mxu0 0.0
        %4687 = vmatpush1.xpose.msra.mxu0 0.0
        %4688 = vmatprep.subr.mxu0 0.0
        %4689 = vmatpush1.xpose.msra.mxu0 0.0
        %4690 = vmatprep.subr.mxu0 0.0
        %4691 = vmatpush1.xpose.msra.mxu0 0.0
        %4692 = vmatprep.subr.mxu0 0.0
        %4693 = vmatpush1.xpose.msra.mxu0 0.0
        %4694 = vmatprep.subr.mxu0 0.0
        %4695 = vmatpush1.xpose.msra.mxu0 0.0
        %4696 = vmatprep.subr.mxu0 0.0
        %4697 = vmatpush1.xpose.msra.mxu0 0.0
        %4698 = vmatprep.subr.mxu0 0.0
        %4699 = vmatpush1.xpose.msra.mxu0 0.0
        %4700 = vmatprep.subr.mxu0 0.0
        %4701 = vmatpush1.xpose.msra.mxu0 0.0
        %4702 = vmatprep.subr.mxu0 0.0
        %4703 = vmatpush1.xpose.msra.mxu0 0.0
        %4704 = vmatprep.mubr.f32.mxu0 %v1220
        %4705 = vmatmul.mubr.f32.gmra.mrb[0].mxu0 %v1212
        %v4706 = vpop.f32.mrb[0].mxu0
        %v4707 = vadd.f32 %v4637, %v4706
        %v4708 = vpop.f32.mrb[0].mxu0
        %4709 = vdwg.mxu0
        %4710 = vmatprep.subr.mxu0 %v411
        %4711 = vmatpush1.xpose.msra.mxu0 %v410
        %4712 = vmatprep.subr.mxu0 %v667
        %4713 = vmatpush1.xpose.msra.mxu0 %v666
        %4714 = vmatprep.subr.mxu0 0.0
        %4715 = vmatpush1.xpose.msra.mxu0 0.0
        %4716 = vmatprep.subr.mxu0 0.0
        %4717 = vmatpush1.xpose.msra.mxu0 0.0
        %4718 = vmatprep.subr.mxu0 0.0
        %4719 = vmatpush1.xpose.msra.mxu0 0.0
        %4720 = vmatprep.subr.mxu0 0.0
        %4721 = vmatpush1.xpose.msra.mxu0 0.0
        %4722 = vmatprep.subr.mxu0 0.0
        %4723 = vmatpush1.xpose.msra.mxu0 0.0
        %4724 = vmatprep.subr.mxu0 0.0
        %4725 = vmatpush1.xpose.msra.mxu0 0.0
        %4726 = vmatprep.subr.mxu0 0.0
        %4727 = vmatpush1.xpose.msra.mxu0 0.0
        %4728 = vmatprep.subr.mxu0 0.0
        %4729 = vmatpush1.xpose.msra.mxu0 0.0
        %4730 = vmatprep.subr.mxu0 0.0
        %4731 = vmatpush1.xpose.msra.mxu0 0.0
        %4732 = vmatprep.subr.mxu0 0.0
        %4733 = vmatpush1.xpose.msra.mxu0 0.0
        %4734 = vmatprep.subr.mxu0 0.0
        %4735 = vmatpush1.xpose.msra.mxu0 0.0
        %4736 = vmatprep.subr.mxu0 0.0
        %4737 = vmatpush1.xpose.msra.mxu0 0.0
        %4738 = vmatprep.subr.mxu0 0.0
        %4739 = vmatpush1.xpose.msra.mxu0 0.0
        %4740 = vmatprep.subr.mxu0 0.0
        %4741 = vmatpush1.xpose.msra.mxu0 0.0
        %4742 = vmatprep.subr.mxu0 0.0
        %4743 = vmatpush1.xpose.msra.mxu0 0.0
        %4744 = vmatprep.subr.mxu0 0.0
        %4745 = vmatpush1.xpose.msra.mxu0 0.0
        %4746 = vmatprep.subr.mxu0 0.0
        %4747 = vmatpush1.xpose.msra.mxu0 0.0
        %4748 = vmatprep.subr.mxu0 0.0
        %4749 = vmatpush1.xpose.msra.mxu0 0.0
        %4750 = vmatprep.subr.mxu0 0.0
        %4751 = vmatpush1.xpose.msra.mxu0 0.0
        %4752 = vmatprep.subr.mxu0 0.0
        %4753 = vmatpush1.xpose.msra.mxu0 0.0
        %4754 = vmatprep.subr.mxu0 0.0
        %4755 = vmatpush1.xpose.msra.mxu0 0.0
        %4756 = vmatprep.subr.mxu0 0.0
        %4757 = vmatpush1.xpose.msra.mxu0 0.0
        %4758 = vmatprep.subr.mxu0 0.0
        %4759 = vmatpush1.xpose.msra.mxu0 0.0
        %4760 = vmatprep.subr.mxu0 0.0
        %4761 = vmatpush1.xpose.msra.mxu0 0.0
        %4762 = vmatprep.subr.mxu0 0.0
        %4763 = vmatpush1.xpose.msra.mxu0 0.0
        %4764 = vmatprep.subr.mxu0 0.0
        %4765 = vmatpush1.xpose.msra.mxu0 0.0
        %4766 = vmatprep.subr.mxu0 0.0
        %4767 = vmatpush1.xpose.msra.mxu0 0.0
        %4768 = vmatprep.subr.mxu0 0.0
        %4769 = vmatpush1.xpose.msra.mxu0 0.0
        %4770 = vmatprep.subr.mxu0 0.0
        %4771 = vmatpush1.xpose.msra.mxu0 0.0
        %4772 = vmatprep.subr.mxu0 0.0
        %4773 = vmatpush1.xpose.msra.mxu0 0.0
        %4774 = vmatprep.mubr.f32.mxu0 %v1221
        %4775 = vmatmul.mubr.f32.gmra.mrb[0].mxu0 %v1219
        %v4776 = vpop.f32.mrb[0].mxu0
        %v4777 = vadd.f32 %v4707, %v4776
        %v4778 = vpop.f32.mrb[0].mxu0
        %4779 = vdwg.mxu0
        %4780 = vmatprep.subr.mxu0 %v413
        %4781 = vmatpush1.xpose.msra.mxu0 %v412
        %4782 = vmatprep.subr.mxu0 %v669
        %4783 = vmatpush1.xpose.msra.mxu0 %v668
        %4784 = vmatprep.subr.mxu0 0.0
        %4785 = vmatpush1.xpose.msra.mxu0 0.0
        %4786 = vmatprep.subr.mxu0 0.0
        %4787 = vmatpush1.xpose.msra.mxu0 0.0
        %4788 = vmatprep.subr.mxu0 0.0
        %4789 = vmatpush1.xpose.msra.mxu0 0.0
        %4790 = vmatprep.subr.mxu0 0.0
        %4791 = vmatpush1.xpose.msra.mxu0 0.0
        %4792 = vmatprep.subr.mxu0 0.0
        %4793 = vmatpush1.xpose.msra.mxu0 0.0
        %4794 = vmatprep.subr.mxu0 0.0
        %4795 = vmatpush1.xpose.msra.mxu0 0.0
        %4796 = vmatprep.subr.mxu0 0.0
        %4797 = vmatpush1.xpose.msra.mxu0 0.0
        %4798 = vmatprep.subr.mxu0 0.0
        %4799 = vmatpush1.xpose.msra.mxu0 0.0
        %4800 = vmatprep.subr.mxu0 0.0
        %4801 = vmatpush1.xpose.msra.mxu0 0.0
        %4802 = vmatprep.subr.mxu0 0.0
        %4803 = vmatpush1.xpose.msra.mxu0 0.0
        %4804 = vmatprep.subr.mxu0 0.0
        %4805 = vmatpush1.xpose.msra.mxu0 0.0
        %4806 = vmatprep.subr.mxu0 0.0
        %4807 = vmatpush1.xpose.msra.mxu0 0.0
        %4808 = vmatprep.subr.mxu0 0.0
        %4809 = vmatpush1.xpose.msra.mxu0 0.0
        %4810 = vmatprep.subr.mxu0 0.0
        %4811 = vmatpush1.xpose.msra.mxu0 0.0
        %4812 = vmatprep.subr.mxu0 0.0
        %4813 = vmatpush1.xpose.msra.mxu0 0.0
        %4814 = vmatprep.subr.mxu0 0.0
        %4815 = vmatpush1.xpose.msra.mxu0 0.0
        %4816 = vmatprep.subr.mxu0 0.0
        %4817 = vmatpush1.xpose.msra.mxu0 0.0
        %4818 = vmatprep.subr.mxu0 0.0
        %4819 = vmatpush1.xpose.msra.mxu0 0.0
        %4820 = vmatprep.subr.mxu0 0.0
        %4821 = vmatpush1.xpose.msra.mxu0 0.0
        %4822 = vmatprep.subr.mxu0 0.0
        %4823 = vmatpush1.xpose.msra.mxu0 0.0
        %4824 = vmatprep.subr.mxu0 0.0
        %4825 = vmatpush1.xpose.msra.mxu0 0.0
        %4826 = vmatprep.subr.mxu0 0.0
        %4827 = vmatpush1.xpose.msra.mxu0 0.0
        %4828 = vmatprep.subr.mxu0 0.0
        %4829 = vmatpush1.xpose.msra.mxu0 0.0
        %4830 = vmatprep.subr.mxu0 0.0
        %4831 = vmatpush1.xpose.msra.mxu0 0.0
        %4832 = vmatprep.subr.mxu0 0.0
        %4833 = vmatpush1.xpose.msra.mxu0 0.0
        %4834 = vmatprep.subr.mxu0 0.0
        %4835 = vmatpush1.xpose.msra.mxu0 0.0
        %4836 = vmatprep.subr.mxu0 0.0
        %4837 = vmatpush1.xpose.msra.mxu0 0.0
        %4838 = vmatprep.subr.mxu0 0.0
        %4839 = vmatpush1.xpose.msra.mxu0 0.0
        %4840 = vmatprep.subr.mxu0 0.0
        %4841 = vmatpush1.xpose.msra.mxu0 0.0
        %4842 = vmatprep.subr.mxu0 0.0
        %4843 = vmatpush1.xpose.msra.mxu0 0.0
        %4844 = vmatprep.mubr.f32.mxu0 %v1237
        %4845 = vmatmul.mubr.f32.gmra.mrb[0].mxu0 %v1229
        %v4846 = vpop.f32.mrb[0].mxu0
        %v4847 = vadd.f32 %v4777, %v4846
        %v4848 = vpop.f32.mrb[0].mxu0
        %4849 = vdwg.mxu0
        %4850 = vmatprep.subr.mxu0 %v415
        %4851 = vmatpush1.xpose.msra.mxu0 %v414
        %4852 = vmatprep.subr.mxu0 %v671
        %4853 = vmatpush1.xpose.msra.mxu0 %v670
        %4854 = vmatprep.subr.mxu0 0.0
        %4855 = vmatpush1.xpose.msra.mxu0 0.0
        %4856 = vmatprep.subr.mxu0 0.0
        %4857 = vmatpush1.xpose.msra.mxu0 0.0
        %4858 = vmatprep.subr.mxu0 0.0
        %4859 = vmatpush1.xpose.msra.mxu0 0.0
        %4860 = vmatprep.subr.mxu0 0.0
        %4861 = vmatpush1.xpose.msra.mxu0 0.0
        %4862 = vmatprep.subr.mxu0 0.0
        %4863 = vmatpush1.xpose.msra.mxu0 0.0
        %4864 = vmatprep.subr.mxu0 0.0
        %4865 = vmatpush1.xpose.msra.mxu0 0.0
        %4866 = vmatprep.subr.mxu0 0.0
        %4867 = vmatpush1.xpose.msra.mxu0 0.0
        %4868 = vmatprep.subr.mxu0 0.0
        %4869 = vmatpush1.xpose.msra.mxu0 0.0
        %4870 = vmatprep.subr.mxu0 0.0
        %4871 = vmatpush1.xpose.msra.mxu0 0.0
        %4872 = vmatprep.subr.mxu0 0.0
        %4873 = vmatpush1.xpose.msra.mxu0 0.0
        %4874 = vmatprep.subr.mxu0 0.0
        %4875 = vmatpush1.xpose.msra.mxu0 0.0
        %4876 = vmatprep.subr.mxu0 0.0
        %4877 = vmatpush1.xpose.msra.mxu0 0.0
        %4878 = vmatprep.subr.mxu0 0.0
        %4879 = vmatpush1.xpose.msra.mxu0 0.0
        %4880 = vmatprep.subr.mxu0 0.0
        %4881 = vmatpush1.xpose.msra.mxu0 0.0
        %4882 = vmatprep.subr.mxu0 0.0
        %4883 = vmatpush1.xpose.msra.mxu0 0.0
        %4884 = vmatprep.subr.mxu0 0.0
        %4885 = vmatpush1.xpose.msra.mxu0 0.0
        %4886 = vmatprep.subr.mxu0 0.0
        %4887 = vmatpush1.xpose.msra.mxu0 0.0
        %4888 = vmatprep.subr.mxu0 0.0
        %4889 = vmatpush1.xpose.msra.mxu0 0.0
        %4890 = vmatprep.subr.mxu0 0.0
        %4891 = vmatpush1.xpose.msra.mxu0 0.0
        %4892 = vmatprep.subr.mxu0 0.0
        %4893 = vmatpush1.xpose.msra.mxu0 0.0
        %4894 = vmatprep.subr.mxu0 0.0
        %4895 = vmatpush1.xpose.msra.mxu0 0.0
        %4896 = vmatprep.subr.mxu0 0.0
        %4897 = vmatpush1.xpose.msra.mxu0 0.0
        %4898 = vmatprep.subr.mxu0 0.0
        %4899 = vmatpush1.xpose.msra.mxu0 0.0
        %4900 = vmatprep.subr.mxu0 0.0
        %4901 = vmatpush1.xpose.msra.mxu0 0.0
        %4902 = vmatprep.subr.mxu0 0.0
        %4903 = vmatpush1.xpose.msra.mxu0 0.0
        %4904 = vmatprep.subr.mxu0 0.0
        %4905 = vmatpush1.xpose.msra.mxu0 0.0
        %4906 = vmatprep.subr.mxu0 0.0
        %4907 = vmatpush1.xpose.msra.mxu0 0.0
        %4908 = vmatprep.subr.mxu0 0.0
        %4909 = vmatpush1.xpose.msra.mxu0 0.0
        %4910 = vmatprep.subr.mxu0 0.0
        %4911 = vmatpush1.xpose.msra.mxu0 0.0
        %4912 = vmatprep.subr.mxu0 0.0
        %4913 = vmatpush1.xpose.msra.mxu0 0.0
        %4914 = vmatprep.mubr.f32.mxu0 %v1238
        %4915 = vmatmul.mubr.f32.gmra.mrb[0].mxu0 %v1236
        %v4916 = vpop.f32.mrb[0].mxu0
        %v4917 = vadd.f32 %v4847, %v4916
        %v4918 = vpop.f32.mrb[0].mxu0
        %4919 = vdwg.mxu0
        %4920 = vmatprep.subr.mxu0 %v417
        %4921 = vmatpush1.xpose.msra.mxu0 %v416
        %4922 = vmatprep.subr.mxu0 %v673
        %4923 = vmatpush1.xpose.msra.mxu0 %v672
        %4924 = vmatprep.subr.mxu0 0.0
        %4925 = vmatpush1.xpose.msra.mxu0 0.0
        %4926 = vmatprep.subr.mxu0 0.0
        %4927 = vmatpush1.xpose.msra.mxu0 0.0
        %4928 = vmatprep.subr.mxu0 0.0
        %4929 = vmatpush1.xpose.msra.mxu0 0.0
        %4930 = vmatprep.subr.mxu0 0.0
        %4931 = vmatpush1.xpose.msra.mxu0 0.0
        %4932 = vmatprep.subr.mxu0 0.0
        %4933 = vmatpush1.xpose.msra.mxu0 0.0
        %4934 = vmatprep.subr.mxu0 0.0
        %4935 = vmatpush1.xpose.msra.mxu0 0.0
        %4936 = vmatprep.subr.mxu0 0.0
        %4937 = vmatpush1.xpose.msra.mxu0 0.0
        %4938 = vmatprep.subr.mxu0 0.0
        %4939 = vmatpush1.xpose.msra.mxu0 0.0
        %4940 = vmatprep.subr.mxu0 0.0
        %4941 = vmatpush1.xpose.msra.mxu0 0.0
        %4942 = vmatprep.subr.mxu0 0.0
        %4943 = vmatpush1.xpose.msra.mxu0 0.0
        %4944 = vmatprep.subr.mxu0 0.0
        %4945 = vmatpush1.xpose.msra.mxu0 0.0
        %4946 = vmatprep.subr.mxu0 0.0
        %4947 = vmatpush1.xpose.msra.mxu0 0.0
        %4948 = vmatprep.subr.mxu0 0.0
        %4949 = vmatpush1.xpose.msra.mxu0 0.0
        %4950 = vmatprep.subr.mxu0 0.0
        %4951 = vmatpush1.xpose.msra.mxu0 0.0
        %4952 = vmatprep.subr.mxu0 0.0
        %4953 = vmatpush1.xpose.msra.mxu0 0.0
        %4954 = vmatprep.subr.mxu0 0.0
        %4955 = vmatpush1.xpose.msra.mxu0 0.0
        %4956 = vmatprep.subr.mxu0 0.0
        %4957 = vmatpush1.xpose.msra.mxu0 0.0
        %4958 = vmatprep.subr.mxu0 0.0
        %4959 = vmatpush1.xpose.msra.mxu0 0.0
        %4960 = vmatprep.subr.mxu0 0.0
        %4961 = vmatpush1.xpose.msra.mxu0 0.0
        %4962 = vmatprep.subr.mxu0 0.0
        %4963 = vmatpush1.xpose.msra.mxu0 0.0
        %4964 = vmatprep.subr.mxu0 0.0
        %4965 = vmatpush1.xpose.msra.mxu0 0.0
        %4966 = vmatprep.subr.mxu0 0.0
        %4967 = vmatpush1.xpose.msra.mxu0 0.0
        %4968 = vmatprep.subr.mxu0 0.0
        %4969 = vmatpush1.xpose.msra.mxu0 0.0
        %4970 = vmatprep.subr.mxu0 0.0
        %4971 = vmatpush1.xpose.msra.mxu0 0.0
        %4972 = vmatprep.subr.mxu0 0.0
        %4973 = vmatpush1.xpose.msra.mxu0 0.0
        %4974 = vmatprep.subr.mxu0 0.0
        %4975 = vmatpush1.xpose.msra.mxu0 0.0
        %4976 = vmatprep.subr.mxu0 0.0
        %4977 = vmatpush1.xpose.msra.mxu0 0.0
        %4978 = vmatprep.subr.mxu0 0.0
        %4979 = vmatpush1.xpose.msra.mxu0 0.0
        %4980 = vmatprep.subr.mxu0 0.0
        %4981 = vmatpush1.xpose.msra.mxu0 0.0
        %4982 = vmatprep.subr.mxu0 0.0
        %4983 = vmatpush1.xpose.msra.mxu0 0.0
        %4984 = vmatprep.mubr.f32.mxu0 %v1254
        %4985 = vmatmul.mubr.f32.gmra.mrb[0].mxu0 %v1246
        %v4986 = vpop.f32.mrb[0].mxu0
        %v4987 = vadd.f32 %v4917, %v4986
        %v4988 = vpop.f32.mrb[0].mxu0
        %4989 = vdwg.mxu0
        %4990 = vmatprep.subr.mxu0 %v419
        %4991 = vmatpush1.xpose.msra.mxu0 %v418
        %4992 = vmatprep.subr.mxu0 %v675
        %4993 = vmatpush1.xpose.msra.mxu0 %v674
        %4994 = vmatprep.subr.mxu0 0.0
        %4995 = vmatpush1.xpose.msra.mxu0 0.0
        %4996 = vmatprep.subr.mxu0 0.0
        %4997 = vmatpush1.xpose.msra.mxu0 0.0
        %4998 = vmatprep.subr.mxu0 0.0
        %4999 = vmatpush1.xpose.msra.mxu0 0.0
        %5000 = vmatprep.subr.mxu0 0.0
        %5001 = vmatpush1.xpose.msra.mxu0 0.0
        %5002 = vmatprep.subr.mxu0 0.0
        %5003 = vmatpush1.xpose.msra.mxu0 0.0
        %5004 = vmatprep.subr.mxu0 0.0
        %5005 = vmatpush1.xpose.msra.mxu0 0.0
        %5006 = vmatprep.subr.mxu0 0.0
        %5007 = vmatpush1.xpose.msra.mxu0 0.0
        %5008 = vmatprep.subr.mxu0 0.0
        %5009 = vmatpush1.xpose.msra.mxu0 0.0
        %5010 = vmatprep.subr.mxu0 0.0
        %5011 = vmatpush1.xpose.msra.mxu0 0.0
        %5012 = vmatprep.subr.mxu0 0.0
        %5013 = vmatpush1.xpose.msra.mxu0 0.0
        %5014 = vmatprep.subr.mxu0 0.0
        %5015 = vmatpush1.xpose.msra.mxu0 0.0
        %5016 = vmatprep.subr.mxu0 0.0
        %5017 = vmatpush1.xpose.msra.mxu0 0.0
        %5018 = vmatprep.subr.mxu0 0.0
        %5019 = vmatpush1.xpose.msra.mxu0 0.0
        %5020 = vmatprep.subr.mxu0 0.0
        %5021 = vmatpush1.xpose.msra.mxu0 0.0
        %5022 = vmatprep.subr.mxu0 0.0
        %5023 = vmatpush1.xpose.msra.mxu0 0.0
        %5024 = vmatprep.subr.mxu0 0.0
        %5025 = vmatpush1.xpose.msra.mxu0 0.0
        %5026 = vmatprep.subr.mxu0 0.0
        %5027 = vmatpush1.xpose.msra.mxu0 0.0
        %5028 = vmatprep.subr.mxu0 0.0
        %5029 = vmatpush1.xpose.msra.mxu0 0.0
        %5030 = vmatprep.subr.mxu0 0.0
        %5031 = vmatpush1.xpose.msra.mxu0 0.0
        %5032 = vmatprep.subr.mxu0 0.0
        %5033 = vmatpush1.xpose.msra.mxu0 0.0
        %5034 = vmatprep.subr.mxu0 0.0
        %5035 = vmatpush1.xpose.msra.mxu0 0.0
        %5036 = vmatprep.subr.mxu0 0.0
        %5037 = vmatpush1.xpose.msra.mxu0 0.0
        %5038 = vmatprep.subr.mxu0 0.0
        %5039 = vmatpush1.xpose.msra.mxu0 0.0
        %5040 = vmatprep.subr.mxu0 0.0
        %5041 = vmatpush1.xpose.msra.mxu0 0.0
        %5042 = vmatprep.subr.mxu0 0.0
        %5043 = vmatpush1.xpose.msra.mxu0 0.0
        %5044 = vmatprep.subr.mxu0 0.0
        %5045 = vmatpush1.xpose.msra.mxu0 0.0
        %5046 = vmatprep.subr.mxu0 0.0
        %5047 = vmatpush1.xpose.msra.mxu0 0.0
        %5048 = vmatprep.subr.mxu0 0.0
        %5049 = vmatpush1.xpose.msra.mxu0 0.0
        %5050 = vmatprep.subr.mxu0 0.0
        %5051 = vmatpush1.xpose.msra.mxu0 0.0
        %5052 = vmatprep.subr.mxu0 0.0
        %5053 = vmatpush1.xpose.msra.mxu0 0.0
        %5054 = vmatprep.mubr.f32.mxu0 %v1255
        %5055 = vmatmul.mubr.f32.gmra.mrb[0].mxu0 %v1253
        %v5056 = vpop.f32.mrb[0].mxu0
        %v5057 = vadd.f32 %v4987, %v5056
        %v5058 = vpop.f32.mrb[0].mxu0
        %5059 = vdwg.mxu0
        %5060 = vmatprep.subr.mxu0 %v421
        %5061 = vmatpush1.xpose.msra.mxu0 %v420
        %5062 = vmatprep.subr.mxu0 %v677
        %5063 = vmatpush1.xpose.msra.mxu0 %v676
        %5064 = vmatprep.subr.mxu0 0.0
        %5065 = vmatpush1.xpose.msra.mxu0 0.0
        %5066 = vmatprep.subr.mxu0 0.0
        %5067 = vmatpush1.xpose.msra.mxu0 0.0
        %5068 = vmatprep.subr.mxu0 0.0
        %5069 = vmatpush1.xpose.msra.mxu0 0.0
        %5070 = vmatprep.subr.mxu0 0.0
        %5071 = vmatpush1.xpose.msra.mxu0 0.0
        %5072 = vmatprep.subr.mxu0 0.0
        %5073 = vmatpush1.xpose.msra.mxu0 0.0
        %5074 = vmatprep.subr.mxu0 0.0
        %5075 = vmatpush1.xpose.msra.mxu0 0.0
        %5076 = vmatprep.subr.mxu0 0.0
        %5077 = vmatpush1.xpose.msra.mxu0 0.0
        %5078 = vmatprep.subr.mxu0 0.0
        %5079 = vmatpush1.xpose.msra.mxu0 0.0
        %5080 = vmatprep.subr.mxu0 0.0
        %5081 = vmatpush1.xpose.msra.mxu0 0.0
        %5082 = vmatprep.subr.mxu0 0.0
        %5083 = vmatpush1.xpose.msra.mxu0 0.0
        %5084 = vmatprep.subr.mxu0 0.0
        %5085 = vmatpush1.xpose.msra.mxu0 0.0
        %5086 = vmatprep.subr.mxu0 0.0
        %5087 = vmatpush1.xpose.msra.mxu0 0.0
        %5088 = vmatprep.subr.mxu0 0.0
        %5089 = vmatpush1.xpose.msra.mxu0 0.0
        %5090 = vmatprep.subr.mxu0 0.0
        %5091 = vmatpush1.xpose.msra.mxu0 0.0
        %5092 = vmatprep.subr.mxu0 0.0
        %5093 = vmatpush1.xpose.msra.mxu0 0.0
        %5094 = vmatprep.subr.mxu0 0.0
        %5095 = vmatpush1.xpose.msra.mxu0 0.0
        %5096 = vmatprep.subr.mxu0 0.0
        %5097 = vmatpush1.xpose.msra.mxu0 0.0
        %5098 = vmatprep.subr.mxu0 0.0
        %5099 = vmatpush1.xpose.msra.mxu0 0.0
        %5100 = vmatprep.subr.mxu0 0.0
        %5101 = vmatpush1.xpose.msra.mxu0 0.0
        %5102 = vmatprep.subr.mxu0 0.0
        %5103 = vmatpush1.xpose.msra.mxu0 0.0
        %5104 = vmatprep.subr.mxu0 0.0
        %5105 = vmatpush1.xpose.msra.mxu0 0.0
        %5106 = vmatprep.subr.mxu0 0.0
        %5107 = vmatpush1.xpose.msra.mxu0 0.0
        %5108 = vmatprep.subr.mxu0 0.0
        %5109 = vmatpush1.xpose.msra.mxu0 0.0
        %5110 = vmatprep.subr.mxu0 0.0
        %5111 = vmatpush1.xpose.msra.mxu0 0.0
        %5112 = vmatprep.subr.mxu0 0.0
        %5113 = vmatpush1.xpose.msra.mxu0 0.0
        %5114 = vmatprep.subr.mxu0 0.0
        %5115 = vmatpush1.xpose.msra.mxu0 0.0
        %5116 = vmatprep.subr.mxu0 0.0
        %5117 = vmatpush1.xpose.msra.mxu0 0.0
        %5118 = vmatprep.subr.mxu0 0.0
        %5119 = vmatpush1.xpose.msra.mxu0 0.0
        %5120 = vmatprep.subr.mxu0 0.0
        %5121 = vmatpush1.xpose.msra.mxu0 0.0
        %5122 = vmatprep.subr.mxu0 0.0
        %5123 = vmatpush1.xpose.msra.mxu0 0.0
        %5124 = vmatprep.mubr.f32.mxu0 %v1271
        %5125 = vmatmul.mubr.f32.gmra.mrb[0].mxu0 %v1263
        %v5126 = vpop.f32.mrb[0].mxu0
        %v5127 = vadd.f32 %v5057, %v5126
        %v5128 = vpop.f32.mrb[0].mxu0
        %5129 = vdwg.mxu0
        %5130 = vmatprep.subr.mxu0 %v423
        %5131 = vmatpush1.xpose.msra.mxu0 %v422
        %5132 = vmatprep.subr.mxu0 %v679
        %5133 = vmatpush1.xpose.msra.mxu0 %v678
        %5134 = vmatprep.subr.mxu0 0.0
        %5135 = vmatpush1.xpose.msra.mxu0 0.0
        %5136 = vmatprep.subr.mxu0 0.0
        %5137 = vmatpush1.xpose.msra.mxu0 0.0
        %5138 = vmatprep.subr.mxu0 0.0
        %5139 = vmatpush1.xpose.msra.mxu0 0.0
        %5140 = vmatprep.subr.mxu0 0.0
        %5141 = vmatpush1.xpose.msra.mxu0 0.0
        %5142 = vmatprep.subr.mxu0 0.0
        %5143 = vmatpush1.xpose.msra.mxu0 0.0
        %5144 = vmatprep.subr.mxu0 0.0
        %5145 = vmatpush1.xpose.msra.mxu0 0.0
        %5146 = vmatprep.subr.mxu0 0.0
        %5147 = vmatpush1.xpose.msra.mxu0 0.0
        %5148 = vmatprep.subr.mxu0 0.0
        %5149 = vmatpush1.xpose.msra.mxu0 0.0
        %5150 = vmatprep.subr.mxu0 0.0
        %5151 = vmatpush1.xpose.msra.mxu0 0.0
        %5152 = vmatprep.subr.mxu0 0.0
        %5153 = vmatpush1.xpose.msra.mxu0 0.0
        %5154 = vmatprep.subr.mxu0 0.0
        %5155 = vmatpush1.xpose.msra.mxu0 0.0
        %5156 = vmatprep.subr.mxu0 0.0
        %5157 = vmatpush1.xpose.msra.mxu0 0.0
        %5158 = vmatprep.subr.mxu0 0.0
        %5159 = vmatpush1.xpose.msra.mxu0 0.0
        %5160 = vmatprep.subr.mxu0 0.0
        %5161 = vmatpush1.xpose.msra.mxu0 0.0
        %5162 = vmatprep.subr.mxu0 0.0
        %5163 = vmatpush1.xpose.msra.mxu0 0.0
        %5164 = vmatprep.subr.mxu0 0.0
        %5165 = vmatpush1.xpose.msra.mxu0 0.0
        %5166 = vmatprep.subr.mxu0 0.0
        %5167 = vmatpush1.xpose.msra.mxu0 0.0
        %5168 = vmatprep.subr.mxu0 0.0
        %5169 = vmatpush1.xpose.msra.mxu0 0.0
        %5170 = vmatprep.subr.mxu0 0.0
        %5171 = vmatpush1.xpose.msra.mxu0 0.0
        %5172 = vmatprep.subr.mxu0 0.0
        %5173 = vmatpush1.xpose.msra.mxu0 0.0
        %5174 = vmatprep.subr.mxu0 0.0
        %5175 = vmatpush1.xpose.msra.mxu0 0.0
        %5176 = vmatprep.subr.mxu0 0.0
        %5177 = vmatpush1.xpose.msra.mxu0 0.0
        %5178 = vmatprep.subr.mxu0 0.0
        %5179 = vmatpush1.xpose.msra.mxu0 0.0
        %5180 = vmatprep.subr.mxu0 0.0
        %5181 = vmatpush1.xpose.msra.mxu0 0.0
        %5182 = vmatprep.subr.mxu0 0.0
        %5183 = vmatpush1.xpose.msra.mxu0 0.0
        %5184 = vmatprep.subr.mxu0 0.0
        %5185 = vmatpush1.xpose.msra.mxu0 0.0
        %5186 = vmatprep.subr.mxu0 0.0
        %5187 = vmatpush1.xpose.msra.mxu0 0.0
        %5188 = vmatprep.subr.mxu0 0.0
        %5189 = vmatpush1.xpose.msra.mxu0 0.0
        %5190 = vmatprep.subr.mxu0 0.0
        %5191 = vmatpush1.xpose.msra.mxu0 0.0
        %5192 = vmatprep.subr.mxu0 0.0
        %5193 = vmatpush1.xpose.msra.mxu0 0.0
        %5194 = vmatprep.mubr.f32.mxu0 %v1272
        %5195 = vmatmul.mubr.f32.gmra.mrb[0].mxu0 %v1270
        %v5196 = vpop.f32.mrb[0].mxu0
        %v5197 = vadd.f32 %v5127, %v5196
        %v5198 = vpop.f32.mrb[0].mxu0
        %5199 = vdwg.mxu0
        %5200 = vmatprep.subr.mxu0 %v425
        %5201 = vmatpush1.xpose.msra.mxu0 %v424
        %5202 = vmatprep.subr.mxu0 %v681
        %5203 = vmatpush1.xpose.msra.mxu0 %v680
        %5204 = vmatprep.subr.mxu0 0.0
        %5205 = vmatpush1.xpose.msra.mxu0 0.0
        %5206 = vmatprep.subr.mxu0 0.0
        %5207 = vmatpush1.xpose.msra.mxu0 0.0
        %5208 = vmatprep.subr.mxu0 0.0
        %5209 = vmatpush1.xpose.msra.mxu0 0.0
        %5210 = vmatprep.subr.mxu0 0.0
        %5211 = vmatpush1.xpose.msra.mxu0 0.0
        %5212 = vmatprep.subr.mxu0 0.0
        %5213 = vmatpush1.xpose.msra.mxu0 0.0
        %5214 = vmatprep.subr.mxu0 0.0
        %5215 = vmatpush1.xpose.msra.mxu0 0.0
        %5216 = vmatprep.subr.mxu0 0.0
        %5217 = vmatpush1.xpose.msra.mxu0 0.0
        %5218 = vmatprep.subr.mxu0 0.0
        %5219 = vmatpush1.xpose.msra.mxu0 0.0
        %5220 = vmatprep.subr.mxu0 0.0
        %5221 = vmatpush1.xpose.msra.mxu0 0.0
        %5222 = vmatprep.subr.mxu0 0.0
        %5223 = vmatpush1.xpose.msra.mxu0 0.0
        %5224 = vmatprep.subr.mxu0 0.0
        %5225 = vmatpush1.xpose.msra.mxu0 0.0
        %5226 = vmatprep.subr.mxu0 0.0
        %5227 = vmatpush1.xpose.msra.mxu0 0.0
        %5228 = vmatprep.subr.mxu0 0.0
        %5229 = vmatpush1.xpose.msra.mxu0 0.0
        %5230 = vmatprep.subr.mxu0 0.0
        %5231 = vmatpush1.xpose.msra.mxu0 0.0
        %5232 = vmatprep.subr.mxu0 0.0
        %5233 = vmatpush1.xpose.msra.mxu0 0.0
        %5234 = vmatprep.subr.mxu0 0.0
        %5235 = vmatpush1.xpose.msra.mxu0 0.0
        %5236 = vmatprep.subr.mxu0 0.0
        %5237 = vmatpush1.xpose.msra.mxu0 0.0
        %5238 = vmatprep.subr.mxu0 0.0
        %5239 = vmatpush1.xpose.msra.mxu0 0.0
        %5240 = vmatprep.subr.mxu0 0.0
        %5241 = vmatpush1.xpose.msra.mxu0 0.0
        %5242 = vmatprep.subr.mxu0 0.0
        %5243 = vmatpush1.xpose.msra.mxu0 0.0
        %5244 = vmatprep.subr.mxu0 0.0
        %5245 = vmatpush1.xpose.msra.mxu0 0.0
        %5246 = vmatprep.subr.mxu0 0.0
        %5247 = vmatpush1.xpose.msra.mxu0 0.0
        %5248 = vmatprep.subr.mxu0 0.0
        %5249 = vmatpush1.xpose.msra.mxu0 0.0
        %5250 = vmatprep.subr.mxu0 0.0
        %5251 = vmatpush1.xpose.msra.mxu0 0.0
        %5252 = vmatprep.subr.mxu0 0.0
        %5253 = vmatpush1.xpose.msra.mxu0 0.0
        %5254 = vmatprep.subr.mxu0 0.0
        %5255 = vmatpush1.xpose.msra.mxu0 0.0
        %5256 = vmatprep.subr.mxu0 0.0
        %5257 = vmatpush1.xpose.msra.mxu0 0.0
        %5258 = vmatprep.subr.mxu0 0.0
        %5259 = vmatpush1.xpose.msra.mxu0 0.0
        %5260 = vmatprep.subr.mxu0 0.0
        %5261 = vmatpush1.xpose.msra.mxu0 0.0
        %5262 = vmatprep.subr.mxu0 0.0
        %5263 = vmatpush1.xpose.msra.mxu0 0.0
        %5264 = vmatprep.mubr.f32.mxu0 %v1288
        %5265 = vmatmul.mubr.f32.gmra.mrb[0].mxu0 %v1280
        %v5266 = vpop.f32.mrb[0].mxu0
        %v5267 = vadd.f32 %v5197, %v5266
        %v5268 = vpop.f32.mrb[0].mxu0
        %5269 = vdwg.mxu0
        %5270 = vmatprep.subr.mxu0 %v427
        %5271 = vmatpush1.xpose.msra.mxu0 %v426
        %5272 = vmatprep.subr.mxu0 %v683
        %5273 = vmatpush1.xpose.msra.mxu0 %v682
        %5274 = vmatprep.subr.mxu0 0.0
        %5275 = vmatpush1.xpose.msra.mxu0 0.0
        %5276 = vmatprep.subr.mxu0 0.0
        %5277 = vmatpush1.xpose.msra.mxu0 0.0
        %5278 = vmatprep.subr.mxu0 0.0
        %5279 = vmatpush1.xpose.msra.mxu0 0.0
        %5280 = vmatprep.subr.mxu0 0.0
        %5281 = vmatpush1.xpose.msra.mxu0 0.0
        %5282 = vmatprep.subr.mxu0 0.0
        %5283 = vmatpush1.xpose.msra.mxu0 0.0
        %5284 = vmatprep.subr.mxu0 0.0
        %5285 = vmatpush1.xpose.msra.mxu0 0.0
        %5286 = vmatprep.subr.mxu0 0.0
        %5287 = vmatpush1.xpose.msra.mxu0 0.0
        %5288 = vmatprep.subr.mxu0 0.0
        %5289 = vmatpush1.xpose.msra.mxu0 0.0
        %5290 = vmatprep.subr.mxu0 0.0
        %5291 = vmatpush1.xpose.msra.mxu0 0.0
        %5292 = vmatprep.subr.mxu0 0.0
        %5293 = vmatpush1.xpose.msra.mxu0 0.0
        %5294 = vmatprep.subr.mxu0 0.0
        %5295 = vmatpush1.xpose.msra.mxu0 0.0
        %5296 = vmatprep.subr.mxu0 0.0
        %5297 = vmatpush1.xpose.msra.mxu0 0.0
        %5298 = vmatprep.subr.mxu0 0.0
        %5299 = vmatpush1.xpose.msra.mxu0 0.0
        %5300 = vmatprep.subr.mxu0 0.0
        %5301 = vmatpush1.xpose.msra.mxu0 0.0
        %5302 = vmatprep.subr.mxu0 0.0
        %5303 = vmatpush1.xpose.msra.mxu0 0.0
        %5304 = vmatprep.subr.mxu0 0.0
        %5305 = vmatpush1.xpose.msra.mxu0 0.0
        %5306 = vmatprep.subr.mxu0 0.0
        %5307 = vmatpush1.xpose.msra.mxu0 0.0
        %5308 = vmatprep.subr.mxu0 0.0
        %5309 = vmatpush1.xpose.msra.mxu0 0.0
        %5310 = vmatprep.subr.mxu0 0.0
        %5311 = vmatpush1.xpose.msra.mxu0 0.0
        %5312 = vmatprep.subr.mxu0 0.0
        %5313 = vmatpush1.xpose.msra.mxu0 0.0
        %5314 = vmatprep.subr.mxu0 0.0
        %5315 = vmatpush1.xpose.msra.mxu0 0.0
        %5316 = vmatprep.subr.mxu0 0.0
        %5317 = vmatpush1.xpose.msra.mxu0 0.0
        %5318 = vmatprep.subr.mxu0 0.0
        %5319 = vmatpush1.xpose.msra.mxu0 0.0
        %5320 = vmatprep.subr.mxu0 0.0
        %5321 = vmatpush1.xpose.msra.mxu0 0.0
        %5322 = vmatprep.subr.mxu0 0.0
        %5323 = vmatpush1.xpose.msra.mxu0 0.0
        %5324 = vmatprep.subr.mxu0 0.0
        %5325 = vmatpush1.xpose.msra.mxu0 0.0
        %5326 = vmatprep.subr.mxu0 0.0
        %5327 = vmatpush1.xpose.msra.mxu0 0.0
        %5328 = vmatprep.subr.mxu0 0.0
        %5329 = vmatpush1.xpose.msra.mxu0 0.0
        %5330 = vmatprep.subr.mxu0 0.0
        %5331 = vmatpush1.xpose.msra.mxu0 0.0
        %5332 = vmatprep.subr.mxu0 0.0
        %5333 = vmatpush1.xpose.msra.mxu0 0.0
        %5334 = vmatprep.mubr.f32.mxu0 %v1289
        %5335 = vmatmul.mubr.f32.gmra.mrb[0].mxu0 %v1287
        %v5336 = vpop.f32.mrb[0].mxu0
        %v5337 = vadd.f32 %v5267, %v5336
        %v5338 = vpop.f32.mrb[0].mxu0
        %5339 = vdwg.mxu0
        %5340 = vmatprep.subr.mxu0 %v429
        %5341 = vmatpush1.xpose.msra.mxu0 %v428
        %5342 = vmatprep.subr.mxu0 %v685
        %5343 = vmatpush1.xpose.msra.mxu0 %v684
        %5344 = vmatprep.subr.mxu0 0.0
        %5345 = vmatpush1.xpose.msra.mxu0 0.0
        %5346 = vmatprep.subr.mxu0 0.0
        %5347 = vmatpush1.xpose.msra.mxu0 0.0
        %5348 = vmatprep.subr.mxu0 0.0
        %5349 = vmatpush1.xpose.msra.mxu0 0.0
        %5350 = vmatprep.subr.mxu0 0.0
        %5351 = vmatpush1.xpose.msra.mxu0 0.0
        %5352 = vmatprep.subr.mxu0 0.0
        %5353 = vmatpush1.xpose.msra.mxu0 0.0
        %5354 = vmatprep.subr.mxu0 0.0
        %5355 = vmatpush1.xpose.msra.mxu0 0.0
        %5356 = vmatprep.subr.mxu0 0.0
        %5357 = vmatpush1.xpose.msra.mxu0 0.0
        %5358 = vmatprep.subr.mxu0 0.0
        %5359 = vmatpush1.xpose.msra.mxu0 0.0
        %5360 = vmatprep.subr.mxu0 0.0
        %5361 = vmatpush1.xpose.msra.mxu0 0.0
        %5362 = vmatprep.subr.mxu0 0.0
        %5363 = vmatpush1.xpose.msra.mxu0 0.0
        %5364 = vmatprep.subr.mxu0 0.0
        %5365 = vmatpush1.xpose.msra.mxu0 0.0
        %5366 = vmatprep.subr.mxu0 0.0
        %5367 = vmatpush1.xpose.msra.mxu0 0.0
        %5368 = vmatprep.subr.mxu0 0.0
        %5369 = vmatpush1.xpose.msra.mxu0 0.0
        %5370 = vmatprep.subr.mxu0 0.0
        %5371 = vmatpush1.xpose.msra.mxu0 0.0
        %5372 = vmatprep.subr.mxu0 0.0
        %5373 = vmatpush1.xpose.msra.mxu0 0.0
        %5374 = vmatprep.subr.mxu0 0.0
        %5375 = vmatpush1.xpose.msra.mxu0 0.0
        %5376 = vmatprep.subr.mxu0 0.0
        %5377 = vmatpush1.xpose.msra.mxu0 0.0
        %5378 = vmatprep.subr.mxu0 0.0
        %5379 = vmatpush1.xpose.msra.mxu0 0.0
        %5380 = vmatprep.subr.mxu0 0.0
        %5381 = vmatpush1.xpose.msra.mxu0 0.0
        %5382 = vmatprep.subr.mxu0 0.0
        %5383 = vmatpush1.xpose.msra.mxu0 0.0
        %5384 = vmatprep.subr.mxu0 0.0
        %5385 = vmatpush1.xpose.msra.mxu0 0.0
        %5386 = vmatprep.subr.mxu0 0.0
        %5387 = vmatpush1.xpose.msra.mxu0 0.0
        %5388 = vmatprep.subr.mxu0 0.0
        %5389 = vmatpush1.xpose.msra.mxu0 0.0
        %5390 = vmatprep.subr.mxu0 0.0
        %5391 = vmatpush1.xpose.msra.mxu0 0.0
        %5392 = vmatprep.subr.mxu0 0.0
        %5393 = vmatpush1.xpose.msra.mxu0 0.0
        %5394 = vmatprep.subr.mxu0 0.0
        %5395 = vmatpush1.xpose.msra.mxu0 0.0
        %5396 = vmatprep.subr.mxu0 0.0
        %5397 = vmatpush1.xpose.msra.mxu0 0.0
        %5398 = vmatprep.subr.mxu0 0.0
        %5399 = vmatpush1.xpose.msra.mxu0 0.0
        %5400 = vmatprep.subr.mxu0 0.0
        %5401 = vmatpush1.xpose.msra.mxu0 0.0
        %5402 = vmatprep.subr.mxu0 0.0
        %5403 = vmatpush1.xpose.msra.mxu0 0.0
        %5404 = vmatprep.mubr.f32.mxu0 %v1305
        %5405 = vmatmul.mubr.f32.gmra.mrb[0].mxu0 %v1297
        %v5406 = vpop.f32.mrb[0].mxu0
        %v5407 = vadd.f32 %v5337, %v5406
        %v5408 = vpop.f32.mrb[0].mxu0
        %5409 = vdwg.mxu0
        %5410 = vmatprep.subr.mxu0 %v431
        %5411 = vmatpush1.xpose.msra.mxu0 %v430
        %5412 = vmatprep.subr.mxu0 %v687
        %5413 = vmatpush1.xpose.msra.mxu0 %v686
        %5414 = vmatprep.subr.mxu0 0.0
        %5415 = vmatpush1.xpose.msra.mxu0 0.0
        %5416 = vmatprep.subr.mxu0 0.0
        %5417 = vmatpush1.xpose.msra.mxu0 0.0
        %5418 = vmatprep.subr.mxu0 0.0
        %5419 = vmatpush1.xpose.msra.mxu0 0.0
        %5420 = vmatprep.subr.mxu0 0.0
        %5421 = vmatpush1.xpose.msra.mxu0 0.0
        %5422 = vmatprep.subr.mxu0 0.0
        %5423 = vmatpush1.xpose.msra.mxu0 0.0
        %5424 = vmatprep.subr.mxu0 0.0
        %5425 = vmatpush1.xpose.msra.mxu0 0.0
        %5426 = vmatprep.subr.mxu0 0.0
        %5427 = vmatpush1.xpose.msra.mxu0 0.0
        %5428 = vmatprep.subr.mxu0 0.0
        %5429 = vmatpush1.xpose.msra.mxu0 0.0
        %5430 = vmatprep.subr.mxu0 0.0
        %5431 = vmatpush1.xpose.msra.mxu0 0.0
        %5432 = vmatprep.subr.mxu0 0.0
        %5433 = vmatpush1.xpose.msra.mxu0 0.0
        %5434 = vmatprep.subr.mxu0 0.0
        %5435 = vmatpush1.xpose.msra.mxu0 0.0
        %5436 = vmatprep.subr.mxu0 0.0
        %5437 = vmatpush1.xpose.msra.mxu0 0.0
        %5438 = vmatprep.subr.mxu0 0.0
        %5439 = vmatpush1.xpose.msra.mxu0 0.0
        %5440 = vmatprep.subr.mxu0 0.0
        %5441 = vmatpush1.xpose.msra.mxu0 0.0
        %5442 = vmatprep.subr.mxu0 0.0
        %5443 = vmatpush1.xpose.msra.mxu0 0.0
        %5444 = vmatprep.subr.mxu0 0.0
        %5445 = vmatpush1.xpose.msra.mxu0 0.0
        %5446 = vmatprep.subr.mxu0 0.0
        %5447 = vmatpush1.xpose.msra.mxu0 0.0
        %5448 = vmatprep.subr.mxu0 0.0
        %5449 = vmatpush1.xpose.msra.mxu0 0.0
        %5450 = vmatprep.subr.mxu0 0.0
        %5451 = vmatpush1.xpose.msra.mxu0 0.0
        %5452 = vmatprep.subr.mxu0 0.0
        %5453 = vmatpush1.xpose.msra.mxu0 0.0
        %5454 = vmatprep.subr.mxu0 0.0
        %5455 = vmatpush1.xpose.msra.mxu0 0.0
        %5456 = vmatprep.subr.mxu0 0.0
        %5457 = vmatpush1.xpose.msra.mxu0 0.0
        %5458 = vmatprep.subr.mxu0 0.0
        %5459 = vmatpush1.xpose.msra.mxu0 0.0
        %5460 = vmatprep.subr.mxu0 0.0
        %5461 = vmatpush1.xpose.msra.mxu0 0.0
        %5462 = vmatprep.subr.mxu0 0.0
        %5463 = vmatpush1.xpose.msra.mxu0 0.0
        %5464 = vmatprep.subr.mxu0 0.0
        %5465 = vmatpush1.xpose.msra.mxu0 0.0
        %5466 = vmatprep.subr.mxu0 0.0
        %5467 = vmatpush1.xpose.msra.mxu0 0.0
        %5468 = vmatprep.subr.mxu0 0.0
        %5469 = vmatpush1.xpose.msra.mxu0 0.0
        %5470 = vmatprep.subr.mxu0 0.0
        %5471 = vmatpush1.xpose.msra.mxu0 0.0
        %5472 = vmatprep.subr.mxu0 0.0
        %5473 = vmatpush1.xpose.msra.mxu0 0.0
        %5474 = vmatprep.mubr.f32.mxu0 %v1306
        %5475 = vmatmul.mubr.f32.gmra.mrb[0].mxu0 %v1304
        %v5476 = vpop.f32.mrb[0].mxu0
        %v5477 = vadd.f32 %v5407, %v5476
        %v5478 = vpop.f32.mrb[0].mxu0
        %5479 = vdwg.mxu0
        %5480 = vmatprep.subr.mxu0 %v433
        %5481 = vmatpush1.xpose.msra.mxu0 %v432
        %5482 = vmatprep.subr.mxu0 %v689
        %5483 = vmatpush1.xpose.msra.mxu0 %v688
        %5484 = vmatprep.subr.mxu0 0.0
        %5485 = vmatpush1.xpose.msra.mxu0 0.0
        %5486 = vmatprep.subr.mxu0 0.0
        %5487 = vmatpush1.xpose.msra.mxu0 0.0
        %5488 = vmatprep.subr.mxu0 0.0
        %5489 = vmatpush1.xpose.msra.mxu0 0.0
        %5490 = vmatprep.subr.mxu0 0.0
        %5491 = vmatpush1.xpose.msra.mxu0 0.0
        %5492 = vmatprep.subr.mxu0 0.0
        %5493 = vmatpush1.xpose.msra.mxu0 0.0
        %5494 = vmatprep.subr.mxu0 0.0
        %5495 = vmatpush1.xpose.msra.mxu0 0.0
        %5496 = vmatprep.subr.mxu0 0.0
        %5497 = vmatpush1.xpose.msra.mxu0 0.0
        %5498 = vmatprep.subr.mxu0 0.0
        %5499 = vmatpush1.xpose.msra.mxu0 0.0
        %5500 = vmatprep.subr.mxu0 0.0
        %5501 = vmatpush1.xpose.msra.mxu0 0.0
        %5502 = vmatprep.subr.mxu0 0.0
        %5503 = vmatpush1.xpose.msra.mxu0 0.0
        %5504 = vmatprep.subr.mxu0 0.0
        %5505 = vmatpush1.xpose.msra.mxu0 0.0
        %5506 = vmatprep.subr.mxu0 0.0
        %5507 = vmatpush1.xpose.msra.mxu0 0.0
        %5508 = vmatprep.subr.mxu0 0.0
        %5509 = vmatpush1.xpose.msra.mxu0 0.0
        %5510 = vmatprep.subr.mxu0 0.0
        %5511 = vmatpush1.xpose.msra.mxu0 0.0
        %5512 = vmatprep.subr.mxu0 0.0
        %5513 = vmatpush1.xpose.msra.mxu0 0.0
        %5514 = vmatprep.subr.mxu0 0.0
        %5515 = vmatpush1.xpose.msra.mxu0 0.0
        %5516 = vmatprep.subr.mxu0 0.0
        %5517 = vmatpush1.xpose.msra.mxu0 0.0
        %5518 = vmatprep.subr.mxu0 0.0
        %5519 = vmatpush1.xpose.msra.mxu0 0.0
        %5520 = vmatprep.subr.mxu0 0.0
        %5521 = vmatpush1.xpose.msra.mxu0 0.0
        %5522 = vmatprep.subr.mxu0 0.0
        %5523 = vmatpush1.xpose.msra.mxu0 0.0
        %5524 = vmatprep.subr.mxu0 0.0
        %5525 = vmatpush1.xpose.msra.mxu0 0.0
        %5526 = vmatprep.subr.mxu0 0.0
        %5527 = vmatpush1.xpose.msra.mxu0 0.0
        %5528 = vmatprep.subr.mxu0 0.0
        %5529 = vmatpush1.xpose.msra.mxu0 0.0
        %5530 = vmatprep.subr.mxu0 0.0
        %5531 = vmatpush1.xpose.msra.mxu0 0.0
        %5532 = vmatprep.subr.mxu0 0.0
        %5533 = vmatpush1.xpose.msra.mxu0 0.0
        %5534 = vmatprep.subr.mxu0 0.0
        %5535 = vmatpush1.xpose.msra.mxu0 0.0
        %5536 = vmatprep.subr.mxu0 0.0
        %5537 = vmatpush1.xpose.msra.mxu0 0.0
        %5538 = vmatprep.subr.mxu0 0.0
        %5539 = vmatpush1.xpose.msra.mxu0 0.0
        %5540 = vmatprep.subr.mxu0 0.0
        %5541 = vmatpush1.xpose.msra.mxu0 0.0
        %5542 = vmatprep.subr.mxu0 0.0
        %5543 = vmatpush1.xpose.msra.mxu0 0.0
        %5544 = vmatprep.mubr.f32.mxu0 %v1322
        %5545 = vmatmul.mubr.f32.gmra.mrb[0].mxu0 %v1314
        %v5546 = vpop.f32.mrb[0].mxu0
        %v5547 = vadd.f32 %v5477, %v5546
        %v5548 = vpop.f32.mrb[0].mxu0
        %5549 = vdwg.mxu0
        %5550 = vmatprep.subr.mxu0 %v435
        %5551 = vmatpush1.xpose.msra.mxu0 %v434
        %5552 = vmatprep.subr.mxu0 %v691
        %5553 = vmatpush1.xpose.msra.mxu0 %v690
        %5554 = vmatprep.subr.mxu0 0.0
        %5555 = vmatpush1.xpose.msra.mxu0 0.0
        %5556 = vmatprep.subr.mxu0 0.0
        %5557 = vmatpush1.xpose.msra.mxu0 0.0
        %5558 = vmatprep.subr.mxu0 0.0
        %5559 = vmatpush1.xpose.msra.mxu0 0.0
        %5560 = vmatprep.subr.mxu0 0.0
        %5561 = vmatpush1.xpose.msra.mxu0 0.0
        %5562 = vmatprep.subr.mxu0 0.0
        %5563 = vmatpush1.xpose.msra.mxu0 0.0
        %5564 = vmatprep.subr.mxu0 0.0
        %5565 = vmatpush1.xpose.msra.mxu0 0.0
        %5566 = vmatprep.subr.mxu0 0.0
        %5567 = vmatpush1.xpose.msra.mxu0 0.0
        %5568 = vmatprep.subr.mxu0 0.0
        %5569 = vmatpush1.xpose.msra.mxu0 0.0
        %5570 = vmatprep.subr.mxu0 0.0
        %5571 = vmatpush1.xpose.msra.mxu0 0.0
        %5572 = vmatprep.subr.mxu0 0.0
        %5573 = vmatpush1.xpose.msra.mxu0 0.0
        %5574 = vmatprep.subr.mxu0 0.0
        %5575 = vmatpush1.xpose.msra.mxu0 0.0
        %5576 = vmatprep.subr.mxu0 0.0
        %5577 = vmatpush1.xpose.msra.mxu0 0.0
        %5578 = vmatprep.subr.mxu0 0.0
        %5579 = vmatpush1.xpose.msra.mxu0 0.0
        %5580 = vmatprep.subr.mxu0 0.0
        %5581 = vmatpush1.xpose.msra.mxu0 0.0
        %5582 = vmatprep.subr.mxu0 0.0
        %5583 = vmatpush1.xpose.msra.mxu0 0.0
        %5584 = vmatprep.subr.mxu0 0.0
        %5585 = vmatpush1.xpose.msra.mxu0 0.0
        %5586 = vmatprep.subr.mxu0 0.0
        %5587 = vmatpush1.xpose.msra.mxu0 0.0
        %5588 = vmatprep.subr.mxu0 0.0
        %5589 = vmatpush1.xpose.msra.mxu0 0.0
        %5590 = vmatprep.subr.mxu0 0.0
        %5591 = vmatpush1.xpose.msra.mxu0 0.0
        %5592 = vmatprep.subr.mxu0 0.0
        %5593 = vmatpush1.xpose.msra.mxu0 0.0
        %5594 = vmatprep.subr.mxu0 0.0
        %5595 = vmatpush1.xpose.msra.mxu0 0.0
        %5596 = vmatprep.subr.mxu0 0.0
        %5597 = vmatpush1.xpose.msra.mxu0 0.0
        %5598 = vmatprep.subr.mxu0 0.0
        %5599 = vmatpush1.xpose.msra.mxu0 0.0
        %5600 = vmatprep.subr.mxu0 0.0
        %5601 = vmatpush1.xpose.msra.mxu0 0.0
        %5602 = vmatprep.subr.mxu0 0.0
        %5603 = vmatpush1.xpose.msra.mxu0 0.0
        %5604 = vmatprep.subr.mxu0 0.0
        %5605 = vmatpush1.xpose.msra.mxu0 0.0
        %5606 = vmatprep.subr.mxu0 0.0
        %5607 = vmatpush1.xpose.msra.mxu0 0.0
        %5608 = vmatprep.subr.mxu0 0.0
        %5609 = vmatpush1.xpose.msra.mxu0 0.0
        %5610 = vmatprep.subr.mxu0 0.0
        %5611 = vmatpush1.xpose.msra.mxu0 0.0
        %5612 = vmatprep.subr.mxu0 0.0
        %5613 = vmatpush1.xpose.msra.mxu0 0.0
        %5614 = vmatprep.mubr.f32.mxu0 %v1323
        %5615 = vmatmul.mubr.f32.gmra.mrb[0].mxu0 %v1321
        %v5616 = vpop.f32.mrb[0].mxu0
        %v5617 = vadd.f32 %v5547, %v5616
        %v5618 = vpop.f32.mrb[0].mxu0
        %5619 = vdwg.mxu0
        %5620 = vmatprep.subr.mxu0 %v437
        %5621 = vmatpush1.xpose.msra.mxu0 %v436
        %5622 = vmatprep.subr.mxu0 %v693
        %5623 = vmatpush1.xpose.msra.mxu0 %v692
        %5624 = vmatprep.subr.mxu0 0.0
        %5625 = vmatpush1.xpose.msra.mxu0 0.0
        %5626 = vmatprep.subr.mxu0 0.0
        %5627 = vmatpush1.xpose.msra.mxu0 0.0
        %5628 = vmatprep.subr.mxu0 0.0
        %5629 = vmatpush1.xpose.msra.mxu0 0.0
        %5630 = vmatprep.subr.mxu0 0.0
        %5631 = vmatpush1.xpose.msra.mxu0 0.0
        %5632 = vmatprep.subr.mxu0 0.0
        %5633 = vmatpush1.xpose.msra.mxu0 0.0
        %5634 = vmatprep.subr.mxu0 0.0
        %5635 = vmatpush1.xpose.msra.mxu0 0.0
        %5636 = vmatprep.subr.mxu0 0.0
        %5637 = vmatpush1.xpose.msra.mxu0 0.0
        %5638 = vmatprep.subr.mxu0 0.0
        %5639 = vmatpush1.xpose.msra.mxu0 0.0
        %5640 = vmatprep.subr.mxu0 0.0
        %5641 = vmatpush1.xpose.msra.mxu0 0.0
        %5642 = vmatprep.subr.mxu0 0.0
        %5643 = vmatpush1.xpose.msra.mxu0 0.0
        %5644 = vmatprep.subr.mxu0 0.0
        %5645 = vmatpush1.xpose.msra.mxu0 0.0
        %5646 = vmatprep.subr.mxu0 0.0
        %5647 = vmatpush1.xpose.msra.mxu0 0.0
        %5648 = vmatprep.subr.mxu0 0.0
        %5649 = vmatpush1.xpose.msra.mxu0 0.0
        %5650 = vmatprep.subr.mxu0 0.0
        %5651 = vmatpush1.xpose.msra.mxu0 0.0
        %5652 = vmatprep.subr.mxu0 0.0
        %5653 = vmatpush1.xpose.msra.mxu0 0.0
        %5654 = vmatprep.subr.mxu0 0.0
        %5655 = vmatpush1.xpose.msra.mxu0 0.0
        %5656 = vmatprep.subr.mxu0 0.0
        %5657 = vmatpush1.xpose.msra.mxu0 0.0
        %5658 = vmatprep.subr.mxu0 0.0
        %5659 = vmatpush1.xpose.msra.mxu0 0.0
        %5660 = vmatprep.subr.mxu0 0.0
        %5661 = vmatpush1.xpose.msra.mxu0 0.0
        %5662 = vmatprep.subr.mxu0 0.0
        %5663 = vmatpush1.xpose.msra.mxu0 0.0
        %5664 = vmatprep.subr.mxu0 0.0
        %5665 = vmatpush1.xpose.msra.mxu0 0.0
        %5666 = vmatprep.subr.mxu0 0.0
        %5667 = vmatpush1.xpose.msra.mxu0 0.0
        %5668 = vmatprep.subr.mxu0 0.0
        %5669 = vmatpush1.xpose.msra.mxu0 0.0
        %5670 = vmatprep.subr.mxu0 0.0
        %5671 = vmatpush1.xpose.msra.mxu0 0.0
        %5672 = vmatprep.subr.mxu0 0.0
        %5673 = vmatpush1.xpose.msra.mxu0 0.0
        %5674 = vmatprep.subr.mxu0 0.0
        %5675 = vmatpush1.xpose.msra.mxu0 0.0
        %5676 = vmatprep.subr.mxu0 0.0
        %5677 = vmatpush1.xpose.msra.mxu0 0.0
        %5678 = vmatprep.subr.mxu0 0.0
        %5679 = vmatpush1.xpose.msra.mxu0 0.0
        %5680 = vmatprep.subr.mxu0 0.0
        %5681 = vmatpush1.xpose.msra.mxu0 0.0
        %5682 = vmatprep.subr.mxu0 0.0
        %5683 = vmatpush1.xpose.msra.mxu0 0.0
        %5684 = vmatprep.mubr.f32.mxu0 %v1339
        %5685 = vmatmul.mubr.f32.gmra.mrb[0].mxu0 %v1331
        %v5686 = vpop.f32.mrb[0].mxu0
        %v5687 = vadd.f32 %v5617, %v5686
        %v5688 = vpop.f32.mrb[0].mxu0
        %5689 = vdwg.mxu0
        %5690 = vmatprep.subr.mxu0 %v439
        %5691 = vmatpush1.xpose.msra.mxu0 %v438
        %5692 = vmatprep.subr.mxu0 %v695
        %5693 = vmatpush1.xpose.msra.mxu0 %v694
        %5694 = vmatprep.subr.mxu0 0.0
        %5695 = vmatpush1.xpose.msra.mxu0 0.0
        %5696 = vmatprep.subr.mxu0 0.0
        %5697 = vmatpush1.xpose.msra.mxu0 0.0
        %5698 = vmatprep.subr.mxu0 0.0
        %5699 = vmatpush1.xpose.msra.mxu0 0.0
        %5700 = vmatprep.subr.mxu0 0.0
        %5701 = vmatpush1.xpose.msra.mxu0 0.0
        %5702 = vmatprep.subr.mxu0 0.0
        %5703 = vmatpush1.xpose.msra.mxu0 0.0
        %5704 = vmatprep.subr.mxu0 0.0
        %5705 = vmatpush1.xpose.msra.mxu0 0.0
        %5706 = vmatprep.subr.mxu0 0.0
        %5707 = vmatpush1.xpose.msra.mxu0 0.0
        %5708 = vmatprep.subr.mxu0 0.0
        %5709 = vmatpush1.xpose.msra.mxu0 0.0
        %5710 = vmatprep.subr.mxu0 0.0
        %5711 = vmatpush1.xpose.msra.mxu0 0.0
        %5712 = vmatprep.subr.mxu0 0.0
        %5713 = vmatpush1.xpose.msra.mxu0 0.0
        %5714 = vmatprep.subr.mxu0 0.0
        %5715 = vmatpush1.xpose.msra.mxu0 0.0
        %5716 = vmatprep.subr.mxu0 0.0
        %5717 = vmatpush1.xpose.msra.mxu0 0.0
        %5718 = vmatprep.subr.mxu0 0.0
        %5719 = vmatpush1.xpose.msra.mxu0 0.0
        %5720 = vmatprep.subr.mxu0 0.0
        %5721 = vmatpush1.xpose.msra.mxu0 0.0
        %5722 = vmatprep.subr.mxu0 0.0
        %5723 = vmatpush1.xpose.msra.mxu0 0.0
        %5724 = vmatprep.subr.mxu0 0.0
        %5725 = vmatpush1.xpose.msra.mxu0 0.0
        %5726 = vmatprep.subr.mxu0 0.0
        %5727 = vmatpush1.xpose.msra.mxu0 0.0
        %5728 = vmatprep.subr.mxu0 0.0
        %5729 = vmatpush1.xpose.msra.mxu0 0.0
        %5730 = vmatprep.subr.mxu0 0.0
        %5731 = vmatpush1.xpose.msra.mxu0 0.0
        %5732 = vmatprep.subr.mxu0 0.0
        %5733 = vmatpush1.xpose.msra.mxu0 0.0
        %5734 = vmatprep.subr.mxu0 0.0
        %5735 = vmatpush1.xpose.msra.mxu0 0.0
        %5736 = vmatprep.subr.mxu0 0.0
        %5737 = vmatpush1.xpose.msra.mxu0 0.0
        %5738 = vmatprep.subr.mxu0 0.0
        %5739 = vmatpush1.xpose.msra.mxu0 0.0
        %5740 = vmatprep.subr.mxu0 0.0
        %5741 = vmatpush1.xpose.msra.mxu0 0.0
        %5742 = vmatprep.subr.mxu0 0.0
        %5743 = vmatpush1.xpose.msra.mxu0 0.0
        %5744 = vmatprep.subr.mxu0 0.0
        %5745 = vmatpush1.xpose.msra.mxu0 0.0
        %5746 = vmatprep.subr.mxu0 0.0
        %5747 = vmatpush1.xpose.msra.mxu0 0.0
        %5748 = vmatprep.subr.mxu0 0.0
        %5749 = vmatpush1.xpose.msra.mxu0 0.0
        %5750 = vmatprep.subr.mxu0 0.0
        %5751 = vmatpush1.xpose.msra.mxu0 0.0
        %5752 = vmatprep.subr.mxu0 0.0
        %5753 = vmatpush1.xpose.msra.mxu0 0.0
        %5754 = vmatprep.mubr.f32.mxu0 %v1340
        %5755 = vmatmul.mubr.f32.gmra.mrb[0].mxu0 %v1338
        %v5756 = vpop.f32.mrb[0].mxu0
        %v5757 = vadd.f32 %v5687, %v5756
        %v5758 = vpop.f32.mrb[0].mxu0
        %5759 = vdwg.mxu0
        %5760 = vmatprep.subr.mxu0 %v441
        %5761 = vmatpush1.xpose.msra.mxu0 %v440
        %5762 = vmatprep.subr.mxu0 %v697
        %5763 = vmatpush1.xpose.msra.mxu0 %v696
        %5764 = vmatprep.subr.mxu0 0.0
        %5765 = vmatpush1.xpose.msra.mxu0 0.0
        %5766 = vmatprep.subr.mxu0 0.0
        %5767 = vmatpush1.xpose.msra.mxu0 0.0
        %5768 = vmatprep.subr.mxu0 0.0
        %5769 = vmatpush1.xpose.msra.mxu0 0.0
        %5770 = vmatprep.subr.mxu0 0.0
        %5771 = vmatpush1.xpose.msra.mxu0 0.0
        %5772 = vmatprep.subr.mxu0 0.0
        %5773 = vmatpush1.xpose.msra.mxu0 0.0
        %5774 = vmatprep.subr.mxu0 0.0
        %5775 = vmatpush1.xpose.msra.mxu0 0.0
        %5776 = vmatprep.subr.mxu0 0.0
        %5777 = vmatpush1.xpose.msra.mxu0 0.0
        %5778 = vmatprep.subr.mxu0 0.0
        %5779 = vmatpush1.xpose.msra.mxu0 0.0
        %5780 = vmatprep.subr.mxu0 0.0
        %5781 = vmatpush1.xpose.msra.mxu0 0.0
        %5782 = vmatprep.subr.mxu0 0.0
        %5783 = vmatpush1.xpose.msra.mxu0 0.0
        %5784 = vmatprep.subr.mxu0 0.0
        %5785 = vmatpush1.xpose.msra.mxu0 0.0
        %5786 = vmatprep.subr.mxu0 0.0
        %5787 = vmatpush1.xpose.msra.mxu0 0.0
        %5788 = vmatprep.subr.mxu0 0.0
        %5789 = vmatpush1.xpose.msra.mxu0 0.0
        %5790 = vmatprep.subr.mxu0 0.0
        %5791 = vmatpush1.xpose.msra.mxu0 0.0
        %5792 = vmatprep.subr.mxu0 0.0
        %5793 = vmatpush1.xpose.msra.mxu0 0.0
        %5794 = vmatprep.subr.mxu0 0.0
        %5795 = vmatpush1.xpose.msra.mxu0 0.0
        %5796 = vmatprep.subr.mxu0 0.0
        %5797 = vmatpush1.xpose.msra.mxu0 0.0
        %5798 = vmatprep.subr.mxu0 0.0
        %5799 = vmatpush1.xpose.msra.mxu0 0.0
        %5800 = vmatprep.subr.mxu0 0.0
        %5801 = vmatpush1.xpose.msra.mxu0 0.0
        %5802 = vmatprep.subr.mxu0 0.0
        %5803 = vmatpush1.xpose.msra.mxu0 0.0
        %5804 = vmatprep.subr.mxu0 0.0
        %5805 = vmatpush1.xpose.msra.mxu0 0.0
        %5806 = vmatprep.subr.mxu0 0.0
        %5807 = vmatpush1.xpose.msra.mxu0 0.0
        %5808 = vmatprep.subr.mxu0 0.0
        %5809 = vmatpush1.xpose.msra.mxu0 0.0
        %5810 = vmatprep.subr.mxu0 0.0
        %5811 = vmatpush1.xpose.msra.mxu0 0.0
        %5812 = vmatprep.subr.mxu0 0.0
        %5813 = vmatpush1.xpose.msra.mxu0 0.0
        %5814 = vmatprep.subr.mxu0 0.0
        %5815 = vmatpush1.xpose.msra.mxu0 0.0
        %5816 = vmatprep.subr.mxu0 0.0
        %5817 = vmatpush1.xpose.msra.mxu0 0.0
        %5818 = vmatprep.subr.mxu0 0.0
        %5819 = vmatpush1.xpose.msra.mxu0 0.0
        %5820 = vmatprep.subr.mxu0 0.0
        %5821 = vmatpush1.xpose.msra.mxu0 0.0
        %5822 = vmatprep.subr.mxu0 0.0
        %5823 = vmatpush1.xpose.msra.mxu0 0.0
        %5824 = vmatprep.mubr.f32.mxu0 %v1356
        %5825 = vmatmul.mubr.f32.gmra.mrb[0].mxu0 %v1348
        %v5826 = vpop.f32.mrb[0].mxu0
        %v5827 = vadd.f32 %v5757, %v5826
        %v5828 = vpop.f32.mrb[0].mxu0
        %5829 = vdwg.mxu0
        %5830 = vmatprep.subr.mxu0 %v443
        %5831 = vmatpush1.xpose.msra.mxu0 %v442
        %5832 = vmatprep.subr.mxu0 %v699
        %5833 = vmatpush1.xpose.msra.mxu0 %v698
        %5834 = vmatprep.subr.mxu0 0.0
        %5835 = vmatpush1.xpose.msra.mxu0 0.0
        %5836 = vmatprep.subr.mxu0 0.0
        %5837 = vmatpush1.xpose.msra.mxu0 0.0
        %5838 = vmatprep.subr.mxu0 0.0
        %5839 = vmatpush1.xpose.msra.mxu0 0.0
        %5840 = vmatprep.subr.mxu0 0.0
        %5841 = vmatpush1.xpose.msra.mxu0 0.0
        %5842 = vmatprep.subr.mxu0 0.0
        %5843 = vmatpush1.xpose.msra.mxu0 0.0
        %5844 = vmatprep.subr.mxu0 0.0
        %5845 = vmatpush1.xpose.msra.mxu0 0.0
        %5846 = vmatprep.subr.mxu0 0.0
        %5847 = vmatpush1.xpose.msra.mxu0 0.0
        %5848 = vmatprep.subr.mxu0 0.0
        %5849 = vmatpush1.xpose.msra.mxu0 0.0
        %5850 = vmatprep.subr.mxu0 0.0
        %5851 = vmatpush1.xpose.msra.mxu0 0.0
        %5852 = vmatprep.subr.mxu0 0.0
        %5853 = vmatpush1.xpose.msra.mxu0 0.0
        %5854 = vmatprep.subr.mxu0 0.0
        %5855 = vmatpush1.xpose.msra.mxu0 0.0
        %5856 = vmatprep.subr.mxu0 0.0
        %5857 = vmatpush1.xpose.msra.mxu0 0.0
        %5858 = vmatprep.subr.mxu0 0.0
        %5859 = vmatpush1.xpose.msra.mxu0 0.0
        %5860 = vmatprep.subr.mxu0 0.0
        %5861 = vmatpush1.xpose.msra.mxu0 0.0
        %5862 = vmatprep.subr.mxu0 0.0
        %5863 = vmatpush1.xpose.msra.mxu0 0.0
        %5864 = vmatprep.subr.mxu0 0.0
        %5865 = vmatpush1.xpose.msra.mxu0 0.0
        %5866 = vmatprep.subr.mxu0 0.0
        %5867 = vmatpush1.xpose.msra.mxu0 0.0
        %5868 = vmatprep.subr.mxu0 0.0
        %5869 = vmatpush1.xpose.msra.mxu0 0.0
        %5870 = vmatprep.subr.mxu0 0.0
        %5871 = vmatpush1.xpose.msra.mxu0 0.0
        %5872 = vmatprep.subr.mxu0 0.0
        %5873 = vmatpush1.xpose.msra.mxu0 0.0
        %5874 = vmatprep.subr.mxu0 0.0
        %5875 = vmatpush1.xpose.msra.mxu0 0.0
        %5876 = vmatprep.subr.mxu0 0.0
        %5877 = vmatpush1.xpose.msra.mxu0 0.0
        %5878 = vmatprep.subr.mxu0 0.0
        %5879 = vmatpush1.xpose.msra.mxu0 0.0
        %5880 = vmatprep.subr.mxu0 0.0
        %5881 = vmatpush1.xpose.msra.mxu0 0.0
        %5882 = vmatprep.subr.mxu0 0.0
        %5883 = vmatpush1.xpose.msra.mxu0 0.0
        %5884 = vmatprep.subr.mxu0 0.0
        %5885 = vmatpush1.xpose.msra.mxu0 0.0
        %5886 = vmatprep.subr.mxu0 0.0
        %5887 = vmatpush1.xpose.msra.mxu0 0.0
        %5888 = vmatprep.subr.mxu0 0.0
        %5889 = vmatpush1.xpose.msra.mxu0 0.0
        %5890 = vmatprep.subr.mxu0 0.0
        %5891 = vmatpush1.xpose.msra.mxu0 0.0
        %5892 = vmatprep.subr.mxu0 0.0
        %5893 = vmatpush1.xpose.msra.mxu0 0.0
        %5894 = vmatprep.mubr.f32.mxu0 %v1357
        %5895 = vmatmul.mubr.f32.gmra.mrb[0].mxu0 %v1355
        %v5896 = vpop.f32.mrb[0].mxu0
        %v5897 = vadd.f32 %v5827, %v5896
        %v5898 = vpop.f32.mrb[0].mxu0
        %5899 = vdwg.mxu0
        %5900 = vmatprep.subr.mxu0 %v445
        %5901 = vmatpush1.xpose.msra.mxu0 %v444
        %5902 = vmatprep.subr.mxu0 %v701
        %5903 = vmatpush1.xpose.msra.mxu0 %v700
        %5904 = vmatprep.subr.mxu0 0.0
        %5905 = vmatpush1.xpose.msra.mxu0 0.0
        %5906 = vmatprep.subr.mxu0 0.0
        %5907 = vmatpush1.xpose.msra.mxu0 0.0
        %5908 = vmatprep.subr.mxu0 0.0
        %5909 = vmatpush1.xpose.msra.mxu0 0.0
        %5910 = vmatprep.subr.mxu0 0.0
        %5911 = vmatpush1.xpose.msra.mxu0 0.0
        %5912 = vmatprep.subr.mxu0 0.0
        %5913 = vmatpush1.xpose.msra.mxu0 0.0
        %5914 = vmatprep.subr.mxu0 0.0
        %5915 = vmatpush1.xpose.msra.mxu0 0.0
        %5916 = vmatprep.subr.mxu0 0.0
        %5917 = vmatpush1.xpose.msra.mxu0 0.0
        %5918 = vmatprep.subr.mxu0 0.0
        %5919 = vmatpush1.xpose.msra.mxu0 0.0
        %5920 = vmatprep.subr.mxu0 0.0
        %5921 = vmatpush1.xpose.msra.mxu0 0.0
        %5922 = vmatprep.subr.mxu0 0.0
        %5923 = vmatpush1.xpose.msra.mxu0 0.0
        %5924 = vmatprep.subr.mxu0 0.0
        %5925 = vmatpush1.xpose.msra.mxu0 0.0
        %5926 = vmatprep.subr.mxu0 0.0
        %5927 = vmatpush1.xpose.msra.mxu0 0.0
        %5928 = vmatprep.subr.mxu0 0.0
        %5929 = vmatpush1.xpose.msra.mxu0 0.0
        %5930 = vmatprep.subr.mxu0 0.0
        %5931 = vmatpush1.xpose.msra.mxu0 0.0
        %5932 = vmatprep.subr.mxu0 0.0
        %5933 = vmatpush1.xpose.msra.mxu0 0.0
        %5934 = vmatprep.subr.mxu0 0.0
        %5935 = vmatpush1.xpose.msra.mxu0 0.0
        %5936 = vmatprep.subr.mxu0 0.0
        %5937 = vmatpush1.xpose.msra.mxu0 0.0
        %5938 = vmatprep.subr.mxu0 0.0
        %5939 = vmatpush1.xpose.msra.mxu0 0.0
        %5940 = vmatprep.subr.mxu0 0.0
        %5941 = vmatpush1.xpose.msra.mxu0 0.0
        %5942 = vmatprep.subr.mxu0 0.0
        %5943 = vmatpush1.xpose.msra.mxu0 0.0
        %5944 = vmatprep.subr.mxu0 0.0
        %5945 = vmatpush1.xpose.msra.mxu0 0.0
        %5946 = vmatprep.subr.mxu0 0.0
        %5947 = vmatpush1.xpose.msra.mxu0 0.0
        %5948 = vmatprep.subr.mxu0 0.0
        %5949 = vmatpush1.xpose.msra.mxu0 0.0
        %5950 = vmatprep.subr.mxu0 0.0
        %5951 = vmatpush1.xpose.msra.mxu0 0.0
        %5952 = vmatprep.subr.mxu0 0.0
        %5953 = vmatpush1.xpose.msra.mxu0 0.0
        %5954 = vmatprep.subr.mxu0 0.0
        %5955 = vmatpush1.xpose.msra.mxu0 0.0
        %5956 = vmatprep.subr.mxu0 0.0
        %5957 = vmatpush1.xpose.msra.mxu0 0.0
        %5958 = vmatprep.subr.mxu0 0.0
        %5959 = vmatpush1.xpose.msra.mxu0 0.0
        %5960 = vmatprep.subr.mxu0 0.0
        %5961 = vmatpush1.xpose.msra.mxu0 0.0
        %5962 = vmatprep.subr.mxu0 0.0
        %5963 = vmatpush1.xpose.msra.mxu0 0.0
        %5964 = vmatprep.mubr.f32.mxu0 %v1373
        %5965 = vmatmul.mubr.f32.gmra.mrb[0].mxu0 %v1365
        %v5966 = vpop.f32.mrb[0].mxu0
        %v5967 = vadd.f32 %v5897, %v5966
        %v5968 = vpop.f32.mrb[0].mxu0
        %5969 = vdwg.mxu0
        %5970 = vmatprep.subr.mxu0 %v447
        %5971 = vmatpush1.xpose.msra.mxu0 %v446
        %5972 = vmatprep.subr.mxu0 %v703
        %5973 = vmatpush1.xpose.msra.mxu0 %v702
        %5974 = vmatprep.subr.mxu0 0.0
        %5975 = vmatpush1.xpose.msra.mxu0 0.0
        %5976 = vmatprep.subr.mxu0 0.0
        %5977 = vmatpush1.xpose.msra.mxu0 0.0
        %5978 = vmatprep.subr.mxu0 0.0
        %5979 = vmatpush1.xpose.msra.mxu0 0.0
        %5980 = vmatprep.subr.mxu0 0.0
        %5981 = vmatpush1.xpose.msra.mxu0 0.0
        %5982 = vmatprep.subr.mxu0 0.0
        %5983 = vmatpush1.xpose.msra.mxu0 0.0
        %5984 = vmatprep.subr.mxu0 0.0
        %5985 = vmatpush1.xpose.msra.mxu0 0.0
        %5986 = vmatprep.subr.mxu0 0.0
        %5987 = vmatpush1.xpose.msra.mxu0 0.0
        %5988 = vmatprep.subr.mxu0 0.0
        %5989 = vmatpush1.xpose.msra.mxu0 0.0
        %5990 = vmatprep.subr.mxu0 0.0
        %5991 = vmatpush1.xpose.msra.mxu0 0.0
        %5992 = vmatprep.subr.mxu0 0.0
        %5993 = vmatpush1.xpose.msra.mxu0 0.0
        %5994 = vmatprep.subr.mxu0 0.0
        %5995 = vmatpush1.xpose.msra.mxu0 0.0
        %5996 = vmatprep.subr.mxu0 0.0
        %5997 = vmatpush1.xpose.msra.mxu0 0.0
        %5998 = vmatprep.subr.mxu0 0.0
        %5999 = vmatpush1.xpose.msra.mxu0 0.0
        %6000 = vmatprep.subr.mxu0 0.0
        %6001 = vmatpush1.xpose.msra.mxu0 0.0
        %6002 = vmatprep.subr.mxu0 0.0
        %6003 = vmatpush1.xpose.msra.mxu0 0.0
        %6004 = vmatprep.subr.mxu0 0.0
        %6005 = vmatpush1.xpose.msra.mxu0 0.0
        %6006 = vmatprep.subr.mxu0 0.0
        %6007 = vmatpush1.xpose.msra.mxu0 0.0
        %6008 = vmatprep.subr.mxu0 0.0
        %6009 = vmatpush1.xpose.msra.mxu0 0.0
        %6010 = vmatprep.subr.mxu0 0.0
        %6011 = vmatpush1.xpose.msra.mxu0 0.0
        %6012 = vmatprep.subr.mxu0 0.0
        %6013 = vmatpush1.xpose.msra.mxu0 0.0
        %6014 = vmatprep.subr.mxu0 0.0
        %6015 = vmatpush1.xpose.msra.mxu0 0.0
        %6016 = vmatprep.subr.mxu0 0.0
        %6017 = vmatpush1.xpose.msra.mxu0 0.0
        %6018 = vmatprep.subr.mxu0 0.0
        %6019 = vmatpush1.xpose.msra.mxu0 0.0
        %6020 = vmatprep.subr.mxu0 0.0
        %6021 = vmatpush1.xpose.msra.mxu0 0.0
        %6022 = vmatprep.subr.mxu0 0.0
        %6023 = vmatpush1.xpose.msra.mxu0 0.0
        %6024 = vmatprep.subr.mxu0 0.0
        %6025 = vmatpush1.xpose.msra.mxu0 0.0
        %6026 = vmatprep.subr.mxu0 0.0
        %6027 = vmatpush1.xpose.msra.mxu0 0.0
        %6028 = vmatprep.subr.mxu0 0.0
        %6029 = vmatpush1.xpose.msra.mxu0 0.0
        %6030 = vmatprep.subr.mxu0 0.0
        %6031 = vmatpush1.xpose.msra.mxu0 0.0
        %6032 = vmatprep.subr.mxu0 0.0
        %6033 = vmatpush1.xpose.msra.mxu0 0.0
        %6034 = vmatprep.mubr.f32.mxu0 %v1374
        %6035 = vmatmul.mubr.f32.gmra.mrb[0].mxu0 %v1372
        %v6036 = vpop.f32.mrb[0].mxu0
        %v6037 = vadd.f32 %v5967, %v6036
        %v6038 = vpop.f32.mrb[0].mxu0
        %6039 = vdwg.mxu0
        %6040 = vmatprep.subr.mxu0 %v449
        %6041 = vmatpush1.xpose.msra.mxu0 %v448
        %6042 = vmatprep.subr.mxu0 %v705
        %6043 = vmatpush1.xpose.msra.mxu0 %v704
        %6044 = vmatprep.subr.mxu0 0.0
        %6045 = vmatpush1.xpose.msra.mxu0 0.0
        %6046 = vmatprep.subr.mxu0 0.0
        %6047 = vmatpush1.xpose.msra.mxu0 0.0
        %6048 = vmatprep.subr.mxu0 0.0
        %6049 = vmatpush1.xpose.msra.mxu0 0.0
        %6050 = vmatprep.subr.mxu0 0.0
        %6051 = vmatpush1.xpose.msra.mxu0 0.0
        %6052 = vmatprep.subr.mxu0 0.0
        %6053 = vmatpush1.xpose.msra.mxu0 0.0
        %6054 = vmatprep.subr.mxu0 0.0
        %6055 = vmatpush1.xpose.msra.mxu0 0.0
        %6056 = vmatprep.subr.mxu0 0.0
        %6057 = vmatpush1.xpose.msra.mxu0 0.0
        %6058 = vmatprep.subr.mxu0 0.0
        %6059 = vmatpush1.xpose.msra.mxu0 0.0
        %6060 = vmatprep.subr.mxu0 0.0
        %6061 = vmatpush1.xpose.msra.mxu0 0.0
        %6062 = vmatprep.subr.mxu0 0.0
        %6063 = vmatpush1.xpose.msra.mxu0 0.0
        %6064 = vmatprep.subr.mxu0 0.0
        %6065 = vmatpush1.xpose.msra.mxu0 0.0
        %6066 = vmatprep.subr.mxu0 0.0
        %6067 = vmatpush1.xpose.msra.mxu0 0.0
        %6068 = vmatprep.subr.mxu0 0.0
        %6069 = vmatpush1.xpose.msra.mxu0 0.0
        %6070 = vmatprep.subr.mxu0 0.0
        %6071 = vmatpush1.xpose.msra.mxu0 0.0
        %6072 = vmatprep.subr.mxu0 0.0
        %6073 = vmatpush1.xpose.msra.mxu0 0.0
        %6074 = vmatprep.subr.mxu0 0.0
        %6075 = vmatpush1.xpose.msra.mxu0 0.0
        %6076 = vmatprep.subr.mxu0 0.0
        %6077 = vmatpush1.xpose.msra.mxu0 0.0
        %6078 = vmatprep.subr.mxu0 0.0
        %6079 = vmatpush1.xpose.msra.mxu0 0.0
        %6080 = vmatprep.subr.mxu0 0.0
        %6081 = vmatpush1.xpose.msra.mxu0 0.0
        %6082 = vmatprep.subr.mxu0 0.0
        %6083 = vmatpush1.xpose.msra.mxu0 0.0
        %6084 = vmatprep.subr.mxu0 0.0
        %6085 = vmatpush1.xpose.msra.mxu0 0.0
        %6086 = vmatprep.subr.mxu0 0.0
        %6087 = vmatpush1.xpose.msra.mxu0 0.0
        %6088 = vmatprep.subr.mxu0 0.0
        %6089 = vmatpush1.xpose.msra.mxu0 0.0
        %6090 = vmatprep.subr.mxu0 0.0
        %6091 = vmatpush1.xpose.msra.mxu0 0.0
        %6092 = vmatprep.subr.mxu0 0.0
        %6093 = vmatpush1.xpose.msra.mxu0 0.0
        %6094 = vmatprep.subr.mxu0 0.0
        %6095 = vmatpush1.xpose.msra.mxu0 0.0
        %6096 = vmatprep.subr.mxu0 0.0
        %6097 = vmatpush1.xpose.msra.mxu0 0.0
        %6098 = vmatprep.subr.mxu0 0.0
        %6099 = vmatpush1.xpose.msra.mxu0 0.0
        %6100 = vmatprep.subr.mxu0 0.0
        %6101 = vmatpush1.xpose.msra.mxu0 0.0
        %6102 = vmatprep.subr.mxu0 0.0
        %6103 = vmatpush1.xpose.msra.mxu0 0.0
        %6104 = vmatprep.mubr.f32.mxu0 %v1390
        %6105 = vmatmul.mubr.f32.gmra.mrb[0].mxu0 %v1382
        %v6106 = vpop.f32.mrb[0].mxu0
        %v6107 = vadd.f32 %v6037, %v6106
        %v6108 = vpop.f32.mrb[0].mxu0
        %6109 = vdwg.mxu0
        %6110 = vmatprep.subr.mxu0 %v451
        %6111 = vmatpush1.xpose.msra.mxu0 %v450
        %6112 = vmatprep.subr.mxu0 %v707
        %6113 = vmatpush1.xpose.msra.mxu0 %v706
        %6114 = vmatprep.subr.mxu0 0.0
        %6115 = vmatpush1.xpose.msra.mxu0 0.0
        %6116 = vmatprep.subr.mxu0 0.0
        %6117 = vmatpush1.xpose.msra.mxu0 0.0
        %6118 = vmatprep.subr.mxu0 0.0
        %6119 = vmatpush1.xpose.msra.mxu0 0.0
        %6120 = vmatprep.subr.mxu0 0.0
        %6121 = vmatpush1.xpose.msra.mxu0 0.0
        %6122 = vmatprep.subr.mxu0 0.0
        %6123 = vmatpush1.xpose.msra.mxu0 0.0
        %6124 = vmatprep.subr.mxu0 0.0
        %6125 = vmatpush1.xpose.msra.mxu0 0.0
        %6126 = vmatprep.subr.mxu0 0.0
        %6127 = vmatpush1.xpose.msra.mxu0 0.0
        %6128 = vmatprep.subr.mxu0 0.0
        %6129 = vmatpush1.xpose.msra.mxu0 0.0
        %6130 = vmatprep.subr.mxu0 0.0
        %6131 = vmatpush1.xpose.msra.mxu0 0.0
        %6132 = vmatprep.subr.mxu0 0.0
        %6133 = vmatpush1.xpose.msra.mxu0 0.0
        %6134 = vmatprep.subr.mxu0 0.0
        %6135 = vmatpush1.xpose.msra.mxu0 0.0
        %6136 = vmatprep.subr.mxu0 0.0
        %6137 = vmatpush1.xpose.msra.mxu0 0.0
        %6138 = vmatprep.subr.mxu0 0.0
        %6139 = vmatpush1.xpose.msra.mxu0 0.0
        %6140 = vmatprep.subr.mxu0 0.0
        %6141 = vmatpush1.xpose.msra.mxu0 0.0
        %6142 = vmatprep.subr.mxu0 0.0
        %6143 = vmatpush1.xpose.msra.mxu0 0.0
        %6144 = vmatprep.subr.mxu0 0.0
        %6145 = vmatpush1.xpose.msra.mxu0 0.0
        %6146 = vmatprep.subr.mxu0 0.0
        %6147 = vmatpush1.xpose.msra.mxu0 0.0
        %6148 = vmatprep.subr.mxu0 0.0
        %6149 = vmatpush1.xpose.msra.mxu0 0.0
        %6150 = vmatprep.subr.mxu0 0.0
        %6151 = vmatpush1.xpose.msra.mxu0 0.0
        %6152 = vmatprep.subr.mxu0 0.0
        %6153 = vmatpush1.xpose.msra.mxu0 0.0
        %6154 = vmatprep.subr.mxu0 0.0
        %6155 = vmatpush1.xpose.msra.mxu0 0.0
        %6156 = vmatprep.subr.mxu0 0.0
        %6157 = vmatpush1.xpose.msra.mxu0 0.0
        %6158 = vmatprep.subr.mxu0 0.0
        %6159 = vmatpush1.xpose.msra.mxu0 0.0
        %6160 = vmatprep.subr.mxu0 0.0
        %6161 = vmatpush1.xpose.msra.mxu0 0.0
        %6162 = vmatprep.subr.mxu0 0.0
        %6163 = vmatpush1.xpose.msra.mxu0 0.0
        %6164 = vmatprep.subr.mxu0 0.0
        %6165 = vmatpush1.xpose.msra.mxu0 0.0
        %6166 = vmatprep.subr.mxu0 0.0
        %6167 = vmatpush1.xpose.msra.mxu0 0.0
        %6168 = vmatprep.subr.mxu0 0.0
        %6169 = vmatpush1.xpose.msra.mxu0 0.0
        %6170 = vmatprep.subr.mxu0 0.0
        %6171 = vmatpush1.xpose.msra.mxu0 0.0
        %6172 = vmatprep.subr.mxu0 0.0
        %6173 = vmatpush1.xpose.msra.mxu0 0.0
        %6174 = vmatprep.mubr.f32.mxu0 %v1391
        %6175 = vmatmul.mubr.f32.gmra.mrb[0].mxu0 %v1389
        %v6176 = vpop.f32.mrb[0].mxu0
        %v6177 = vadd.f32 %v6107, %v6176
        %v6178 = vpop.f32.mrb[0].mxu0
        %6179 = vdwg.mxu0
        %6180 = vmatprep.subr.mxu0 %v453
        %6181 = vmatpush1.xpose.msra.mxu0 %v452
        %6182 = vmatprep.subr.mxu0 %v709
        %6183 = vmatpush1.xpose.msra.mxu0 %v708
        %6184 = vmatprep.subr.mxu0 0.0
        %6185 = vmatpush1.xpose.msra.mxu0 0.0
        %6186 = vmatprep.subr.mxu0 0.0
        %6187 = vmatpush1.xpose.msra.mxu0 0.0
        %6188 = vmatprep.subr.mxu0 0.0
        %6189 = vmatpush1.xpose.msra.mxu0 0.0
        %6190 = vmatprep.subr.mxu0 0.0
        %6191 = vmatpush1.xpose.msra.mxu0 0.0
        %6192 = vmatprep.subr.mxu0 0.0
        %6193 = vmatpush1.xpose.msra.mxu0 0.0
        %6194 = vmatprep.subr.mxu0 0.0
        %6195 = vmatpush1.xpose.msra.mxu0 0.0
        %6196 = vmatprep.subr.mxu0 0.0
        %6197 = vmatpush1.xpose.msra.mxu0 0.0
        %6198 = vmatprep.subr.mxu0 0.0
        %6199 = vmatpush1.xpose.msra.mxu0 0.0
        %6200 = vmatprep.subr.mxu0 0.0
        %6201 = vmatpush1.xpose.msra.mxu0 0.0
        %6202 = vmatprep.subr.mxu0 0.0
        %6203 = vmatpush1.xpose.msra.mxu0 0.0
        %6204 = vmatprep.subr.mxu0 0.0
        %6205 = vmatpush1.xpose.msra.mxu0 0.0
        %6206 = vmatprep.subr.mxu0 0.0
        %6207 = vmatpush1.xpose.msra.mxu0 0.0
        %6208 = vmatprep.subr.mxu0 0.0
        %6209 = vmatpush1.xpose.msra.mxu0 0.0
        %6210 = vmatprep.subr.mxu0 0.0
        %6211 = vmatpush1.xpose.msra.mxu0 0.0
        %6212 = vmatprep.subr.mxu0 0.0
        %6213 = vmatpush1.xpose.msra.mxu0 0.0
        %6214 = vmatprep.subr.mxu0 0.0
        %6215 = vmatpush1.xpose.msra.mxu0 0.0
        %6216 = vmatprep.subr.mxu0 0.0
        %6217 = vmatpush1.xpose.msra.mxu0 0.0
        %6218 = vmatprep.subr.mxu0 0.0
        %6219 = vmatpush1.xpose.msra.mxu0 0.0
        %6220 = vmatprep.subr.mxu0 0.0
        %6221 = vmatpush1.xpose.msra.mxu0 0.0
        %6222 = vmatprep.subr.mxu0 0.0
        %6223 = vmatpush1.xpose.msra.mxu0 0.0
        %6224 = vmatprep.subr.mxu0 0.0
        %6225 = vmatpush1.xpose.msra.mxu0 0.0
        %6226 = vmatprep.subr.mxu0 0.0
        %6227 = vmatpush1.xpose.msra.mxu0 0.0
        %6228 = vmatprep.subr.mxu0 0.0
        %6229 = vmatpush1.xpose.msra.mxu0 0.0
        %6230 = vmatprep.subr.mxu0 0.0
        %6231 = vmatpush1.xpose.msra.mxu0 0.0
        %6232 = vmatprep.subr.mxu0 0.0
        %6233 = vmatpush1.xpose.msra.mxu0 0.0
        %6234 = vmatprep.subr.mxu0 0.0
        %6235 = vmatpush1.xpose.msra.mxu0 0.0
        %6236 = vmatprep.subr.mxu0 0.0
        %6237 = vmatpush1.xpose.msra.mxu0 0.0
        %6238 = vmatprep.subr.mxu0 0.0
        %6239 = vmatpush1.xpose.msra.mxu0 0.0
        %6240 = vmatprep.subr.mxu0 0.0
        %6241 = vmatpush1.xpose.msra.mxu0 0.0
        %6242 = vmatprep.subr.mxu0 0.0
        %6243 = vmatpush1.xpose.msra.mxu0 0.0
        %6244 = vmatprep.mubr.f32.mxu0 %v1407
        %6245 = vmatmul.mubr.f32.gmra.mrb[0].mxu0 %v1399
        %v6246 = vpop.f32.mrb[0].mxu0
        %v6247 = vadd.f32 %v6177, %v6246
        %v6248 = vpop.f32.mrb[0].mxu0
        %6249 = vdwg.mxu0
        %6250 = vmatprep.subr.mxu0 %v455
        %6251 = vmatpush1.xpose.msra.mxu0 %v454
        %6252 = vmatprep.subr.mxu0 %v711
        %6253 = vmatpush1.xpose.msra.mxu0 %v710
        %6254 = vmatprep.subr.mxu0 0.0
        %6255 = vmatpush1.xpose.msra.mxu0 0.0
        %6256 = vmatprep.subr.mxu0 0.0
        %6257 = vmatpush1.xpose.msra.mxu0 0.0
        %6258 = vmatprep.subr.mxu0 0.0
        %6259 = vmatpush1.xpose.msra.mxu0 0.0
        %6260 = vmatprep.subr.mxu0 0.0
        %6261 = vmatpush1.xpose.msra.mxu0 0.0
        %6262 = vmatprep.subr.mxu0 0.0
        %6263 = vmatpush1.xpose.msra.mxu0 0.0
        %6264 = vmatprep.subr.mxu0 0.0
        %6265 = vmatpush1.xpose.msra.mxu0 0.0
        %6266 = vmatprep.subr.mxu0 0.0
        %6267 = vmatpush1.xpose.msra.mxu0 0.0
        %6268 = vmatprep.subr.mxu0 0.0
        %6269 = vmatpush1.xpose.msra.mxu0 0.0
        %6270 = vmatprep.subr.mxu0 0.0
        %6271 = vmatpush1.xpose.msra.mxu0 0.0
        %6272 = vmatprep.subr.mxu0 0.0
        %6273 = vmatpush1.xpose.msra.mxu0 0.0
        %6274 = vmatprep.subr.mxu0 0.0
        %6275 = vmatpush1.xpose.msra.mxu0 0.0
        %6276 = vmatprep.subr.mxu0 0.0
        %6277 = vmatpush1.xpose.msra.mxu0 0.0
        %6278 = vmatprep.subr.mxu0 0.0
        %6279 = vmatpush1.xpose.msra.mxu0 0.0
        %6280 = vmatprep.subr.mxu0 0.0
        %6281 = vmatpush1.xpose.msra.mxu0 0.0
        %6282 = vmatprep.subr.mxu0 0.0
        %6283 = vmatpush1.xpose.msra.mxu0 0.0
        %6284 = vmatprep.subr.mxu0 0.0
        %6285 = vmatpush1.xpose.msra.mxu0 0.0
        %6286 = vmatprep.subr.mxu0 0.0
        %6287 = vmatpush1.xpose.msra.mxu0 0.0
        %6288 = vmatprep.subr.mxu0 0.0
        %6289 = vmatpush1.xpose.msra.mxu0 0.0
        %6290 = vmatprep.subr.mxu0 0.0
        %6291 = vmatpush1.xpose.msra.mxu0 0.0
        %6292 = vmatprep.subr.mxu0 0.0
        %6293 = vmatpush1.xpose.msra.mxu0 0.0
        %6294 = vmatprep.subr.mxu0 0.0
        %6295 = vmatpush1.xpose.msra.mxu0 0.0
        %6296 = vmatprep.subr.mxu0 0.0
        %6297 = vmatpush1.xpose.msra.mxu0 0.0
        %6298 = vmatprep.subr.mxu0 0.0
        %6299 = vmatpush1.xpose.msra.mxu0 0.0
        %6300 = vmatprep.subr.mxu0 0.0
        %6301 = vmatpush1.xpose.msra.mxu0 0.0
        %6302 = vmatprep.subr.mxu0 0.0
        %6303 = vmatpush1.xpose.msra.mxu0 0.0
        %6304 = vmatprep.subr.mxu0 0.0
        %6305 = vmatpush1.xpose.msra.mxu0 0.0
        %6306 = vmatprep.subr.mxu0 0.0
        %6307 = vmatpush1.xpose.msra.mxu0 0.0
        %6308 = vmatprep.subr.mxu0 0.0
        %6309 = vmatpush1.xpose.msra.mxu0 0.0
        %6310 = vmatprep.subr.mxu0 0.0
        %6311 = vmatpush1.xpose.msra.mxu0 0.0
        %6312 = vmatprep.subr.mxu0 0.0
        %6313 = vmatpush1.xpose.msra.mxu0 0.0
        %6314 = vmatprep.mubr.f32.mxu0 %v1408
        %6315 = vmatmul.mubr.f32.gmra.mrb[0].mxu0 %v1406
        %v6316 = vpop.f32.mrb[0].mxu0
        %v6317 = vadd.f32 %v6247, %v6316
        %v6318 = vpop.f32.mrb[0].mxu0
        %6319 = vdwg.mxu0
        %6320 = vmatprep.subr.mxu0 %v457
        %6321 = vmatpush1.xpose.msra.mxu0 %v456
        %6322 = vmatprep.subr.mxu0 %v713
        %6323 = vmatpush1.xpose.msra.mxu0 %v712
        %6324 = vmatprep.subr.mxu0 0.0
        %6325 = vmatpush1.xpose.msra.mxu0 0.0
        %6326 = vmatprep.subr.mxu0 0.0
        %6327 = vmatpush1.xpose.msra.mxu0 0.0
        %6328 = vmatprep.subr.mxu0 0.0
        %6329 = vmatpush1.xpose.msra.mxu0 0.0
        %6330 = vmatprep.subr.mxu0 0.0
        %6331 = vmatpush1.xpose.msra.mxu0 0.0
        %6332 = vmatprep.subr.mxu0 0.0
        %6333 = vmatpush1.xpose.msra.mxu0 0.0
        %6334 = vmatprep.subr.mxu0 0.0
        %6335 = vmatpush1.xpose.msra.mxu0 0.0
        %6336 = vmatprep.subr.mxu0 0.0
        %6337 = vmatpush1.xpose.msra.mxu0 0.0
        %6338 = vmatprep.subr.mxu0 0.0
        %6339 = vmatpush1.xpose.msra.mxu0 0.0
        %6340 = vmatprep.subr.mxu0 0.0
        %6341 = vmatpush1.xpose.msra.mxu0 0.0
        %6342 = vmatprep.subr.mxu0 0.0
        %6343 = vmatpush1.xpose.msra.mxu0 0.0
        %6344 = vmatprep.subr.mxu0 0.0
        %6345 = vmatpush1.xpose.msra.mxu0 0.0
        %6346 = vmatprep.subr.mxu0 0.0
        %6347 = vmatpush1.xpose.msra.mxu0 0.0
        %6348 = vmatprep.subr.mxu0 0.0
        %6349 = vmatpush1.xpose.msra.mxu0 0.0
        %6350 = vmatprep.subr.mxu0 0.0
        %6351 = vmatpush1.xpose.msra.mxu0 0.0
        %6352 = vmatprep.subr.mxu0 0.0
        %6353 = vmatpush1.xpose.msra.mxu0 0.0
        %6354 = vmatprep.subr.mxu0 0.0
        %6355 = vmatpush1.xpose.msra.mxu0 0.0
        %6356 = vmatprep.subr.mxu0 0.0
        %6357 = vmatpush1.xpose.msra.mxu0 0.0
        %6358 = vmatprep.subr.mxu0 0.0
        %6359 = vmatpush1.xpose.msra.mxu0 0.0
        %6360 = vmatprep.subr.mxu0 0.0
        %6361 = vmatpush1.xpose.msra.mxu0 0.0
        %6362 = vmatprep.subr.mxu0 0.0
        %6363 = vmatpush1.xpose.msra.mxu0 0.0
        %6364 = vmatprep.subr.mxu0 0.0
        %6365 = vmatpush1.xpose.msra.mxu0 0.0
        %6366 = vmatprep.subr.mxu0 0.0
        %6367 = vmatpush1.xpose.msra.mxu0 0.0
        %6368 = vmatprep.subr.mxu0 0.0
        %6369 = vmatpush1.xpose.msra.mxu0 0.0
        %6370 = vmatprep.subr.mxu0 0.0
        %6371 = vmatpush1.xpose.msra.mxu0 0.0
        %6372 = vmatprep.subr.mxu0 0.0
        %6373 = vmatpush1.xpose.msra.mxu0 0.0
        %6374 = vmatprep.subr.mxu0 0.0
        %6375 = vmatpush1.xpose.msra.mxu0 0.0
        %6376 = vmatprep.subr.mxu0 0.0
        %6377 = vmatpush1.xpose.msra.mxu0 0.0
        %6378 = vmatprep.subr.mxu0 0.0
        %6379 = vmatpush1.xpose.msra.mxu0 0.0
        %6380 = vmatprep.subr.mxu0 0.0
        %6381 = vmatpush1.xpose.msra.mxu0 0.0
        %6382 = vmatprep.subr.mxu0 0.0
        %6383 = vmatpush1.xpose.msra.mxu0 0.0
        %6384 = vmatprep.mubr.f32.mxu0 %v1424
        %6385 = vmatmul.mubr.f32.gmra.mrb[0].mxu0 %v1416
        %v6386 = vpop.f32.mrb[0].mxu0
        %v6387 = vadd.f32 %v6317, %v6386
        %v6388 = vpop.f32.mrb[0].mxu0
        %6389 = vdwg.mxu0
        %6390 = vmatprep.subr.mxu0 %v459
        %6391 = vmatpush1.xpose.msra.mxu0 %v458
        %6392 = vmatprep.subr.mxu0 %v715
        %6393 = vmatpush1.xpose.msra.mxu0 %v714
        %6394 = vmatprep.subr.mxu0 0.0
        %6395 = vmatpush1.xpose.msra.mxu0 0.0
        %6396 = vmatprep.subr.mxu0 0.0
        %6397 = vmatpush1.xpose.msra.mxu0 0.0
        %6398 = vmatprep.subr.mxu0 0.0
        %6399 = vmatpush1.xpose.msra.mxu0 0.0
        %6400 = vmatprep.subr.mxu0 0.0
        %6401 = vmatpush1.xpose.msra.mxu0 0.0
        %6402 = vmatprep.subr.mxu0 0.0
        %6403 = vmatpush1.xpose.msra.mxu0 0.0
        %6404 = vmatprep.subr.mxu0 0.0
        %6405 = vmatpush1.xpose.msra.mxu0 0.0
        %6406 = vmatprep.subr.mxu0 0.0
        %6407 = vmatpush1.xpose.msra.mxu0 0.0
        %6408 = vmatprep.subr.mxu0 0.0
        %6409 = vmatpush1.xpose.msra.mxu0 0.0
        %6410 = vmatprep.subr.mxu0 0.0
        %6411 = vmatpush1.xpose.msra.mxu0 0.0
        %6412 = vmatprep.subr.mxu0 0.0
        %6413 = vmatpush1.xpose.msra.mxu0 0.0
        %6414 = vmatprep.subr.mxu0 0.0
        %6415 = vmatpush1.xpose.msra.mxu0 0.0
        %6416 = vmatprep.subr.mxu0 0.0
        %6417 = vmatpush1.xpose.msra.mxu0 0.0
        %6418 = vmatprep.subr.mxu0 0.0
        %6419 = vmatpush1.xpose.msra.mxu0 0.0
        %6420 = vmatprep.subr.mxu0 0.0
        %6421 = vmatpush1.xpose.msra.mxu0 0.0
        %6422 = vmatprep.subr.mxu0 0.0
        %6423 = vmatpush1.xpose.msra.mxu0 0.0
        %6424 = vmatprep.subr.mxu0 0.0
        %6425 = vmatpush1.xpose.msra.mxu0 0.0
        %6426 = vmatprep.subr.mxu0 0.0
        %6427 = vmatpush1.xpose.msra.mxu0 0.0
        %6428 = vmatprep.subr.mxu0 0.0
        %6429 = vmatpush1.xpose.msra.mxu0 0.0
        %6430 = vmatprep.subr.mxu0 0.0
        %6431 = vmatpush1.xpose.msra.mxu0 0.0
        %6432 = vmatprep.subr.mxu0 0.0
        %6433 = vmatpush1.xpose.msra.mxu0 0.0
        %6434 = vmatprep.subr.mxu0 0.0
        %6435 = vmatpush1.xpose.msra.mxu0 0.0
        %6436 = vmatprep.subr.mxu0 0.0
        %6437 = vmatpush1.xpose.msra.mxu0 0.0
        %6438 = vmatprep.subr.mxu0 0.0
        %6439 = vmatpush1.xpose.msra.mxu0 0.0
        %6440 = vmatprep.subr.mxu0 0.0
        %6441 = vmatpush1.xpose.msra.mxu0 0.0
        %6442 = vmatprep.subr.mxu0 0.0
        %6443 = vmatpush1.xpose.msra.mxu0 0.0
        %6444 = vmatprep.subr.mxu0 0.0
        %6445 = vmatpush1.xpose.msra.mxu0 0.0
        %6446 = vmatprep.subr.mxu0 0.0
        %6447 = vmatpush1.xpose.msra.mxu0 0.0
        %6448 = vmatprep.subr.mxu0 0.0
        %6449 = vmatpush1.xpose.msra.mxu0 0.0
        %6450 = vmatprep.subr.mxu0 0.0
        %6451 = vmatpush1.xpose.msra.mxu0 0.0
        %6452 = vmatprep.subr.mxu0 0.0
        %6453 = vmatpush1.xpose.msra.mxu0 0.0
        %6454 = vmatprep.mubr.f32.mxu0 %v1425
        %6455 = vmatmul.mubr.f32.gmra.mrb[0].mxu0 %v1423
        %v6456 = vpop.f32.mrb[0].mxu0
        %v6457 = vadd.f32 %v6387, %v6456
        %v6458 = vpop.f32.mrb[0].mxu0
        %6459 = vdwg.mxu0
        %6460 = vmatprep.subr.mxu0 %v461
        %6461 = vmatpush1.xpose.msra.mxu0 %v460
        %6462 = vmatprep.subr.mxu0 %v717
        %6463 = vmatpush1.xpose.msra.mxu0 %v716
        %6464 = vmatprep.subr.mxu0 0.0
        %6465 = vmatpush1.xpose.msra.mxu0 0.0
        %6466 = vmatprep.subr.mxu0 0.0
        %6467 = vmatpush1.xpose.msra.mxu0 0.0
        %6468 = vmatprep.subr.mxu0 0.0
        %6469 = vmatpush1.xpose.msra.mxu0 0.0
        %6470 = vmatprep.subr.mxu0 0.0
        %6471 = vmatpush1.xpose.msra.mxu0 0.0
        %6472 = vmatprep.subr.mxu0 0.0
        %6473 = vmatpush1.xpose.msra.mxu0 0.0
        %6474 = vmatprep.subr.mxu0 0.0
        %6475 = vmatpush1.xpose.msra.mxu0 0.0
        %6476 = vmatprep.subr.mxu0 0.0
        %6477 = vmatpush1.xpose.msra.mxu0 0.0
        %6478 = vmatprep.subr.mxu0 0.0
        %6479 = vmatpush1.xpose.msra.mxu0 0.0
        %6480 = vmatprep.subr.mxu0 0.0
        %6481 = vmatpush1.xpose.msra.mxu0 0.0
        %6482 = vmatprep.subr.mxu0 0.0
        %6483 = vmatpush1.xpose.msra.mxu0 0.0
        %6484 = vmatprep.subr.mxu0 0.0
        %6485 = vmatpush1.xpose.msra.mxu0 0.0
        %6486 = vmatprep.subr.mxu0 0.0
        %6487 = vmatpush1.xpose.msra.mxu0 0.0
        %6488 = vmatprep.subr.mxu0 0.0
        %6489 = vmatpush1.xpose.msra.mxu0 0.0
        %6490 = vmatprep.subr.mxu0 0.0
        %6491 = vmatpush1.xpose.msra.mxu0 0.0
        %6492 = vmatprep.subr.mxu0 0.0
        %6493 = vmatpush1.xpose.msra.mxu0 0.0
        %6494 = vmatprep.subr.mxu0 0.0
        %6495 = vmatpush1.xpose.msra.mxu0 0.0
        %6496 = vmatprep.subr.mxu0 0.0
        %6497 = vmatpush1.xpose.msra.mxu0 0.0
        %6498 = vmatprep.subr.mxu0 0.0
        %6499 = vmatpush1.xpose.msra.mxu0 0.0
        %6500 = vmatprep.subr.mxu0 0.0
        %6501 = vmatpush1.xpose.msra.mxu0 0.0
        %6502 = vmatprep.subr.mxu0 0.0
        %6503 = vmatpush1.xpose.msra.mxu0 0.0
        %6504 = vmatprep.subr.mxu0 0.0
        %6505 = vmatpush1.xpose.msra.mxu0 0.0
        %6506 = vmatprep.subr.mxu0 0.0
        %6507 = vmatpush1.xpose.msra.mxu0 0.0
        %6508 = vmatprep.subr.mxu0 0.0
        %6509 = vmatpush1.xpose.msra.mxu0 0.0
        %6510 = vmatprep.subr.mxu0 0.0
        %6511 = vmatpush1.xpose.msra.mxu0 0.0
        %6512 = vmatprep.subr.mxu0 0.0
        %6513 = vmatpush1.xpose.msra.mxu0 0.0
        %6514 = vmatprep.subr.mxu0 0.0
        %6515 = vmatpush1.xpose.msra.mxu0 0.0
        %6516 = vmatprep.subr.mxu0 0.0
        %6517 = vmatpush1.xpose.msra.mxu0 0.0
        %6518 = vmatprep.subr.mxu0 0.0
        %6519 = vmatpush1.xpose.msra.mxu0 0.0
        %6520 = vmatprep.subr.mxu0 0.0
        %6521 = vmatpush1.xpose.msra.mxu0 0.0
        %6522 = vmatprep.subr.mxu0 0.0
        %6523 = vmatpush1.xpose.msra.mxu0 0.0
        %6524 = vmatprep.mubr.f32.mxu0 %v1441
        %6525 = vmatmul.mubr.f32.gmra.mrb[0].mxu0 %v1433
        %v6526 = vpop.f32.mrb[0].mxu0
        %v6527 = vadd.f32 %v6457, %v6526
        %v6528 = vpop.f32.mrb[0].mxu0
        %6529 = vdwg.mxu0
        %6530 = vmatprep.subr.mxu0 %v463
        %6531 = vmatpush1.xpose.msra.mxu0 %v462
        %6532 = vmatprep.subr.mxu0 %v719
        %6533 = vmatpush1.xpose.msra.mxu0 %v718
        %6534 = vmatprep.subr.mxu0 0.0
        %6535 = vmatpush1.xpose.msra.mxu0 0.0
        %6536 = vmatprep.subr.mxu0 0.0
        %6537 = vmatpush1.xpose.msra.mxu0 0.0
        %6538 = vmatprep.subr.mxu0 0.0
        %6539 = vmatpush1.xpose.msra.mxu0 0.0
        %6540 = vmatprep.subr.mxu0 0.0
        %6541 = vmatpush1.xpose.msra.mxu0 0.0
        %6542 = vmatprep.subr.mxu0 0.0
        %6543 = vmatpush1.xpose.msra.mxu0 0.0
        %6544 = vmatprep.subr.mxu0 0.0
        %6545 = vmatpush1.xpose.msra.mxu0 0.0
        %6546 = vmatprep.subr.mxu0 0.0
        %6547 = vmatpush1.xpose.msra.mxu0 0.0
        %6548 = vmatprep.subr.mxu0 0.0
        %6549 = vmatpush1.xpose.msra.mxu0 0.0
        %6550 = vmatprep.subr.mxu0 0.0
        %6551 = vmatpush1.xpose.msra.mxu0 0.0
        %6552 = vmatprep.subr.mxu0 0.0
        %6553 = vmatpush1.xpose.msra.mxu0 0.0
        %6554 = vmatprep.subr.mxu0 0.0
        %6555 = vmatpush1.xpose.msra.mxu0 0.0
        %6556 = vmatprep.subr.mxu0 0.0
        %6557 = vmatpush1.xpose.msra.mxu0 0.0
        %6558 = vmatprep.subr.mxu0 0.0
        %6559 = vmatpush1.xpose.msra.mxu0 0.0
        %6560 = vmatprep.subr.mxu0 0.0
        %6561 = vmatpush1.xpose.msra.mxu0 0.0
        %6562 = vmatprep.subr.mxu0 0.0
        %6563 = vmatpush1.xpose.msra.mxu0 0.0
        %6564 = vmatprep.subr.mxu0 0.0
        %6565 = vmatpush1.xpose.msra.mxu0 0.0
        %6566 = vmatprep.subr.mxu0 0.0
        %6567 = vmatpush1.xpose.msra.mxu0 0.0
        %6568 = vmatprep.subr.mxu0 0.0
        %6569 = vmatpush1.xpose.msra.mxu0 0.0
        %6570 = vmatprep.subr.mxu0 0.0
        %6571 = vmatpush1.xpose.msra.mxu0 0.0
        %6572 = vmatprep.subr.mxu0 0.0
        %6573 = vmatpush1.xpose.msra.mxu0 0.0
        %6574 = vmatprep.subr.mxu0 0.0
        %6575 = vmatpush1.xpose.msra.mxu0 0.0
        %6576 = vmatprep.subr.mxu0 0.0
        %6577 = vmatpush1.xpose.msra.mxu0 0.0
        %6578 = vmatprep.subr.mxu0 0.0
        %6579 = vmatpush1.xpose.msra.mxu0 0.0
        %6580 = vmatprep.subr.mxu0 0.0
        %6581 = vmatpush1.xpose.msra.mxu0 0.0
        %6582 = vmatprep.subr.mxu0 0.0
        %6583 = vmatpush1.xpose.msra.mxu0 0.0
        %6584 = vmatprep.subr.mxu0 0.0
        %6585 = vmatpush1.xpose.msra.mxu0 0.0
        %6586 = vmatprep.subr.mxu0 0.0
        %6587 = vmatpush1.xpose.msra.mxu0 0.0
        %6588 = vmatprep.subr.mxu0 0.0
        %6589 = vmatpush1.xpose.msra.mxu0 0.0
        %6590 = vmatprep.subr.mxu0 0.0
        %6591 = vmatpush1.xpose.msra.mxu0 0.0
        %6592 = vmatprep.subr.mxu0 0.0
        %6593 = vmatpush1.xpose.msra.mxu0 0.0
        %6594 = vmatprep.mubr.f32.mxu0 %v1442
        %6595 = vmatmul.mubr.f32.gmra.mrb[0].mxu0 %v1440
        %v6596 = vpop.f32.mrb[0].mxu0
        %v6597 = vadd.f32 %v6527, %v6596
        %v6598 = vpop.f32.mrb[0].mxu0
        %6599 = vdwg.mxu0
        %6600 = vmatprep.subr.mxu0 %v465
        %6601 = vmatpush1.xpose.msra.mxu0 %v464
        %6602 = vmatprep.subr.mxu0 %v721
        %6603 = vmatpush1.xpose.msra.mxu0 %v720
        %6604 = vmatprep.subr.mxu0 0.0
        %6605 = vmatpush1.xpose.msra.mxu0 0.0
        %6606 = vmatprep.subr.mxu0 0.0
        %6607 = vmatpush1.xpose.msra.mxu0 0.0
        %6608 = vmatprep.subr.mxu0 0.0
        %6609 = vmatpush1.xpose.msra.mxu0 0.0
        %6610 = vmatprep.subr.mxu0 0.0
        %6611 = vmatpush1.xpose.msra.mxu0 0.0
        %6612 = vmatprep.subr.mxu0 0.0
        %6613 = vmatpush1.xpose.msra.mxu0 0.0
        %6614 = vmatprep.subr.mxu0 0.0
        %6615 = vmatpush1.xpose.msra.mxu0 0.0
        %6616 = vmatprep.subr.mxu0 0.0
        %6617 = vmatpush1.xpose.msra.mxu0 0.0
        %6618 = vmatprep.subr.mxu0 0.0
        %6619 = vmatpush1.xpose.msra.mxu0 0.0
        %6620 = vmatprep.subr.mxu0 0.0
        %6621 = vmatpush1.xpose.msra.mxu0 0.0
        %6622 = vmatprep.subr.mxu0 0.0
        %6623 = vmatpush1.xpose.msra.mxu0 0.0
        %6624 = vmatprep.subr.mxu0 0.0
        %6625 = vmatpush1.xpose.msra.mxu0 0.0
        %6626 = vmatprep.subr.mxu0 0.0
        %6627 = vmatpush1.xpose.msra.mxu0 0.0
        %6628 = vmatprep.subr.mxu0 0.0
        %6629 = vmatpush1.xpose.msra.mxu0 0.0
        %6630 = vmatprep.subr.mxu0 0.0
        %6631 = vmatpush1.xpose.msra.mxu0 0.0
        %6632 = vmatprep.subr.mxu0 0.0
        %6633 = vmatpush1.xpose.msra.mxu0 0.0
        %6634 = vmatprep.subr.mxu0 0.0
        %6635 = vmatpush1.xpose.msra.mxu0 0.0
        %6636 = vmatprep.subr.mxu0 0.0
        %6637 = vmatpush1.xpose.msra.mxu0 0.0
        %6638 = vmatprep.subr.mxu0 0.0
        %6639 = vmatpush1.xpose.msra.mxu0 0.0
        %6640 = vmatprep.subr.mxu0 0.0
        %6641 = vmatpush1.xpose.msra.mxu0 0.0
        %6642 = vmatprep.subr.mxu0 0.0
        %6643 = vmatpush1.xpose.msra.mxu0 0.0
        %6644 = vmatprep.subr.mxu0 0.0
        %6645 = vmatpush1.xpose.msra.mxu0 0.0
        %6646 = vmatprep.subr.mxu0 0.0
        %6647 = vmatpush1.xpose.msra.mxu0 0.0
        %6648 = vmatprep.subr.mxu0 0.0
        %6649 = vmatpush1.xpose.msra.mxu0 0.0
        %6650 = vmatprep.subr.mxu0 0.0
        %6651 = vmatpush1.xpose.msra.mxu0 0.0
        %6652 = vmatprep.subr.mxu0 0.0
        %6653 = vmatpush1.xpose.msra.mxu0 0.0
        %6654 = vmatprep.subr.mxu0 0.0
        %6655 = vmatpush1.xpose.msra.mxu0 0.0
        %6656 = vmatprep.subr.mxu0 0.0
        %6657 = vmatpush1.xpose.msra.mxu0 0.0
        %6658 = vmatprep.subr.mxu0 0.0
        %6659 = vmatpush1.xpose.msra.mxu0 0.0
        %6660 = vmatprep.subr.mxu0 0.0
        %6661 = vmatpush1.xpose.msra.mxu0 0.0
        %6662 = vmatprep.subr.mxu0 0.0
        %6663 = vmatpush1.xpose.msra.mxu0 0.0
        %6664 = vmatprep.mubr.f32.mxu0 %v1458
        %6665 = vmatmul.mubr.f32.gmra.mrb[0].mxu0 %v1450
        %v6666 = vpop.f32.mrb[0].mxu0
        %v6667 = vadd.f32 %v6597, %v6666
        %v6668 = vpop.f32.mrb[0].mxu0
        %6669 = vdwg.mxu0
        %6670 = vmatprep.subr.mxu0 %v467
        %6671 = vmatpush1.xpose.msra.mxu0 %v466
        %6672 = vmatprep.subr.mxu0 %v723
        %6673 = vmatpush1.xpose.msra.mxu0 %v722
        %6674 = vmatprep.subr.mxu0 0.0
        %6675 = vmatpush1.xpose.msra.mxu0 0.0
        %6676 = vmatprep.subr.mxu0 0.0
        %6677 = vmatpush1.xpose.msra.mxu0 0.0
        %6678 = vmatprep.subr.mxu0 0.0
        %6679 = vmatpush1.xpose.msra.mxu0 0.0
        %6680 = vmatprep.subr.mxu0 0.0
        %6681 = vmatpush1.xpose.msra.mxu0 0.0
        %6682 = vmatprep.subr.mxu0 0.0
        %6683 = vmatpush1.xpose.msra.mxu0 0.0
        %6684 = vmatprep.subr.mxu0 0.0
        %6685 = vmatpush1.xpose.msra.mxu0 0.0
        %6686 = vmatprep.subr.mxu0 0.0
        %6687 = vmatpush1.xpose.msra.mxu0 0.0
        %6688 = vmatprep.subr.mxu0 0.0
        %6689 = vmatpush1.xpose.msra.mxu0 0.0
        %6690 = vmatprep.subr.mxu0 0.0
        %6691 = vmatpush1.xpose.msra.mxu0 0.0
        %6692 = vmatprep.subr.mxu0 0.0
        %6693 = vmatpush1.xpose.msra.mxu0 0.0
        %6694 = vmatprep.subr.mxu0 0.0
        %6695 = vmatpush1.xpose.msra.mxu0 0.0
        %6696 = vmatprep.subr.mxu0 0.0
        %6697 = vmatpush1.xpose.msra.mxu0 0.0
        %6698 = vmatprep.subr.mxu0 0.0
        %6699 = vmatpush1.xpose.msra.mxu0 0.0
        %6700 = vmatprep.subr.mxu0 0.0
        %6701 = vmatpush1.xpose.msra.mxu0 0.0
        %6702 = vmatprep.subr.mxu0 0.0
        %6703 = vmatpush1.xpose.msra.mxu0 0.0
        %6704 = vmatprep.subr.mxu0 0.0
        %6705 = vmatpush1.xpose.msra.mxu0 0.0
        %6706 = vmatprep.subr.mxu0 0.0
        %6707 = vmatpush1.xpose.msra.mxu0 0.0
        %6708 = vmatprep.subr.mxu0 0.0
        %6709 = vmatpush1.xpose.msra.mxu0 0.0
        %6710 = vmatprep.subr.mxu0 0.0
        %6711 = vmatpush1.xpose.msra.mxu0 0.0
        %6712 = vmatprep.subr.mxu0 0.0
        %6713 = vmatpush1.xpose.msra.mxu0 0.0
        %6714 = vmatprep.subr.mxu0 0.0
        %6715 = vmatpush1.xpose.msra.mxu0 0.0
        %6716 = vmatprep.subr.mxu0 0.0
        %6717 = vmatpush1.xpose.msra.mxu0 0.0
        %6718 = vmatprep.subr.mxu0 0.0
        %6719 = vmatpush1.xpose.msra.mxu0 0.0
        %6720 = vmatprep.subr.mxu0 0.0
        %6721 = vmatpush1.xpose.msra.mxu0 0.0
        %6722 = vmatprep.subr.mxu0 0.0
        %6723 = vmatpush1.xpose.msra.mxu0 0.0
        %6724 = vmatprep.subr.mxu0 0.0
        %6725 = vmatpush1.xpose.msra.mxu0 0.0
        %6726 = vmatprep.subr.mxu0 0.0
        %6727 = vmatpush1.xpose.msra.mxu0 0.0
        %6728 = vmatprep.subr.mxu0 0.0
        %6729 = vmatpush1.xpose.msra.mxu0 0.0
        %6730 = vmatprep.subr.mxu0 0.0
        %6731 = vmatpush1.xpose.msra.mxu0 0.0
        %6732 = vmatprep.subr.mxu0 0.0
        %6733 = vmatpush1.xpose.msra.mxu0 0.0
        %6734 = vmatprep.mubr.f32.mxu0 %v1459
        %6735 = vmatmul.mubr.f32.gmra.mrb[0].mxu0 %v1457
        %v6736 = vpop.f32.mrb[0].mxu0
        %v6737 = vadd.f32 %v6667, %v6736
        %v6738 = vpop.f32.mrb[0].mxu0
        %6739 = vdwg.mxu0
        %6740 = vmatprep.subr.mxu0 %v469
        %6741 = vmatpush1.xpose.msra.mxu0 %v468
        %6742 = vmatprep.subr.mxu0 %v725
        %6743 = vmatpush1.xpose.msra.mxu0 %v724
        %6744 = vmatprep.subr.mxu0 0.0
        %6745 = vmatpush1.xpose.msra.mxu0 0.0
        %6746 = vmatprep.subr.mxu0 0.0
        %6747 = vmatpush1.xpose.msra.mxu0 0.0
        %6748 = vmatprep.subr.mxu0 0.0
        %6749 = vmatpush1.xpose.msra.mxu0 0.0
        %6750 = vmatprep.subr.mxu0 0.0
        %6751 = vmatpush1.xpose.msra.mxu0 0.0
        %6752 = vmatprep.subr.mxu0 0.0
        %6753 = vmatpush1.xpose.msra.mxu0 0.0
        %6754 = vmatprep.subr.mxu0 0.0
        %6755 = vmatpush1.xpose.msra.mxu0 0.0
        %6756 = vmatprep.subr.mxu0 0.0
        %6757 = vmatpush1.xpose.msra.mxu0 0.0
        %6758 = vmatprep.subr.mxu0 0.0
        %6759 = vmatpush1.xpose.msra.mxu0 0.0
        %6760 = vmatprep.subr.mxu0 0.0
        %6761 = vmatpush1.xpose.msra.mxu0 0.0
        %6762 = vmatprep.subr.mxu0 0.0
        %6763 = vmatpush1.xpose.msra.mxu0 0.0
        %6764 = vmatprep.subr.mxu0 0.0
        %6765 = vmatpush1.xpose.msra.mxu0 0.0
        %6766 = vmatprep.subr.mxu0 0.0
        %6767 = vmatpush1.xpose.msra.mxu0 0.0
        %6768 = vmatprep.subr.mxu0 0.0
        %6769 = vmatpush1.xpose.msra.mxu0 0.0
        %6770 = vmatprep.subr.mxu0 0.0
        %6771 = vmatpush1.xpose.msra.mxu0 0.0
        %6772 = vmatprep.subr.mxu0 0.0
        %6773 = vmatpush1.xpose.msra.mxu0 0.0
        %6774 = vmatprep.subr.mxu0 0.0
        %6775 = vmatpush1.xpose.msra.mxu0 0.0
        %6776 = vmatprep.subr.mxu0 0.0
        %6777 = vmatpush1.xpose.msra.mxu0 0.0
        %6778 = vmatprep.subr.mxu0 0.0
        %6779 = vmatpush1.xpose.msra.mxu0 0.0
        %6780 = vmatprep.subr.mxu0 0.0
        %6781 = vmatpush1.xpose.msra.mxu0 0.0
        %6782 = vmatprep.subr.mxu0 0.0
        %6783 = vmatpush1.xpose.msra.mxu0 0.0
        %6784 = vmatprep.subr.mxu0 0.0
        %6785 = vmatpush1.xpose.msra.mxu0 0.0
        %6786 = vmatprep.subr.mxu0 0.0
        %6787 = vmatpush1.xpose.msra.mxu0 0.0
        %6788 = vmatprep.subr.mxu0 0.0
        %6789 = vmatpush1.xpose.msra.mxu0 0.0
        %6790 = vmatprep.subr.mxu0 0.0
        %6791 = vmatpush1.xpose.msra.mxu0 0.0
        %6792 = vmatprep.subr.mxu0 0.0
        %6793 = vmatpush1.xpose.msra.mxu0 0.0
        %6794 = vmatprep.subr.mxu0 0.0
        %6795 = vmatpush1.xpose.msra.mxu0 0.0
        %6796 = vmatprep.subr.mxu0 0.0
        %6797 = vmatpush1.xpose.msra.mxu0 0.0
        %6798 = vmatprep.subr.mxu0 0.0
        %6799 = vmatpush1.xpose.msra.mxu0 0.0
        %6800 = vmatprep.subr.mxu0 0.0
        %6801 = vmatpush1.xpose.msra.mxu0 0.0
        %6802 = vmatprep.subr.mxu0 0.0
        %6803 = vmatpush1.xpose.msra.mxu0 0.0
        %6804 = vmatprep.mubr.f32.mxu0 %v1475
        %6805 = vmatmul.mubr.f32.gmra.mrb[0].mxu0 %v1467
        %v6806 = vpop.f32.mrb[0].mxu0
        %v6807 = vadd.f32 %v6737, %v6806
        %v6808 = vpop.f32.mrb[0].mxu0
        %6809 = vdwg.mxu0
        %6810 = vmatprep.subr.mxu0 %v471
        %6811 = vmatpush1.xpose.msra.mxu0 %v470
        %6812 = vmatprep.subr.mxu0 %v727
        %6813 = vmatpush1.xpose.msra.mxu0 %v726
        %6814 = vmatprep.subr.mxu0 0.0
        %6815 = vmatpush1.xpose.msra.mxu0 0.0
        %6816 = vmatprep.subr.mxu0 0.0
        %6817 = vmatpush1.xpose.msra.mxu0 0.0
        %6818 = vmatprep.subr.mxu0 0.0
        %6819 = vmatpush1.xpose.msra.mxu0 0.0
        %6820 = vmatprep.subr.mxu0 0.0
        %6821 = vmatpush1.xpose.msra.mxu0 0.0
        %6822 = vmatprep.subr.mxu0 0.0
        %6823 = vmatpush1.xpose.msra.mxu0 0.0
        %6824 = vmatprep.subr.mxu0 0.0
        %6825 = vmatpush1.xpose.msra.mxu0 0.0
        %6826 = vmatprep.subr.mxu0 0.0
        %6827 = vmatpush1.xpose.msra.mxu0 0.0
        %6828 = vmatprep.subr.mxu0 0.0
        %6829 = vmatpush1.xpose.msra.mxu0 0.0
        %6830 = vmatprep.subr.mxu0 0.0
        %6831 = vmatpush1.xpose.msra.mxu0 0.0
        %6832 = vmatprep.subr.mxu0 0.0
        %6833 = vmatpush1.xpose.msra.mxu0 0.0
        %6834 = vmatprep.subr.mxu0 0.0
        %6835 = vmatpush1.xpose.msra.mxu0 0.0
        %6836 = vmatprep.subr.mxu0 0.0
        %6837 = vmatpush1.xpose.msra.mxu0 0.0
        %6838 = vmatprep.subr.mxu0 0.0
        %6839 = vmatpush1.xpose.msra.mxu0 0.0
        %6840 = vmatprep.subr.mxu0 0.0
        %6841 = vmatpush1.xpose.msra.mxu0 0.0
        %6842 = vmatprep.subr.mxu0 0.0
        %6843 = vmatpush1.xpose.msra.mxu0 0.0
        %6844 = vmatprep.subr.mxu0 0.0
        %6845 = vmatpush1.xpose.msra.mxu0 0.0
        %6846 = vmatprep.subr.mxu0 0.0
        %6847 = vmatpush1.xpose.msra.mxu0 0.0
        %6848 = vmatprep.subr.mxu0 0.0
        %6849 = vmatpush1.xpose.msra.mxu0 0.0
        %6850 = vmatprep.subr.mxu0 0.0
        %6851 = vmatpush1.xpose.msra.mxu0 0.0
        %6852 = vmatprep.subr.mxu0 0.0
        %6853 = vmatpush1.xpose.msra.mxu0 0.0
        %6854 = vmatprep.subr.mxu0 0.0
        %6855 = vmatpush1.xpose.msra.mxu0 0.0
        %6856 = vmatprep.subr.mxu0 0.0
        %6857 = vmatpush1.xpose.msra.mxu0 0.0
        %6858 = vmatprep.subr.mxu0 0.0
        %6859 = vmatpush1.xpose.msra.mxu0 0.0
        %6860 = vmatprep.subr.mxu0 0.0
        %6861 = vmatpush1.xpose.msra.mxu0 0.0
        %6862 = vmatprep.subr.mxu0 0.0
        %6863 = vmatpush1.xpose.msra.mxu0 0.0
        %6864 = vmatprep.subr.mxu0 0.0
        %6865 = vmatpush1.xpose.msra.mxu0 0.0
        %6866 = vmatprep.subr.mxu0 0.0
        %6867 = vmatpush1.xpose.msra.mxu0 0.0
        %6868 = vmatprep.subr.mxu0 0.0
        %6869 = vmatpush1.xpose.msra.mxu0 0.0
        %6870 = vmatprep.subr.mxu0 0.0
        %6871 = vmatpush1.xpose.msra.mxu0 0.0
        %6872 = vmatprep.subr.mxu0 0.0
        %6873 = vmatpush1.xpose.msra.mxu0 0.0
        %6874 = vmatprep.mubr.f32.mxu0 %v1476
        %6875 = vmatmul.mubr.f32.gmra.mrb[0].mxu0 %v1474
        %v6876 = vpop.f32.mrb[0].mxu0
        %v6877 = vadd.f32 %v6807, %v6876
        %v6878 = vpop.f32.mrb[0].mxu0
        %6879 = vdwg.mxu0
        %6880 = vmatprep.subr.mxu0 %v473
        %6881 = vmatpush1.xpose.msra.mxu0 %v472
        %6882 = vmatprep.subr.mxu0 %v729
        %6883 = vmatpush1.xpose.msra.mxu0 %v728
        %6884 = vmatprep.subr.mxu0 0.0
        %6885 = vmatpush1.xpose.msra.mxu0 0.0
        %6886 = vmatprep.subr.mxu0 0.0
        %6887 = vmatpush1.xpose.msra.mxu0 0.0
        %6888 = vmatprep.subr.mxu0 0.0
        %6889 = vmatpush1.xpose.msra.mxu0 0.0
        %6890 = vmatprep.subr.mxu0 0.0
        %6891 = vmatpush1.xpose.msra.mxu0 0.0
        %6892 = vmatprep.subr.mxu0 0.0
        %6893 = vmatpush1.xpose.msra.mxu0 0.0
        %6894 = vmatprep.subr.mxu0 0.0
        %6895 = vmatpush1.xpose.msra.mxu0 0.0
        %6896 = vmatprep.subr.mxu0 0.0
        %6897 = vmatpush1.xpose.msra.mxu0 0.0
        %6898 = vmatprep.subr.mxu0 0.0
        %6899 = vmatpush1.xpose.msra.mxu0 0.0
        %6900 = vmatprep.subr.mxu0 0.0
        %6901 = vmatpush1.xpose.msra.mxu0 0.0
        %6902 = vmatprep.subr.mxu0 0.0
        %6903 = vmatpush1.xpose.msra.mxu0 0.0
        %6904 = vmatprep.subr.mxu0 0.0
        %6905 = vmatpush1.xpose.msra.mxu0 0.0
        %6906 = vmatprep.subr.mxu0 0.0
        %6907 = vmatpush1.xpose.msra.mxu0 0.0
        %6908 = vmatprep.subr.mxu0 0.0
        %6909 = vmatpush1.xpose.msra.mxu0 0.0
        %6910 = vmatprep.subr.mxu0 0.0
        %6911 = vmatpush1.xpose.msra.mxu0 0.0
        %6912 = vmatprep.subr.mxu0 0.0
        %6913 = vmatpush1.xpose.msra.mxu0 0.0
        %6914 = vmatprep.subr.mxu0 0.0
        %6915 = vmatpush1.xpose.msra.mxu0 0.0
        %6916 = vmatprep.subr.mxu0 0.0
        %6917 = vmatpush1.xpose.msra.mxu0 0.0
        %6918 = vmatprep.subr.mxu0 0.0
        %6919 = vmatpush1.xpose.msra.mxu0 0.0
        %6920 = vmatprep.subr.mxu0 0.0
        %6921 = vmatpush1.xpose.msra.mxu0 0.0
        %6922 = vmatprep.subr.mxu0 0.0
        %6923 = vmatpush1.xpose.msra.mxu0 0.0
        %6924 = vmatprep.subr.mxu0 0.0
        %6925 = vmatpush1.xpose.msra.mxu0 0.0
        %6926 = vmatprep.subr.mxu0 0.0
        %6927 = vmatpush1.xpose.msra.mxu0 0.0
        %6928 = vmatprep.subr.mxu0 0.0
        %6929 = vmatpush1.xpose.msra.mxu0 0.0
        %6930 = vmatprep.subr.mxu0 0.0
        %6931 = vmatpush1.xpose.msra.mxu0 0.0
        %6932 = vmatprep.subr.mxu0 0.0
        %6933 = vmatpush1.xpose.msra.mxu0 0.0
        %6934 = vmatprep.subr.mxu0 0.0
        %6935 = vmatpush1.xpose.msra.mxu0 0.0
        %6936 = vmatprep.subr.mxu0 0.0
        %6937 = vmatpush1.xpose.msra.mxu0 0.0
        %6938 = vmatprep.subr.mxu0 0.0
        %6939 = vmatpush1.xpose.msra.mxu0 0.0
        %6940 = vmatprep.subr.mxu0 0.0
        %6941 = vmatpush1.xpose.msra.mxu0 0.0
        %6942 = vmatprep.subr.mxu0 0.0
        %6943 = vmatpush1.xpose.msra.mxu0 0.0
        %6944 = vmatprep.mubr.f32.mxu0 %v1492
        %6945 = vmatmul.mubr.f32.gmra.mrb[0].mxu0 %v1484
        %v6946 = vpop.f32.mrb[0].mxu0
        %v6947 = vadd.f32 %v6877, %v6946
        %v6948 = vpop.f32.mrb[0].mxu0
        %6949 = vdwg.mxu0
        %6950 = vmatprep.subr.mxu0 %v475
        %6951 = vmatpush1.xpose.msra.mxu0 %v474
        %6952 = vmatprep.subr.mxu0 %v731
        %6953 = vmatpush1.xpose.msra.mxu0 %v730
        %6954 = vmatprep.subr.mxu0 0.0
        %6955 = vmatpush1.xpose.msra.mxu0 0.0
        %6956 = vmatprep.subr.mxu0 0.0
        %6957 = vmatpush1.xpose.msra.mxu0 0.0
        %6958 = vmatprep.subr.mxu0 0.0
        %6959 = vmatpush1.xpose.msra.mxu0 0.0
        %6960 = vmatprep.subr.mxu0 0.0
        %6961 = vmatpush1.xpose.msra.mxu0 0.0
        %6962 = vmatprep.subr.mxu0 0.0
        %6963 = vmatpush1.xpose.msra.mxu0 0.0
        %6964 = vmatprep.subr.mxu0 0.0
        %6965 = vmatpush1.xpose.msra.mxu0 0.0
        %6966 = vmatprep.subr.mxu0 0.0
        %6967 = vmatpush1.xpose.msra.mxu0 0.0
        %6968 = vmatprep.subr.mxu0 0.0
        %6969 = vmatpush1.xpose.msra.mxu0 0.0
        %6970 = vmatprep.subr.mxu0 0.0
        %6971 = vmatpush1.xpose.msra.mxu0 0.0
        %6972 = vmatprep.subr.mxu0 0.0
        %6973 = vmatpush1.xpose.msra.mxu0 0.0
        %6974 = vmatprep.subr.mxu0 0.0
        %6975 = vmatpush1.xpose.msra.mxu0 0.0
        %6976 = vmatprep.subr.mxu0 0.0
        %6977 = vmatpush1.xpose.msra.mxu0 0.0
        %6978 = vmatprep.subr.mxu0 0.0
        %6979 = vmatpush1.xpose.msra.mxu0 0.0
        %6980 = vmatprep.subr.mxu0 0.0
        %6981 = vmatpush1.xpose.msra.mxu0 0.0
        %6982 = vmatprep.subr.mxu0 0.0
        %6983 = vmatpush1.xpose.msra.mxu0 0.0
        %6984 = vmatprep.subr.mxu0 0.0
        %6985 = vmatpush1.xpose.msra.mxu0 0.0
        %6986 = vmatprep.subr.mxu0 0.0
        %6987 = vmatpush1.xpose.msra.mxu0 0.0
        %6988 = vmatprep.subr.mxu0 0.0
        %6989 = vmatpush1.xpose.msra.mxu0 0.0
        %6990 = vmatprep.subr.mxu0 0.0
        %6991 = vmatpush1.xpose.msra.mxu0 0.0
        %6992 = vmatprep.subr.mxu0 0.0
        %6993 = vmatpush1.xpose.msra.mxu0 0.0
        %6994 = vmatprep.subr.mxu0 0.0
        %6995 = vmatpush1.xpose.msra.mxu0 0.0
        %6996 = vmatprep.subr.mxu0 0.0
        %6997 = vmatpush1.xpose.msra.mxu0 0.0
        %6998 = vmatprep.subr.mxu0 0.0
        %6999 = vmatpush1.xpose.msra.mxu0 0.0
        %7000 = vmatprep.subr.mxu0 0.0
        %7001 = vmatpush1.xpose.msra.mxu0 0.0
        %7002 = vmatprep.subr.mxu0 0.0
        %7003 = vmatpush1.xpose.msra.mxu0 0.0
        %7004 = vmatprep.subr.mxu0 0.0
        %7005 = vmatpush1.xpose.msra.mxu0 0.0
        %7006 = vmatprep.subr.mxu0 0.0
        %7007 = vmatpush1.xpose.msra.mxu0 0.0
        %7008 = vmatprep.subr.mxu0 0.0
        %7009 = vmatpush1.xpose.msra.mxu0 0.0
        %7010 = vmatprep.subr.mxu0 0.0
        %7011 = vmatpush1.xpose.msra.mxu0 0.0
        %7012 = vmatprep.subr.mxu0 0.0
        %7013 = vmatpush1.xpose.msra.mxu0 0.0
        %7014 = vmatprep.mubr.f32.mxu0 %v1493
        %7015 = vmatmul.mubr.f32.gmra.mrb[0].mxu0 %v1491
        %v7016 = vpop.f32.mrb[0].mxu0
        %v7017 = vadd.f32 %v6947, %v7016
        %v7018 = vpop.f32.mrb[0].mxu0
        %7019 = vdwg.mxu0
        %7020 = vmatprep.subr.mxu0 %v477
        %7021 = vmatpush1.xpose.msra.mxu0 %v476
        %7022 = vmatprep.subr.mxu0 %v733
        %7023 = vmatpush1.xpose.msra.mxu0 %v732
        %7024 = vmatprep.subr.mxu0 0.0
        %7025 = vmatpush1.xpose.msra.mxu0 0.0
        %7026 = vmatprep.subr.mxu0 0.0
        %7027 = vmatpush1.xpose.msra.mxu0 0.0
        %7028 = vmatprep.subr.mxu0 0.0
        %7029 = vmatpush1.xpose.msra.mxu0 0.0
        %7030 = vmatprep.subr.mxu0 0.0
        %7031 = vmatpush1.xpose.msra.mxu0 0.0
        %7032 = vmatprep.subr.mxu0 0.0
        %7033 = vmatpush1.xpose.msra.mxu0 0.0
        %7034 = vmatprep.subr.mxu0 0.0
        %7035 = vmatpush1.xpose.msra.mxu0 0.0
        %7036 = vmatprep.subr.mxu0 0.0
        %7037 = vmatpush1.xpose.msra.mxu0 0.0
        %7038 = vmatprep.subr.mxu0 0.0
        %7039 = vmatpush1.xpose.msra.mxu0 0.0
        %7040 = vmatprep.subr.mxu0 0.0
        %7041 = vmatpush1.xpose.msra.mxu0 0.0
        %7042 = vmatprep.subr.mxu0 0.0
        %7043 = vmatpush1.xpose.msra.mxu0 0.0
        %7044 = vmatprep.subr.mxu0 0.0
        %7045 = vmatpush1.xpose.msra.mxu0 0.0
        %7046 = vmatprep.subr.mxu0 0.0
        %7047 = vmatpush1.xpose.msra.mxu0 0.0
        %7048 = vmatprep.subr.mxu0 0.0
        %7049 = vmatpush1.xpose.msra.mxu0 0.0
        %7050 = vmatprep.subr.mxu0 0.0
        %7051 = vmatpush1.xpose.msra.mxu0 0.0
        %7052 = vmatprep.subr.mxu0 0.0
        %7053 = vmatpush1.xpose.msra.mxu0 0.0
        %7054 = vmatprep.subr.mxu0 0.0
        %7055 = vmatpush1.xpose.msra.mxu0 0.0
        %7056 = vmatprep.subr.mxu0 0.0
        %7057 = vmatpush1.xpose.msra.mxu0 0.0
        %7058 = vmatprep.subr.mxu0 0.0
        %7059 = vmatpush1.xpose.msra.mxu0 0.0
        %7060 = vmatprep.subr.mxu0 0.0
        %7061 = vmatpush1.xpose.msra.mxu0 0.0
        %7062 = vmatprep.subr.mxu0 0.0
        %7063 = vmatpush1.xpose.msra.mxu0 0.0
        %7064 = vmatprep.subr.mxu0 0.0
        %7065 = vmatpush1.xpose.msra.mxu0 0.0
        %7066 = vmatprep.subr.mxu0 0.0
        %7067 = vmatpush1.xpose.msra.mxu0 0.0
        %7068 = vmatprep.subr.mxu0 0.0
        %7069 = vmatpush1.xpose.msra.mxu0 0.0
        %7070 = vmatprep.subr.mxu0 0.0
        %7071 = vmatpush1.xpose.msra.mxu0 0.0
        %7072 = vmatprep.subr.mxu0 0.0
        %7073 = vmatpush1.xpose.msra.mxu0 0.0
        %7074 = vmatprep.subr.mxu0 0.0
        %7075 = vmatpush1.xpose.msra.mxu0 0.0
        %7076 = vmatprep.subr.mxu0 0.0
        %7077 = vmatpush1.xpose.msra.mxu0 0.0
        %7078 = vmatprep.subr.mxu0 0.0
        %7079 = vmatpush1.xpose.msra.mxu0 0.0
        %7080 = vmatprep.subr.mxu0 0.0
        %7081 = vmatpush1.xpose.msra.mxu0 0.0
        %7082 = vmatprep.subr.mxu0 0.0
        %7083 = vmatpush1.xpose.msra.mxu0 0.0
        %7084 = vmatprep.mubr.f32.mxu0 %v1509
        %7085 = vmatmul.mubr.f32.gmra.mrb[0].mxu0 %v1501
        %v7086 = vpop.f32.mrb[0].mxu0
        %v7087 = vadd.f32 %v7017, %v7086
        %v7088 = vpop.f32.mrb[0].mxu0
        %7089 = vdwg.mxu0
        %7090 = vmatprep.subr.mxu0 %v479
        %7091 = vmatpush1.xpose.msra.mxu0 %v478
        %7092 = vmatprep.subr.mxu0 %v735
        %7093 = vmatpush1.xpose.msra.mxu0 %v734
        %7094 = vmatprep.subr.mxu0 0.0
        %7095 = vmatpush1.xpose.msra.mxu0 0.0
        %7096 = vmatprep.subr.mxu0 0.0
        %7097 = vmatpush1.xpose.msra.mxu0 0.0
        %7098 = vmatprep.subr.mxu0 0.0
        %7099 = vmatpush1.xpose.msra.mxu0 0.0
        %7100 = vmatprep.subr.mxu0 0.0
        %7101 = vmatpush1.xpose.msra.mxu0 0.0
        %7102 = vmatprep.subr.mxu0 0.0
        %7103 = vmatpush1.xpose.msra.mxu0 0.0
        %7104 = vmatprep.subr.mxu0 0.0
        %7105 = vmatpush1.xpose.msra.mxu0 0.0
        %7106 = vmatprep.subr.mxu0 0.0
        %7107 = vmatpush1.xpose.msra.mxu0 0.0
        %7108 = vmatprep.subr.mxu0 0.0
        %7109 = vmatpush1.xpose.msra.mxu0 0.0
        %7110 = vmatprep.subr.mxu0 0.0
        %7111 = vmatpush1.xpose.msra.mxu0 0.0
        %7112 = vmatprep.subr.mxu0 0.0
        %7113 = vmatpush1.xpose.msra.mxu0 0.0
        %7114 = vmatprep.subr.mxu0 0.0
        %7115 = vmatpush1.xpose.msra.mxu0 0.0
        %7116 = vmatprep.subr.mxu0 0.0
        %7117 = vmatpush1.xpose.msra.mxu0 0.0
        %7118 = vmatprep.subr.mxu0 0.0
        %7119 = vmatpush1.xpose.msra.mxu0 0.0
        %7120 = vmatprep.subr.mxu0 0.0
        %7121 = vmatpush1.xpose.msra.mxu0 0.0
        %7122 = vmatprep.subr.mxu0 0.0
        %7123 = vmatpush1.xpose.msra.mxu0 0.0
        %7124 = vmatprep.subr.mxu0 0.0
        %7125 = vmatpush1.xpose.msra.mxu0 0.0
        %7126 = vmatprep.subr.mxu0 0.0
        %7127 = vmatpush1.xpose.msra.mxu0 0.0
        %7128 = vmatprep.subr.mxu0 0.0
        %7129 = vmatpush1.xpose.msra.mxu0 0.0
        %7130 = vmatprep.subr.mxu0 0.0
        %7131 = vmatpush1.xpose.msra.mxu0 0.0
        %7132 = vmatprep.subr.mxu0 0.0
        %7133 = vmatpush1.xpose.msra.mxu0 0.0
        %7134 = vmatprep.subr.mxu0 0.0
        %7135 = vmatpush1.xpose.msra.mxu0 0.0
        %7136 = vmatprep.subr.mxu0 0.0
        %7137 = vmatpush1.xpose.msra.mxu0 0.0
        %7138 = vmatprep.subr.mxu0 0.0
        %7139 = vmatpush1.xpose.msra.mxu0 0.0
        %7140 = vmatprep.subr.mxu0 0.0
        %7141 = vmatpush1.xpose.msra.mxu0 0.0
        %7142 = vmatprep.subr.mxu0 0.0
        %7143 = vmatpush1.xpose.msra.mxu0 0.0
        %7144 = vmatprep.subr.mxu0 0.0
        %7145 = vmatpush1.xpose.msra.mxu0 0.0
        %7146 = vmatprep.subr.mxu0 0.0
        %7147 = vmatpush1.xpose.msra.mxu0 0.0
        %7148 = vmatprep.subr.mxu0 0.0
        %7149 = vmatpush1.xpose.msra.mxu0 0.0
        %7150 = vmatprep.subr.mxu0 0.0
        %7151 = vmatpush1.xpose.msra.mxu0 0.0
        %7152 = vmatprep.subr.mxu0 0.0
        %7153 = vmatpush1.xpose.msra.mxu0 0.0
        %7154 = vmatprep.mubr.f32.mxu0 %v1510
        %7155 = vmatmul.mubr.f32.gmra.mrb[0].mxu0 %v1508
        %v7156 = vpop.f32.mrb[0].mxu0
        %v7157 = vadd.f32 %v7087, %v7156
        %v7158 = vpop.f32.mrb[0].mxu0
        %7159 = vdwg.mxu0
        %7160 = vmatprep.subr.mxu0 %v481
        %7161 = vmatpush1.xpose.msra.mxu0 %v480
        %7162 = vmatprep.subr.mxu0 %v737
        %7163 = vmatpush1.xpose.msra.mxu0 %v736
        %7164 = vmatprep.subr.mxu0 0.0
        %7165 = vmatpush1.xpose.msra.mxu0 0.0
        %7166 = vmatprep.subr.mxu0 0.0
        %7167 = vmatpush1.xpose.msra.mxu0 0.0
        %7168 = vmatprep.subr.mxu0 0.0
        %7169 = vmatpush1.xpose.msra.mxu0 0.0
        %7170 = vmatprep.subr.mxu0 0.0
        %7171 = vmatpush1.xpose.msra.mxu0 0.0
        %7172 = vmatprep.subr.mxu0 0.0
        %7173 = vmatpush1.xpose.msra.mxu0 0.0
        %7174 = vmatprep.subr.mxu0 0.0
        %7175 = vmatpush1.xpose.msra.mxu0 0.0
        %7176 = vmatprep.subr.mxu0 0.0
        %7177 = vmatpush1.xpose.msra.mxu0 0.0
        %7178 = vmatprep.subr.mxu0 0.0
        %7179 = vmatpush1.xpose.msra.mxu0 0.0
        %7180 = vmatprep.subr.mxu0 0.0
        %7181 = vmatpush1.xpose.msra.mxu0 0.0
        %7182 = vmatprep.subr.mxu0 0.0
        %7183 = vmatpush1.xpose.msra.mxu0 0.0
        %7184 = vmatprep.subr.mxu0 0.0
        %7185 = vmatpush1.xpose.msra.mxu0 0.0
        %7186 = vmatprep.subr.mxu0 0.0
        %7187 = vmatpush1.xpose.msra.mxu0 0.0
        %7188 = vmatprep.subr.mxu0 0.0
        %7189 = vmatpush1.xpose.msra.mxu0 0.0
        %7190 = vmatprep.subr.mxu0 0.0
        %7191 = vmatpush1.xpose.msra.mxu0 0.0
        %7192 = vmatprep.subr.mxu0 0.0
        %7193 = vmatpush1.xpose.msra.mxu0 0.0
        %7194 = vmatprep.subr.mxu0 0.0
        %7195 = vmatpush1.xpose.msra.mxu0 0.0
        %7196 = vmatprep.subr.mxu0 0.0
        %7197 = vmatpush1.xpose.msra.mxu0 0.0
        %7198 = vmatprep.subr.mxu0 0.0
        %7199 = vmatpush1.xpose.msra.mxu0 0.0
        %7200 = vmatprep.subr.mxu0 0.0
        %7201 = vmatpush1.xpose.msra.mxu0 0.0
        %7202 = vmatprep.subr.mxu0 0.0
        %7203 = vmatpush1.xpose.msra.mxu0 0.0
        %7204 = vmatprep.subr.mxu0 0.0
        %7205 = vmatpush1.xpose.msra.mxu0 0.0
        %7206 = vmatprep.subr.mxu0 0.0
        %7207 = vmatpush1.xpose.msra.mxu0 0.0
        %7208 = vmatprep.subr.mxu0 0.0
        %7209 = vmatpush1.xpose.msra.mxu0 0.0
        %7210 = vmatprep.subr.mxu0 0.0
        %7211 = vmatpush1.xpose.msra.mxu0 0.0
        %7212 = vmatprep.subr.mxu0 0.0
        %7213 = vmatpush1.xpose.msra.mxu0 0.0
        %7214 = vmatprep.subr.mxu0 0.0
        %7215 = vmatpush1.xpose.msra.mxu0 0.0
        %7216 = vmatprep.subr.mxu0 0.0
        %7217 = vmatpush1.xpose.msra.mxu0 0.0
        %7218 = vmatprep.subr.mxu0 0.0
        %7219 = vmatpush1.xpose.msra.mxu0 0.0
        %7220 = vmatprep.subr.mxu0 0.0
        %7221 = vmatpush1.xpose.msra.mxu0 0.0
        %7222 = vmatprep.subr.mxu0 0.0
        %7223 = vmatpush1.xpose.msra.mxu0 0.0
        %7224 = vmatprep.mubr.f32.mxu0 %v1526
        %7225 = vmatmul.mubr.f32.gmra.mrb[0].mxu0 %v1518
        %v7226 = vpop.f32.mrb[0].mxu0
        %v7227 = vadd.f32 %v7157, %v7226
        %v7228 = vpop.f32.mrb[0].mxu0
        %7229 = vdwg.mxu0
        %7230 = vmatprep.subr.mxu0 %v483
        %7231 = vmatpush1.xpose.msra.mxu0 %v482
        %7232 = vmatprep.subr.mxu0 %v739
        %7233 = vmatpush1.xpose.msra.mxu0 %v738
        %7234 = vmatprep.subr.mxu0 0.0
        %7235 = vmatpush1.xpose.msra.mxu0 0.0
        %7236 = vmatprep.subr.mxu0 0.0
        %7237 = vmatpush1.xpose.msra.mxu0 0.0
        %7238 = vmatprep.subr.mxu0 0.0
        %7239 = vmatpush1.xpose.msra.mxu0 0.0
        %7240 = vmatprep.subr.mxu0 0.0
        %7241 = vmatpush1.xpose.msra.mxu0 0.0
        %7242 = vmatprep.subr.mxu0 0.0
        %7243 = vmatpush1.xpose.msra.mxu0 0.0
        %7244 = vmatprep.subr.mxu0 0.0
        %7245 = vmatpush1.xpose.msra.mxu0 0.0
        %7246 = vmatprep.subr.mxu0 0.0
        %7247 = vmatpush1.xpose.msra.mxu0 0.0
        %7248 = vmatprep.subr.mxu0 0.0
        %7249 = vmatpush1.xpose.msra.mxu0 0.0
        %7250 = vmatprep.subr.mxu0 0.0
        %7251 = vmatpush1.xpose.msra.mxu0 0.0
        %7252 = vmatprep.subr.mxu0 0.0
        %7253 = vmatpush1.xpose.msra.mxu0 0.0
        %7254 = vmatprep.subr.mxu0 0.0
        %7255 = vmatpush1.xpose.msra.mxu0 0.0
        %7256 = vmatprep.subr.mxu0 0.0
        %7257 = vmatpush1.xpose.msra.mxu0 0.0
        %7258 = vmatprep.subr.mxu0 0.0
        %7259 = vmatpush1.xpose.msra.mxu0 0.0
        %7260 = vmatprep.subr.mxu0 0.0
        %7261 = vmatpush1.xpose.msra.mxu0 0.0
        %7262 = vmatprep.subr.mxu0 0.0
        %7263 = vmatpush1.xpose.msra.mxu0 0.0
        %7264 = vmatprep.subr.mxu0 0.0
        %7265 = vmatpush1.xpose.msra.mxu0 0.0
        %7266 = vmatprep.subr.mxu0 0.0
        %7267 = vmatpush1.xpose.msra.mxu0 0.0
        %7268 = vmatprep.subr.mxu0 0.0
        %7269 = vmatpush1.xpose.msra.mxu0 0.0
        %7270 = vmatprep.subr.mxu0 0.0
        %7271 = vmatpush1.xpose.msra.mxu0 0.0
        %7272 = vmatprep.subr.mxu0 0.0
        %7273 = vmatpush1.xpose.msra.mxu0 0.0
        %7274 = vmatprep.subr.mxu0 0.0
        %7275 = vmatpush1.xpose.msra.mxu0 0.0
        %7276 = vmatprep.subr.mxu0 0.0
        %7277 = vmatpush1.xpose.msra.mxu0 0.0
        %7278 = vmatprep.subr.mxu0 0.0
        %7279 = vmatpush1.xpose.msra.mxu0 0.0
        %7280 = vmatprep.subr.mxu0 0.0
        %7281 = vmatpush1.xpose.msra.mxu0 0.0
        %7282 = vmatprep.subr.mxu0 0.0
        %7283 = vmatpush1.xpose.msra.mxu0 0.0
        %7284 = vmatprep.subr.mxu0 0.0
        %7285 = vmatpush1.xpose.msra.mxu0 0.0
        %7286 = vmatprep.subr.mxu0 0.0
        %7287 = vmatpush1.xpose.msra.mxu0 0.0
        %7288 = vmatprep.subr.mxu0 0.0
        %7289 = vmatpush1.xpose.msra.mxu0 0.0
        %7290 = vmatprep.subr.mxu0 0.0
        %7291 = vmatpush1.xpose.msra.mxu0 0.0
        %7292 = vmatprep.subr.mxu0 0.0
        %7293 = vmatpush1.xpose.msra.mxu0 0.0
        %7294 = vmatprep.mubr.f32.mxu0 %v1527
        %7295 = vmatmul.mubr.f32.gmra.mrb[0].mxu0 %v1525
        %v7296 = vpop.f32.mrb[0].mxu0
        %v7297 = vadd.f32 %v7227, %v7296
        %v7298 = vpop.f32.mrb[0].mxu0
        %7299 = vdwg.mxu0
        %7300 = vmatprep.subr.mxu0 %v485
        %7301 = vmatpush1.xpose.msra.mxu0 %v484
        %7302 = vmatprep.subr.mxu0 %v741
        %7303 = vmatpush1.xpose.msra.mxu0 %v740
        %7304 = vmatprep.subr.mxu0 0.0
        %7305 = vmatpush1.xpose.msra.mxu0 0.0
        %7306 = vmatprep.subr.mxu0 0.0
        %7307 = vmatpush1.xpose.msra.mxu0 0.0
        %7308 = vmatprep.subr.mxu0 0.0
        %7309 = vmatpush1.xpose.msra.mxu0 0.0
        %7310 = vmatprep.subr.mxu0 0.0
        %7311 = vmatpush1.xpose.msra.mxu0 0.0
        %7312 = vmatprep.subr.mxu0 0.0
        %7313 = vmatpush1.xpose.msra.mxu0 0.0
        %7314 = vmatprep.subr.mxu0 0.0
        %7315 = vmatpush1.xpose.msra.mxu0 0.0
        %7316 = vmatprep.subr.mxu0 0.0
        %7317 = vmatpush1.xpose.msra.mxu0 0.0
        %7318 = vmatprep.subr.mxu0 0.0
        %7319 = vmatpush1.xpose.msra.mxu0 0.0
        %7320 = vmatprep.subr.mxu0 0.0
        %7321 = vmatpush1.xpose.msra.mxu0 0.0
        %7322 = vmatprep.subr.mxu0 0.0
        %7323 = vmatpush1.xpose.msra.mxu0 0.0
        %7324 = vmatprep.subr.mxu0 0.0
        %7325 = vmatpush1.xpose.msra.mxu0 0.0
        %7326 = vmatprep.subr.mxu0 0.0
        %7327 = vmatpush1.xpose.msra.mxu0 0.0
        %7328 = vmatprep.subr.mxu0 0.0
        %7329 = vmatpush1.xpose.msra.mxu0 0.0
        %7330 = vmatprep.subr.mxu0 0.0
        %7331 = vmatpush1.xpose.msra.mxu0 0.0
        %7332 = vmatprep.subr.mxu0 0.0
        %7333 = vmatpush1.xpose.msra.mxu0 0.0
        %7334 = vmatprep.subr.mxu0 0.0
        %7335 = vmatpush1.xpose.msra.mxu0 0.0
        %7336 = vmatprep.subr.mxu0 0.0
        %7337 = vmatpush1.xpose.msra.mxu0 0.0
        %7338 = vmatprep.subr.mxu0 0.0
        %7339 = vmatpush1.xpose.msra.mxu0 0.0
        %7340 = vmatprep.subr.mxu0 0.0
        %7341 = vmatpush1.xpose.msra.mxu0 0.0
        %7342 = vmatprep.subr.mxu0 0.0
        %7343 = vmatpush1.xpose.msra.mxu0 0.0
        %7344 = vmatprep.subr.mxu0 0.0
        %7345 = vmatpush1.xpose.msra.mxu0 0.0
        %7346 = vmatprep.subr.mxu0 0.0
        %7347 = vmatpush1.xpose.msra.mxu0 0.0
        %7348 = vmatprep.subr.mxu0 0.0
        %7349 = vmatpush1.xpose.msra.mxu0 0.0
        %7350 = vmatprep.subr.mxu0 0.0
        %7351 = vmatpush1.xpose.msra.mxu0 0.0
        %7352 = vmatprep.subr.mxu0 0.0
        %7353 = vmatpush1.xpose.msra.mxu0 0.0
        %7354 = vmatprep.subr.mxu0 0.0
        %7355 = vmatpush1.xpose.msra.mxu0 0.0
        %7356 = vmatprep.subr.mxu0 0.0
        %7357 = vmatpush1.xpose.msra.mxu0 0.0
        %7358 = vmatprep.subr.mxu0 0.0
        %7359 = vmatpush1.xpose.msra.mxu0 0.0
        %7360 = vmatprep.subr.mxu0 0.0
        %7361 = vmatpush1.xpose.msra.mxu0 0.0
        %7362 = vmatprep.subr.mxu0 0.0
        %7363 = vmatpush1.xpose.msra.mxu0 0.0
        %7364 = vmatprep.mubr.f32.mxu0 %v1543
        %7365 = vmatmul.mubr.f32.gmra.mrb[0].mxu0 %v1535
        %v7366 = vpop.f32.mrb[0].mxu0
        %v7367 = vadd.f32 %v7297, %v7366
        %v7368 = vpop.f32.mrb[0].mxu0
        %7369 = vdwg.mxu0
        %7370 = vmatprep.subr.mxu0 %v487
        %7371 = vmatpush1.xpose.msra.mxu0 %v486
        %7372 = vmatprep.subr.mxu0 %v743
        %7373 = vmatpush1.xpose.msra.mxu0 %v742
        %7374 = vmatprep.subr.mxu0 0.0
        %7375 = vmatpush1.xpose.msra.mxu0 0.0
        %7376 = vmatprep.subr.mxu0 0.0
        %7377 = vmatpush1.xpose.msra.mxu0 0.0
        %7378 = vmatprep.subr.mxu0 0.0
        %7379 = vmatpush1.xpose.msra.mxu0 0.0
        %7380 = vmatprep.subr.mxu0 0.0
        %7381 = vmatpush1.xpose.msra.mxu0 0.0
        %7382 = vmatprep.subr.mxu0 0.0
        %7383 = vmatpush1.xpose.msra.mxu0 0.0
        %7384 = vmatprep.subr.mxu0 0.0
        %7385 = vmatpush1.xpose.msra.mxu0 0.0
        %7386 = vmatprep.subr.mxu0 0.0
        %7387 = vmatpush1.xpose.msra.mxu0 0.0
        %7388 = vmatprep.subr.mxu0 0.0
        %7389 = vmatpush1.xpose.msra.mxu0 0.0
        %7390 = vmatprep.subr.mxu0 0.0
        %7391 = vmatpush1.xpose.msra.mxu0 0.0
        %7392 = vmatprep.subr.mxu0 0.0
        %7393 = vmatpush1.xpose.msra.mxu0 0.0
        %7394 = vmatprep.subr.mxu0 0.0
        %7395 = vmatpush1.xpose.msra.mxu0 0.0
        %7396 = vmatprep.subr.mxu0 0.0
        %7397 = vmatpush1.xpose.msra.mxu0 0.0
        %7398 = vmatprep.subr.mxu0 0.0
        %7399 = vmatpush1.xpose.msra.mxu0 0.0
        %7400 = vmatprep.subr.mxu0 0.0
        %7401 = vmatpush1.xpose.msra.mxu0 0.0
        %7402 = vmatprep.subr.mxu0 0.0
        %7403 = vmatpush1.xpose.msra.mxu0 0.0
        %7404 = vmatprep.subr.mxu0 0.0
        %7405 = vmatpush1.xpose.msra.mxu0 0.0
        %7406 = vmatprep.subr.mxu0 0.0
        %7407 = vmatpush1.xpose.msra.mxu0 0.0
        %7408 = vmatprep.subr.mxu0 0.0
        %7409 = vmatpush1.xpose.msra.mxu0 0.0
        %7410 = vmatprep.subr.mxu0 0.0
        %7411 = vmatpush1.xpose.msra.mxu0 0.0
        %7412 = vmatprep.subr.mxu0 0.0
        %7413 = vmatpush1.xpose.msra.mxu0 0.0
        %7414 = vmatprep.subr.mxu0 0.0
        %7415 = vmatpush1.xpose.msra.mxu0 0.0
        %7416 = vmatprep.subr.mxu0 0.0
        %7417 = vmatpush1.xpose.msra.mxu0 0.0
        %7418 = vmatprep.subr.mxu0 0.0
        %7419 = vmatpush1.xpose.msra.mxu0 0.0
        %7420 = vmatprep.subr.mxu0 0.0
        %7421 = vmatpush1.xpose.msra.mxu0 0.0
        %7422 = vmatprep.subr.mxu0 0.0
        %7423 = vmatpush1.xpose.msra.mxu0 0.0
        %7424 = vmatprep.subr.mxu0 0.0
        %7425 = vmatpush1.xpose.msra.mxu0 0.0
        %7426 = vmatprep.subr.mxu0 0.0
        %7427 = vmatpush1.xpose.msra.mxu0 0.0
        %7428 = vmatprep.subr.mxu0 0.0
        %7429 = vmatpush1.xpose.msra.mxu0 0.0
        %7430 = vmatprep.subr.mxu0 0.0
        %7431 = vmatpush1.xpose.msra.mxu0 0.0
        %7432 = vmatprep.subr.mxu0 0.0
        %7433 = vmatpush1.xpose.msra.mxu0 0.0
        %7434 = vmatprep.mubr.f32.mxu0 %v1544
        %7435 = vmatmul.mubr.f32.gmra.mrb[0].mxu0 %v1542
        %v7436 = vpop.f32.mrb[0].mxu0
        %v7437 = vadd.f32 %v7367, %v7436
        %v7438 = vpop.f32.mrb[0].mxu0
        %7439 = vdwg.mxu0
        %7440 = vmatprep.subr.mxu0 %v489
        %7441 = vmatpush1.xpose.msra.mxu0 %v488
        %7442 = vmatprep.subr.mxu0 %v745
        %7443 = vmatpush1.xpose.msra.mxu0 %v744
        %7444 = vmatprep.subr.mxu0 0.0
        %7445 = vmatpush1.xpose.msra.mxu0 0.0
        %7446 = vmatprep.subr.mxu0 0.0
        %7447 = vmatpush1.xpose.msra.mxu0 0.0
        %7448 = vmatprep.subr.mxu0 0.0
        %7449 = vmatpush1.xpose.msra.mxu0 0.0
        %7450 = vmatprep.subr.mxu0 0.0
        %7451 = vmatpush1.xpose.msra.mxu0 0.0
        %7452 = vmatprep.subr.mxu0 0.0
        %7453 = vmatpush1.xpose.msra.mxu0 0.0
        %7454 = vmatprep.subr.mxu0 0.0
        %7455 = vmatpush1.xpose.msra.mxu0 0.0
        %7456 = vmatprep.subr.mxu0 0.0
        %7457 = vmatpush1.xpose.msra.mxu0 0.0
        %7458 = vmatprep.subr.mxu0 0.0
        %7459 = vmatpush1.xpose.msra.mxu0 0.0
        %7460 = vmatprep.subr.mxu0 0.0
        %7461 = vmatpush1.xpose.msra.mxu0 0.0
        %7462 = vmatprep.subr.mxu0 0.0
        %7463 = vmatpush1.xpose.msra.mxu0 0.0
        %7464 = vmatprep.subr.mxu0 0.0
        %7465 = vmatpush1.xpose.msra.mxu0 0.0
        %7466 = vmatprep.subr.mxu0 0.0
        %7467 = vmatpush1.xpose.msra.mxu0 0.0
        %7468 = vmatprep.subr.mxu0 0.0
        %7469 = vmatpush1.xpose.msra.mxu0 0.0
        %7470 = vmatprep.subr.mxu0 0.0
        %7471 = vmatpush1.xpose.msra.mxu0 0.0
        %7472 = vmatprep.subr.mxu0 0.0
        %7473 = vmatpush1.xpose.msra.mxu0 0.0
        %7474 = vmatprep.subr.mxu0 0.0
        %7475 = vmatpush1.xpose.msra.mxu0 0.0
        %7476 = vmatprep.subr.mxu0 0.0
        %7477 = vmatpush1.xpose.msra.mxu0 0.0
        %7478 = vmatprep.subr.mxu0 0.0
        %7479 = vmatpush1.xpose.msra.mxu0 0.0
        %7480 = vmatprep.subr.mxu0 0.0
        %7481 = vmatpush1.xpose.msra.mxu0 0.0
        %7482 = vmatprep.subr.mxu0 0.0
        %7483 = vmatpush1.xpose.msra.mxu0 0.0
        %7484 = vmatprep.subr.mxu0 0.0
        %7485 = vmatpush1.xpose.msra.mxu0 0.0
        %7486 = vmatprep.subr.mxu0 0.0
        %7487 = vmatpush1.xpose.msra.mxu0 0.0
        %7488 = vmatprep.subr.mxu0 0.0
        %7489 = vmatpush1.xpose.msra.mxu0 0.0
        %7490 = vmatprep.subr.mxu0 0.0
        %7491 = vmatpush1.xpose.msra.mxu0 0.0
        %7492 = vmatprep.subr.mxu0 0.0
        %7493 = vmatpush1.xpose.msra.mxu0 0.0
        %7494 = vmatprep.subr.mxu0 0.0
        %7495 = vmatpush1.xpose.msra.mxu0 0.0
        %7496 = vmatprep.subr.mxu0 0.0
        %7497 = vmatpush1.xpose.msra.mxu0 0.0
        %7498 = vmatprep.subr.mxu0 0.0
        %7499 = vmatpush1.xpose.msra.mxu0 0.0
        %7500 = vmatprep.subr.mxu0 0.0
        %7501 = vmatpush1.xpose.msra.mxu0 0.0
        %7502 = vmatprep.subr.mxu0 0.0
        %7503 = vmatpush1.xpose.msra.mxu0 0.0
        %7504 = vmatprep.mubr.f32.mxu0 %v1560
        %7505 = vmatmul.mubr.f32.gmra.mrb[0].mxu0 %v1552
        %v7506 = vpop.f32.mrb[0].mxu0
        %v7507 = vadd.f32 %v7437, %v7506
        %v7508 = vpop.f32.mrb[0].mxu0
        %7509 = vdwg.mxu0
        %7510 = vmatprep.subr.mxu0 %v491
        %7511 = vmatpush1.xpose.msra.mxu0 %v490
        %7512 = vmatprep.subr.mxu0 %v747
        %7513 = vmatpush1.xpose.msra.mxu0 %v746
        %7514 = vmatprep.subr.mxu0 0.0
        %7515 = vmatpush1.xpose.msra.mxu0 0.0
        %7516 = vmatprep.subr.mxu0 0.0
        %7517 = vmatpush1.xpose.msra.mxu0 0.0
        %7518 = vmatprep.subr.mxu0 0.0
        %7519 = vmatpush1.xpose.msra.mxu0 0.0
        %7520 = vmatprep.subr.mxu0 0.0
        %7521 = vmatpush1.xpose.msra.mxu0 0.0
        %7522 = vmatprep.subr.mxu0 0.0
        %7523 = vmatpush1.xpose.msra.mxu0 0.0
        %7524 = vmatprep.subr.mxu0 0.0
        %7525 = vmatpush1.xpose.msra.mxu0 0.0
        %7526 = vmatprep.subr.mxu0 0.0
        %7527 = vmatpush1.xpose.msra.mxu0 0.0
        %7528 = vmatprep.subr.mxu0 0.0
        %7529 = vmatpush1.xpose.msra.mxu0 0.0
        %7530 = vmatprep.subr.mxu0 0.0
        %7531 = vmatpush1.xpose.msra.mxu0 0.0
        %7532 = vmatprep.subr.mxu0 0.0
        %7533 = vmatpush1.xpose.msra.mxu0 0.0
        %7534 = vmatprep.subr.mxu0 0.0
        %7535 = vmatpush1.xpose.msra.mxu0 0.0
        %7536 = vmatprep.subr.mxu0 0.0
        %7537 = vmatpush1.xpose.msra.mxu0 0.0
        %7538 = vmatprep.subr.mxu0 0.0
        %7539 = vmatpush1.xpose.msra.mxu0 0.0
        %7540 = vmatprep.subr.mxu0 0.0
        %7541 = vmatpush1.xpose.msra.mxu0 0.0
        %7542 = vmatprep.subr.mxu0 0.0
        %7543 = vmatpush1.xpose.msra.mxu0 0.0
        %7544 = vmatprep.subr.mxu0 0.0
        %7545 = vmatpush1.xpose.msra.mxu0 0.0
        %7546 = vmatprep.subr.mxu0 0.0
        %7547 = vmatpush1.xpose.msra.mxu0 0.0
        %7548 = vmatprep.subr.mxu0 0.0
        %7549 = vmatpush1.xpose.msra.mxu0 0.0
        %7550 = vmatprep.subr.mxu0 0.0
        %7551 = vmatpush1.xpose.msra.mxu0 0.0
        %7552 = vmatprep.subr.mxu0 0.0
        %7553 = vmatpush1.xpose.msra.mxu0 0.0
        %7554 = vmatprep.subr.mxu0 0.0
        %7555 = vmatpush1.xpose.msra.mxu0 0.0
        %7556 = vmatprep.subr.mxu0 0.0
        %7557 = vmatpush1.xpose.msra.mxu0 0.0
        %7558 = vmatprep.subr.mxu0 0.0
        %7559 = vmatpush1.xpose.msra.mxu0 0.0
        %7560 = vmatprep.subr.mxu0 0.0
        %7561 = vmatpush1.xpose.msra.mxu0 0.0
        %7562 = vmatprep.subr.mxu0 0.0
        %7563 = vmatpush1.xpose.msra.mxu0 0.0
        %7564 = vmatprep.subr.mxu0 0.0
        %7565 = vmatpush1.xpose.msra.mxu0 0.0
        %7566 = vmatprep.subr.mxu0 0.0
        %7567 = vmatpush1.xpose.msra.mxu0 0.0
        %7568 = vmatprep.subr.mxu0 0.0
        %7569 = vmatpush1.xpose.msra.mxu0 0.0
        %7570 = vmatprep.subr.mxu0 0.0
        %7571 = vmatpush1.xpose.msra.mxu0 0.0
        %7572 = vmatprep.subr.mxu0 0.0
        %7573 = vmatpush1.xpose.msra.mxu0 0.0
        %7574 = vmatprep.mubr.f32.mxu0 %v1561
        %7575 = vmatmul.mubr.f32.gmra.mrb[0].mxu0 %v1559
        %v7576 = vpop.f32.mrb[0].mxu0
        %v7577 = vadd.f32 %v7507, %v7576
        %v7578 = vpop.f32.mrb[0].mxu0
        %7579 = vdwg.mxu0
        %7580 = vmatprep.subr.mxu0 %v493
        %7581 = vmatpush1.xpose.msra.mxu0 %v492
        %7582 = vmatprep.subr.mxu0 %v749
        %7583 = vmatpush1.xpose.msra.mxu0 %v748
        %7584 = vmatprep.subr.mxu0 0.0
        %7585 = vmatpush1.xpose.msra.mxu0 0.0
        %7586 = vmatprep.subr.mxu0 0.0
        %7587 = vmatpush1.xpose.msra.mxu0 0.0
        %7588 = vmatprep.subr.mxu0 0.0
        %7589 = vmatpush1.xpose.msra.mxu0 0.0
        %7590 = vmatprep.subr.mxu0 0.0
        %7591 = vmatpush1.xpose.msra.mxu0 0.0
        %7592 = vmatprep.subr.mxu0 0.0
        %7593 = vmatpush1.xpose.msra.mxu0 0.0
        %7594 = vmatprep.subr.mxu0 0.0
        %7595 = vmatpush1.xpose.msra.mxu0 0.0
        %7596 = vmatprep.subr.mxu0 0.0
        %7597 = vmatpush1.xpose.msra.mxu0 0.0
        %7598 = vmatprep.subr.mxu0 0.0
        %7599 = vmatpush1.xpose.msra.mxu0 0.0
        %7600 = vmatprep.subr.mxu0 0.0
        %7601 = vmatpush1.xpose.msra.mxu0 0.0
        %7602 = vmatprep.subr.mxu0 0.0
        %7603 = vmatpush1.xpose.msra.mxu0 0.0
        %7604 = vmatprep.subr.mxu0 0.0
        %7605 = vmatpush1.xpose.msra.mxu0 0.0
        %7606 = vmatprep.subr.mxu0 0.0
        %7607 = vmatpush1.xpose.msra.mxu0 0.0
        %7608 = vmatprep.subr.mxu0 0.0
        %7609 = vmatpush1.xpose.msra.mxu0 0.0
        %7610 = vmatprep.subr.mxu0 0.0
        %7611 = vmatpush1.xpose.msra.mxu0 0.0
        %7612 = vmatprep.subr.mxu0 0.0
        %7613 = vmatpush1.xpose.msra.mxu0 0.0
        %7614 = vmatprep.subr.mxu0 0.0
        %7615 = vmatpush1.xpose.msra.mxu0 0.0
        %7616 = vmatprep.subr.mxu0 0.0
        %7617 = vmatpush1.xpose.msra.mxu0 0.0
        %7618 = vmatprep.subr.mxu0 0.0
        %7619 = vmatpush1.xpose.msra.mxu0 0.0
        %7620 = vmatprep.subr.mxu0 0.0
        %7621 = vmatpush1.xpose.msra.mxu0 0.0
        %7622 = vmatprep.subr.mxu0 0.0
        %7623 = vmatpush1.xpose.msra.mxu0 0.0
        %7624 = vmatprep.subr.mxu0 0.0
        %7625 = vmatpush1.xpose.msra.mxu0 0.0
        %7626 = vmatprep.subr.mxu0 0.0
        %7627 = vmatpush1.xpose.msra.mxu0 0.0
        %7628 = vmatprep.subr.mxu0 0.0
        %7629 = vmatpush1.xpose.msra.mxu0 0.0
        %7630 = vmatprep.subr.mxu0 0.0
        %7631 = vmatpush1.xpose.msra.mxu0 0.0
        %7632 = vmatprep.subr.mxu0 0.0
        %7633 = vmatpush1.xpose.msra.mxu0 0.0
        %7634 = vmatprep.subr.mxu0 0.0
        %7635 = vmatpush1.xpose.msra.mxu0 0.0
        %7636 = vmatprep.subr.mxu0 0.0
        %7637 = vmatpush1.xpose.msra.mxu0 0.0
        %7638 = vmatprep.subr.mxu0 0.0
        %7639 = vmatpush1.xpose.msra.mxu0 0.0
        %7640 = vmatprep.subr.mxu0 0.0
        %7641 = vmatpush1.xpose.msra.mxu0 0.0
        %7642 = vmatprep.subr.mxu0 0.0
        %7643 = vmatpush1.xpose.msra.mxu0 0.0
        %7644 = vmatprep.mubr.f32.mxu0 %v1577
        %7645 = vmatmul.mubr.f32.gmra.mrb[0].mxu0 %v1569
        %v7646 = vpop.f32.mrb[0].mxu0
        %v7647 = vadd.f32 %v7577, %v7646
        %v7648 = vpop.f32.mrb[0].mxu0
        %7649 = vdwg.mxu0
        %7650 = vmatprep.subr.mxu0 %v495
        %7651 = vmatpush1.xpose.msra.mxu0 %v494
        %7652 = vmatprep.subr.mxu0 %v751
        %7653 = vmatpush1.xpose.msra.mxu0 %v750
        %7654 = vmatprep.subr.mxu0 0.0
        %7655 = vmatpush1.xpose.msra.mxu0 0.0
        %7656 = vmatprep.subr.mxu0 0.0
        %7657 = vmatpush1.xpose.msra.mxu0 0.0
        %7658 = vmatprep.subr.mxu0 0.0
        %7659 = vmatpush1.xpose.msra.mxu0 0.0
        %7660 = vmatprep.subr.mxu0 0.0
        %7661 = vmatpush1.xpose.msra.mxu0 0.0
        %7662 = vmatprep.subr.mxu0 0.0
        %7663 = vmatpush1.xpose.msra.mxu0 0.0
        %7664 = vmatprep.subr.mxu0 0.0
        %7665 = vmatpush1.xpose.msra.mxu0 0.0
        %7666 = vmatprep.subr.mxu0 0.0
        %7667 = vmatpush1.xpose.msra.mxu0 0.0
        %7668 = vmatprep.subr.mxu0 0.0
        %7669 = vmatpush1.xpose.msra.mxu0 0.0
        %7670 = vmatprep.subr.mxu0 0.0
        %7671 = vmatpush1.xpose.msra.mxu0 0.0
        %7672 = vmatprep.subr.mxu0 0.0
        %7673 = vmatpush1.xpose.msra.mxu0 0.0
        %7674 = vmatprep.subr.mxu0 0.0
        %7675 = vmatpush1.xpose.msra.mxu0 0.0
        %7676 = vmatprep.subr.mxu0 0.0
        %7677 = vmatpush1.xpose.msra.mxu0 0.0
        %7678 = vmatprep.subr.mxu0 0.0
        %7679 = vmatpush1.xpose.msra.mxu0 0.0
        %7680 = vmatprep.subr.mxu0 0.0
        %7681 = vmatpush1.xpose.msra.mxu0 0.0
        %7682 = vmatprep.subr.mxu0 0.0
        %7683 = vmatpush1.xpose.msra.mxu0 0.0
        %7684 = vmatprep.subr.mxu0 0.0
        %7685 = vmatpush1.xpose.msra.mxu0 0.0
        %7686 = vmatprep.subr.mxu0 0.0
        %7687 = vmatpush1.xpose.msra.mxu0 0.0
        %7688 = vmatprep.subr.mxu0 0.0
        %7689 = vmatpush1.xpose.msra.mxu0 0.0
        %7690 = vmatprep.subr.mxu0 0.0
        %7691 = vmatpush1.xpose.msra.mxu0 0.0
        %7692 = vmatprep.subr.mxu0 0.0
        %7693 = vmatpush1.xpose.msra.mxu0 0.0
        %7694 = vmatprep.subr.mxu0 0.0
        %7695 = vmatpush1.xpose.msra.mxu0 0.0
        %7696 = vmatprep.subr.mxu0 0.0
        %7697 = vmatpush1.xpose.msra.mxu0 0.0
        %7698 = vmatprep.subr.mxu0 0.0
        %7699 = vmatpush1.xpose.msra.mxu0 0.0
        %7700 = vmatprep.subr.mxu0 0.0
        %7701 = vmatpush1.xpose.msra.mxu0 0.0
        %7702 = vmatprep.subr.mxu0 0.0
        %7703 = vmatpush1.xpose.msra.mxu0 0.0
        %7704 = vmatprep.subr.mxu0 0.0
        %7705 = vmatpush1.xpose.msra.mxu0 0.0
        %7706 = vmatprep.subr.mxu0 0.0
        %7707 = vmatpush1.xpose.msra.mxu0 0.0
        %7708 = vmatprep.subr.mxu0 0.0
        %7709 = vmatpush1.xpose.msra.mxu0 0.0
        %7710 = vmatprep.subr.mxu0 0.0
        %7711 = vmatpush1.xpose.msra.mxu0 0.0
        %7712 = vmatprep.subr.mxu0 0.0
        %7713 = vmatpush1.xpose.msra.mxu0 0.0
        %7714 = vmatprep.mubr.f32.mxu0 %v1578
        %7715 = vmatmul.mubr.f32.gmra.mrb[0].mxu0 %v1576
        %v7716 = vpop.f32.mrb[0].mxu0
        %v7717 = vadd.f32 %v7647, %v7716
        %v7718 = vpop.f32.mrb[0].mxu0
        %7719 = vdwg.mxu0
        %7720 = vmatprep.subr.mxu0 %v497
        %7721 = vmatpush1.xpose.msra.mxu0 %v496
        %7722 = vmatprep.subr.mxu0 %v753
        %7723 = vmatpush1.xpose.msra.mxu0 %v752
        %7724 = vmatprep.subr.mxu0 0.0
        %7725 = vmatpush1.xpose.msra.mxu0 0.0
        %7726 = vmatprep.subr.mxu0 0.0
        %7727 = vmatpush1.xpose.msra.mxu0 0.0
        %7728 = vmatprep.subr.mxu0 0.0
        %7729 = vmatpush1.xpose.msra.mxu0 0.0
        %7730 = vmatprep.subr.mxu0 0.0
        %7731 = vmatpush1.xpose.msra.mxu0 0.0
        %7732 = vmatprep.subr.mxu0 0.0
        %7733 = vmatpush1.xpose.msra.mxu0 0.0
        %7734 = vmatprep.subr.mxu0 0.0
        %7735 = vmatpush1.xpose.msra.mxu0 0.0
        %7736 = vmatprep.subr.mxu0 0.0
        %7737 = vmatpush1.xpose.msra.mxu0 0.0
        %7738 = vmatprep.subr.mxu0 0.0
        %7739 = vmatpush1.xpose.msra.mxu0 0.0
        %7740 = vmatprep.subr.mxu0 0.0
        %7741 = vmatpush1.xpose.msra.mxu0 0.0
        %7742 = vmatprep.subr.mxu0 0.0
        %7743 = vmatpush1.xpose.msra.mxu0 0.0
        %7744 = vmatprep.subr.mxu0 0.0
        %7745 = vmatpush1.xpose.msra.mxu0 0.0
        %7746 = vmatprep.subr.mxu0 0.0
        %7747 = vmatpush1.xpose.msra.mxu0 0.0
        %7748 = vmatprep.subr.mxu0 0.0
        %7749 = vmatpush1.xpose.msra.mxu0 0.0
        %7750 = vmatprep.subr.mxu0 0.0
        %7751 = vmatpush1.xpose.msra.mxu0 0.0
        %7752 = vmatprep.subr.mxu0 0.0
        %7753 = vmatpush1.xpose.msra.mxu0 0.0
        %7754 = vmatprep.subr.mxu0 0.0
        %7755 = vmatpush1.xpose.msra.mxu0 0.0
        %7756 = vmatprep.subr.mxu0 0.0
        %7757 = vmatpush1.xpose.msra.mxu0 0.0
        %7758 = vmatprep.subr.mxu0 0.0
        %7759 = vmatpush1.xpose.msra.mxu0 0.0
        %7760 = vmatprep.subr.mxu0 0.0
        %7761 = vmatpush1.xpose.msra.mxu0 0.0
        %7762 = vmatprep.subr.mxu0 0.0
        %7763 = vmatpush1.xpose.msra.mxu0 0.0
        %7764 = vmatprep.subr.mxu0 0.0
        %7765 = vmatpush1.xpose.msra.mxu0 0.0
        %7766 = vmatprep.subr.mxu0 0.0
        %7767 = vmatpush1.xpose.msra.mxu0 0.0
        %7768 = vmatprep.subr.mxu0 0.0
        %7769 = vmatpush1.xpose.msra.mxu0 0.0
        %7770 = vmatprep.subr.mxu0 0.0
        %7771 = vmatpush1.xpose.msra.mxu0 0.0
        %7772 = vmatprep.subr.mxu0 0.0
        %7773 = vmatpush1.xpose.msra.mxu0 0.0
        %7774 = vmatprep.subr.mxu0 0.0
        %7775 = vmatpush1.xpose.msra.mxu0 0.0
        %7776 = vmatprep.subr.mxu0 0.0
        %7777 = vmatpush1.xpose.msra.mxu0 0.0
        %7778 = vmatprep.subr.mxu0 0.0
        %7779 = vmatpush1.xpose.msra.mxu0 0.0
        %7780 = vmatprep.subr.mxu0 0.0
        %7781 = vmatpush1.xpose.msra.mxu0 0.0
        %7782 = vmatprep.subr.mxu0 0.0
        %7783 = vmatpush1.xpose.msra.mxu0 0.0
        %7784 = vmatprep.mubr.f32.mxu0 %v1594
        %7785 = vmatmul.mubr.f32.gmra.mrb[0].mxu0 %v1586
        %v7786 = vpop.f32.mrb[0].mxu0
        %v7787 = vadd.f32 %v7717, %v7786
        %v7788 = vpop.f32.mrb[0].mxu0
        %7789 = vdwg.mxu0
        %7790 = vmatprep.subr.mxu0 %v499
        %7791 = vmatpush1.xpose.msra.mxu0 %v498
        %7792 = vmatprep.subr.mxu0 %v755
        %7793 = vmatpush1.xpose.msra.mxu0 %v754
        %7794 = vmatprep.subr.mxu0 0.0
        %7795 = vmatpush1.xpose.msra.mxu0 0.0
        %7796 = vmatprep.subr.mxu0 0.0
        %7797 = vmatpush1.xpose.msra.mxu0 0.0
        %7798 = vmatprep.subr.mxu0 0.0
        %7799 = vmatpush1.xpose.msra.mxu0 0.0
        %7800 = vmatprep.subr.mxu0 0.0
        %7801 = vmatpush1.xpose.msra.mxu0 0.0
        %7802 = vmatprep.subr.mxu0 0.0
        %7803 = vmatpush1.xpose.msra.mxu0 0.0
        %7804 = vmatprep.subr.mxu0 0.0
        %7805 = vmatpush1.xpose.msra.mxu0 0.0
        %7806 = vmatprep.subr.mxu0 0.0
        %7807 = vmatpush1.xpose.msra.mxu0 0.0
        %7808 = vmatprep.subr.mxu0 0.0
        %7809 = vmatpush1.xpose.msra.mxu0 0.0
        %7810 = vmatprep.subr.mxu0 0.0
        %7811 = vmatpush1.xpose.msra.mxu0 0.0
        %7812 = vmatprep.subr.mxu0 0.0
        %7813 = vmatpush1.xpose.msra.mxu0 0.0
        %7814 = vmatprep.subr.mxu0 0.0
        %7815 = vmatpush1.xpose.msra.mxu0 0.0
        %7816 = vmatprep.subr.mxu0 0.0
        %7817 = vmatpush1.xpose.msra.mxu0 0.0
        %7818 = vmatprep.subr.mxu0 0.0
        %7819 = vmatpush1.xpose.msra.mxu0 0.0
        %7820 = vmatprep.subr.mxu0 0.0
        %7821 = vmatpush1.xpose.msra.mxu0 0.0
        %7822 = vmatprep.subr.mxu0 0.0
        %7823 = vmatpush1.xpose.msra.mxu0 0.0
        %7824 = vmatprep.subr.mxu0 0.0
        %7825 = vmatpush1.xpose.msra.mxu0 0.0
        %7826 = vmatprep.subr.mxu0 0.0
        %7827 = vmatpush1.xpose.msra.mxu0 0.0
        %7828 = vmatprep.subr.mxu0 0.0
        %7829 = vmatpush1.xpose.msra.mxu0 0.0
        %7830 = vmatprep.subr.mxu0 0.0
        %7831 = vmatpush1.xpose.msra.mxu0 0.0
        %7832 = vmatprep.subr.mxu0 0.0
        %7833 = vmatpush1.xpose.msra.mxu0 0.0
        %7834 = vmatprep.subr.mxu0 0.0
        %7835 = vmatpush1.xpose.msra.mxu0 0.0
        %7836 = vmatprep.subr.mxu0 0.0
        %7837 = vmatpush1.xpose.msra.mxu0 0.0
        %7838 = vmatprep.subr.mxu0 0.0
        %7839 = vmatpush1.xpose.msra.mxu0 0.0
        %7840 = vmatprep.subr.mxu0 0.0
        %7841 = vmatpush1.xpose.msra.mxu0 0.0
        %7842 = vmatprep.subr.mxu0 0.0
        %7843 = vmatpush1.xpose.msra.mxu0 0.0
        %7844 = vmatprep.subr.mxu0 0.0
        %7845 = vmatpush1.xpose.msra.mxu0 0.0
        %7846 = vmatprep.subr.mxu0 0.0
        %7847 = vmatpush1.xpose.msra.mxu0 0.0
        %7848 = vmatprep.subr.mxu0 0.0
        %7849 = vmatpush1.xpose.msra.mxu0 0.0
        %7850 = vmatprep.subr.mxu0 0.0
        %7851 = vmatpush1.xpose.msra.mxu0 0.0
        %7852 = vmatprep.subr.mxu0 0.0
        %7853 = vmatpush1.xpose.msra.mxu0 0.0
        %7854 = vmatprep.mubr.f32.mxu0 %v1595
        %7855 = vmatmul.mubr.f32.gmra.mrb[0].mxu0 %v1593
        %v7856 = vpop.f32.mrb[0].mxu0
        %v7857 = vadd.f32 %v7787, %v7856
        %v7858 = vpop.f32.mrb[0].mxu0
        %7859 = vdwg.mxu0
        %7860 = vmatprep.subr.mxu0 %v501
        %7861 = vmatpush1.xpose.msra.mxu0 %v500
        %7862 = vmatprep.subr.mxu0 %v757
        %7863 = vmatpush1.xpose.msra.mxu0 %v756
        %7864 = vmatprep.subr.mxu0 0.0
        %7865 = vmatpush1.xpose.msra.mxu0 0.0
        %7866 = vmatprep.subr.mxu0 0.0
        %7867 = vmatpush1.xpose.msra.mxu0 0.0
        %7868 = vmatprep.subr.mxu0 0.0
        %7869 = vmatpush1.xpose.msra.mxu0 0.0
        %7870 = vmatprep.subr.mxu0 0.0
        %7871 = vmatpush1.xpose.msra.mxu0 0.0
        %7872 = vmatprep.subr.mxu0 0.0
        %7873 = vmatpush1.xpose.msra.mxu0 0.0
        %7874 = vmatprep.subr.mxu0 0.0
        %7875 = vmatpush1.xpose.msra.mxu0 0.0
        %7876 = vmatprep.subr.mxu0 0.0
        %7877 = vmatpush1.xpose.msra.mxu0 0.0
        %7878 = vmatprep.subr.mxu0 0.0
        %7879 = vmatpush1.xpose.msra.mxu0 0.0
        %7880 = vmatprep.subr.mxu0 0.0
        %7881 = vmatpush1.xpose.msra.mxu0 0.0
        %7882 = vmatprep.subr.mxu0 0.0
        %7883 = vmatpush1.xpose.msra.mxu0 0.0
        %7884 = vmatprep.subr.mxu0 0.0
        %7885 = vmatpush1.xpose.msra.mxu0 0.0
        %7886 = vmatprep.subr.mxu0 0.0
        %7887 = vmatpush1.xpose.msra.mxu0 0.0
        %7888 = vmatprep.subr.mxu0 0.0
        %7889 = vmatpush1.xpose.msra.mxu0 0.0
        %7890 = vmatprep.subr.mxu0 0.0
        %7891 = vmatpush1.xpose.msra.mxu0 0.0
        %7892 = vmatprep.subr.mxu0 0.0
        %7893 = vmatpush1.xpose.msra.mxu0 0.0
        %7894 = vmatprep.subr.mxu0 0.0
        %7895 = vmatpush1.xpose.msra.mxu0 0.0
        %7896 = vmatprep.subr.mxu0 0.0
        %7897 = vmatpush1.xpose.msra.mxu0 0.0
        %7898 = vmatprep.subr.mxu0 0.0
        %7899 = vmatpush1.xpose.msra.mxu0 0.0
        %7900 = vmatprep.subr.mxu0 0.0
        %7901 = vmatpush1.xpose.msra.mxu0 0.0
        %7902 = vmatprep.subr.mxu0 0.0
        %7903 = vmatpush1.xpose.msra.mxu0 0.0
        %7904 = vmatprep.subr.mxu0 0.0
        %7905 = vmatpush1.xpose.msra.mxu0 0.0
        %7906 = vmatprep.subr.mxu0 0.0
        %7907 = vmatpush1.xpose.msra.mxu0 0.0
        %7908 = vmatprep.subr.mxu0 0.0
        %7909 = vmatpush1.xpose.msra.mxu0 0.0
        %7910 = vmatprep.subr.mxu0 0.0
        %7911 = vmatpush1.xpose.msra.mxu0 0.0
        %7912 = vmatprep.subr.mxu0 0.0
        %7913 = vmatpush1.xpose.msra.mxu0 0.0
        %7914 = vmatprep.subr.mxu0 0.0
        %7915 = vmatpush1.xpose.msra.mxu0 0.0
        %7916 = vmatprep.subr.mxu0 0.0
        %7917 = vmatpush1.xpose.msra.mxu0 0.0
        %7918 = vmatprep.subr.mxu0 0.0
        %7919 = vmatpush1.xpose.msra.mxu0 0.0
        %7920 = vmatprep.subr.mxu0 0.0
        %7921 = vmatpush1.xpose.msra.mxu0 0.0
        %7922 = vmatprep.subr.mxu0 0.0
        %7923 = vmatpush1.xpose.msra.mxu0 0.0
        %7924 = vmatprep.mubr.f32.mxu0 %v1611
        %7925 = vmatmul.mubr.f32.gmra.mrb[0].mxu0 %v1603
        %v7926 = vpop.f32.mrb[0].mxu0
        %v7927 = vadd.f32 %v7857, %v7926
        %v7928 = vpop.f32.mrb[0].mxu0
        %7929 = vdwg.mxu0
        %7930 = vmatprep.subr.mxu0 %v503
        %7931 = vmatpush1.xpose.msra.mxu0 %v502
        %7932 = vmatprep.subr.mxu0 %v759
        %7933 = vmatpush1.xpose.msra.mxu0 %v758
        %7934 = vmatprep.subr.mxu0 0.0
        %7935 = vmatpush1.xpose.msra.mxu0 0.0
        %7936 = vmatprep.subr.mxu0 0.0
        %7937 = vmatpush1.xpose.msra.mxu0 0.0
        %7938 = vmatprep.subr.mxu0 0.0
        %7939 = vmatpush1.xpose.msra.mxu0 0.0
        %7940 = vmatprep.subr.mxu0 0.0
        %7941 = vmatpush1.xpose.msra.mxu0 0.0
        %7942 = vmatprep.subr.mxu0 0.0
        %7943 = vmatpush1.xpose.msra.mxu0 0.0
        %7944 = vmatprep.subr.mxu0 0.0
        %7945 = vmatpush1.xpose.msra.mxu0 0.0
        %7946 = vmatprep.subr.mxu0 0.0
        %7947 = vmatpush1.xpose.msra.mxu0 0.0
        %7948 = vmatprep.subr.mxu0 0.0
        %7949 = vmatpush1.xpose.msra.mxu0 0.0
        %7950 = vmatprep.subr.mxu0 0.0
        %7951 = vmatpush1.xpose.msra.mxu0 0.0
        %7952 = vmatprep.subr.mxu0 0.0
        %7953 = vmatpush1.xpose.msra.mxu0 0.0
        %7954 = vmatprep.subr.mxu0 0.0
        %7955 = vmatpush1.xpose.msra.mxu0 0.0
        %7956 = vmatprep.subr.mxu0 0.0
        %7957 = vmatpush1.xpose.msra.mxu0 0.0
        %7958 = vmatprep.subr.mxu0 0.0
        %7959 = vmatpush1.xpose.msra.mxu0 0.0
        %7960 = vmatprep.subr.mxu0 0.0
        %7961 = vmatpush1.xpose.msra.mxu0 0.0
        %7962 = vmatprep.subr.mxu0 0.0
        %7963 = vmatpush1.xpose.msra.mxu0 0.0
        %7964 = vmatprep.subr.mxu0 0.0
        %7965 = vmatpush1.xpose.msra.mxu0 0.0
        %7966 = vmatprep.subr.mxu0 0.0
        %7967 = vmatpush1.xpose.msra.mxu0 0.0
        %7968 = vmatprep.subr.mxu0 0.0
        %7969 = vmatpush1.xpose.msra.mxu0 0.0
        %7970 = vmatprep.subr.mxu0 0.0
        %7971 = vmatpush1.xpose.msra.mxu0 0.0
        %7972 = vmatprep.subr.mxu0 0.0
        %7973 = vmatpush1.xpose.msra.mxu0 0.0
        %7974 = vmatprep.subr.mxu0 0.0
        %7975 = vmatpush1.xpose.msra.mxu0 0.0
        %7976 = vmatprep.subr.mxu0 0.0
        %7977 = vmatpush1.xpose.msra.mxu0 0.0
        %7978 = vmatprep.subr.mxu0 0.0
        %7979 = vmatpush1.xpose.msra.mxu0 0.0
        %7980 = vmatprep.subr.mxu0 0.0
        %7981 = vmatpush1.xpose.msra.mxu0 0.0
        %7982 = vmatprep.subr.mxu0 0.0
        %7983 = vmatpush1.xpose.msra.mxu0 0.0
        %7984 = vmatprep.subr.mxu0 0.0
        %7985 = vmatpush1.xpose.msra.mxu0 0.0
        %7986 = vmatprep.subr.mxu0 0.0
        %7987 = vmatpush1.xpose.msra.mxu0 0.0
        %7988 = vmatprep.subr.mxu0 0.0
        %7989 = vmatpush1.xpose.msra.mxu0 0.0
        %7990 = vmatprep.subr.mxu0 0.0
        %7991 = vmatpush1.xpose.msra.mxu0 0.0
        %7992 = vmatprep.subr.mxu0 0.0
        %7993 = vmatpush1.xpose.msra.mxu0 0.0
        %7994 = vmatprep.mubr.f32.mxu0 %v1612
        %7995 = vmatmul.mubr.f32.gmra.mrb[0].mxu0 %v1610
        %v7996 = vpop.f32.mrb[0].mxu0
        %v7997 = vadd.f32 %v7927, %v7996
        %v7998 = vpop.f32.mrb[0].mxu0
        %7999 = vdwg.mxu0
        %8000 = vmatprep.subr.mxu0 %v505
        %8001 = vmatpush1.xpose.msra.mxu0 %v504
        %8002 = vmatprep.subr.mxu0 %v761
        %8003 = vmatpush1.xpose.msra.mxu0 %v760
        %8004 = vmatprep.subr.mxu0 0.0
        %8005 = vmatpush1.xpose.msra.mxu0 0.0
        %8006 = vmatprep.subr.mxu0 0.0
        %8007 = vmatpush1.xpose.msra.mxu0 0.0
        %8008 = vmatprep.subr.mxu0 0.0
        %8009 = vmatpush1.xpose.msra.mxu0 0.0
        %8010 = vmatprep.subr.mxu0 0.0
        %8011 = vmatpush1.xpose.msra.mxu0 0.0
        %8012 = vmatprep.subr.mxu0 0.0
        %8013 = vmatpush1.xpose.msra.mxu0 0.0
        %8014 = vmatprep.subr.mxu0 0.0
        %8015 = vmatpush1.xpose.msra.mxu0 0.0
        %8016 = vmatprep.subr.mxu0 0.0
        %8017 = vmatpush1.xpose.msra.mxu0 0.0
        %8018 = vmatprep.subr.mxu0 0.0
        %8019 = vmatpush1.xpose.msra.mxu0 0.0
        %8020 = vmatprep.subr.mxu0 0.0
        %8021 = vmatpush1.xpose.msra.mxu0 0.0
        %8022 = vmatprep.subr.mxu0 0.0
        %8023 = vmatpush1.xpose.msra.mxu0 0.0
        %8024 = vmatprep.subr.mxu0 0.0
        %8025 = vmatpush1.xpose.msra.mxu0 0.0
        %8026 = vmatprep.subr.mxu0 0.0
        %8027 = vmatpush1.xpose.msra.mxu0 0.0
        %8028 = vmatprep.subr.mxu0 0.0
        %8029 = vmatpush1.xpose.msra.mxu0 0.0
        %8030 = vmatprep.subr.mxu0 0.0
        %8031 = vmatpush1.xpose.msra.mxu0 0.0
        %8032 = vmatprep.subr.mxu0 0.0
        %8033 = vmatpush1.xpose.msra.mxu0 0.0
        %8034 = vmatprep.subr.mxu0 0.0
        %8035 = vmatpush1.xpose.msra.mxu0 0.0
        %8036 = vmatprep.subr.mxu0 0.0
        %8037 = vmatpush1.xpose.msra.mxu0 0.0
        %8038 = vmatprep.subr.mxu0 0.0
        %8039 = vmatpush1.xpose.msra.mxu0 0.0
        %8040 = vmatprep.subr.mxu0 0.0
        %8041 = vmatpush1.xpose.msra.mxu0 0.0
        %8042 = vmatprep.subr.mxu0 0.0
        %8043 = vmatpush1.xpose.msra.mxu0 0.0
        %8044 = vmatprep.subr.mxu0 0.0
        %8045 = vmatpush1.xpose.msra.mxu0 0.0
        %8046 = vmatprep.subr.mxu0 0.0
        %8047 = vmatpush1.xpose.msra.mxu0 0.0
        %8048 = vmatprep.subr.mxu0 0.0
        %8049 = vmatpush1.xpose.msra.mxu0 0.0
        %8050 = vmatprep.subr.mxu0 0.0
        %8051 = vmatpush1.xpose.msra.mxu0 0.0
        %8052 = vmatprep.subr.mxu0 0.0
        %8053 = vmatpush1.xpose.msra.mxu0 0.0
        %8054 = vmatprep.subr.mxu0 0.0
        %8055 = vmatpush1.xpose.msra.mxu0 0.0
        %8056 = vmatprep.subr.mxu0 0.0
        %8057 = vmatpush1.xpose.msra.mxu0 0.0
        %8058 = vmatprep.subr.mxu0 0.0
        %8059 = vmatpush1.xpose.msra.mxu0 0.0
        %8060 = vmatprep.subr.mxu0 0.0
        %8061 = vmatpush1.xpose.msra.mxu0 0.0
        %8062 = vmatprep.subr.mxu0 0.0
        %8063 = vmatpush1.xpose.msra.mxu0 0.0
        %8064 = vmatprep.mubr.f32.mxu0 %v1628
        %8065 = vmatmul.mubr.f32.gmra.mrb[0].mxu0 %v1620
        %v8066 = vpop.f32.mrb[0].mxu0
        %v8067 = vadd.f32 %v7997, %v8066
        %v8068 = vpop.f32.mrb[0].mxu0
        %8069 = vdwg.mxu0
        %8070 = vmatprep.subr.mxu0 %v507
        %8071 = vmatpush1.xpose.msra.mxu0 %v506
        %8072 = vmatprep.subr.mxu0 %v763
        %8073 = vmatpush1.xpose.msra.mxu0 %v762
        %8074 = vmatprep.subr.mxu0 0.0
        %8075 = vmatpush1.xpose.msra.mxu0 0.0
        %8076 = vmatprep.subr.mxu0 0.0
        %8077 = vmatpush1.xpose.msra.mxu0 0.0
        %8078 = vmatprep.subr.mxu0 0.0
        %8079 = vmatpush1.xpose.msra.mxu0 0.0
        %8080 = vmatprep.subr.mxu0 0.0
        %8081 = vmatpush1.xpose.msra.mxu0 0.0
        %8082 = vmatprep.subr.mxu0 0.0
        %8083 = vmatpush1.xpose.msra.mxu0 0.0
        %8084 = vmatprep.subr.mxu0 0.0
        %8085 = vmatpush1.xpose.msra.mxu0 0.0
        %8086 = vmatprep.subr.mxu0 0.0
        %8087 = vmatpush1.xpose.msra.mxu0 0.0
        %8088 = vmatprep.subr.mxu0 0.0
        %8089 = vmatpush1.xpose.msra.mxu0 0.0
        %8090 = vmatprep.subr.mxu0 0.0
        %8091 = vmatpush1.xpose.msra.mxu0 0.0
        %8092 = vmatprep.subr.mxu0 0.0
        %8093 = vmatpush1.xpose.msra.mxu0 0.0
        %8094 = vmatprep.subr.mxu0 0.0
        %8095 = vmatpush1.xpose.msra.mxu0 0.0
        %8096 = vmatprep.subr.mxu0 0.0
        %8097 = vmatpush1.xpose.msra.mxu0 0.0
        %8098 = vmatprep.subr.mxu0 0.0
        %8099 = vmatpush1.xpose.msra.mxu0 0.0
        %8100 = vmatprep.subr.mxu0 0.0
        %8101 = vmatpush1.xpose.msra.mxu0 0.0
        %8102 = vmatprep.subr.mxu0 0.0
        %8103 = vmatpush1.xpose.msra.mxu0 0.0
        %8104 = vmatprep.subr.mxu0 0.0
        %8105 = vmatpush1.xpose.msra.mxu0 0.0
        %8106 = vmatprep.subr.mxu0 0.0
        %8107 = vmatpush1.xpose.msra.mxu0 0.0
        %8108 = vmatprep.subr.mxu0 0.0
        %8109 = vmatpush1.xpose.msra.mxu0 0.0
        %8110 = vmatprep.subr.mxu0 0.0
        %8111 = vmatpush1.xpose.msra.mxu0 0.0
        %8112 = vmatprep.subr.mxu0 0.0
        %8113 = vmatpush1.xpose.msra.mxu0 0.0
        %8114 = vmatprep.subr.mxu0 0.0
        %8115 = vmatpush1.xpose.msra.mxu0 0.0
        %8116 = vmatprep.subr.mxu0 0.0
        %8117 = vmatpush1.xpose.msra.mxu0 0.0
        %8118 = vmatprep.subr.mxu0 0.0
        %8119 = vmatpush1.xpose.msra.mxu0 0.0
        %8120 = vmatprep.subr.mxu0 0.0
        %8121 = vmatpush1.xpose.msra.mxu0 0.0
        %8122 = vmatprep.subr.mxu0 0.0
        %8123 = vmatpush1.xpose.msra.mxu0 0.0
        %8124 = vmatprep.subr.mxu0 0.0
        %8125 = vmatpush1.xpose.msra.mxu0 0.0
        %8126 = vmatprep.subr.mxu0 0.0
        %8127 = vmatpush1.xpose.msra.mxu0 0.0
        %8128 = vmatprep.subr.mxu0 0.0
        %8129 = vmatpush1.xpose.msra.mxu0 0.0
        %8130 = vmatprep.subr.mxu0 0.0
        %8131 = vmatpush1.xpose.msra.mxu0 0.0
        %8132 = vmatprep.subr.mxu0 0.0
        %8133 = vmatpush1.xpose.msra.mxu0 0.0
        %8134 = vmatprep.mubr.f32.mxu0 %v1629
        %8135 = vmatmul.mubr.f32.gmra.mrb[0].mxu0 %v1627
        %v8136 = vpop.f32.mrb[0].mxu0
        %v8137 = vadd.f32 %v8067, %v8136
        %v8138 = vpop.f32.mrb[0].mxu0
        %8139 = vdwg.mxu0
        %8140 = vmatprep.subr.mxu0 %v509
        %8141 = vmatpush1.xpose.msra.mxu0 %v508
        %8142 = vmatprep.subr.mxu0 %v765
        %8143 = vmatpush1.xpose.msra.mxu0 %v764
        %8144 = vmatprep.subr.mxu0 0.0
        %8145 = vmatpush1.xpose.msra.mxu0 0.0
        %8146 = vmatprep.subr.mxu0 0.0
        %8147 = vmatpush1.xpose.msra.mxu0 0.0
        %8148 = vmatprep.subr.mxu0 0.0
        %8149 = vmatpush1.xpose.msra.mxu0 0.0
        %8150 = vmatprep.subr.mxu0 0.0
        %8151 = vmatpush1.xpose.msra.mxu0 0.0
        %8152 = vmatprep.subr.mxu0 0.0
        %8153 = vmatpush1.xpose.msra.mxu0 0.0
        %8154 = vmatprep.subr.mxu0 0.0
        %8155 = vmatpush1.xpose.msra.mxu0 0.0
        %8156 = vmatprep.subr.mxu0 0.0
        %8157 = vmatpush1.xpose.msra.mxu0 0.0
        %8158 = vmatprep.subr.mxu0 0.0
        %8159 = vmatpush1.xpose.msra.mxu0 0.0
        %8160 = vmatprep.subr.mxu0 0.0
        %8161 = vmatpush1.xpose.msra.mxu0 0.0
        %8162 = vmatprep.subr.mxu0 0.0
        %8163 = vmatpush1.xpose.msra.mxu0 0.0
        %8164 = vmatprep.subr.mxu0 0.0
        %8165 = vmatpush1.xpose.msra.mxu0 0.0
        %8166 = vmatprep.subr.mxu0 0.0
        %8167 = vmatpush1.xpose.msra.mxu0 0.0
        %8168 = vmatprep.subr.mxu0 0.0
        %8169 = vmatpush1.xpose.msra.mxu0 0.0
        %8170 = vmatprep.subr.mxu0 0.0
        %8171 = vmatpush1.xpose.msra.mxu0 0.0
        %8172 = vmatprep.subr.mxu0 0.0
        %8173 = vmatpush1.xpose.msra.mxu0 0.0
        %8174 = vmatprep.subr.mxu0 0.0
        %8175 = vmatpush1.xpose.msra.mxu0 0.0
        %8176 = vmatprep.subr.mxu0 0.0
        %8177 = vmatpush1.xpose.msra.mxu0 0.0
        %8178 = vmatprep.subr.mxu0 0.0
        %8179 = vmatpush1.xpose.msra.mxu0 0.0
        %8180 = vmatprep.subr.mxu0 0.0
        %8181 = vmatpush1.xpose.msra.mxu0 0.0
        %8182 = vmatprep.subr.mxu0 0.0
        %8183 = vmatpush1.xpose.msra.mxu0 0.0
        %8184 = vmatprep.subr.mxu0 0.0
        %8185 = vmatpush1.xpose.msra.mxu0 0.0
        %8186 = vmatprep.subr.mxu0 0.0
        %8187 = vmatpush1.xpose.msra.mxu0 0.0
        %8188 = vmatprep.subr.mxu0 0.0
        %8189 = vmatpush1.xpose.msra.mxu0 0.0
        %8190 = vmatprep.subr.mxu0 0.0
        %8191 = vmatpush1.xpose.msra.mxu0 0.0
        %8192 = vmatprep.subr.mxu0 0.0
        %8193 = vmatpush1.xpose.msra.mxu0 0.0
        %8194 = vmatprep.subr.mxu0 0.0
        %8195 = vmatpush1.xpose.msra.mxu0 0.0
        %8196 = vmatprep.subr.mxu0 0.0
        %8197 = vmatpush1.xpose.msra.mxu0 0.0
        %8198 = vmatprep.subr.mxu0 0.0
        %8199 = vmatpush1.xpose.msra.mxu0 0.0
        %8200 = vmatprep.subr.mxu0 0.0
        %8201 = vmatpush1.xpose.msra.mxu0 0.0
        %8202 = vmatprep.subr.mxu0 0.0
        %8203 = vmatpush1.xpose.msra.mxu0 0.0
        %8204 = vmatprep.mubr.f32.mxu0 %v1645
        %8205 = vmatmul.mubr.f32.gmra.mrb[0].mxu0 %v1637
        %v8206 = vpop.f32.mrb[0].mxu0
        %v8207 = vadd.f32 %v8137, %v8206
        %v8208 = vpop.f32.mrb[0].mxu0
        %8209 = vdwg.mxu0
        %8210 = vmatprep.subr.mxu0 %v511
        %8211 = vmatpush1.xpose.msra.mxu0 %v510
        %8212 = vmatprep.subr.mxu0 %v767
        %8213 = vmatpush1.xpose.msra.mxu0 %v766
        %8214 = vmatprep.subr.mxu0 0.0
        %8215 = vmatpush1.xpose.msra.mxu0 0.0
        %8216 = vmatprep.subr.mxu0 0.0
        %8217 = vmatpush1.xpose.msra.mxu0 0.0
        %8218 = vmatprep.subr.mxu0 0.0
        %8219 = vmatpush1.xpose.msra.mxu0 0.0
        %8220 = vmatprep.subr.mxu0 0.0
        %8221 = vmatpush1.xpose.msra.mxu0 0.0
        %8222 = vmatprep.subr.mxu0 0.0
        %8223 = vmatpush1.xpose.msra.mxu0 0.0
        %8224 = vmatprep.subr.mxu0 0.0
        %8225 = vmatpush1.xpose.msra.mxu0 0.0
        %8226 = vmatprep.subr.mxu0 0.0
        %8227 = vmatpush1.xpose.msra.mxu0 0.0
        %8228 = vmatprep.subr.mxu0 0.0
        %8229 = vmatpush1.xpose.msra.mxu0 0.0
        %8230 = vmatprep.subr.mxu0 0.0
        %8231 = vmatpush1.xpose.msra.mxu0 0.0
        %8232 = vmatprep.subr.mxu0 0.0
        %8233 = vmatpush1.xpose.msra.mxu0 0.0
        %8234 = vmatprep.subr.mxu0 0.0
        %8235 = vmatpush1.xpose.msra.mxu0 0.0
        %8236 = vmatprep.subr.mxu0 0.0
        %8237 = vmatpush1.xpose.msra.mxu0 0.0
        %8238 = vmatprep.subr.mxu0 0.0
        %8239 = vmatpush1.xpose.msra.mxu0 0.0
        %8240 = vmatprep.subr.mxu0 0.0
        %8241 = vmatpush1.xpose.msra.mxu0 0.0
        %8242 = vmatprep.subr.mxu0 0.0
        %8243 = vmatpush1.xpose.msra.mxu0 0.0
        %8244 = vmatprep.subr.mxu0 0.0
        %8245 = vmatpush1.xpose.msra.mxu0 0.0
        %8246 = vmatprep.subr.mxu0 0.0
        %8247 = vmatpush1.xpose.msra.mxu0 0.0
        %8248 = vmatprep.subr.mxu0 0.0
        %8249 = vmatpush1.xpose.msra.mxu0 0.0
        %8250 = vmatprep.subr.mxu0 0.0
        %8251 = vmatpush1.xpose.msra.mxu0 0.0
        %8252 = vmatprep.subr.mxu0 0.0
        %8253 = vmatpush1.xpose.msra.mxu0 0.0
        %8254 = vmatprep.subr.mxu0 0.0
        %8255 = vmatpush1.xpose.msra.mxu0 0.0
        %8256 = vmatprep.subr.mxu0 0.0
        %8257 = vmatpush1.xpose.msra.mxu0 0.0
        %8258 = vmatprep.subr.mxu0 0.0
        %8259 = vmatpush1.xpose.msra.mxu0 0.0
        %8260 = vmatprep.subr.mxu0 0.0
        %8261 = vmatpush1.xpose.msra.mxu0 0.0
        %8262 = vmatprep.subr.mxu0 0.0
        %8263 = vmatpush1.xpose.msra.mxu0 0.0
        %8264 = vmatprep.subr.mxu0 0.0
        %8265 = vmatpush1.xpose.msra.mxu0 0.0
        %8266 = vmatprep.subr.mxu0 0.0
        %8267 = vmatpush1.xpose.msra.mxu0 0.0
        %8268 = vmatprep.subr.mxu0 0.0
        %8269 = vmatpush1.xpose.msra.mxu0 0.0
        %8270 = vmatprep.subr.mxu0 0.0
        %8271 = vmatpush1.xpose.msra.mxu0 0.0
        %8272 = vmatprep.subr.mxu0 0.0
        %8273 = vmatpush1.xpose.msra.mxu0 0.0
        %8274 = vmatprep.mubr.f32.mxu0 %v1646
        %8275 = vmatmul.mubr.f32.gmra.mrb[0].mxu0 %v1644
        %v8276 = vpop.f32.mrb[0].mxu0
        %v8277 = vadd.f32 %v8207, %v8276
        %v8278 = vpop.f32.mrb[0].mxu0
        %8279 = vdwg.mxu0
        %8280 = vmatprep.subr.mxu0 %v513
        %8281 = vmatpush1.xpose.msra.mxu0 %v512
        %8282 = vmatprep.subr.mxu0 %v769
        %8283 = vmatpush1.xpose.msra.mxu0 %v768
        %8284 = vmatprep.subr.mxu0 0.0
        %8285 = vmatpush1.xpose.msra.mxu0 0.0
        %8286 = vmatprep.subr.mxu0 0.0
        %8287 = vmatpush1.xpose.msra.mxu0 0.0
        %8288 = vmatprep.subr.mxu0 0.0
        %8289 = vmatpush1.xpose.msra.mxu0 0.0
        %8290 = vmatprep.subr.mxu0 0.0
        %8291 = vmatpush1.xpose.msra.mxu0 0.0
        %8292 = vmatprep.subr.mxu0 0.0
        %8293 = vmatpush1.xpose.msra.mxu0 0.0
        %8294 = vmatprep.subr.mxu0 0.0
        %8295 = vmatpush1.xpose.msra.mxu0 0.0
        %8296 = vmatprep.subr.mxu0 0.0
        %8297 = vmatpush1.xpose.msra.mxu0 0.0
        %8298 = vmatprep.subr.mxu0 0.0
        %8299 = vmatpush1.xpose.msra.mxu0 0.0
        %8300 = vmatprep.subr.mxu0 0.0
        %8301 = vmatpush1.xpose.msra.mxu0 0.0
        %8302 = vmatprep.subr.mxu0 0.0
        %8303 = vmatpush1.xpose.msra.mxu0 0.0
        %8304 = vmatprep.subr.mxu0 0.0
        %8305 = vmatpush1.xpose.msra.mxu0 0.0
        %8306 = vmatprep.subr.mxu0 0.0
        %8307 = vmatpush1.xpose.msra.mxu0 0.0
        %8308 = vmatprep.subr.mxu0 0.0
        %8309 = vmatpush1.xpose.msra.mxu0 0.0
        %8310 = vmatprep.subr.mxu0 0.0
        %8311 = vmatpush1.xpose.msra.mxu0 0.0
        %8312 = vmatprep.subr.mxu0 0.0
        %8313 = vmatpush1.xpose.msra.mxu0 0.0
        %8314 = vmatprep.subr.mxu0 0.0
        %8315 = vmatpush1.xpose.msra.mxu0 0.0
        %8316 = vmatprep.subr.mxu0 0.0
        %8317 = vmatpush1.xpose.msra.mxu0 0.0
        %8318 = vmatprep.subr.mxu0 0.0
        %8319 = vmatpush1.xpose.msra.mxu0 0.0
        %8320 = vmatprep.subr.mxu0 0.0
        %8321 = vmatpush1.xpose.msra.mxu0 0.0
        %8322 = vmatprep.subr.mxu0 0.0
        %8323 = vmatpush1.xpose.msra.mxu0 0.0
        %8324 = vmatprep.subr.mxu0 0.0
        %8325 = vmatpush1.xpose.msra.mxu0 0.0
        %8326 = vmatprep.subr.mxu0 0.0
        %8327 = vmatpush1.xpose.msra.mxu0 0.0
        %8328 = vmatprep.subr.mxu0 0.0
        %8329 = vmatpush1.xpose.msra.mxu0 0.0
        %8330 = vmatprep.subr.mxu0 0.0
        %8331 = vmatpush1.xpose.msra.mxu0 0.0
        %8332 = vmatprep.subr.mxu0 0.0
        %8333 = vmatpush1.xpose.msra.mxu0 0.0
        %8334 = vmatprep.subr.mxu0 0.0
        %8335 = vmatpush1.xpose.msra.mxu0 0.0
        %8336 = vmatprep.subr.mxu0 0.0
        %8337 = vmatpush1.xpose.msra.mxu0 0.0
        %8338 = vmatprep.subr.mxu0 0.0
        %8339 = vmatpush1.xpose.msra.mxu0 0.0
        %8340 = vmatprep.subr.mxu0 0.0
        %8341 = vmatpush1.xpose.msra.mxu0 0.0
        %8342 = vmatprep.subr.mxu0 0.0
        %8343 = vmatpush1.xpose.msra.mxu0 0.0
        %8344 = vmatprep.mubr.f32.mxu0 %v1662
        %8345 = vmatmul.mubr.f32.gmra.mrb[0].mxu0 %v1654
        %v8346 = vpop.f32.mrb[0].mxu0
        %v8347 = vadd.f32 %v8277, %v8346
        %v8348 = vpop.f32.mrb[0].mxu0
        %8349 = vdwg.mxu0
        %8350 = vmatprep.subr.mxu0 %v515
        %8351 = vmatpush1.xpose.msra.mxu0 %v514
        %8352 = vmatprep.subr.mxu0 %v771
        %8353 = vmatpush1.xpose.msra.mxu0 %v770
        %8354 = vmatprep.subr.mxu0 0.0
        %8355 = vmatpush1.xpose.msra.mxu0 0.0
        %8356 = vmatprep.subr.mxu0 0.0
        %8357 = vmatpush1.xpose.msra.mxu0 0.0
        %8358 = vmatprep.subr.mxu0 0.0
        %8359 = vmatpush1.xpose.msra.mxu0 0.0
        %8360 = vmatprep.subr.mxu0 0.0
        %8361 = vmatpush1.xpose.msra.mxu0 0.0
        %8362 = vmatprep.subr.mxu0 0.0
        %8363 = vmatpush1.xpose.msra.mxu0 0.0
        %8364 = vmatprep.subr.mxu0 0.0
        %8365 = vmatpush1.xpose.msra.mxu0 0.0
        %8366 = vmatprep.subr.mxu0 0.0
        %8367 = vmatpush1.xpose.msra.mxu0 0.0
        %8368 = vmatprep.subr.mxu0 0.0
        %8369 = vmatpush1.xpose.msra.mxu0 0.0
        %8370 = vmatprep.subr.mxu0 0.0
        %8371 = vmatpush1.xpose.msra.mxu0 0.0
        %8372 = vmatprep.subr.mxu0 0.0
        %8373 = vmatpush1.xpose.msra.mxu0 0.0
        %8374 = vmatprep.subr.mxu0 0.0
        %8375 = vmatpush1.xpose.msra.mxu0 0.0
        %8376 = vmatprep.subr.mxu0 0.0
        %8377 = vmatpush1.xpose.msra.mxu0 0.0
        %8378 = vmatprep.subr.mxu0 0.0
        %8379 = vmatpush1.xpose.msra.mxu0 0.0
        %8380 = vmatprep.subr.mxu0 0.0
        %8381 = vmatpush1.xpose.msra.mxu0 0.0
        %8382 = vmatprep.subr.mxu0 0.0
        %8383 = vmatpush1.xpose.msra.mxu0 0.0
        %8384 = vmatprep.subr.mxu0 0.0
        %8385 = vmatpush1.xpose.msra.mxu0 0.0
        %8386 = vmatprep.subr.mxu0 0.0
        %8387 = vmatpush1.xpose.msra.mxu0 0.0
        %8388 = vmatprep.subr.mxu0 0.0
        %8389 = vmatpush1.xpose.msra.mxu0 0.0
        %8390 = vmatprep.subr.mxu0 0.0
        %8391 = vmatpush1.xpose.msra.mxu0 0.0
        %8392 = vmatprep.subr.mxu0 0.0
        %8393 = vmatpush1.xpose.msra.mxu0 0.0
        %8394 = vmatprep.subr.mxu0 0.0
        %8395 = vmatpush1.xpose.msra.mxu0 0.0
        %8396 = vmatprep.subr.mxu0 0.0
        %8397 = vmatpush1.xpose.msra.mxu0 0.0
        %8398 = vmatprep.subr.mxu0 0.0
        %8399 = vmatpush1.xpose.msra.mxu0 0.0
        %8400 = vmatprep.subr.mxu0 0.0
        %8401 = vmatpush1.xpose.msra.mxu0 0.0
        %8402 = vmatprep.subr.mxu0 0.0
        %8403 = vmatpush1.xpose.msra.mxu0 0.0
        %8404 = vmatprep.subr.mxu0 0.0
        %8405 = vmatpush1.xpose.msra.mxu0 0.0
        %8406 = vmatprep.subr.mxu0 0.0
        %8407 = vmatpush1.xpose.msra.mxu0 0.0
        %8408 = vmatprep.subr.mxu0 0.0
        %8409 = vmatpush1.xpose.msra.mxu0 0.0
        %8410 = vmatprep.subr.mxu0 0.0
        %8411 = vmatpush1.xpose.msra.mxu0 0.0
        %8412 = vmatprep.subr.mxu0 0.0
        %8413 = vmatpush1.xpose.msra.mxu0 0.0
        %8414 = vmatprep.mubr.f32.mxu0 %v1663
        %8415 = vmatmul.mubr.f32.gmra.mrb[0].mxu0 %v1661
        %v8416 = vpop.f32.mrb[0].mxu0
        %v8417 = vadd.f32 %v8347, %v8416
        %v8418 = vpop.f32.mrb[0].mxu0
        %8419 = vdwg.mxu0
        %8420 = vmatprep.subr.mxu0 %v517
        %8421 = vmatpush1.xpose.msra.mxu0 %v516
        %8422 = vmatprep.subr.mxu0 %v773
        %8423 = vmatpush1.xpose.msra.mxu0 %v772
        %8424 = vmatprep.subr.mxu0 0.0
        %8425 = vmatpush1.xpose.msra.mxu0 0.0
        %8426 = vmatprep.subr.mxu0 0.0
        %8427 = vmatpush1.xpose.msra.mxu0 0.0
        %8428 = vmatprep.subr.mxu0 0.0
        %8429 = vmatpush1.xpose.msra.mxu0 0.0
        %8430 = vmatprep.subr.mxu0 0.0
        %8431 = vmatpush1.xpose.msra.mxu0 0.0
        %8432 = vmatprep.subr.mxu0 0.0
        %8433 = vmatpush1.xpose.msra.mxu0 0.0
        %8434 = vmatprep.subr.mxu0 0.0
        %8435 = vmatpush1.xpose.msra.mxu0 0.0
        %8436 = vmatprep.subr.mxu0 0.0
        %8437 = vmatpush1.xpose.msra.mxu0 0.0
        %8438 = vmatprep.subr.mxu0 0.0
        %8439 = vmatpush1.xpose.msra.mxu0 0.0
        %8440 = vmatprep.subr.mxu0 0.0
        %8441 = vmatpush1.xpose.msra.mxu0 0.0
        %8442 = vmatprep.subr.mxu0 0.0
        %8443 = vmatpush1.xpose.msra.mxu0 0.0
        %8444 = vmatprep.subr.mxu0 0.0
        %8445 = vmatpush1.xpose.msra.mxu0 0.0
        %8446 = vmatprep.subr.mxu0 0.0
        %8447 = vmatpush1.xpose.msra.mxu0 0.0
        %8448 = vmatprep.subr.mxu0 0.0
        %8449 = vmatpush1.xpose.msra.mxu0 0.0
        %8450 = vmatprep.subr.mxu0 0.0
        %8451 = vmatpush1.xpose.msra.mxu0 0.0
        %8452 = vmatprep.subr.mxu0 0.0
        %8453 = vmatpush1.xpose.msra.mxu0 0.0
        %8454 = vmatprep.subr.mxu0 0.0
        %8455 = vmatpush1.xpose.msra.mxu0 0.0
        %8456 = vmatprep.subr.mxu0 0.0
        %8457 = vmatpush1.xpose.msra.mxu0 0.0
        %8458 = vmatprep.subr.mxu0 0.0
        %8459 = vmatpush1.xpose.msra.mxu0 0.0
        %8460 = vmatprep.subr.mxu0 0.0
        %8461 = vmatpush1.xpose.msra.mxu0 0.0
        %8462 = vmatprep.subr.mxu0 0.0
        %8463 = vmatpush1.xpose.msra.mxu0 0.0
        %8464 = vmatprep.subr.mxu0 0.0
        %8465 = vmatpush1.xpose.msra.mxu0 0.0
        %8466 = vmatprep.subr.mxu0 0.0
        %8467 = vmatpush1.xpose.msra.mxu0 0.0
        %8468 = vmatprep.subr.mxu0 0.0
        %8469 = vmatpush1.xpose.msra.mxu0 0.0
        %8470 = vmatprep.subr.mxu0 0.0
        %8471 = vmatpush1.xpose.msra.mxu0 0.0
        %8472 = vmatprep.subr.mxu0 0.0
        %8473 = vmatpush1.xpose.msra.mxu0 0.0
        %8474 = vmatprep.subr.mxu0 0.0
        %8475 = vmatpush1.xpose.msra.mxu0 0.0
        %8476 = vmatprep.subr.mxu0 0.0
        %8477 = vmatpush1.xpose.msra.mxu0 0.0
        %8478 = vmatprep.subr.mxu0 0.0
        %8479 = vmatpush1.xpose.msra.mxu0 0.0
        %8480 = vmatprep.subr.mxu0 0.0
        %8481 = vmatpush1.xpose.msra.mxu0 0.0
        %8482 = vmatprep.subr.mxu0 0.0
        %8483 = vmatpush1.xpose.msra.mxu0 0.0
        %8484 = vmatprep.mubr.f32.mxu0 %v1679
        %8485 = vmatmul.mubr.f32.gmra.mrb[0].mxu0 %v1671
        %v8486 = vpop.f32.mrb[0].mxu0
        %v8487 = vadd.f32 %v8417, %v8486
        %v8488 = vpop.f32.mrb[0].mxu0
        %8489 = vdwg.mxu0
        %8490 = vmatprep.subr.mxu0 %v519
        %8491 = vmatpush1.xpose.msra.mxu0 %v518
        %8492 = vmatprep.subr.mxu0 %v775
        %8493 = vmatpush1.xpose.msra.mxu0 %v774
        %8494 = vmatprep.subr.mxu0 0.0
        %8495 = vmatpush1.xpose.msra.mxu0 0.0
        %8496 = vmatprep.subr.mxu0 0.0
        %8497 = vmatpush1.xpose.msra.mxu0 0.0
        %8498 = vmatprep.subr.mxu0 0.0
        %8499 = vmatpush1.xpose.msra.mxu0 0.0
        %8500 = vmatprep.subr.mxu0 0.0
        %8501 = vmatpush1.xpose.msra.mxu0 0.0
        %8502 = vmatprep.subr.mxu0 0.0
        %8503 = vmatpush1.xpose.msra.mxu0 0.0
        %8504 = vmatprep.subr.mxu0 0.0
        %8505 = vmatpush1.xpose.msra.mxu0 0.0
        %8506 = vmatprep.subr.mxu0 0.0
        %8507 = vmatpush1.xpose.msra.mxu0 0.0
        %8508 = vmatprep.subr.mxu0 0.0
        %8509 = vmatpush1.xpose.msra.mxu0 0.0
        %8510 = vmatprep.subr.mxu0 0.0
        %8511 = vmatpush1.xpose.msra.mxu0 0.0
        %8512 = vmatprep.subr.mxu0 0.0
        %8513 = vmatpush1.xpose.msra.mxu0 0.0
        %8514 = vmatprep.subr.mxu0 0.0
        %8515 = vmatpush1.xpose.msra.mxu0 0.0
        %8516 = vmatprep.subr.mxu0 0.0
        %8517 = vmatpush1.xpose.msra.mxu0 0.0
        %8518 = vmatprep.subr.mxu0 0.0
        %8519 = vmatpush1.xpose.msra.mxu0 0.0
        %8520 = vmatprep.subr.mxu0 0.0
        %8521 = vmatpush1.xpose.msra.mxu0 0.0
        %8522 = vmatprep.subr.mxu0 0.0
        %8523 = vmatpush1.xpose.msra.mxu0 0.0
        %8524 = vmatprep.subr.mxu0 0.0
        %8525 = vmatpush1.xpose.msra.mxu0 0.0
        %8526 = vmatprep.subr.mxu0 0.0
        %8527 = vmatpush1.xpose.msra.mxu0 0.0
        %8528 = vmatprep.subr.mxu0 0.0
        %8529 = vmatpush1.xpose.msra.mxu0 0.0
        %8530 = vmatprep.subr.mxu0 0.0
        %8531 = vmatpush1.xpose.msra.mxu0 0.0
        %8532 = vmatprep.subr.mxu0 0.0
        %8533 = vmatpush1.xpose.msra.mxu0 0.0
        %8534 = vmatprep.subr.mxu0 0.0
        %8535 = vmatpush1.xpose.msra.mxu0 0.0
        %8536 = vmatprep.subr.mxu0 0.0
        %8537 = vmatpush1.xpose.msra.mxu0 0.0
        %8538 = vmatprep.subr.mxu0 0.0
        %8539 = vmatpush1.xpose.msra.mxu0 0.0
        %8540 = vmatprep.subr.mxu0 0.0
        %8541 = vmatpush1.xpose.msra.mxu0 0.0
        %8542 = vmatprep.subr.mxu0 0.0
        %8543 = vmatpush1.xpose.msra.mxu0 0.0
        %8544 = vmatprep.subr.mxu0 0.0
        %8545 = vmatpush1.xpose.msra.mxu0 0.0
        %8546 = vmatprep.subr.mxu0 0.0
        %8547 = vmatpush1.xpose.msra.mxu0 0.0
        %8548 = vmatprep.subr.mxu0 0.0
        %8549 = vmatpush1.xpose.msra.mxu0 0.0
        %8550 = vmatprep.subr.mxu0 0.0
        %8551 = vmatpush1.xpose.msra.mxu0 0.0
        %8552 = vmatprep.subr.mxu0 0.0
        %8553 = vmatpush1.xpose.msra.mxu0 0.0
        %8554 = vmatprep.mubr.f32.mxu0 %v1680
        %8555 = vmatmul.mubr.f32.gmra.mrb[0].mxu0 %v1678
        %v8556 = vpop.f32.mrb[0].mxu0
        %v8557 = vadd.f32 %v8487, %v8556
        %v8558 = vpop.f32.mrb[0].mxu0
        %8559 = vdwg.mxu0
        %8560 = vmatprep.subr.mxu0 %v521
        %8561 = vmatpush1.xpose.msra.mxu0 %v520
        %8562 = vmatprep.subr.mxu0 %v777
        %8563 = vmatpush1.xpose.msra.mxu0 %v776
        %8564 = vmatprep.subr.mxu0 0.0
        %8565 = vmatpush1.xpose.msra.mxu0 0.0
        %8566 = vmatprep.subr.mxu0 0.0
        %8567 = vmatpush1.xpose.msra.mxu0 0.0
        %8568 = vmatprep.subr.mxu0 0.0
        %8569 = vmatpush1.xpose.msra.mxu0 0.0
        %8570 = vmatprep.subr.mxu0 0.0
        %8571 = vmatpush1.xpose.msra.mxu0 0.0
        %8572 = vmatprep.subr.mxu0 0.0
        %8573 = vmatpush1.xpose.msra.mxu0 0.0
        %8574 = vmatprep.subr.mxu0 0.0
        %8575 = vmatpush1.xpose.msra.mxu0 0.0
        %8576 = vmatprep.subr.mxu0 0.0
        %8577 = vmatpush1.xpose.msra.mxu0 0.0
        %8578 = vmatprep.subr.mxu0 0.0
        %8579 = vmatpush1.xpose.msra.mxu0 0.0
        %8580 = vmatprep.subr.mxu0 0.0
        %8581 = vmatpush1.xpose.msra.mxu0 0.0
        %8582 = vmatprep.subr.mxu0 0.0
        %8583 = vmatpush1.xpose.msra.mxu0 0.0
        %8584 = vmatprep.subr.mxu0 0.0
        %8585 = vmatpush1.xpose.msra.mxu0 0.0
        %8586 = vmatprep.subr.mxu0 0.0
        %8587 = vmatpush1.xpose.msra.mxu0 0.0
        %8588 = vmatprep.subr.mxu0 0.0
        %8589 = vmatpush1.xpose.msra.mxu0 0.0
        %8590 = vmatprep.subr.mxu0 0.0
        %8591 = vmatpush1.xpose.msra.mxu0 0.0
        %8592 = vmatprep.subr.mxu0 0.0
        %8593 = vmatpush1.xpose.msra.mxu0 0.0
        %8594 = vmatprep.subr.mxu0 0.0
        %8595 = vmatpush1.xpose.msra.mxu0 0.0
        %8596 = vmatprep.subr.mxu0 0.0
        %8597 = vmatpush1.xpose.msra.mxu0 0.0
        %8598 = vmatprep.subr.mxu0 0.0
        %8599 = vmatpush1.xpose.msra.mxu0 0.0
        %8600 = vmatprep.subr.mxu0 0.0
        %8601 = vmatpush1.xpose.msra.mxu0 0.0
        %8602 = vmatprep.subr.mxu0 0.0
        %8603 = vmatpush1.xpose.msra.mxu0 0.0
        %8604 = vmatprep.subr.mxu0 0.0
        %8605 = vmatpush1.xpose.msra.mxu0 0.0
        %8606 = vmatprep.subr.mxu0 0.0
        %8607 = vmatpush1.xpose.msra.mxu0 0.0
        %8608 = vmatprep.subr.mxu0 0.0
        %8609 = vmatpush1.xpose.msra.mxu0 0.0
        %8610 = vmatprep.subr.mxu0 0.0
        %8611 = vmatpush1.xpose.msra.mxu0 0.0
        %8612 = vmatprep.subr.mxu0 0.0
        %8613 = vmatpush1.xpose.msra.mxu0 0.0
        %8614 = vmatprep.subr.mxu0 0.0
        %8615 = vmatpush1.xpose.msra.mxu0 0.0
        %8616 = vmatprep.subr.mxu0 0.0
        %8617 = vmatpush1.xpose.msra.mxu0 0.0
        %8618 = vmatprep.subr.mxu0 0.0
        %8619 = vmatpush1.xpose.msra.mxu0 0.0
        %8620 = vmatprep.subr.mxu0 0.0
        %8621 = vmatpush1.xpose.msra.mxu0 0.0
        %8622 = vmatprep.subr.mxu0 0.0
        %8623 = vmatpush1.xpose.msra.mxu0 0.0
        %8624 = vmatprep.mubr.f32.mxu0 %v1696
        %8625 = vmatmul.mubr.f32.gmra.mrb[0].mxu0 %v1688
        %v8626 = vpop.f32.mrb[0].mxu0
        %v8627 = vadd.f32 %v8557, %v8626
        %v8628 = vpop.f32.mrb[0].mxu0
        %8629 = vdwg.mxu0
        %8630 = vmatprep.subr.mxu0 %v523
        %8631 = vmatpush1.xpose.msra.mxu0 %v522
        %8632 = vmatprep.subr.mxu0 %v779
        %8633 = vmatpush1.xpose.msra.mxu0 %v778
        %8634 = vmatprep.subr.mxu0 0.0
        %8635 = vmatpush1.xpose.msra.mxu0 0.0
        %8636 = vmatprep.subr.mxu0 0.0
        %8637 = vmatpush1.xpose.msra.mxu0 0.0
        %8638 = vmatprep.subr.mxu0 0.0
        %8639 = vmatpush1.xpose.msra.mxu0 0.0
        %8640 = vmatprep.subr.mxu0 0.0
        %8641 = vmatpush1.xpose.msra.mxu0 0.0
        %8642 = vmatprep.subr.mxu0 0.0
        %8643 = vmatpush1.xpose.msra.mxu0 0.0
        %8644 = vmatprep.subr.mxu0 0.0
        %8645 = vmatpush1.xpose.msra.mxu0 0.0
        %8646 = vmatprep.subr.mxu0 0.0
        %8647 = vmatpush1.xpose.msra.mxu0 0.0
        %8648 = vmatprep.subr.mxu0 0.0
        %8649 = vmatpush1.xpose.msra.mxu0 0.0
        %8650 = vmatprep.subr.mxu0 0.0
        %8651 = vmatpush1.xpose.msra.mxu0 0.0
        %8652 = vmatprep.subr.mxu0 0.0
        %8653 = vmatpush1.xpose.msra.mxu0 0.0
        %8654 = vmatprep.subr.mxu0 0.0
        %8655 = vmatpush1.xpose.msra.mxu0 0.0
        %8656 = vmatprep.subr.mxu0 0.0
        %8657 = vmatpush1.xpose.msra.mxu0 0.0
        %8658 = vmatprep.subr.mxu0 0.0
        %8659 = vmatpush1.xpose.msra.mxu0 0.0
        %8660 = vmatprep.subr.mxu0 0.0
        %8661 = vmatpush1.xpose.msra.mxu0 0.0
        %8662 = vmatprep.subr.mxu0 0.0
        %8663 = vmatpush1.xpose.msra.mxu0 0.0
        %8664 = vmatprep.subr.mxu0 0.0
        %8665 = vmatpush1.xpose.msra.mxu0 0.0
        %8666 = vmatprep.subr.mxu0 0.0
        %8667 = vmatpush1.xpose.msra.mxu0 0.0
        %8668 = vmatprep.subr.mxu0 0.0
        %8669 = vmatpush1.xpose.msra.mxu0 0.0
        %8670 = vmatprep.subr.mxu0 0.0
        %8671 = vmatpush1.xpose.msra.mxu0 0.0
        %8672 = vmatprep.subr.mxu0 0.0
        %8673 = vmatpush1.xpose.msra.mxu0 0.0
        %8674 = vmatprep.subr.mxu0 0.0
        %8675 = vmatpush1.xpose.msra.mxu0 0.0
        %8676 = vmatprep.subr.mxu0 0.0
        %8677 = vmatpush1.xpose.msra.mxu0 0.0
        %8678 = vmatprep.subr.mxu0 0.0
        %8679 = vmatpush1.xpose.msra.mxu0 0.0
        %8680 = vmatprep.subr.mxu0 0.0
        %8681 = vmatpush1.xpose.msra.mxu0 0.0
        %8682 = vmatprep.subr.mxu0 0.0
        %8683 = vmatpush1.xpose.msra.mxu0 0.0
        %8684 = vmatprep.subr.mxu0 0.0
        %8685 = vmatpush1.xpose.msra.mxu0 0.0
        %8686 = vmatprep.subr.mxu0 0.0
        %8687 = vmatpush1.xpose.msra.mxu0 0.0
        %8688 = vmatprep.subr.mxu0 0.0
        %8689 = vmatpush1.xpose.msra.mxu0 0.0
        %8690 = vmatprep.subr.mxu0 0.0
        %8691 = vmatpush1.xpose.msra.mxu0 0.0
        %8692 = vmatprep.subr.mxu0 0.0
        %8693 = vmatpush1.xpose.msra.mxu0 0.0
        %8694 = vmatprep.mubr.f32.mxu0 %v1697
        %8695 = vmatmul.mubr.f32.gmra.mrb[0].mxu0 %v1695
        %v8696 = vpop.f32.mrb[0].mxu0
        %v8697 = vadd.f32 %v8627, %v8696
        %v8698 = vpop.f32.mrb[0].mxu0
        %8699 = vdwg.mxu0
        %8700 = vmatprep.subr.mxu0 %v525
        %8701 = vmatpush1.xpose.msra.mxu0 %v524
        %8702 = vmatprep.subr.mxu0 %v781
        %8703 = vmatpush1.xpose.msra.mxu0 %v780
        %8704 = vmatprep.subr.mxu0 0.0
        %8705 = vmatpush1.xpose.msra.mxu0 0.0
        %8706 = vmatprep.subr.mxu0 0.0
        %8707 = vmatpush1.xpose.msra.mxu0 0.0
        %8708 = vmatprep.subr.mxu0 0.0
        %8709 = vmatpush1.xpose.msra.mxu0 0.0
        %8710 = vmatprep.subr.mxu0 0.0
        %8711 = vmatpush1.xpose.msra.mxu0 0.0
        %8712 = vmatprep.subr.mxu0 0.0
        %8713 = vmatpush1.xpose.msra.mxu0 0.0
        %8714 = vmatprep.subr.mxu0 0.0
        %8715 = vmatpush1.xpose.msra.mxu0 0.0
        %8716 = vmatprep.subr.mxu0 0.0
        %8717 = vmatpush1.xpose.msra.mxu0 0.0
        %8718 = vmatprep.subr.mxu0 0.0
        %8719 = vmatpush1.xpose.msra.mxu0 0.0
        %8720 = vmatprep.subr.mxu0 0.0
        %8721 = vmatpush1.xpose.msra.mxu0 0.0
        %8722 = vmatprep.subr.mxu0 0.0
        %8723 = vmatpush1.xpose.msra.mxu0 0.0
        %8724 = vmatprep.subr.mxu0 0.0
        %8725 = vmatpush1.xpose.msra.mxu0 0.0
        %8726 = vmatprep.subr.mxu0 0.0
        %8727 = vmatpush1.xpose.msra.mxu0 0.0
        %8728 = vmatprep.subr.mxu0 0.0
        %8729 = vmatpush1.xpose.msra.mxu0 0.0
        %8730 = vmatprep.subr.mxu0 0.0
        %8731 = vmatpush1.xpose.msra.mxu0 0.0
        %8732 = vmatprep.subr.mxu0 0.0
        %8733 = vmatpush1.xpose.msra.mxu0 0.0
        %8734 = vmatprep.subr.mxu0 0.0
        %8735 = vmatpush1.xpose.msra.mxu0 0.0
        %8736 = vmatprep.subr.mxu0 0.0
        %8737 = vmatpush1.xpose.msra.mxu0 0.0
        %8738 = vmatprep.subr.mxu0 0.0
        %8739 = vmatpush1.xpose.msra.mxu0 0.0
        %8740 = vmatprep.subr.mxu0 0.0
        %8741 = vmatpush1.xpose.msra.mxu0 0.0
        %8742 = vmatprep.subr.mxu0 0.0
        %8743 = vmatpush1.xpose.msra.mxu0 0.0
        %8744 = vmatprep.subr.mxu0 0.0
        %8745 = vmatpush1.xpose.msra.mxu0 0.0
        %8746 = vmatprep.subr.mxu0 0.0
        %8747 = vmatpush1.xpose.msra.mxu0 0.0
        %8748 = vmatprep.subr.mxu0 0.0
        %8749 = vmatpush1.xpose.msra.mxu0 0.0
        %8750 = vmatprep.subr.mxu0 0.0
        %8751 = vmatpush1.xpose.msra.mxu0 0.0
        %8752 = vmatprep.subr.mxu0 0.0
        %8753 = vmatpush1.xpose.msra.mxu0 0.0
        %8754 = vmatprep.subr.mxu0 0.0
        %8755 = vmatpush1.xpose.msra.mxu0 0.0
        %8756 = vmatprep.subr.mxu0 0.0
        %8757 = vmatpush1.xpose.msra.mxu0 0.0
        %8758 = vmatprep.subr.mxu0 0.0
        %8759 = vmatpush1.xpose.msra.mxu0 0.0
        %8760 = vmatprep.subr.mxu0 0.0
        %8761 = vmatpush1.xpose.msra.mxu0 0.0
        %8762 = vmatprep.subr.mxu0 0.0
        %8763 = vmatpush1.xpose.msra.mxu0 0.0
        %8764 = vmatprep.mubr.f32.mxu0 %v1713
        %8765 = vmatmul.mubr.f32.gmra.mrb[0].mxu0 %v1705
        %v8766 = vpop.f32.mrb[0].mxu0
        %v8767 = vadd.f32 %v8697, %v8766
        %v8768 = vpop.f32.mrb[0].mxu0
        %8769 = vdwg.mxu0
        %8770 = vmatprep.subr.mxu0 %v527
        %8771 = vmatpush1.xpose.msra.mxu0 %v526
        %8772 = vmatprep.subr.mxu0 %v783
        %8773 = vmatpush1.xpose.msra.mxu0 %v782
        %8774 = vmatprep.subr.mxu0 0.0
        %8775 = vmatpush1.xpose.msra.mxu0 0.0
        %8776 = vmatprep.subr.mxu0 0.0
        %8777 = vmatpush1.xpose.msra.mxu0 0.0
        %8778 = vmatprep.subr.mxu0 0.0
        %8779 = vmatpush1.xpose.msra.mxu0 0.0
        %8780 = vmatprep.subr.mxu0 0.0
        %8781 = vmatpush1.xpose.msra.mxu0 0.0
        %8782 = vmatprep.subr.mxu0 0.0
        %8783 = vmatpush1.xpose.msra.mxu0 0.0
        %8784 = vmatprep.subr.mxu0 0.0
        %8785 = vmatpush1.xpose.msra.mxu0 0.0
        %8786 = vmatprep.subr.mxu0 0.0
        %8787 = vmatpush1.xpose.msra.mxu0 0.0
        %8788 = vmatprep.subr.mxu0 0.0
        %8789 = vmatpush1.xpose.msra.mxu0 0.0
        %8790 = vmatprep.subr.mxu0 0.0
        %8791 = vmatpush1.xpose.msra.mxu0 0.0
        %8792 = vmatprep.subr.mxu0 0.0
        %8793 = vmatpush1.xpose.msra.mxu0 0.0
        %8794 = vmatprep.subr.mxu0 0.0
        %8795 = vmatpush1.xpose.msra.mxu0 0.0
        %8796 = vmatprep.subr.mxu0 0.0
        %8797 = vmatpush1.xpose.msra.mxu0 0.0
        %8798 = vmatprep.subr.mxu0 0.0
        %8799 = vmatpush1.xpose.msra.mxu0 0.0
        %8800 = vmatprep.subr.mxu0 0.0
        %8801 = vmatpush1.xpose.msra.mxu0 0.0
        %8802 = vmatprep.subr.mxu0 0.0
        %8803 = vmatpush1.xpose.msra.mxu0 0.0
        %8804 = vmatprep.subr.mxu0 0.0
        %8805 = vmatpush1.xpose.msra.mxu0 0.0
        %8806 = vmatprep.subr.mxu0 0.0
        %8807 = vmatpush1.xpose.msra.mxu0 0.0
        %8808 = vmatprep.subr.mxu0 0.0
        %8809 = vmatpush1.xpose.msra.mxu0 0.0
        %8810 = vmatprep.subr.mxu0 0.0
        %8811 = vmatpush1.xpose.msra.mxu0 0.0
        %8812 = vmatprep.subr.mxu0 0.0
        %8813 = vmatpush1.xpose.msra.mxu0 0.0
        %8814 = vmatprep.subr.mxu0 0.0
        %8815 = vmatpush1.xpose.msra.mxu0 0.0
        %8816 = vmatprep.subr.mxu0 0.0
        %8817 = vmatpush1.xpose.msra.mxu0 0.0
        %8818 = vmatprep.subr.mxu0 0.0
        %8819 = vmatpush1.xpose.msra.mxu0 0.0
        %8820 = vmatprep.subr.mxu0 0.0
        %8821 = vmatpush1.xpose.msra.mxu0 0.0
        %8822 = vmatprep.subr.mxu0 0.0
        %8823 = vmatpush1.xpose.msra.mxu0 0.0
        %8824 = vmatprep.subr.mxu0 0.0
        %8825 = vmatpush1.xpose.msra.mxu0 0.0
        %8826 = vmatprep.subr.mxu0 0.0
        %8827 = vmatpush1.xpose.msra.mxu0 0.0
        %8828 = vmatprep.subr.mxu0 0.0
        %8829 = vmatpush1.xpose.msra.mxu0 0.0
        %8830 = vmatprep.subr.mxu0 0.0
        %8831 = vmatpush1.xpose.msra.mxu0 0.0
        %8832 = vmatprep.subr.mxu0 0.0
        %8833 = vmatpush1.xpose.msra.mxu0 0.0
        %8834 = vmatprep.mubr.f32.mxu0 %v1714
        %8835 = vmatmul.mubr.f32.gmra.mrb[0].mxu0 %v1712
        %v8836 = vpop.f32.mrb[0].mxu0
        %v8837 = vadd.f32 %v8767, %v8836
        %v8838 = vpop.f32.mrb[0].mxu0
        %8839 = vdwg.mxu0
        %8840 = vmatprep.subr.mxu0 %v529
        %8841 = vmatpush1.xpose.msra.mxu0 %v528
        %8842 = vmatprep.subr.mxu0 %v785
        %8843 = vmatpush1.xpose.msra.mxu0 %v784
        %8844 = vmatprep.subr.mxu0 0.0
        %8845 = vmatpush1.xpose.msra.mxu0 0.0
        %8846 = vmatprep.subr.mxu0 0.0
        %8847 = vmatpush1.xpose.msra.mxu0 0.0
        %8848 = vmatprep.subr.mxu0 0.0
        %8849 = vmatpush1.xpose.msra.mxu0 0.0
        %8850 = vmatprep.subr.mxu0 0.0
        %8851 = vmatpush1.xpose.msra.mxu0 0.0
        %8852 = vmatprep.subr.mxu0 0.0
        %8853 = vmatpush1.xpose.msra.mxu0 0.0
        %8854 = vmatprep.subr.mxu0 0.0
        %8855 = vmatpush1.xpose.msra.mxu0 0.0
        %8856 = vmatprep.subr.mxu0 0.0
        %8857 = vmatpush1.xpose.msra.mxu0 0.0
        %8858 = vmatprep.subr.mxu0 0.0
        %8859 = vmatpush1.xpose.msra.mxu0 0.0
        %8860 = vmatprep.subr.mxu0 0.0
        %8861 = vmatpush1.xpose.msra.mxu0 0.0
        %8862 = vmatprep.subr.mxu0 0.0
        %8863 = vmatpush1.xpose.msra.mxu0 0.0
        %8864 = vmatprep.subr.mxu0 0.0
        %8865 = vmatpush1.xpose.msra.mxu0 0.0
        %8866 = vmatprep.subr.mxu0 0.0
        %8867 = vmatpush1.xpose.msra.mxu0 0.0
        %8868 = vmatprep.subr.mxu0 0.0
        %8869 = vmatpush1.xpose.msra.mxu0 0.0
        %8870 = vmatprep.subr.mxu0 0.0
        %8871 = vmatpush1.xpose.msra.mxu0 0.0
        %8872 = vmatprep.subr.mxu0 0.0
        %8873 = vmatpush1.xpose.msra.mxu0 0.0
        %8874 = vmatprep.subr.mxu0 0.0
        %8875 = vmatpush1.xpose.msra.mxu0 0.0
        %8876 = vmatprep.subr.mxu0 0.0
        %8877 = vmatpush1.xpose.msra.mxu0 0.0
        %8878 = vmatprep.subr.mxu0 0.0
        %8879 = vmatpush1.xpose.msra.mxu0 0.0
        %8880 = vmatprep.subr.mxu0 0.0
        %8881 = vmatpush1.xpose.msra.mxu0 0.0
        %8882 = vmatprep.subr.mxu0 0.0
        %8883 = vmatpush1.xpose.msra.mxu0 0.0
        %8884 = vmatprep.subr.mxu0 0.0
        %8885 = vmatpush1.xpose.msra.mxu0 0.0
        %8886 = vmatprep.subr.mxu0 0.0
        %8887 = vmatpush1.xpose.msra.mxu0 0.0
        %8888 = vmatprep.subr.mxu0 0.0
        %8889 = vmatpush1.xpose.msra.mxu0 0.0
        %8890 = vmatprep.subr.mxu0 0.0
        %8891 = vmatpush1.xpose.msra.mxu0 0.0
        %8892 = vmatprep.subr.mxu0 0.0
        %8893 = vmatpush1.xpose.msra.mxu0 0.0
        %8894 = vmatprep.subr.mxu0 0.0
        %8895 = vmatpush1.xpose.msra.mxu0 0.0
        %8896 = vmatprep.subr.mxu0 0.0
        %8897 = vmatpush1.xpose.msra.mxu0 0.0
        %8898 = vmatprep.subr.mxu0 0.0
        %8899 = vmatpush1.xpose.msra.mxu0 0.0
        %8900 = vmatprep.subr.mxu0 0.0
        %8901 = vmatpush1.xpose.msra.mxu0 0.0
        %8902 = vmatprep.subr.mxu0 0.0
        %8903 = vmatpush1.xpose.msra.mxu0 0.0
        %8904 = vmatprep.mubr.f32.mxu0 %v1730
        %8905 = vmatmul.mubr.f32.gmra.mrb[0].mxu0 %v1722
        %v8906 = vpop.f32.mrb[0].mxu0
        %v8907 = vadd.f32 %v8837, %v8906
        %v8908 = vpop.f32.mrb[0].mxu0
        %8909 = vdwg.mxu0
        %8910 = vmatprep.subr.mxu0 %v531
        %8911 = vmatpush1.xpose.msra.mxu0 %v530
        %8912 = vmatprep.subr.mxu0 %v787
        %8913 = vmatpush1.xpose.msra.mxu0 %v786
        %8914 = vmatprep.subr.mxu0 0.0
        %8915 = vmatpush1.xpose.msra.mxu0 0.0
        %8916 = vmatprep.subr.mxu0 0.0
        %8917 = vmatpush1.xpose.msra.mxu0 0.0
        %8918 = vmatprep.subr.mxu0 0.0
        %8919 = vmatpush1.xpose.msra.mxu0 0.0
        %8920 = vmatprep.subr.mxu0 0.0
        %8921 = vmatpush1.xpose.msra.mxu0 0.0
        %8922 = vmatprep.subr.mxu0 0.0
        %8923 = vmatpush1.xpose.msra.mxu0 0.0
        %8924 = vmatprep.subr.mxu0 0.0
        %8925 = vmatpush1.xpose.msra.mxu0 0.0
        %8926 = vmatprep.subr.mxu0 0.0
        %8927 = vmatpush1.xpose.msra.mxu0 0.0
        %8928 = vmatprep.subr.mxu0 0.0
        %8929 = vmatpush1.xpose.msra.mxu0 0.0
        %8930 = vmatprep.subr.mxu0 0.0
        %8931 = vmatpush1.xpose.msra.mxu0 0.0
        %8932 = vmatprep.subr.mxu0 0.0
        %8933 = vmatpush1.xpose.msra.mxu0 0.0
        %8934 = vmatprep.subr.mxu0 0.0
        %8935 = vmatpush1.xpose.msra.mxu0 0.0
        %8936 = vmatprep.subr.mxu0 0.0
        %8937 = vmatpush1.xpose.msra.mxu0 0.0
        %8938 = vmatprep.subr.mxu0 0.0
        %8939 = vmatpush1.xpose.msra.mxu0 0.0
        %8940 = vmatprep.subr.mxu0 0.0
        %8941 = vmatpush1.xpose.msra.mxu0 0.0
        %8942 = vmatprep.subr.mxu0 0.0
        %8943 = vmatpush1.xpose.msra.mxu0 0.0
        %8944 = vmatprep.subr.mxu0 0.0
        %8945 = vmatpush1.xpose.msra.mxu0 0.0
        %8946 = vmatprep.subr.mxu0 0.0
        %8947 = vmatpush1.xpose.msra.mxu0 0.0
        %8948 = vmatprep.subr.mxu0 0.0
        %8949 = vmatpush1.xpose.msra.mxu0 0.0
        %8950 = vmatprep.subr.mxu0 0.0
        %8951 = vmatpush1.xpose.msra.mxu0 0.0
        %8952 = vmatprep.subr.mxu0 0.0
        %8953 = vmatpush1.xpose.msra.mxu0 0.0
        %8954 = vmatprep.subr.mxu0 0.0
        %8955 = vmatpush1.xpose.msra.mxu0 0.0
        %8956 = vmatprep.subr.mxu0 0.0
        %8957 = vmatpush1.xpose.msra.mxu0 0.0
        %8958 = vmatprep.subr.mxu0 0.0
        %8959 = vmatpush1.xpose.msra.mxu0 0.0
        %8960 = vmatprep.subr.mxu0 0.0
        %8961 = vmatpush1.xpose.msra.mxu0 0.0
        %8962 = vmatprep.subr.mxu0 0.0
        %8963 = vmatpush1.xpose.msra.mxu0 0.0
        %8964 = vmatprep.subr.mxu0 0.0
        %8965 = vmatpush1.xpose.msra.mxu0 0.0
        %8966 = vmatprep.subr.mxu0 0.0
        %8967 = vmatpush1.xpose.msra.mxu0 0.0
        %8968 = vmatprep.subr.mxu0 0.0
        %8969 = vmatpush1.xpose.msra.mxu0 0.0
        %8970 = vmatprep.subr.mxu0 0.0
        %8971 = vmatpush1.xpose.msra.mxu0 0.0
        %8972 = vmatprep.subr.mxu0 0.0
        %8973 = vmatpush1.xpose.msra.mxu0 0.0
        %8974 = vmatprep.mubr.f32.mxu0 %v1731
        %8975 = vmatmul.mubr.f32.gmra.mrb[0].mxu0 %v1729
        %v8976 = vpop.f32.mrb[0].mxu0
        %v8977 = vadd.f32 %v8907, %v8976
        %v8978 = vpop.f32.mrb[0].mxu0
        %8979 = vdwg.mxu0
        %8980 = vmatprep.subr.mxu0 %v533
        %8981 = vmatpush1.xpose.msra.mxu0 %v532
        %8982 = vmatprep.subr.mxu0 %v789
        %8983 = vmatpush1.xpose.msra.mxu0 %v788
        %8984 = vmatprep.subr.mxu0 0.0
        %8985 = vmatpush1.xpose.msra.mxu0 0.0
        %8986 = vmatprep.subr.mxu0 0.0
        %8987 = vmatpush1.xpose.msra.mxu0 0.0
        %8988 = vmatprep.subr.mxu0 0.0
        %8989 = vmatpush1.xpose.msra.mxu0 0.0
        %8990 = vmatprep.subr.mxu0 0.0
        %8991 = vmatpush1.xpose.msra.mxu0 0.0
        %8992 = vmatprep.subr.mxu0 0.0
        %8993 = vmatpush1.xpose.msra.mxu0 0.0
        %8994 = vmatprep.subr.mxu0 0.0
        %8995 = vmatpush1.xpose.msra.mxu0 0.0
        %8996 = vmatprep.subr.mxu0 0.0
        %8997 = vmatpush1.xpose.msra.mxu0 0.0
        %8998 = vmatprep.subr.mxu0 0.0
        %8999 = vmatpush1.xpose.msra.mxu0 0.0
        %9000 = vmatprep.subr.mxu0 0.0
        %9001 = vmatpush1.xpose.msra.mxu0 0.0
        %9002 = vmatprep.subr.mxu0 0.0
        %9003 = vmatpush1.xpose.msra.mxu0 0.0
        %9004 = vmatprep.subr.mxu0 0.0
        %9005 = vmatpush1.xpose.msra.mxu0 0.0
        %9006 = vmatprep.subr.mxu0 0.0
        %9007 = vmatpush1.xpose.msra.mxu0 0.0
        %9008 = vmatprep.subr.mxu0 0.0
        %9009 = vmatpush1.xpose.msra.mxu0 0.0
        %9010 = vmatprep.subr.mxu0 0.0
        %9011 = vmatpush1.xpose.msra.mxu0 0.0
        %9012 = vmatprep.subr.mxu0 0.0
        %9013 = vmatpush1.xpose.msra.mxu0 0.0
        %9014 = vmatprep.subr.mxu0 0.0
        %9015 = vmatpush1.xpose.msra.mxu0 0.0
        %9016 = vmatprep.subr.mxu0 0.0
        %9017 = vmatpush1.xpose.msra.mxu0 0.0
        %9018 = vmatprep.subr.mxu0 0.0
        %9019 = vmatpush1.xpose.msra.mxu0 0.0
        %9020 = vmatprep.subr.mxu0 0.0
        %9021 = vmatpush1.xpose.msra.mxu0 0.0
        %9022 = vmatprep.subr.mxu0 0.0
        %9023 = vmatpush1.xpose.msra.mxu0 0.0
        %9024 = vmatprep.subr.mxu0 0.0
        %9025 = vmatpush1.xpose.msra.mxu0 0.0
        %9026 = vmatprep.subr.mxu0 0.0
        %9027 = vmatpush1.xpose.msra.mxu0 0.0
        %9028 = vmatprep.subr.mxu0 0.0
        %9029 = vmatpush1.xpose.msra.mxu0 0.0
        %9030 = vmatprep.subr.mxu0 0.0
        %9031 = vmatpush1.xpose.msra.mxu0 0.0
        %9032 = vmatprep.subr.mxu0 0.0
        %9033 = vmatpush1.xpose.msra.mxu0 0.0
        %9034 = vmatprep.subr.mxu0 0.0
        %9035 = vmatpush1.xpose.msra.mxu0 0.0
        %9036 = vmatprep.subr.mxu0 0.0
        %9037 = vmatpush1.xpose.msra.mxu0 0.0
        %9038 = vmatprep.subr.mxu0 0.0
        %9039 = vmatpush1.xpose.msra.mxu0 0.0
        %9040 = vmatprep.subr.mxu0 0.0
        %9041 = vmatpush1.xpose.msra.mxu0 0.0
        %9042 = vmatprep.subr.mxu0 0.0
        %9043 = vmatpush1.xpose.msra.mxu0 0.0
        %9044 = vmatprep.mubr.f32.mxu0 %v1747
        %9045 = vmatmul.mubr.f32.gmra.mrb[0].mxu0 %v1739
        %v9046 = vpop.f32.mrb[0].mxu0
        %v9047 = vadd.f32 %v8977, %v9046
        %v9048 = vpop.f32.mrb[0].mxu0
        %9049 = vdwg.mxu0
        %9050 = vmatprep.subr.mxu0 %v535
        %9051 = vmatpush1.xpose.msra.mxu0 %v534
        %9052 = vmatprep.subr.mxu0 %v791
        %9053 = vmatpush1.xpose.msra.mxu0 %v790
        %9054 = vmatprep.subr.mxu0 0.0
        %9055 = vmatpush1.xpose.msra.mxu0 0.0
        %9056 = vmatprep.subr.mxu0 0.0
        %9057 = vmatpush1.xpose.msra.mxu0 0.0
        %9058 = vmatprep.subr.mxu0 0.0
        %9059 = vmatpush1.xpose.msra.mxu0 0.0
        %9060 = vmatprep.subr.mxu0 0.0
        %9061 = vmatpush1.xpose.msra.mxu0 0.0
        %9062 = vmatprep.subr.mxu0 0.0
        %9063 = vmatpush1.xpose.msra.mxu0 0.0
        %9064 = vmatprep.subr.mxu0 0.0
        %9065 = vmatpush1.xpose.msra.mxu0 0.0
        %9066 = vmatprep.subr.mxu0 0.0
        %9067 = vmatpush1.xpose.msra.mxu0 0.0
        %9068 = vmatprep.subr.mxu0 0.0
        %9069 = vmatpush1.xpose.msra.mxu0 0.0
        %9070 = vmatprep.subr.mxu0 0.0
        %9071 = vmatpush1.xpose.msra.mxu0 0.0
        %9072 = vmatprep.subr.mxu0 0.0
        %9073 = vmatpush1.xpose.msra.mxu0 0.0
        %9074 = vmatprep.subr.mxu0 0.0
        %9075 = vmatpush1.xpose.msra.mxu0 0.0
        %9076 = vmatprep.subr.mxu0 0.0
        %9077 = vmatpush1.xpose.msra.mxu0 0.0
        %9078 = vmatprep.subr.mxu0 0.0
        %9079 = vmatpush1.xpose.msra.mxu0 0.0
        %9080 = vmatprep.subr.mxu0 0.0
        %9081 = vmatpush1.xpose.msra.mxu0 0.0
        %9082 = vmatprep.subr.mxu0 0.0
        %9083 = vmatpush1.xpose.msra.mxu0 0.0
        %9084 = vmatprep.subr.mxu0 0.0
        %9085 = vmatpush1.xpose.msra.mxu0 0.0
        %9086 = vmatprep.subr.mxu0 0.0
        %9087 = vmatpush1.xpose.msra.mxu0 0.0
        %9088 = vmatprep.subr.mxu0 0.0
        %9089 = vmatpush1.xpose.msra.mxu0 0.0
        %9090 = vmatprep.subr.mxu0 0.0
        %9091 = vmatpush1.xpose.msra.mxu0 0.0
        %9092 = vmatprep.subr.mxu0 0.0
        %9093 = vmatpush1.xpose.msra.mxu0 0.0
        %9094 = vmatprep.subr.mxu0 0.0
        %9095 = vmatpush1.xpose.msra.mxu0 0.0
        %9096 = vmatprep.subr.mxu0 0.0
        %9097 = vmatpush1.xpose.msra.mxu0 0.0
        %9098 = vmatprep.subr.mxu0 0.0
        %9099 = vmatpush1.xpose.msra.mxu0 0.0
        %9100 = vmatprep.subr.mxu0 0.0
        %9101 = vmatpush1.xpose.msra.mxu0 0.0
        %9102 = vmatprep.subr.mxu0 0.0
        %9103 = vmatpush1.xpose.msra.mxu0 0.0
        %9104 = vmatprep.subr.mxu0 0.0
        %9105 = vmatpush1.xpose.msra.mxu0 0.0
        %9106 = vmatprep.subr.mxu0 0.0
        %9107 = vmatpush1.xpose.msra.mxu0 0.0
        %9108 = vmatprep.subr.mxu0 0.0
        %9109 = vmatpush1.xpose.msra.mxu0 0.0
        %9110 = vmatprep.subr.mxu0 0.0
        %9111 = vmatpush1.xpose.msra.mxu0 0.0
        %9112 = vmatprep.subr.mxu0 0.0
        %9113 = vmatpush1.xpose.msra.mxu0 0.0
        %9114 = vmatprep.mubr.f32.mxu0 %v1748
        %9115 = vmatmul.mubr.f32.gmra.mrb[0].mxu0 %v1746
        %v9116 = vpop.f32.mrb[0].mxu0
        %v9117 = vadd.f32 %v9047, %v9116
        %v9118 = vpop.f32.mrb[0].mxu0
        %9119 = vdwg.mxu0
        %9120 = vmatprep.subr.mxu0 %v537
        %9121 = vmatpush1.xpose.msra.mxu0 %v536
        %9122 = vmatprep.subr.mxu0 %v793
        %9123 = vmatpush1.xpose.msra.mxu0 %v792
        %9124 = vmatprep.subr.mxu0 0.0
        %9125 = vmatpush1.xpose.msra.mxu0 0.0
        %9126 = vmatprep.subr.mxu0 0.0
        %9127 = vmatpush1.xpose.msra.mxu0 0.0
        %9128 = vmatprep.subr.mxu0 0.0
        %9129 = vmatpush1.xpose.msra.mxu0 0.0
        %9130 = vmatprep.subr.mxu0 0.0
        %9131 = vmatpush1.xpose.msra.mxu0 0.0
        %9132 = vmatprep.subr.mxu0 0.0
        %9133 = vmatpush1.xpose.msra.mxu0 0.0
        %9134 = vmatprep.subr.mxu0 0.0
        %9135 = vmatpush1.xpose.msra.mxu0 0.0
        %9136 = vmatprep.subr.mxu0 0.0
        %9137 = vmatpush1.xpose.msra.mxu0 0.0
        %9138 = vmatprep.subr.mxu0 0.0
        %9139 = vmatpush1.xpose.msra.mxu0 0.0
        %9140 = vmatprep.subr.mxu0 0.0
        %9141 = vmatpush1.xpose.msra.mxu0 0.0
        %9142 = vmatprep.subr.mxu0 0.0
        %9143 = vmatpush1.xpose.msra.mxu0 0.0
        %9144 = vmatprep.subr.mxu0 0.0
        %9145 = vmatpush1.xpose.msra.mxu0 0.0
        %9146 = vmatprep.subr.mxu0 0.0
        %9147 = vmatpush1.xpose.msra.mxu0 0.0
        %9148 = vmatprep.subr.mxu0 0.0
        %9149 = vmatpush1.xpose.msra.mxu0 0.0
        %9150 = vmatprep.subr.mxu0 0.0
        %9151 = vmatpush1.xpose.msra.mxu0 0.0
        %9152 = vmatprep.subr.mxu0 0.0
        %9153 = vmatpush1.xpose.msra.mxu0 0.0
        %9154 = vmatprep.subr.mxu0 0.0
        %9155 = vmatpush1.xpose.msra.mxu0 0.0
        %9156 = vmatprep.subr.mxu0 0.0
        %9157 = vmatpush1.xpose.msra.mxu0 0.0
        %9158 = vmatprep.subr.mxu0 0.0
        %9159 = vmatpush1.xpose.msra.mxu0 0.0
        %9160 = vmatprep.subr.mxu0 0.0
        %9161 = vmatpush1.xpose.msra.mxu0 0.0
        %9162 = vmatprep.subr.mxu0 0.0
        %9163 = vmatpush1.xpose.msra.mxu0 0.0
        %9164 = vmatprep.subr.mxu0 0.0
        %9165 = vmatpush1.xpose.msra.mxu0 0.0
        %9166 = vmatprep.subr.mxu0 0.0
        %9167 = vmatpush1.xpose.msra.mxu0 0.0
        %9168 = vmatprep.subr.mxu0 0.0
        %9169 = vmatpush1.xpose.msra.mxu0 0.0
        %9170 = vmatprep.subr.mxu0 0.0
        %9171 = vmatpush1.xpose.msra.mxu0 0.0
        %9172 = vmatprep.subr.mxu0 0.0
        %9173 = vmatpush1.xpose.msra.mxu0 0.0
        %9174 = vmatprep.subr.mxu0 0.0
        %9175 = vmatpush1.xpose.msra.mxu0 0.0
        %9176 = vmatprep.subr.mxu0 0.0
        %9177 = vmatpush1.xpose.msra.mxu0 0.0
        %9178 = vmatprep.subr.mxu0 0.0
        %9179 = vmatpush1.xpose.msra.mxu0 0.0
        %9180 = vmatprep.subr.mxu0 0.0
        %9181 = vmatpush1.xpose.msra.mxu0 0.0
        %9182 = vmatprep.subr.mxu0 0.0
        %9183 = vmatpush1.xpose.msra.mxu0 0.0
        %9184 = vmatprep.mubr.f32.mxu0 %v1764
        %9185 = vmatmul.mubr.f32.gmra.mrb[0].mxu0 %v1756
        %v9186 = vpop.f32.mrb[0].mxu0
        %v9187 = vadd.f32 %v9117, %v9186
        %v9188 = vpop.f32.mrb[0].mxu0
        %9189 = vdwg.mxu0
        %9190 = vmatprep.subr.mxu0 %v539
        %9191 = vmatpush1.xpose.msra.mxu0 %v538
        %9192 = vmatprep.subr.mxu0 %v795
        %9193 = vmatpush1.xpose.msra.mxu0 %v794
        %9194 = vmatprep.subr.mxu0 0.0
        %9195 = vmatpush1.xpose.msra.mxu0 0.0
        %9196 = vmatprep.subr.mxu0 0.0
        %9197 = vmatpush1.xpose.msra.mxu0 0.0
        %9198 = vmatprep.subr.mxu0 0.0
        %9199 = vmatpush1.xpose.msra.mxu0 0.0
        %9200 = vmatprep.subr.mxu0 0.0
        %9201 = vmatpush1.xpose.msra.mxu0 0.0
        %9202 = vmatprep.subr.mxu0 0.0
        %9203 = vmatpush1.xpose.msra.mxu0 0.0
        %9204 = vmatprep.subr.mxu0 0.0
        %9205 = vmatpush1.xpose.msra.mxu0 0.0
        %9206 = vmatprep.subr.mxu0 0.0
        %9207 = vmatpush1.xpose.msra.mxu0 0.0
        %9208 = vmatprep.subr.mxu0 0.0
        %9209 = vmatpush1.xpose.msra.mxu0 0.0
        %9210 = vmatprep.subr.mxu0 0.0
        %9211 = vmatpush1.xpose.msra.mxu0 0.0
        %9212 = vmatprep.subr.mxu0 0.0
        %9213 = vmatpush1.xpose.msra.mxu0 0.0
        %9214 = vmatprep.subr.mxu0 0.0
        %9215 = vmatpush1.xpose.msra.mxu0 0.0
        %9216 = vmatprep.subr.mxu0 0.0
        %9217 = vmatpush1.xpose.msra.mxu0 0.0
        %9218 = vmatprep.subr.mxu0 0.0
        %9219 = vmatpush1.xpose.msra.mxu0 0.0
        %9220 = vmatprep.subr.mxu0 0.0
        %9221 = vmatpush1.xpose.msra.mxu0 0.0
        %9222 = vmatprep.subr.mxu0 0.0
        %9223 = vmatpush1.xpose.msra.mxu0 0.0
        %9224 = vmatprep.subr.mxu0 0.0
        %9225 = vmatpush1.xpose.msra.mxu0 0.0
        %9226 = vmatprep.subr.mxu0 0.0
        %9227 = vmatpush1.xpose.msra.mxu0 0.0
        %9228 = vmatprep.subr.mxu0 0.0
        %9229 = vmatpush1.xpose.msra.mxu0 0.0
        %9230 = vmatprep.subr.mxu0 0.0
        %9231 = vmatpush1.xpose.msra.mxu0 0.0
        %9232 = vmatprep.subr.mxu0 0.0
        %9233 = vmatpush1.xpose.msra.mxu0 0.0
        %9234 = vmatprep.subr.mxu0 0.0
        %9235 = vmatpush1.xpose.msra.mxu0 0.0
        %9236 = vmatprep.subr.mxu0 0.0
        %9237 = vmatpush1.xpose.msra.mxu0 0.0
        %9238 = vmatprep.subr.mxu0 0.0
        %9239 = vmatpush1.xpose.msra.mxu0 0.0
        %9240 = vmatprep.subr.mxu0 0.0
        %9241 = vmatpush1.xpose.msra.mxu0 0.0
        %9242 = vmatprep.subr.mxu0 0.0
        %9243 = vmatpush1.xpose.msra.mxu0 0.0
        %9244 = vmatprep.subr.mxu0 0.0
        %9245 = vmatpush1.xpose.msra.mxu0 0.0
        %9246 = vmatprep.subr.mxu0 0.0
        %9247 = vmatpush1.xpose.msra.mxu0 0.0
        %9248 = vmatprep.subr.mxu0 0.0
        %9249 = vmatpush1.xpose.msra.mxu0 0.0
        %9250 = vmatprep.subr.mxu0 0.0
        %9251 = vmatpush1.xpose.msra.mxu0 0.0
        %9252 = vmatprep.subr.mxu0 0.0
        %9253 = vmatpush1.xpose.msra.mxu0 0.0
        %9254 = vmatprep.mubr.f32.mxu0 %v1765
        %9255 = vmatmul.mubr.f32.gmra.mrb[0].mxu0 %v1763
        %v9256 = vpop.f32.mrb[0].mxu0
        %v9257 = vadd.f32 %v9187, %v9256
        %v9258 = vpop.f32.mrb[0].mxu0
        %9259 = vdwg.mxu0
        %9260 = vmatprep.subr.mxu0 %v541
        %9261 = vmatpush1.xpose.msra.mxu0 %v540
        %9262 = vmatprep.subr.mxu0 %v797
        %9263 = vmatpush1.xpose.msra.mxu0 %v796
        %9264 = vmatprep.subr.mxu0 0.0
        %9265 = vmatpush1.xpose.msra.mxu0 0.0
        %9266 = vmatprep.subr.mxu0 0.0
        %9267 = vmatpush1.xpose.msra.mxu0 0.0
        %9268 = vmatprep.subr.mxu0 0.0
        %9269 = vmatpush1.xpose.msra.mxu0 0.0
        %9270 = vmatprep.subr.mxu0 0.0
        %9271 = vmatpush1.xpose.msra.mxu0 0.0
        %9272 = vmatprep.subr.mxu0 0.0
        %9273 = vmatpush1.xpose.msra.mxu0 0.0
        %9274 = vmatprep.subr.mxu0 0.0
        %9275 = vmatpush1.xpose.msra.mxu0 0.0
        %9276 = vmatprep.subr.mxu0 0.0
        %9277 = vmatpush1.xpose.msra.mxu0 0.0
        %9278 = vmatprep.subr.mxu0 0.0
        %9279 = vmatpush1.xpose.msra.mxu0 0.0
        %9280 = vmatprep.subr.mxu0 0.0
        %9281 = vmatpush1.xpose.msra.mxu0 0.0
        %9282 = vmatprep.subr.mxu0 0.0
        %9283 = vmatpush1.xpose.msra.mxu0 0.0
        %9284 = vmatprep.subr.mxu0 0.0
        %9285 = vmatpush1.xpose.msra.mxu0 0.0
        %9286 = vmatprep.subr.mxu0 0.0
        %9287 = vmatpush1.xpose.msra.mxu0 0.0
        %9288 = vmatprep.subr.mxu0 0.0
        %9289 = vmatpush1.xpose.msra.mxu0 0.0
        %9290 = vmatprep.subr.mxu0 0.0
        %9291 = vmatpush1.xpose.msra.mxu0 0.0
        %9292 = vmatprep.subr.mxu0 0.0
        %9293 = vmatpush1.xpose.msra.mxu0 0.0
        %9294 = vmatprep.subr.mxu0 0.0
        %9295 = vmatpush1.xpose.msra.mxu0 0.0
        %9296 = vmatprep.subr.mxu0 0.0
        %9297 = vmatpush1.xpose.msra.mxu0 0.0
        %9298 = vmatprep.subr.mxu0 0.0
        %9299 = vmatpush1.xpose.msra.mxu0 0.0
        %9300 = vmatprep.subr.mxu0 0.0
        %9301 = vmatpush1.xpose.msra.mxu0 0.0
        %9302 = vmatprep.subr.mxu0 0.0
        %9303 = vmatpush1.xpose.msra.mxu0 0.0
        %9304 = vmatprep.subr.mxu0 0.0
        %9305 = vmatpush1.xpose.msra.mxu0 0.0
        %9306 = vmatprep.subr.mxu0 0.0
        %9307 = vmatpush1.xpose.msra.mxu0 0.0
        %9308 = vmatprep.subr.mxu0 0.0
        %9309 = vmatpush1.xpose.msra.mxu0 0.0
        %9310 = vmatprep.subr.mxu0 0.0
        %9311 = vmatpush1.xpose.msra.mxu0 0.0
        %9312 = vmatprep.subr.mxu0 0.0
        %9313 = vmatpush1.xpose.msra.mxu0 0.0
        %9314 = vmatprep.subr.mxu0 0.0
        %9315 = vmatpush1.xpose.msra.mxu0 0.0
        %9316 = vmatprep.subr.mxu0 0.0
        %9317 = vmatpush1.xpose.msra.mxu0 0.0
        %9318 = vmatprep.subr.mxu0 0.0
        %9319 = vmatpush1.xpose.msra.mxu0 0.0
        %9320 = vmatprep.subr.mxu0 0.0
        %9321 = vmatpush1.xpose.msra.mxu0 0.0
        %9322 = vmatprep.subr.mxu0 0.0
        %9323 = vmatpush1.xpose.msra.mxu0 0.0
        %9324 = vmatprep.mubr.f32.mxu0 %v1781
        %9325 = vmatmul.mubr.f32.gmra.mrb[0].mxu0 %v1773
        %v9326 = vpop.f32.mrb[0].mxu0
        %v9327 = vadd.f32 %v9257, %v9326
        %v9328 = vpop.f32.mrb[0].mxu0
        %9329 = vdwg.mxu0
        %9330 = vmatprep.subr.mxu0 %v543
        %9331 = vmatpush1.xpose.msra.mxu0 %v542
        %9332 = vmatprep.subr.mxu0 %v799
        %9333 = vmatpush1.xpose.msra.mxu0 %v798
        %9334 = vmatprep.subr.mxu0 0.0
        %9335 = vmatpush1.xpose.msra.mxu0 0.0
        %9336 = vmatprep.subr.mxu0 0.0
        %9337 = vmatpush1.xpose.msra.mxu0 0.0
        %9338 = vmatprep.subr.mxu0 0.0
        %9339 = vmatpush1.xpose.msra.mxu0 0.0
        %9340 = vmatprep.subr.mxu0 0.0
        %9341 = vmatpush1.xpose.msra.mxu0 0.0
        %9342 = vmatprep.subr.mxu0 0.0
        %9343 = vmatpush1.xpose.msra.mxu0 0.0
        %9344 = vmatprep.subr.mxu0 0.0
        %9345 = vmatpush1.xpose.msra.mxu0 0.0
        %9346 = vmatprep.subr.mxu0 0.0
        %9347 = vmatpush1.xpose.msra.mxu0 0.0
        %9348 = vmatprep.subr.mxu0 0.0
        %9349 = vmatpush1.xpose.msra.mxu0 0.0
        %9350 = vmatprep.subr.mxu0 0.0
        %9351 = vmatpush1.xpose.msra.mxu0 0.0
        %9352 = vmatprep.subr.mxu0 0.0
        %9353 = vmatpush1.xpose.msra.mxu0 0.0
        %9354 = vmatprep.subr.mxu0 0.0
        %9355 = vmatpush1.xpose.msra.mxu0 0.0
        %9356 = vmatprep.subr.mxu0 0.0
        %9357 = vmatpush1.xpose.msra.mxu0 0.0
        %9358 = vmatprep.subr.mxu0 0.0
        %9359 = vmatpush1.xpose.msra.mxu0 0.0
        %9360 = vmatprep.subr.mxu0 0.0
        %9361 = vmatpush1.xpose.msra.mxu0 0.0
        %9362 = vmatprep.subr.mxu0 0.0
        %9363 = vmatpush1.xpose.msra.mxu0 0.0
        %9364 = vmatprep.subr.mxu0 0.0
        %9365 = vmatpush1.xpose.msra.mxu0 0.0
        %9366 = vmatprep.subr.mxu0 0.0
        %9367 = vmatpush1.xpose.msra.mxu0 0.0
        %9368 = vmatprep.subr.mxu0 0.0
        %9369 = vmatpush1.xpose.msra.mxu0 0.0
        %9370 = vmatprep.subr.mxu0 0.0
        %9371 = vmatpush1.xpose.msra.mxu0 0.0
        %9372 = vmatprep.subr.mxu0 0.0
        %9373 = vmatpush1.xpose.msra.mxu0 0.0
        %9374 = vmatprep.subr.mxu0 0.0
        %9375 = vmatpush1.xpose.msra.mxu0 0.0
        %9376 = vmatprep.subr.mxu0 0.0
        %9377 = vmatpush1.xpose.msra.mxu0 0.0
        %9378 = vmatprep.subr.mxu0 0.0
        %9379 = vmatpush1.xpose.msra.mxu0 0.0
        %9380 = vmatprep.subr.mxu0 0.0
        %9381 = vmatpush1.xpose.msra.mxu0 0.0
        %9382 = vmatprep.subr.mxu0 0.0
        %9383 = vmatpush1.xpose.msra.mxu0 0.0
        %9384 = vmatprep.subr.mxu0 0.0
        %9385 = vmatpush1.xpose.msra.mxu0 0.0
        %9386 = vmatprep.subr.mxu0 0.0
        %9387 = vmatpush1.xpose.msra.mxu0 0.0
        %9388 = vmatprep.subr.mxu0 0.0
        %9389 = vmatpush1.xpose.msra.mxu0 0.0
        %9390 = vmatprep.subr.mxu0 0.0
        %9391 = vmatpush1.xpose.msra.mxu0 0.0
        %9392 = vmatprep.subr.mxu0 0.0
        %9393 = vmatpush1.xpose.msra.mxu0 0.0
        %9394 = vmatprep.mubr.f32.mxu0 %v1782
        %9395 = vmatmul.mubr.f32.gmra.mrb[0].mxu0 %v1780
        %v9396 = vpop.f32.mrb[0].mxu0
        %v9397 = vadd.f32 %v9327, %v9396
        %v9398 = vpop.f32.mrb[0].mxu0
        %9399 = vdwg.mxu0
        %9400 = vmatprep.subr.mxu0 %v545
        %9401 = vmatpush1.xpose.msra.mxu0 %v544
        %9402 = vmatprep.subr.mxu0 %v801
        %9403 = vmatpush1.xpose.msra.mxu0 %v800
        %9404 = vmatprep.subr.mxu0 0.0
        %9405 = vmatpush1.xpose.msra.mxu0 0.0
        %9406 = vmatprep.subr.mxu0 0.0
        %9407 = vmatpush1.xpose.msra.mxu0 0.0
        %9408 = vmatprep.subr.mxu0 0.0
        %9409 = vmatpush1.xpose.msra.mxu0 0.0
        %9410 = vmatprep.subr.mxu0 0.0
        %9411 = vmatpush1.xpose.msra.mxu0 0.0
        %9412 = vmatprep.subr.mxu0 0.0
        %9413 = vmatpush1.xpose.msra.mxu0 0.0
        %9414 = vmatprep.subr.mxu0 0.0
        %9415 = vmatpush1.xpose.msra.mxu0 0.0
        %9416 = vmatprep.subr.mxu0 0.0
        %9417 = vmatpush1.xpose.msra.mxu0 0.0
        %9418 = vmatprep.subr.mxu0 0.0
        %9419 = vmatpush1.xpose.msra.mxu0 0.0
        %9420 = vmatprep.subr.mxu0 0.0
        %9421 = vmatpush1.xpose.msra.mxu0 0.0
        %9422 = vmatprep.subr.mxu0 0.0
        %9423 = vmatpush1.xpose.msra.mxu0 0.0
        %9424 = vmatprep.subr.mxu0 0.0
        %9425 = vmatpush1.xpose.msra.mxu0 0.0
        %9426 = vmatprep.subr.mxu0 0.0
        %9427 = vmatpush1.xpose.msra.mxu0 0.0
        %9428 = vmatprep.subr.mxu0 0.0
        %9429 = vmatpush1.xpose.msra.mxu0 0.0
        %9430 = vmatprep.subr.mxu0 0.0
        %9431 = vmatpush1.xpose.msra.mxu0 0.0
        %9432 = vmatprep.subr.mxu0 0.0
        %9433 = vmatpush1.xpose.msra.mxu0 0.0
        %9434 = vmatprep.subr.mxu0 0.0
        %9435 = vmatpush1.xpose.msra.mxu0 0.0
        %9436 = vmatprep.subr.mxu0 0.0
        %9437 = vmatpush1.xpose.msra.mxu0 0.0
        %9438 = vmatprep.subr.mxu0 0.0
        %9439 = vmatpush1.xpose.msra.mxu0 0.0
        %9440 = vmatprep.subr.mxu0 0.0
        %9441 = vmatpush1.xpose.msra.mxu0 0.0
        %9442 = vmatprep.subr.mxu0 0.0
        %9443 = vmatpush1.xpose.msra.mxu0 0.0
        %9444 = vmatprep.subr.mxu0 0.0
        %9445 = vmatpush1.xpose.msra.mxu0 0.0
        %9446 = vmatprep.subr.mxu0 0.0
        %9447 = vmatpush1.xpose.msra.mxu0 0.0
        %9448 = vmatprep.subr.mxu0 0.0
        %9449 = vmatpush1.xpose.msra.mxu0 0.0
        %9450 = vmatprep.subr.mxu0 0.0
        %9451 = vmatpush1.xpose.msra.mxu0 0.0
        %9452 = vmatprep.subr.mxu0 0.0
        %9453 = vmatpush1.xpose.msra.mxu0 0.0
        %9454 = vmatprep.subr.mxu0 0.0
        %9455 = vmatpush1.xpose.msra.mxu0 0.0
        %9456 = vmatprep.subr.mxu0 0.0
        %9457 = vmatpush1.xpose.msra.mxu0 0.0
        %9458 = vmatprep.subr.mxu0 0.0
        %9459 = vmatpush1.xpose.msra.mxu0 0.0
        %9460 = vmatprep.subr.mxu0 0.0
        %9461 = vmatpush1.xpose.msra.mxu0 0.0
        %9462 = vmatprep.subr.mxu0 0.0
        %9463 = vmatpush1.xpose.msra.mxu0 0.0
        %9464 = vmatprep.mubr.f32.mxu0 %v1798
        %9465 = vmatmul.mubr.f32.gmra.mrb[0].mxu0 %v1790
        %v9466 = vpop.f32.mrb[0].mxu0
        %v9467 = vadd.f32 %v9397, %v9466
        %v9468 = vpop.f32.mrb[0].mxu0
        %9469 = vdwg.mxu0
        %9470 = vmatprep.subr.mxu0 %v547
        %9471 = vmatpush1.xpose.msra.mxu0 %v546
        %9472 = vmatprep.subr.mxu0 %v803
        %9473 = vmatpush1.xpose.msra.mxu0 %v802
        %9474 = vmatprep.subr.mxu0 0.0
        %9475 = vmatpush1.xpose.msra.mxu0 0.0
        %9476 = vmatprep.subr.mxu0 0.0
        %9477 = vmatpush1.xpose.msra.mxu0 0.0
        %9478 = vmatprep.subr.mxu0 0.0
        %9479 = vmatpush1.xpose.msra.mxu0 0.0
        %9480 = vmatprep.subr.mxu0 0.0
        %9481 = vmatpush1.xpose.msra.mxu0 0.0
        %9482 = vmatprep.subr.mxu0 0.0
        %9483 = vmatpush1.xpose.msra.mxu0 0.0
        %9484 = vmatprep.subr.mxu0 0.0
        %9485 = vmatpush1.xpose.msra.mxu0 0.0
        %9486 = vmatprep.subr.mxu0 0.0
        %9487 = vmatpush1.xpose.msra.mxu0 0.0
        %9488 = vmatprep.subr.mxu0 0.0
        %9489 = vmatpush1.xpose.msra.mxu0 0.0
        %9490 = vmatprep.subr.mxu0 0.0
        %9491 = vmatpush1.xpose.msra.mxu0 0.0
        %9492 = vmatprep.subr.mxu0 0.0
        %9493 = vmatpush1.xpose.msra.mxu0 0.0
        %9494 = vmatprep.subr.mxu0 0.0
        %9495 = vmatpush1.xpose.msra.mxu0 0.0
        %9496 = vmatprep.subr.mxu0 0.0
        %9497 = vmatpush1.xpose.msra.mxu0 0.0
        %9498 = vmatprep.subr.mxu0 0.0
        %9499 = vmatpush1.xpose.msra.mxu0 0.0
        %9500 = vmatprep.subr.mxu0 0.0
        %9501 = vmatpush1.xpose.msra.mxu0 0.0
        %9502 = vmatprep.subr.mxu0 0.0
        %9503 = vmatpush1.xpose.msra.mxu0 0.0
        %9504 = vmatprep.subr.mxu0 0.0
        %9505 = vmatpush1.xpose.msra.mxu0 0.0
        %9506 = vmatprep.subr.mxu0 0.0
        %9507 = vmatpush1.xpose.msra.mxu0 0.0
        %9508 = vmatprep.subr.mxu0 0.0
        %9509 = vmatpush1.xpose.msra.mxu0 0.0
        %9510 = vmatprep.subr.mxu0 0.0
        %9511 = vmatpush1.xpose.msra.mxu0 0.0
        %9512 = vmatprep.subr.mxu0 0.0
        %9513 = vmatpush1.xpose.msra.mxu0 0.0
        %9514 = vmatprep.subr.mxu0 0.0
        %9515 = vmatpush1.xpose.msra.mxu0 0.0
        %9516 = vmatprep.subr.mxu0 0.0
        %9517 = vmatpush1.xpose.msra.mxu0 0.0
        %9518 = vmatprep.subr.mxu0 0.0
        %9519 = vmatpush1.xpose.msra.mxu0 0.0
        %9520 = vmatprep.subr.mxu0 0.0
        %9521 = vmatpush1.xpose.msra.mxu0 0.0
        %9522 = vmatprep.subr.mxu0 0.0
        %9523 = vmatpush1.xpose.msra.mxu0 0.0
        %9524 = vmatprep.subr.mxu0 0.0
        %9525 = vmatpush1.xpose.msra.mxu0 0.0
        %9526 = vmatprep.subr.mxu0 0.0
        %9527 = vmatpush1.xpose.msra.mxu0 0.0
        %9528 = vmatprep.subr.mxu0 0.0
        %9529 = vmatpush1.xpose.msra.mxu0 0.0
        %9530 = vmatprep.subr.mxu0 0.0
        %9531 = vmatpush1.xpose.msra.mxu0 0.0
        %9532 = vmatprep.subr.mxu0 0.0
        %9533 = vmatpush1.xpose.msra.mxu0 0.0
        %9534 = vmatprep.mubr.f32.mxu0 %v1799
        %9535 = vmatmul.mubr.f32.gmra.mrb[0].mxu0 %v1797
        %v9536 = vpop.f32.mrb[0].mxu0
        %v9537 = vadd.f32 %v9467, %v9536
        %v9538 = vpop.f32.mrb[0].mxu0
        %9539 = vdwg.mxu0
        %9540 = vmatprep.subr.mxu0 %v549
        %9541 = vmatpush1.xpose.msra.mxu0 %v548
        %9542 = vmatprep.subr.mxu0 %v805
        %9543 = vmatpush1.xpose.msra.mxu0 %v804
        %9544 = vmatprep.subr.mxu0 0.0
        %9545 = vmatpush1.xpose.msra.mxu0 0.0
        %9546 = vmatprep.subr.mxu0 0.0
        %9547 = vmatpush1.xpose.msra.mxu0 0.0
        %9548 = vmatprep.subr.mxu0 0.0
        %9549 = vmatpush1.xpose.msra.mxu0 0.0
        %9550 = vmatprep.subr.mxu0 0.0
        %9551 = vmatpush1.xpose.msra.mxu0 0.0
        %9552 = vmatprep.subr.mxu0 0.0
        %9553 = vmatpush1.xpose.msra.mxu0 0.0
        %9554 = vmatprep.subr.mxu0 0.0
        %9555 = vmatpush1.xpose.msra.mxu0 0.0
        %9556 = vmatprep.subr.mxu0 0.0
        %9557 = vmatpush1.xpose.msra.mxu0 0.0
        %9558 = vmatprep.subr.mxu0 0.0
        %9559 = vmatpush1.xpose.msra.mxu0 0.0
        %9560 = vmatprep.subr.mxu0 0.0
        %9561 = vmatpush1.xpose.msra.mxu0 0.0
        %9562 = vmatprep.subr.mxu0 0.0
        %9563 = vmatpush1.xpose.msra.mxu0 0.0
        %9564 = vmatprep.subr.mxu0 0.0
        %9565 = vmatpush1.xpose.msra.mxu0 0.0
        %9566 = vmatprep.subr.mxu0 0.0
        %9567 = vmatpush1.xpose.msra.mxu0 0.0
        %9568 = vmatprep.subr.mxu0 0.0
        %9569 = vmatpush1.xpose.msra.mxu0 0.0
        %9570 = vmatprep.subr.mxu0 0.0
        %9571 = vmatpush1.xpose.msra.mxu0 0.0
        %9572 = vmatprep.subr.mxu0 0.0
        %9573 = vmatpush1.xpose.msra.mxu0 0.0
        %9574 = vmatprep.subr.mxu0 0.0
        %9575 = vmatpush1.xpose.msra.mxu0 0.0
        %9576 = vmatprep.subr.mxu0 0.0
        %9577 = vmatpush1.xpose.msra.mxu0 0.0
        %9578 = vmatprep.subr.mxu0 0.0
        %9579 = vmatpush1.xpose.msra.mxu0 0.0
        %9580 = vmatprep.subr.mxu0 0.0
        %9581 = vmatpush1.xpose.msra.mxu0 0.0
        %9582 = vmatprep.subr.mxu0 0.0
        %9583 = vmatpush1.xpose.msra.mxu0 0.0
        %9584 = vmatprep.subr.mxu0 0.0
        %9585 = vmatpush1.xpose.msra.mxu0 0.0
        %9586 = vmatprep.subr.mxu0 0.0
        %9587 = vmatpush1.xpose.msra.mxu0 0.0
        %9588 = vmatprep.subr.mxu0 0.0
        %9589 = vmatpush1.xpose.msra.mxu0 0.0
        %9590 = vmatprep.subr.mxu0 0.0
        %9591 = vmatpush1.xpose.msra.mxu0 0.0
        %9592 = vmatprep.subr.mxu0 0.0
        %9593 = vmatpush1.xpose.msra.mxu0 0.0
        %9594 = vmatprep.subr.mxu0 0.0
        %9595 = vmatpush1.xpose.msra.mxu0 0.0
        %9596 = vmatprep.subr.mxu0 0.0
        %9597 = vmatpush1.xpose.msra.mxu0 0.0
        %9598 = vmatprep.subr.mxu0 0.0
        %9599 = vmatpush1.xpose.msra.mxu0 0.0
        %9600 = vmatprep.subr.mxu0 0.0
        %9601 = vmatpush1.xpose.msra.mxu0 0.0
        %9602 = vmatprep.subr.mxu0 0.0
        %9603 = vmatpush1.xpose.msra.mxu0 0.0
        %9604 = vmatprep.mubr.f32.mxu0 %v1815
        %9605 = vmatmul.mubr.f32.gmra.mrb[0].mxu0 %v1807
        %v9606 = vpop.f32.mrb[0].mxu0
        %v9607 = vadd.f32 %v9537, %v9606
        %v9608 = vpop.f32.mrb[0].mxu0
        %9609 = vdwg.mxu0
        %9610 = vmatprep.subr.mxu0 %v551
        %9611 = vmatpush1.xpose.msra.mxu0 %v550
        %9612 = vmatprep.subr.mxu0 %v807
        %9613 = vmatpush1.xpose.msra.mxu0 %v806
        %9614 = vmatprep.subr.mxu0 0.0
        %9615 = vmatpush1.xpose.msra.mxu0 0.0
        %9616 = vmatprep.subr.mxu0 0.0
        %9617 = vmatpush1.xpose.msra.mxu0 0.0
        %9618 = vmatprep.subr.mxu0 0.0
        %9619 = vmatpush1.xpose.msra.mxu0 0.0
        %9620 = vmatprep.subr.mxu0 0.0
        %9621 = vmatpush1.xpose.msra.mxu0 0.0
        %9622 = vmatprep.subr.mxu0 0.0
        %9623 = vmatpush1.xpose.msra.mxu0 0.0
        %9624 = vmatprep.subr.mxu0 0.0
        %9625 = vmatpush1.xpose.msra.mxu0 0.0
        %9626 = vmatprep.subr.mxu0 0.0
        %9627 = vmatpush1.xpose.msra.mxu0 0.0
        %9628 = vmatprep.subr.mxu0 0.0
        %9629 = vmatpush1.xpose.msra.mxu0 0.0
        %9630 = vmatprep.subr.mxu0 0.0
        %9631 = vmatpush1.xpose.msra.mxu0 0.0
        %9632 = vmatprep.subr.mxu0 0.0
        %9633 = vmatpush1.xpose.msra.mxu0 0.0
        %9634 = vmatprep.subr.mxu0 0.0
        %9635 = vmatpush1.xpose.msra.mxu0 0.0
        %9636 = vmatprep.subr.mxu0 0.0
        %9637 = vmatpush1.xpose.msra.mxu0 0.0
        %9638 = vmatprep.subr.mxu0 0.0
        %9639 = vmatpush1.xpose.msra.mxu0 0.0
        %9640 = vmatprep.subr.mxu0 0.0
        %9641 = vmatpush1.xpose.msra.mxu0 0.0
        %9642 = vmatprep.subr.mxu0 0.0
        %9643 = vmatpush1.xpose.msra.mxu0 0.0
        %9644 = vmatprep.subr.mxu0 0.0
        %9645 = vmatpush1.xpose.msra.mxu0 0.0
        %9646 = vmatprep.subr.mxu0 0.0
        %9647 = vmatpush1.xpose.msra.mxu0 0.0
        %9648 = vmatprep.subr.mxu0 0.0
        %9649 = vmatpush1.xpose.msra.mxu0 0.0
        %9650 = vmatprep.subr.mxu0 0.0
        %9651 = vmatpush1.xpose.msra.mxu0 0.0
        %9652 = vmatprep.subr.mxu0 0.0
        %9653 = vmatpush1.xpose.msra.mxu0 0.0
        %9654 = vmatprep.subr.mxu0 0.0
        %9655 = vmatpush1.xpose.msra.mxu0 0.0
        %9656 = vmatprep.subr.mxu0 0.0
        %9657 = vmatpush1.xpose.msra.mxu0 0.0
        %9658 = vmatprep.subr.mxu0 0.0
        %9659 = vmatpush1.xpose.msra.mxu0 0.0
        %9660 = vmatprep.subr.mxu0 0.0
        %9661 = vmatpush1.xpose.msra.mxu0 0.0
        %9662 = vmatprep.subr.mxu0 0.0
        %9663 = vmatpush1.xpose.msra.mxu0 0.0
        %9664 = vmatprep.subr.mxu0 0.0
        %9665 = vmatpush1.xpose.msra.mxu0 0.0
        %9666 = vmatprep.subr.mxu0 0.0
        %9667 = vmatpush1.xpose.msra.mxu0 0.0
        %9668 = vmatprep.subr.mxu0 0.0
        %9669 = vmatpush1.xpose.msra.mxu0 0.0
        %9670 = vmatprep.subr.mxu0 0.0
        %9671 = vmatpush1.xpose.msra.mxu0 0.0
        %9672 = vmatprep.subr.mxu0 0.0
        %9673 = vmatpush1.xpose.msra.mxu0 0.0
        %9674 = vmatprep.mubr.f32.mxu0 %v1816
        %9675 = vmatmul.mubr.f32.gmra.mrb[0].mxu0 %v1814
        %v9676 = vpop.f32.mrb[0].mxu0
        %v9677 = vadd.f32 %v9607, %v9676
        %v9678 = vpop.f32.mrb[0].mxu0
        %9679 = vdwg.mxu0
        %9680 = vmatprep.subr.mxu0 %v553
        %9681 = vmatpush1.xpose.msra.mxu0 %v552
        %9682 = vmatprep.subr.mxu0 %v809
        %9683 = vmatpush1.xpose.msra.mxu0 %v808
        %9684 = vmatprep.subr.mxu0 0.0
        %9685 = vmatpush1.xpose.msra.mxu0 0.0
        %9686 = vmatprep.subr.mxu0 0.0
        %9687 = vmatpush1.xpose.msra.mxu0 0.0
        %9688 = vmatprep.subr.mxu0 0.0
        %9689 = vmatpush1.xpose.msra.mxu0 0.0
        %9690 = vmatprep.subr.mxu0 0.0
        %9691 = vmatpush1.xpose.msra.mxu0 0.0
        %9692 = vmatprep.subr.mxu0 0.0
        %9693 = vmatpush1.xpose.msra.mxu0 0.0
        %9694 = vmatprep.subr.mxu0 0.0
        %9695 = vmatpush1.xpose.msra.mxu0 0.0
        %9696 = vmatprep.subr.mxu0 0.0
        %9697 = vmatpush1.xpose.msra.mxu0 0.0
        %9698 = vmatprep.subr.mxu0 0.0
        %9699 = vmatpush1.xpose.msra.mxu0 0.0
        %9700 = vmatprep.subr.mxu0 0.0
        %9701 = vmatpush1.xpose.msra.mxu0 0.0
        %9702 = vmatprep.subr.mxu0 0.0
        %9703 = vmatpush1.xpose.msra.mxu0 0.0
        %9704 = vmatprep.subr.mxu0 0.0
        %9705 = vmatpush1.xpose.msra.mxu0 0.0
        %9706 = vmatprep.subr.mxu0 0.0
        %9707 = vmatpush1.xpose.msra.mxu0 0.0
        %9708 = vmatprep.subr.mxu0 0.0
        %9709 = vmatpush1.xpose.msra.mxu0 0.0
        %9710 = vmatprep.subr.mxu0 0.0
        %9711 = vmatpush1.xpose.msra.mxu0 0.0
        %9712 = vmatprep.subr.mxu0 0.0
        %9713 = vmatpush1.xpose.msra.mxu0 0.0
        %9714 = vmatprep.subr.mxu0 0.0
        %9715 = vmatpush1.xpose.msra.mxu0 0.0
        %9716 = vmatprep.subr.mxu0 0.0
        %9717 = vmatpush1.xpose.msra.mxu0 0.0
        %9718 = vmatprep.subr.mxu0 0.0
        %9719 = vmatpush1.xpose.msra.mxu0 0.0
        %9720 = vmatprep.subr.mxu0 0.0
        %9721 = vmatpush1.xpose.msra.mxu0 0.0
        %9722 = vmatprep.subr.mxu0 0.0
        %9723 = vmatpush1.xpose.msra.mxu0 0.0
        %9724 = vmatprep.subr.mxu0 0.0
        %9725 = vmatpush1.xpose.msra.mxu0 0.0
        %9726 = vmatprep.subr.mxu0 0.0
        %9727 = vmatpush1.xpose.msra.mxu0 0.0
        %9728 = vmatprep.subr.mxu0 0.0
        %9729 = vmatpush1.xpose.msra.mxu0 0.0
        %9730 = vmatprep.subr.mxu0 0.0
        %9731 = vmatpush1.xpose.msra.mxu0 0.0
        %9732 = vmatprep.subr.mxu0 0.0
        %9733 = vmatpush1.xpose.msra.mxu0 0.0
        %9734 = vmatprep.subr.mxu0 0.0
        %9735 = vmatpush1.xpose.msra.mxu0 0.0
        %9736 = vmatprep.subr.mxu0 0.0
        %9737 = vmatpush1.xpose.msra.mxu0 0.0
        %9738 = vmatprep.subr.mxu0 0.0
        %9739 = vmatpush1.xpose.msra.mxu0 0.0
        %9740 = vmatprep.subr.mxu0 0.0
        %9741 = vmatpush1.xpose.msra.mxu0 0.0
        %9742 = vmatprep.subr.mxu0 0.0
        %9743 = vmatpush1.xpose.msra.mxu0 0.0
        %9744 = vmatprep.mubr.f32.mxu0 %v1832
        %9745 = vmatmul.mubr.f32.gmra.mrb[0].mxu0 %v1824
        %v9746 = vpop.f32.mrb[0].mxu0
        %v9747 = vadd.f32 %v9677, %v9746
        %v9748 = vpop.f32.mrb[0].mxu0
        %9749 = vdwg.mxu0
        %9750 = vmatprep.subr.mxu0 %v555
        %9751 = vmatpush1.xpose.msra.mxu0 %v554
        %9752 = vmatprep.subr.mxu0 %v811
        %9753 = vmatpush1.xpose.msra.mxu0 %v810
        %9754 = vmatprep.subr.mxu0 0.0
        %9755 = vmatpush1.xpose.msra.mxu0 0.0
        %9756 = vmatprep.subr.mxu0 0.0
        %9757 = vmatpush1.xpose.msra.mxu0 0.0
        %9758 = vmatprep.subr.mxu0 0.0
        %9759 = vmatpush1.xpose.msra.mxu0 0.0
        %9760 = vmatprep.subr.mxu0 0.0
        %9761 = vmatpush1.xpose.msra.mxu0 0.0
        %9762 = vmatprep.subr.mxu0 0.0
        %9763 = vmatpush1.xpose.msra.mxu0 0.0
        %9764 = vmatprep.subr.mxu0 0.0
        %9765 = vmatpush1.xpose.msra.mxu0 0.0
        %9766 = vmatprep.subr.mxu0 0.0
        %9767 = vmatpush1.xpose.msra.mxu0 0.0
        %9768 = vmatprep.subr.mxu0 0.0
        %9769 = vmatpush1.xpose.msra.mxu0 0.0
        %9770 = vmatprep.subr.mxu0 0.0
        %9771 = vmatpush1.xpose.msra.mxu0 0.0
        %9772 = vmatprep.subr.mxu0 0.0
        %9773 = vmatpush1.xpose.msra.mxu0 0.0
        %9774 = vmatprep.subr.mxu0 0.0
        %9775 = vmatpush1.xpose.msra.mxu0 0.0
        %9776 = vmatprep.subr.mxu0 0.0
        %9777 = vmatpush1.xpose.msra.mxu0 0.0
        %9778 = vmatprep.subr.mxu0 0.0
        %9779 = vmatpush1.xpose.msra.mxu0 0.0
        %9780 = vmatprep.subr.mxu0 0.0
        %9781 = vmatpush1.xpose.msra.mxu0 0.0
        %9782 = vmatprep.subr.mxu0 0.0
        %9783 = vmatpush1.xpose.msra.mxu0 0.0
        %9784 = vmatprep.subr.mxu0 0.0
        %9785 = vmatpush1.xpose.msra.mxu0 0.0
        %9786 = vmatprep.subr.mxu0 0.0
        %9787 = vmatpush1.xpose.msra.mxu0 0.0
        %9788 = vmatprep.subr.mxu0 0.0
        %9789 = vmatpush1.xpose.msra.mxu0 0.0
        %9790 = vmatprep.subr.mxu0 0.0
        %9791 = vmatpush1.xpose.msra.mxu0 0.0
        %9792 = vmatprep.subr.mxu0 0.0
        %9793 = vmatpush1.xpose.msra.mxu0 0.0
        %9794 = vmatprep.subr.mxu0 0.0
        %9795 = vmatpush1.xpose.msra.mxu0 0.0
        %9796 = vmatprep.subr.mxu0 0.0
        %9797 = vmatpush1.xpose.msra.mxu0 0.0
        %9798 = vmatprep.subr.mxu0 0.0
        %9799 = vmatpush1.xpose.msra.mxu0 0.0
        %9800 = vmatprep.subr.mxu0 0.0
        %9801 = vmatpush1.xpose.msra.mxu0 0.0
        %9802 = vmatprep.subr.mxu0 0.0
        %9803 = vmatpush1.xpose.msra.mxu0 0.0
        %9804 = vmatprep.subr.mxu0 0.0
        %9805 = vmatpush1.xpose.msra.mxu0 0.0
        %9806 = vmatprep.subr.mxu0 0.0
        %9807 = vmatpush1.xpose.msra.mxu0 0.0
        %9808 = vmatprep.subr.mxu0 0.0
        %9809 = vmatpush1.xpose.msra.mxu0 0.0
        %9810 = vmatprep.subr.mxu0 0.0
        %9811 = vmatpush1.xpose.msra.mxu0 0.0
        %9812 = vmatprep.subr.mxu0 0.0
        %9813 = vmatpush1.xpose.msra.mxu0 0.0
        %9814 = vmatprep.mubr.f32.mxu0 %v1833
        %9815 = vmatmul.mubr.f32.gmra.mrb[0].mxu0 %v1831
        %v9816 = vpop.f32.mrb[0].mxu0
        %v9817 = vadd.f32 %v9747, %v9816
        %v9818 = vpop.f32.mrb[0].mxu0
        %9819 = vdwg.mxu0
        %9820 = vmatprep.subr.mxu0 %v557
        %9821 = vmatpush1.xpose.msra.mxu0 %v556
        %9822 = vmatprep.subr.mxu0 %v813
        %9823 = vmatpush1.xpose.msra.mxu0 %v812
        %9824 = vmatprep.subr.mxu0 0.0
        %9825 = vmatpush1.xpose.msra.mxu0 0.0
        %9826 = vmatprep.subr.mxu0 0.0
        %9827 = vmatpush1.xpose.msra.mxu0 0.0
        %9828 = vmatprep.subr.mxu0 0.0
        %9829 = vmatpush1.xpose.msra.mxu0 0.0
        %9830 = vmatprep.subr.mxu0 0.0
        %9831 = vmatpush1.xpose.msra.mxu0 0.0
        %9832 = vmatprep.subr.mxu0 0.0
        %9833 = vmatpush1.xpose.msra.mxu0 0.0
        %9834 = vmatprep.subr.mxu0 0.0
        %9835 = vmatpush1.xpose.msra.mxu0 0.0
        %9836 = vmatprep.subr.mxu0 0.0
        %9837 = vmatpush1.xpose.msra.mxu0 0.0
        %9838 = vmatprep.subr.mxu0 0.0
        %9839 = vmatpush1.xpose.msra.mxu0 0.0
        %9840 = vmatprep.subr.mxu0 0.0
        %9841 = vmatpush1.xpose.msra.mxu0 0.0
        %9842 = vmatprep.subr.mxu0 0.0
        %9843 = vmatpush1.xpose.msra.mxu0 0.0
        %9844 = vmatprep.subr.mxu0 0.0
        %9845 = vmatpush1.xpose.msra.mxu0 0.0
        %9846 = vmatprep.subr.mxu0 0.0
        %9847 = vmatpush1.xpose.msra.mxu0 0.0
        %9848 = vmatprep.subr.mxu0 0.0
        %9849 = vmatpush1.xpose.msra.mxu0 0.0
        %9850 = vmatprep.subr.mxu0 0.0
        %9851 = vmatpush1.xpose.msra.mxu0 0.0
        %9852 = vmatprep.subr.mxu0 0.0
        %9853 = vmatpush1.xpose.msra.mxu0 0.0
        %9854 = vmatprep.subr.mxu0 0.0
        %9855 = vmatpush1.xpose.msra.mxu0 0.0
        %9856 = vmatprep.subr.mxu0 0.0
        %9857 = vmatpush1.xpose.msra.mxu0 0.0
        %9858 = vmatprep.subr.mxu0 0.0
        %9859 = vmatpush1.xpose.msra.mxu0 0.0
        %9860 = vmatprep.subr.mxu0 0.0
        %9861 = vmatpush1.xpose.msra.mxu0 0.0
        %9862 = vmatprep.subr.mxu0 0.0
        %9863 = vmatpush1.xpose.msra.mxu0 0.0
        %9864 = vmatprep.subr.mxu0 0.0
        %9865 = vmatpush1.xpose.msra.mxu0 0.0
        %9866 = vmatprep.subr.mxu0 0.0
        %9867 = vmatpush1.xpose.msra.mxu0 0.0
        %9868 = vmatprep.subr.mxu0 0.0
        %9869 = vmatpush1.xpose.msra.mxu0 0.0
        %9870 = vmatprep.subr.mxu0 0.0
        %9871 = vmatpush1.xpose.msra.mxu0 0.0
        %9872 = vmatprep.subr.mxu0 0.0
        %9873 = vmatpush1.xpose.msra.mxu0 0.0
        %9874 = vmatprep.subr.mxu0 0.0
        %9875 = vmatpush1.xpose.msra.mxu0 0.0
        %9876 = vmatprep.subr.mxu0 0.0
        %9877 = vmatpush1.xpose.msra.mxu0 0.0
        %9878 = vmatprep.subr.mxu0 0.0
        %9879 = vmatpush1.xpose.msra.mxu0 0.0
        %9880 = vmatprep.subr.mxu0 0.0
        %9881 = vmatpush1.xpose.msra.mxu0 0.0
        %9882 = vmatprep.subr.mxu0 0.0
        %9883 = vmatpush1.xpose.msra.mxu0 0.0
        %9884 = vmatprep.mubr.f32.mxu0 %v1849
        %9885 = vmatmul.mubr.f32.gmra.mrb[0].mxu0 %v1841
        %v9886 = vpop.f32.mrb[0].mxu0
        %v9887 = vadd.f32 %v9817, %v9886
        %v9888 = vpop.f32.mrb[0].mxu0
        %9889 = vdwg.mxu0
        %9890 = vmatprep.subr.mxu0 %v559
        %9891 = vmatpush1.xpose.msra.mxu0 %v558
        %9892 = vmatprep.subr.mxu0 %v815
        %9893 = vmatpush1.xpose.msra.mxu0 %v814
        %9894 = vmatprep.subr.mxu0 0.0
        %9895 = vmatpush1.xpose.msra.mxu0 0.0
        %9896 = vmatprep.subr.mxu0 0.0
        %9897 = vmatpush1.xpose.msra.mxu0 0.0
        %9898 = vmatprep.subr.mxu0 0.0
        %9899 = vmatpush1.xpose.msra.mxu0 0.0
        %9900 = vmatprep.subr.mxu0 0.0
        %9901 = vmatpush1.xpose.msra.mxu0 0.0
        %9902 = vmatprep.subr.mxu0 0.0
        %9903 = vmatpush1.xpose.msra.mxu0 0.0
        %9904 = vmatprep.subr.mxu0 0.0
        %9905 = vmatpush1.xpose.msra.mxu0 0.0
        %9906 = vmatprep.subr.mxu0 0.0
        %9907 = vmatpush1.xpose.msra.mxu0 0.0
        %9908 = vmatprep.subr.mxu0 0.0
        %9909 = vmatpush1.xpose.msra.mxu0 0.0
        %9910 = vmatprep.subr.mxu0 0.0
        %9911 = vmatpush1.xpose.msra.mxu0 0.0
        %9912 = vmatprep.subr.mxu0 0.0
        %9913 = vmatpush1.xpose.msra.mxu0 0.0
        %9914 = vmatprep.subr.mxu0 0.0
        %9915 = vmatpush1.xpose.msra.mxu0 0.0
        %9916 = vmatprep.subr.mxu0 0.0
        %9917 = vmatpush1.xpose.msra.mxu0 0.0
        %9918 = vmatprep.subr.mxu0 0.0
        %9919 = vmatpush1.xpose.msra.mxu0 0.0
        %9920 = vmatprep.subr.mxu0 0.0
        %9921 = vmatpush1.xpose.msra.mxu0 0.0
        %9922 = vmatprep.subr.mxu0 0.0
        %9923 = vmatpush1.xpose.msra.mxu0 0.0
        %9924 = vmatprep.subr.mxu0 0.0
        %9925 = vmatpush1.xpose.msra.mxu0 0.0
        %9926 = vmatprep.subr.mxu0 0.0
        %9927 = vmatpush1.xpose.msra.mxu0 0.0
        %9928 = vmatprep.subr.mxu0 0.0
        %9929 = vmatpush1.xpose.msra.mxu0 0.0
        %9930 = vmatprep.subr.mxu0 0.0
        %9931 = vmatpush1.xpose.msra.mxu0 0.0
        %9932 = vmatprep.subr.mxu0 0.0
        %9933 = vmatpush1.xpose.msra.mxu0 0.0
        %9934 = vmatprep.subr.mxu0 0.0
        %9935 = vmatpush1.xpose.msra.mxu0 0.0
        %9936 = vmatprep.subr.mxu0 0.0
        %9937 = vmatpush1.xpose.msra.mxu0 0.0
        %9938 = vmatprep.subr.mxu0 0.0
        %9939 = vmatpush1.xpose.msra.mxu0 0.0
        %9940 = vmatprep.subr.mxu0 0.0
        %9941 = vmatpush1.xpose.msra.mxu0 0.0
        %9942 = vmatprep.subr.mxu0 0.0
        %9943 = vmatpush1.xpose.msra.mxu0 0.0
        %9944 = vmatprep.subr.mxu0 0.0
        %9945 = vmatpush1.xpose.msra.mxu0 0.0
        %9946 = vmatprep.subr.mxu0 0.0
        %9947 = vmatpush1.xpose.msra.mxu0 0.0
        %9948 = vmatprep.subr.mxu0 0.0
        %9949 = vmatpush1.xpose.msra.mxu0 0.0
        %9950 = vmatprep.subr.mxu0 0.0
        %9951 = vmatpush1.xpose.msra.mxu0 0.0
        %9952 = vmatprep.subr.mxu0 0.0
        %9953 = vmatpush1.xpose.msra.mxu0 0.0
        %9954 = vmatprep.mubr.f32.mxu0 %v1850
        %9955 = vmatmul.mubr.f32.gmra.mrb[0].mxu0 %v1848
        %v9956 = vpop.f32.mrb[0].mxu0
        %v9957 = vadd.f32 %v9887, %v9956
        %v9958 = vpop.f32.mrb[0].mxu0
        %9959 = vdwg.mxu0
        %9960 = vmatprep.subr.mxu0 %v561
        %9961 = vmatpush1.xpose.msra.mxu0 %v560
        %9962 = vmatprep.subr.mxu0 %v817
        %9963 = vmatpush1.xpose.msra.mxu0 %v816
        %9964 = vmatprep.subr.mxu0 0.0
        %9965 = vmatpush1.xpose.msra.mxu0 0.0
        %9966 = vmatprep.subr.mxu0 0.0
        %9967 = vmatpush1.xpose.msra.mxu0 0.0
        %9968 = vmatprep.subr.mxu0 0.0
        %9969 = vmatpush1.xpose.msra.mxu0 0.0
        %9970 = vmatprep.subr.mxu0 0.0
        %9971 = vmatpush1.xpose.msra.mxu0 0.0
        %9972 = vmatprep.subr.mxu0 0.0
        %9973 = vmatpush1.xpose.msra.mxu0 0.0
        %9974 = vmatprep.subr.mxu0 0.0
        %9975 = vmatpush1.xpose.msra.mxu0 0.0
        %9976 = vmatprep.subr.mxu0 0.0
        %9977 = vmatpush1.xpose.msra.mxu0 0.0
        %9978 = vmatprep.subr.mxu0 0.0
        %9979 = vmatpush1.xpose.msra.mxu0 0.0
        %9980 = vmatprep.subr.mxu0 0.0
        %9981 = vmatpush1.xpose.msra.mxu0 0.0
        %9982 = vmatprep.subr.mxu0 0.0
        %9983 = vmatpush1.xpose.msra.mxu0 0.0
        %9984 = vmatprep.subr.mxu0 0.0
        %9985 = vmatpush1.xpose.msra.mxu0 0.0
        %9986 = vmatprep.subr.mxu0 0.0
        %9987 = vmatpush1.xpose.msra.mxu0 0.0
        %9988 = vmatprep.subr.mxu0 0.0
        %9989 = vmatpush1.xpose.msra.mxu0 0.0
        %9990 = vmatprep.subr.mxu0 0.0
        %9991 = vmatpush1.xpose.msra.mxu0 0.0
        %9992 = vmatprep.subr.mxu0 0.0
        %9993 = vmatpush1.xpose.msra.mxu0 0.0
        %9994 = vmatprep.subr.mxu0 0.0
        %9995 = vmatpush1.xpose.msra.mxu0 0.0
        %9996 = vmatprep.subr.mxu0 0.0
        %9997 = vmatpush1.xpose.msra.mxu0 0.0
        %9998 = vmatprep.subr.mxu0 0.0
        %9999 = vmatpush1.xpose.msra.mxu0 0.0
        %10000 = vmatprep.subr.mxu0 0.0
        %10001 = vmatpush1.xpose.msra.mxu0 0.0
        %10002 = vmatprep.subr.mxu0 0.0
        %10003 = vmatpush1.xpose.msra.mxu0 0.0
        %10004 = vmatprep.subr.mxu0 0.0
        %10005 = vmatpush1.xpose.msra.mxu0 0.0
        %10006 = vmatprep.subr.mxu0 0.0
        %10007 = vmatpush1.xpose.msra.mxu0 0.0
        %10008 = vmatprep.subr.mxu0 0.0
        %10009 = vmatpush1.xpose.msra.mxu0 0.0
        %10010 = vmatprep.subr.mxu0 0.0
        %10011 = vmatpush1.xpose.msra.mxu0 0.0
        %10012 = vmatprep.subr.mxu0 0.0
        %10013 = vmatpush1.xpose.msra.mxu0 0.0
        %10014 = vmatprep.subr.mxu0 0.0
        %10015 = vmatpush1.xpose.msra.mxu0 0.0
        %10016 = vmatprep.subr.mxu0 0.0
        %10017 = vmatpush1.xpose.msra.mxu0 0.0
        %10018 = vmatprep.subr.mxu0 0.0
        %10019 = vmatpush1.xpose.msra.mxu0 0.0
        %10020 = vmatprep.subr.mxu0 0.0
        %10021 = vmatpush1.xpose.msra.mxu0 0.0
        %10022 = vmatprep.subr.mxu0 0.0
        %10023 = vmatpush1.xpose.msra.mxu0 0.0
        %10024 = vmatprep.mubr.f32.mxu0 %v1866
        %10025 = vmatmul.mubr.f32.gmra.mrb[0].mxu0 %v1858
        %v10026 = vpop.f32.mrb[0].mxu0
        %v10027 = vadd.f32 %v9957, %v10026
        %v10028 = vpop.f32.mrb[0].mxu0
        %10029 = vdwg.mxu0
        %10030 = vmatprep.subr.mxu0 %v563
        %10031 = vmatpush1.xpose.msra.mxu0 %v562
        %10032 = vmatprep.subr.mxu0 %v819
        %10033 = vmatpush1.xpose.msra.mxu0 %v818
        %10034 = vmatprep.subr.mxu0 0.0
        %10035 = vmatpush1.xpose.msra.mxu0 0.0
        %10036 = vmatprep.subr.mxu0 0.0
        %10037 = vmatpush1.xpose.msra.mxu0 0.0
        %10038 = vmatprep.subr.mxu0 0.0
        %10039 = vmatpush1.xpose.msra.mxu0 0.0
        %10040 = vmatprep.subr.mxu0 0.0
        %10041 = vmatpush1.xpose.msra.mxu0 0.0
        %10042 = vmatprep.subr.mxu0 0.0
        %10043 = vmatpush1.xpose.msra.mxu0 0.0
        %10044 = vmatprep.subr.mxu0 0.0
        %10045 = vmatpush1.xpose.msra.mxu0 0.0
        %10046 = vmatprep.subr.mxu0 0.0
        %10047 = vmatpush1.xpose.msra.mxu0 0.0
        %10048 = vmatprep.subr.mxu0 0.0
        %10049 = vmatpush1.xpose.msra.mxu0 0.0
        %10050 = vmatprep.subr.mxu0 0.0
        %10051 = vmatpush1.xpose.msra.mxu0 0.0
        %10052 = vmatprep.subr.mxu0 0.0
        %10053 = vmatpush1.xpose.msra.mxu0 0.0
        %10054 = vmatprep.subr.mxu0 0.0
        %10055 = vmatpush1.xpose.msra.mxu0 0.0
        %10056 = vmatprep.subr.mxu0 0.0
        %10057 = vmatpush1.xpose.msra.mxu0 0.0
        %10058 = vmatprep.subr.mxu0 0.0
        %10059 = vmatpush1.xpose.msra.mxu0 0.0
        %10060 = vmatprep.subr.mxu0 0.0
        %10061 = vmatpush1.xpose.msra.mxu0 0.0
        %10062 = vmatprep.subr.mxu0 0.0
        %10063 = vmatpush1.xpose.msra.mxu0 0.0
        %10064 = vmatprep.subr.mxu0 0.0
        %10065 = vmatpush1.xpose.msra.mxu0 0.0
        %10066 = vmatprep.subr.mxu0 0.0
        %10067 = vmatpush1.xpose.msra.mxu0 0.0
        %10068 = vmatprep.subr.mxu0 0.0
        %10069 = vmatpush1.xpose.msra.mxu0 0.0
        %10070 = vmatprep.subr.mxu0 0.0
        %10071 = vmatpush1.xpose.msra.mxu0 0.0
        %10072 = vmatprep.subr.mxu0 0.0
        %10073 = vmatpush1.xpose.msra.mxu0 0.0
        %10074 = vmatprep.subr.mxu0 0.0
        %10075 = vmatpush1.xpose.msra.mxu0 0.0
        %10076 = vmatprep.subr.mxu0 0.0
        %10077 = vmatpush1.xpose.msra.mxu0 0.0
        %10078 = vmatprep.subr.mxu0 0.0
        %10079 = vmatpush1.xpose.msra.mxu0 0.0
        %10080 = vmatprep.subr.mxu0 0.0
        %10081 = vmatpush1.xpose.msra.mxu0 0.0
        %10082 = vmatprep.subr.mxu0 0.0
        %10083 = vmatpush1.xpose.msra.mxu0 0.0
        %10084 = vmatprep.subr.mxu0 0.0
        %10085 = vmatpush1.xpose.msra.mxu0 0.0
        %10086 = vmatprep.subr.mxu0 0.0
        %10087 = vmatpush1.xpose.msra.mxu0 0.0
        %10088 = vmatprep.subr.mxu0 0.0
        %10089 = vmatpush1.xpose.msra.mxu0 0.0
        %10090 = vmatprep.subr.mxu0 0.0
        %10091 = vmatpush1.xpose.msra.mxu0 0.0
        %10092 = vmatprep.subr.mxu0 0.0
        %10093 = vmatpush1.xpose.msra.mxu0 0.0
        %10094 = vmatprep.mubr.f32.mxu0 %v1867
        %10095 = vmatmul.mubr.f32.gmra.mrb[0].mxu0 %v1865
        %v10096 = vpop.f32.mrb[0].mxu0
        %v10097 = vadd.f32 %v10027, %v10096
        %v10098 = vpop.f32.mrb[0].mxu0
        %10099 = vdwg.mxu0
        %10100 = vmatprep.subr.mxu0 %v565
        %10101 = vmatpush1.xpose.msra.mxu0 %v564
        %10102 = vmatprep.subr.mxu0 %v821
        %10103 = vmatpush1.xpose.msra.mxu0 %v820
        %10104 = vmatprep.subr.mxu0 0.0
        %10105 = vmatpush1.xpose.msra.mxu0 0.0
        %10106 = vmatprep.subr.mxu0 0.0
        %10107 = vmatpush1.xpose.msra.mxu0 0.0
        %10108 = vmatprep.subr.mxu0 0.0
        %10109 = vmatpush1.xpose.msra.mxu0 0.0
        %10110 = vmatprep.subr.mxu0 0.0
        %10111 = vmatpush1.xpose.msra.mxu0 0.0
        %10112 = vmatprep.subr.mxu0 0.0
        %10113 = vmatpush1.xpose.msra.mxu0 0.0
        %10114 = vmatprep.subr.mxu0 0.0
        %10115 = vmatpush1.xpose.msra.mxu0 0.0
        %10116 = vmatprep.subr.mxu0 0.0
        %10117 = vmatpush1.xpose.msra.mxu0 0.0
        %10118 = vmatprep.subr.mxu0 0.0
        %10119 = vmatpush1.xpose.msra.mxu0 0.0
        %10120 = vmatprep.subr.mxu0 0.0
        %10121 = vmatpush1.xpose.msra.mxu0 0.0
        %10122 = vmatprep.subr.mxu0 0.0
        %10123 = vmatpush1.xpose.msra.mxu0 0.0
        %10124 = vmatprep.subr.mxu0 0.0
        %10125 = vmatpush1.xpose.msra.mxu0 0.0
        %10126 = vmatprep.subr.mxu0 0.0
        %10127 = vmatpush1.xpose.msra.mxu0 0.0
        %10128 = vmatprep.subr.mxu0 0.0
        %10129 = vmatpush1.xpose.msra.mxu0 0.0
        %10130 = vmatprep.subr.mxu0 0.0
        %10131 = vmatpush1.xpose.msra.mxu0 0.0
        %10132 = vmatprep.subr.mxu0 0.0
        %10133 = vmatpush1.xpose.msra.mxu0 0.0
        %10134 = vmatprep.subr.mxu0 0.0
        %10135 = vmatpush1.xpose.msra.mxu0 0.0
        %10136 = vmatprep.subr.mxu0 0.0
        %10137 = vmatpush1.xpose.msra.mxu0 0.0
        %10138 = vmatprep.subr.mxu0 0.0
        %10139 = vmatpush1.xpose.msra.mxu0 0.0
        %10140 = vmatprep.subr.mxu0 0.0
        %10141 = vmatpush1.xpose.msra.mxu0 0.0
        %10142 = vmatprep.subr.mxu0 0.0
        %10143 = vmatpush1.xpose.msra.mxu0 0.0
        %10144 = vmatprep.subr.mxu0 0.0
        %10145 = vmatpush1.xpose.msra.mxu0 0.0
        %10146 = vmatprep.subr.mxu0 0.0
        %10147 = vmatpush1.xpose.msra.mxu0 0.0
        %10148 = vmatprep.subr.mxu0 0.0
        %10149 = vmatpush1.xpose.msra.mxu0 0.0
        %10150 = vmatprep.subr.mxu0 0.0
        %10151 = vmatpush1.xpose.msra.mxu0 0.0
        %10152 = vmatprep.subr.mxu0 0.0
        %10153 = vmatpush1.xpose.msra.mxu0 0.0
        %10154 = vmatprep.subr.mxu0 0.0
        %10155 = vmatpush1.xpose.msra.mxu0 0.0
        %10156 = vmatprep.subr.mxu0 0.0
        %10157 = vmatpush1.xpose.msra.mxu0 0.0
        %10158 = vmatprep.subr.mxu0 0.0
        %10159 = vmatpush1.xpose.msra.mxu0 0.0
        %10160 = vmatprep.subr.mxu0 0.0
        %10161 = vmatpush1.xpose.msra.mxu0 0.0
        %10162 = vmatprep.subr.mxu0 0.0
        %10163 = vmatpush1.xpose.msra.mxu0 0.0
        %10164 = vmatprep.mubr.f32.mxu0 %v1883
        %10165 = vmatmul.mubr.f32.gmra.mrb[0].mxu0 %v1875
        %v10166 = vpop.f32.mrb[0].mxu0
        %v10167 = vadd.f32 %v10097, %v10166
        %v10168 = vpop.f32.mrb[0].mxu0
        %10169 = vdwg.mxu0
        %10170 = vmatprep.subr.mxu0 %v567
        %10171 = vmatpush1.xpose.msra.mxu0 %v566
        %10172 = vmatprep.subr.mxu0 %v823
        %10173 = vmatpush1.xpose.msra.mxu0 %v822
        %10174 = vmatprep.subr.mxu0 0.0
        %10175 = vmatpush1.xpose.msra.mxu0 0.0
        %10176 = vmatprep.subr.mxu0 0.0
        %10177 = vmatpush1.xpose.msra.mxu0 0.0
        %10178 = vmatprep.subr.mxu0 0.0
        %10179 = vmatpush1.xpose.msra.mxu0 0.0
        %10180 = vmatprep.subr.mxu0 0.0
        %10181 = vmatpush1.xpose.msra.mxu0 0.0
        %10182 = vmatprep.subr.mxu0 0.0
        %10183 = vmatpush1.xpose.msra.mxu0 0.0
        %10184 = vmatprep.subr.mxu0 0.0
        %10185 = vmatpush1.xpose.msra.mxu0 0.0
        %10186 = vmatprep.subr.mxu0 0.0
        %10187 = vmatpush1.xpose.msra.mxu0 0.0
        %10188 = vmatprep.subr.mxu0 0.0
        %10189 = vmatpush1.xpose.msra.mxu0 0.0
        %10190 = vmatprep.subr.mxu0 0.0
        %10191 = vmatpush1.xpose.msra.mxu0 0.0
        %10192 = vmatprep.subr.mxu0 0.0
        %10193 = vmatpush1.xpose.msra.mxu0 0.0
        %10194 = vmatprep.subr.mxu0 0.0
        %10195 = vmatpush1.xpose.msra.mxu0 0.0
        %10196 = vmatprep.subr.mxu0 0.0
        %10197 = vmatpush1.xpose.msra.mxu0 0.0
        %10198 = vmatprep.subr.mxu0 0.0
        %10199 = vmatpush1.xpose.msra.mxu0 0.0
        %10200 = vmatprep.subr.mxu0 0.0
        %10201 = vmatpush1.xpose.msra.mxu0 0.0
        %10202 = vmatprep.subr.mxu0 0.0
        %10203 = vmatpush1.xpose.msra.mxu0 0.0
        %10204 = vmatprep.subr.mxu0 0.0
        %10205 = vmatpush1.xpose.msra.mxu0 0.0
        %10206 = vmatprep.subr.mxu0 0.0
        %10207 = vmatpush1.xpose.msra.mxu0 0.0
        %10208 = vmatprep.subr.mxu0 0.0
        %10209 = vmatpush1.xpose.msra.mxu0 0.0
        %10210 = vmatprep.subr.mxu0 0.0
        %10211 = vmatpush1.xpose.msra.mxu0 0.0
        %10212 = vmatprep.subr.mxu0 0.0
        %10213 = vmatpush1.xpose.msra.mxu0 0.0
        %10214 = vmatprep.subr.mxu0 0.0
        %10215 = vmatpush1.xpose.msra.mxu0 0.0
        %10216 = vmatprep.subr.mxu0 0.0
        %10217 = vmatpush1.xpose.msra.mxu0 0.0
        %10218 = vmatprep.subr.mxu0 0.0
        %10219 = vmatpush1.xpose.msra.mxu0 0.0
        %10220 = vmatprep.subr.mxu0 0.0
        %10221 = vmatpush1.xpose.msra.mxu0 0.0
        %10222 = vmatprep.subr.mxu0 0.0
        %10223 = vmatpush1.xpose.msra.mxu0 0.0
        %10224 = vmatprep.subr.mxu0 0.0
        %10225 = vmatpush1.xpose.msra.mxu0 0.0
        %10226 = vmatprep.subr.mxu0 0.0
        %10227 = vmatpush1.xpose.msra.mxu0 0.0
        %10228 = vmatprep.subr.mxu0 0.0
        %10229 = vmatpush1.xpose.msra.mxu0 0.0
        %10230 = vmatprep.subr.mxu0 0.0
        %10231 = vmatpush1.xpose.msra.mxu0 0.0
        %10232 = vmatprep.subr.mxu0 0.0
        %10233 = vmatpush1.xpose.msra.mxu0 0.0
        %10234 = vmatprep.mubr.f32.mxu0 %v1884
        %10235 = vmatmul.mubr.f32.gmra.mrb[0].mxu0 %v1882
        %v10236 = vpop.f32.mrb[0].mxu0
        %v10237 = vadd.f32 %v10167, %v10236
        %v10238 = vpop.f32.mrb[0].mxu0
        %10239 = vdwg.mxu0
        %10240 = vmatprep.subr.mxu0 %v569
        %10241 = vmatpush1.xpose.msra.mxu0 %v568
        %10242 = vmatprep.subr.mxu0 %v825
        %10243 = vmatpush1.xpose.msra.mxu0 %v824
        %10244 = vmatprep.subr.mxu0 0.0
        %10245 = vmatpush1.xpose.msra.mxu0 0.0
        %10246 = vmatprep.subr.mxu0 0.0
        %10247 = vmatpush1.xpose.msra.mxu0 0.0
        %10248 = vmatprep.subr.mxu0 0.0
        %10249 = vmatpush1.xpose.msra.mxu0 0.0
        %10250 = vmatprep.subr.mxu0 0.0
        %10251 = vmatpush1.xpose.msra.mxu0 0.0
        %10252 = vmatprep.subr.mxu0 0.0
        %10253 = vmatpush1.xpose.msra.mxu0 0.0
        %10254 = vmatprep.subr.mxu0 0.0
        %10255 = vmatpush1.xpose.msra.mxu0 0.0
        %10256 = vmatprep.subr.mxu0 0.0
        %10257 = vmatpush1.xpose.msra.mxu0 0.0
        %10258 = vmatprep.subr.mxu0 0.0
        %10259 = vmatpush1.xpose.msra.mxu0 0.0
        %10260 = vmatprep.subr.mxu0 0.0
        %10261 = vmatpush1.xpose.msra.mxu0 0.0
        %10262 = vmatprep.subr.mxu0 0.0
        %10263 = vmatpush1.xpose.msra.mxu0 0.0
        %10264 = vmatprep.subr.mxu0 0.0
        %10265 = vmatpush1.xpose.msra.mxu0 0.0
        %10266 = vmatprep.subr.mxu0 0.0
        %10267 = vmatpush1.xpose.msra.mxu0 0.0
        %10268 = vmatprep.subr.mxu0 0.0
        %10269 = vmatpush1.xpose.msra.mxu0 0.0
        %10270 = vmatprep.subr.mxu0 0.0
        %10271 = vmatpush1.xpose.msra.mxu0 0.0
        %10272 = vmatprep.subr.mxu0 0.0
        %10273 = vmatpush1.xpose.msra.mxu0 0.0
        %10274 = vmatprep.subr.mxu0 0.0
        %10275 = vmatpush1.xpose.msra.mxu0 0.0
        %10276 = vmatprep.subr.mxu0 0.0
        %10277 = vmatpush1.xpose.msra.mxu0 0.0
        %10278 = vmatprep.subr.mxu0 0.0
        %10279 = vmatpush1.xpose.msra.mxu0 0.0
        %10280 = vmatprep.subr.mxu0 0.0
        %10281 = vmatpush1.xpose.msra.mxu0 0.0
        %10282 = vmatprep.subr.mxu0 0.0
        %10283 = vmatpush1.xpose.msra.mxu0 0.0
        %10284 = vmatprep.subr.mxu0 0.0
        %10285 = vmatpush1.xpose.msra.mxu0 0.0
        %10286 = vmatprep.subr.mxu0 0.0
        %10287 = vmatpush1.xpose.msra.mxu0 0.0
        %10288 = vmatprep.subr.mxu0 0.0
        %10289 = vmatpush1.xpose.msra.mxu0 0.0
        %10290 = vmatprep.subr.mxu0 0.0
        %10291 = vmatpush1.xpose.msra.mxu0 0.0
        %10292 = vmatprep.subr.mxu0 0.0
        %10293 = vmatpush1.xpose.msra.mxu0 0.0
        %10294 = vmatprep.subr.mxu0 0.0
        %10295 = vmatpush1.xpose.msra.mxu0 0.0
        %10296 = vmatprep.subr.mxu0 0.0
        %10297 = vmatpush1.xpose.msra.mxu0 0.0
        %10298 = vmatprep.subr.mxu0 0.0
        %10299 = vmatpush1.xpose.msra.mxu0 0.0
        %10300 = vmatprep.subr.mxu0 0.0
        %10301 = vmatpush1.xpose.msra.mxu0 0.0
        %10302 = vmatprep.subr.mxu0 0.0
        %10303 = vmatpush1.xpose.msra.mxu0 0.0
        %10304 = vmatprep.mubr.f32.mxu0 %v1900
        %10305 = vmatmul.mubr.f32.gmra.mrb[0].mxu0 %v1892
        %v10306 = vpop.f32.mrb[0].mxu0
        %v10307 = vadd.f32 %v10237, %v10306
        %v10308 = vpop.f32.mrb[0].mxu0
        %10309 = vdwg.mxu0
        %10310 = vmatprep.subr.mxu0 %v571
        %10311 = vmatpush1.xpose.msra.mxu0 %v570
        %10312 = vmatprep.subr.mxu0 %v827
        %10313 = vmatpush1.xpose.msra.mxu0 %v826
        %10314 = vmatprep.subr.mxu0 0.0
        %10315 = vmatpush1.xpose.msra.mxu0 0.0
        %10316 = vmatprep.subr.mxu0 0.0
        %10317 = vmatpush1.xpose.msra.mxu0 0.0
        %10318 = vmatprep.subr.mxu0 0.0
        %10319 = vmatpush1.xpose.msra.mxu0 0.0
        %10320 = vmatprep.subr.mxu0 0.0
        %10321 = vmatpush1.xpose.msra.mxu0 0.0
        %10322 = vmatprep.subr.mxu0 0.0
        %10323 = vmatpush1.xpose.msra.mxu0 0.0
        %10324 = vmatprep.subr.mxu0 0.0
        %10325 = vmatpush1.xpose.msra.mxu0 0.0
        %10326 = vmatprep.subr.mxu0 0.0
        %10327 = vmatpush1.xpose.msra.mxu0 0.0
        %10328 = vmatprep.subr.mxu0 0.0
        %10329 = vmatpush1.xpose.msra.mxu0 0.0
        %10330 = vmatprep.subr.mxu0 0.0
        %10331 = vmatpush1.xpose.msra.mxu0 0.0
        %10332 = vmatprep.subr.mxu0 0.0
        %10333 = vmatpush1.xpose.msra.mxu0 0.0
        %10334 = vmatprep.subr.mxu0 0.0
        %10335 = vmatpush1.xpose.msra.mxu0 0.0
        %10336 = vmatprep.subr.mxu0 0.0
        %10337 = vmatpush1.xpose.msra.mxu0 0.0
        %10338 = vmatprep.subr.mxu0 0.0
        %10339 = vmatpush1.xpose.msra.mxu0 0.0
        %10340 = vmatprep.subr.mxu0 0.0
        %10341 = vmatpush1.xpose.msra.mxu0 0.0
        %10342 = vmatprep.subr.mxu0 0.0
        %10343 = vmatpush1.xpose.msra.mxu0 0.0
        %10344 = vmatprep.subr.mxu0 0.0
        %10345 = vmatpush1.xpose.msra.mxu0 0.0
        %10346 = vmatprep.subr.mxu0 0.0
        %10347 = vmatpush1.xpose.msra.mxu0 0.0
        %10348 = vmatprep.subr.mxu0 0.0
        %10349 = vmatpush1.xpose.msra.mxu0 0.0
        %10350 = vmatprep.subr.mxu0 0.0
        %10351 = vmatpush1.xpose.msra.mxu0 0.0
        %10352 = vmatprep.subr.mxu0 0.0
        %10353 = vmatpush1.xpose.msra.mxu0 0.0
        %10354 = vmatprep.subr.mxu0 0.0
        %10355 = vmatpush1.xpose.msra.mxu0 0.0
        %10356 = vmatprep.subr.mxu0 0.0
        %10357 = vmatpush1.xpose.msra.mxu0 0.0
        %10358 = vmatprep.subr.mxu0 0.0
        %10359 = vmatpush1.xpose.msra.mxu0 0.0
        %10360 = vmatprep.subr.mxu0 0.0
        %10361 = vmatpush1.xpose.msra.mxu0 0.0
        %10362 = vmatprep.subr.mxu0 0.0
        %10363 = vmatpush1.xpose.msra.mxu0 0.0
        %10364 = vmatprep.subr.mxu0 0.0
        %10365 = vmatpush1.xpose.msra.mxu0 0.0
        %10366 = vmatprep.subr.mxu0 0.0
        %10367 = vmatpush1.xpose.msra.mxu0 0.0
        %10368 = vmatprep.subr.mxu0 0.0
        %10369 = vmatpush1.xpose.msra.mxu0 0.0
        %10370 = vmatprep.subr.mxu0 0.0
        %10371 = vmatpush1.xpose.msra.mxu0 0.0
        %10372 = vmatprep.subr.mxu0 0.0
        %10373 = vmatpush1.xpose.msra.mxu0 0.0
        %10374 = vmatprep.mubr.f32.mxu0 %v1901
        %10375 = vmatmul.mubr.f32.gmra.mrb[0].mxu0 %v1899
        %v10376 = vpop.f32.mrb[0].mxu0
        %v10377 = vadd.f32 %v10307, %v10376
        %v10378 = vpop.f32.mrb[0].mxu0
        %10379 = vdwg.mxu0
        %10380 = vmatprep.subr.mxu0 %v573
        %10381 = vmatpush1.xpose.msra.mxu0 %v572
        %10382 = vmatprep.subr.mxu0 %v829
        %10383 = vmatpush1.xpose.msra.mxu0 %v828
        %10384 = vmatprep.subr.mxu0 0.0
        %10385 = vmatpush1.xpose.msra.mxu0 0.0
        %10386 = vmatprep.subr.mxu0 0.0
        %10387 = vmatpush1.xpose.msra.mxu0 0.0
        %10388 = vmatprep.subr.mxu0 0.0
        %10389 = vmatpush1.xpose.msra.mxu0 0.0
        %10390 = vmatprep.subr.mxu0 0.0
        %10391 = vmatpush1.xpose.msra.mxu0 0.0
        %10392 = vmatprep.subr.mxu0 0.0
        %10393 = vmatpush1.xpose.msra.mxu0 0.0
        %10394 = vmatprep.subr.mxu0 0.0
        %10395 = vmatpush1.xpose.msra.mxu0 0.0
        %10396 = vmatprep.subr.mxu0 0.0
        %10397 = vmatpush1.xpose.msra.mxu0 0.0
        %10398 = vmatprep.subr.mxu0 0.0
        %10399 = vmatpush1.xpose.msra.mxu0 0.0
        %10400 = vmatprep.subr.mxu0 0.0
        %10401 = vmatpush1.xpose.msra.mxu0 0.0
        %10402 = vmatprep.subr.mxu0 0.0
        %10403 = vmatpush1.xpose.msra.mxu0 0.0
        %10404 = vmatprep.subr.mxu0 0.0
        %10405 = vmatpush1.xpose.msra.mxu0 0.0
        %10406 = vmatprep.subr.mxu0 0.0
        %10407 = vmatpush1.xpose.msra.mxu0 0.0
        %10408 = vmatprep.subr.mxu0 0.0
        %10409 = vmatpush1.xpose.msra.mxu0 0.0
        %10410 = vmatprep.subr.mxu0 0.0
        %10411 = vmatpush1.xpose.msra.mxu0 0.0
        %10412 = vmatprep.subr.mxu0 0.0
        %10413 = vmatpush1.xpose.msra.mxu0 0.0
        %10414 = vmatprep.subr.mxu0 0.0
        %10415 = vmatpush1.xpose.msra.mxu0 0.0
        %10416 = vmatprep.subr.mxu0 0.0
        %10417 = vmatpush1.xpose.msra.mxu0 0.0
        %10418 = vmatprep.subr.mxu0 0.0
        %10419 = vmatpush1.xpose.msra.mxu0 0.0
        %10420 = vmatprep.subr.mxu0 0.0
        %10421 = vmatpush1.xpose.msra.mxu0 0.0
        %10422 = vmatprep.subr.mxu0 0.0
        %10423 = vmatpush1.xpose.msra.mxu0 0.0
        %10424 = vmatprep.subr.mxu0 0.0
        %10425 = vmatpush1.xpose.msra.mxu0 0.0
        %10426 = vmatprep.subr.mxu0 0.0
        %10427 = vmatpush1.xpose.msra.mxu0 0.0
        %10428 = vmatprep.subr.mxu0 0.0
        %10429 = vmatpush1.xpose.msra.mxu0 0.0
        %10430 = vmatprep.subr.mxu0 0.0
        %10431 = vmatpush1.xpose.msra.mxu0 0.0
        %10432 = vmatprep.subr.mxu0 0.0
        %10433 = vmatpush1.xpose.msra.mxu0 0.0
        %10434 = vmatprep.subr.mxu0 0.0
        %10435 = vmatpush1.xpose.msra.mxu0 0.0
        %10436 = vmatprep.subr.mxu0 0.0
        %10437 = vmatpush1.xpose.msra.mxu0 0.0
        %10438 = vmatprep.subr.mxu0 0.0
        %10439 = vmatpush1.xpose.msra.mxu0 0.0
        %10440 = vmatprep.subr.mxu0 0.0
        %10441 = vmatpush1.xpose.msra.mxu0 0.0
        %10442 = vmatprep.subr.mxu0 0.0
        %10443 = vmatpush1.xpose.msra.mxu0 0.0
        %10444 = vmatprep.mubr.f32.mxu0 %v1917
        %10445 = vmatmul.mubr.f32.gmra.mrb[0].mxu0 %v1909
        %v10446 = vpop.f32.mrb[0].mxu0
        %v10447 = vadd.f32 %v10377, %v10446
        %v10448 = vpop.f32.mrb[0].mxu0
        %10449 = vdwg.mxu0
        %10450 = vmatprep.subr.mxu0 %v575
        %10451 = vmatpush1.xpose.msra.mxu0 %v574
        %10452 = vmatprep.subr.mxu0 %v831
        %10453 = vmatpush1.xpose.msra.mxu0 %v830
        %10454 = vmatprep.subr.mxu0 0.0
        %10455 = vmatpush1.xpose.msra.mxu0 0.0
        %10456 = vmatprep.subr.mxu0 0.0
        %10457 = vmatpush1.xpose.msra.mxu0 0.0
        %10458 = vmatprep.subr.mxu0 0.0
        %10459 = vmatpush1.xpose.msra.mxu0 0.0
        %10460 = vmatprep.subr.mxu0 0.0
        %10461 = vmatpush1.xpose.msra.mxu0 0.0
        %10462 = vmatprep.subr.mxu0 0.0
        %10463 = vmatpush1.xpose.msra.mxu0 0.0
        %10464 = vmatprep.subr.mxu0 0.0
        %10465 = vmatpush1.xpose.msra.mxu0 0.0
        %10466 = vmatprep.subr.mxu0 0.0
        %10467 = vmatpush1.xpose.msra.mxu0 0.0
        %10468 = vmatprep.subr.mxu0 0.0
        %10469 = vmatpush1.xpose.msra.mxu0 0.0
        %10470 = vmatprep.subr.mxu0 0.0
        %10471 = vmatpush1.xpose.msra.mxu0 0.0
        %10472 = vmatprep.subr.mxu0 0.0
        %10473 = vmatpush1.xpose.msra.mxu0 0.0
        %10474 = vmatprep.subr.mxu0 0.0
        %10475 = vmatpush1.xpose.msra.mxu0 0.0
        %10476 = vmatprep.subr.mxu0 0.0
        %10477 = vmatpush1.xpose.msra.mxu0 0.0
        %10478 = vmatprep.subr.mxu0 0.0
        %10479 = vmatpush1.xpose.msra.mxu0 0.0
        %10480 = vmatprep.subr.mxu0 0.0
        %10481 = vmatpush1.xpose.msra.mxu0 0.0
        %10482 = vmatprep.subr.mxu0 0.0
        %10483 = vmatpush1.xpose.msra.mxu0 0.0
        %10484 = vmatprep.subr.mxu0 0.0
        %10485 = vmatpush1.xpose.msra.mxu0 0.0
        %10486 = vmatprep.subr.mxu0 0.0
        %10487 = vmatpush1.xpose.msra.mxu0 0.0
        %10488 = vmatprep.subr.mxu0 0.0
        %10489 = vmatpush1.xpose.msra.mxu0 0.0
        %10490 = vmatprep.subr.mxu0 0.0
        %10491 = vmatpush1.xpose.msra.mxu0 0.0
        %10492 = vmatprep.subr.mxu0 0.0
        %10493 = vmatpush1.xpose.msra.mxu0 0.0
        %10494 = vmatprep.subr.mxu0 0.0
        %10495 = vmatpush1.xpose.msra.mxu0 0.0
        %10496 = vmatprep.subr.mxu0 0.0
        %10497 = vmatpush1.xpose.msra.mxu0 0.0
        %10498 = vmatprep.subr.mxu0 0.0
        %10499 = vmatpush1.xpose.msra.mxu0 0.0
        %10500 = vmatprep.subr.mxu0 0.0
        %10501 = vmatpush1.xpose.msra.mxu0 0.0
        %10502 = vmatprep.subr.mxu0 0.0
        %10503 = vmatpush1.xpose.msra.mxu0 0.0
        %10504 = vmatprep.subr.mxu0 0.0
        %10505 = vmatpush1.xpose.msra.mxu0 0.0
        %10506 = vmatprep.subr.mxu0 0.0
        %10507 = vmatpush1.xpose.msra.mxu0 0.0
        %10508 = vmatprep.subr.mxu0 0.0
        %10509 = vmatpush1.xpose.msra.mxu0 0.0
        %10510 = vmatprep.subr.mxu0 0.0
        %10511 = vmatpush1.xpose.msra.mxu0 0.0
        %10512 = vmatprep.subr.mxu0 0.0
        %10513 = vmatpush1.xpose.msra.mxu0 0.0
        %10514 = vmatprep.mubr.f32.mxu0 %v1918
        %10515 = vmatmul.mubr.f32.gmra.mrb[0].mxu0 %v1916
        %v10516 = vpop.f32.mrb[0].mxu0
        %v10517 = vadd.f32 %v10447, %v10516
        %v10518 = vpop.f32.mrb[0].mxu0
        %10519 = vdwg.mxu0
        %10520 = vmatprep.subr.mxu0 %v577
        %10521 = vmatpush1.xpose.msra.mxu0 %v576
        %10522 = vmatprep.subr.mxu0 %v833
        %10523 = vmatpush1.xpose.msra.mxu0 %v832
        %10524 = vmatprep.subr.mxu0 0.0
        %10525 = vmatpush1.xpose.msra.mxu0 0.0
        %10526 = vmatprep.subr.mxu0 0.0
        %10527 = vmatpush1.xpose.msra.mxu0 0.0
        %10528 = vmatprep.subr.mxu0 0.0
        %10529 = vmatpush1.xpose.msra.mxu0 0.0
        %10530 = vmatprep.subr.mxu0 0.0
        %10531 = vmatpush1.xpose.msra.mxu0 0.0
        %10532 = vmatprep.subr.mxu0 0.0
        %10533 = vmatpush1.xpose.msra.mxu0 0.0
        %10534 = vmatprep.subr.mxu0 0.0
        %10535 = vmatpush1.xpose.msra.mxu0 0.0
        %10536 = vmatprep.subr.mxu0 0.0
        %10537 = vmatpush1.xpose.msra.mxu0 0.0
        %10538 = vmatprep.subr.mxu0 0.0
        %10539 = vmatpush1.xpose.msra.mxu0 0.0
        %10540 = vmatprep.subr.mxu0 0.0
        %10541 = vmatpush1.xpose.msra.mxu0 0.0
        %10542 = vmatprep.subr.mxu0 0.0
        %10543 = vmatpush1.xpose.msra.mxu0 0.0
        %10544 = vmatprep.subr.mxu0 0.0
        %10545 = vmatpush1.xpose.msra.mxu0 0.0
        %10546 = vmatprep.subr.mxu0 0.0
        %10547 = vmatpush1.xpose.msra.mxu0 0.0
        %10548 = vmatprep.subr.mxu0 0.0
        %10549 = vmatpush1.xpose.msra.mxu0 0.0
        %10550 = vmatprep.subr.mxu0 0.0
        %10551 = vmatpush1.xpose.msra.mxu0 0.0
        %10552 = vmatprep.subr.mxu0 0.0
        %10553 = vmatpush1.xpose.msra.mxu0 0.0
        %10554 = vmatprep.subr.mxu0 0.0
        %10555 = vmatpush1.xpose.msra.mxu0 0.0
        %10556 = vmatprep.subr.mxu0 0.0
        %10557 = vmatpush1.xpose.msra.mxu0 0.0
        %10558 = vmatprep.subr.mxu0 0.0
        %10559 = vmatpush1.xpose.msra.mxu0 0.0
        %10560 = vmatprep.subr.mxu0 0.0
        %10561 = vmatpush1.xpose.msra.mxu0 0.0
        %10562 = vmatprep.subr.mxu0 0.0
        %10563 = vmatpush1.xpose.msra.mxu0 0.0
        %10564 = vmatprep.subr.mxu0 0.0
        %10565 = vmatpush1.xpose.msra.mxu0 0.0
        %10566 = vmatprep.subr.mxu0 0.0
        %10567 = vmatpush1.xpose.msra.mxu0 0.0
        %10568 = vmatprep.subr.mxu0 0.0
        %10569 = vmatpush1.xpose.msra.mxu0 0.0
        %10570 = vmatprep.subr.mxu0 0.0
        %10571 = vmatpush1.xpose.msra.mxu0 0.0
        %10572 = vmatprep.subr.mxu0 0.0
        %10573 = vmatpush1.xpose.msra.mxu0 0.0
        %10574 = vmatprep.subr.mxu0 0.0
        %10575 = vmatpush1.xpose.msra.mxu0 0.0
        %10576 = vmatprep.subr.mxu0 0.0
        %10577 = vmatpush1.xpose.msra.mxu0 0.0
        %10578 = vmatprep.subr.mxu0 0.0
        %10579 = vmatpush1.xpose.msra.mxu0 0.0
        %10580 = vmatprep.subr.mxu0 0.0
        %10581 = vmatpush1.xpose.msra.mxu0 0.0
        %10582 = vmatprep.subr.mxu0 0.0
        %10583 = vmatpush1.xpose.msra.mxu0 0.0
        %10584 = vmatprep.mubr.f32.mxu0 %v1934
        %10585 = vmatmul.mubr.f32.gmra.mrb[0].mxu0 %v1926
        %v10586 = vpop.f32.mrb[0].mxu0
        %v10587 = vadd.f32 %v10517, %v10586
        %v10588 = vpop.f32.mrb[0].mxu0
        %10589 = vdwg.mxu0
        %10590 = vmatprep.subr.mxu0 %v579
        %10591 = vmatpush1.xpose.msra.mxu0 %v578
        %10592 = vmatprep.subr.mxu0 %v835
        %10593 = vmatpush1.xpose.msra.mxu0 %v834
        %10594 = vmatprep.subr.mxu0 0.0
        %10595 = vmatpush1.xpose.msra.mxu0 0.0
        %10596 = vmatprep.subr.mxu0 0.0
        %10597 = vmatpush1.xpose.msra.mxu0 0.0
        %10598 = vmatprep.subr.mxu0 0.0
        %10599 = vmatpush1.xpose.msra.mxu0 0.0
        %10600 = vmatprep.subr.mxu0 0.0
        %10601 = vmatpush1.xpose.msra.mxu0 0.0
        %10602 = vmatprep.subr.mxu0 0.0
        %10603 = vmatpush1.xpose.msra.mxu0 0.0
        %10604 = vmatprep.subr.mxu0 0.0
        %10605 = vmatpush1.xpose.msra.mxu0 0.0
        %10606 = vmatprep.subr.mxu0 0.0
        %10607 = vmatpush1.xpose.msra.mxu0 0.0
        %10608 = vmatprep.subr.mxu0 0.0
        %10609 = vmatpush1.xpose.msra.mxu0 0.0
        %10610 = vmatprep.subr.mxu0 0.0
        %10611 = vmatpush1.xpose.msra.mxu0 0.0
        %10612 = vmatprep.subr.mxu0 0.0
        %10613 = vmatpush1.xpose.msra.mxu0 0.0
        %10614 = vmatprep.subr.mxu0 0.0
        %10615 = vmatpush1.xpose.msra.mxu0 0.0
        %10616 = vmatprep.subr.mxu0 0.0
        %10617 = vmatpush1.xpose.msra.mxu0 0.0
        %10618 = vmatprep.subr.mxu0 0.0
        %10619 = vmatpush1.xpose.msra.mxu0 0.0
        %10620 = vmatprep.subr.mxu0 0.0
        %10621 = vmatpush1.xpose.msra.mxu0 0.0
        %10622 = vmatprep.subr.mxu0 0.0
        %10623 = vmatpush1.xpose.msra.mxu0 0.0
        %10624 = vmatprep.subr.mxu0 0.0
        %10625 = vmatpush1.xpose.msra.mxu0 0.0
        %10626 = vmatprep.subr.mxu0 0.0
        %10627 = vmatpush1.xpose.msra.mxu0 0.0
        %10628 = vmatprep.subr.mxu0 0.0
        %10629 = vmatpush1.xpose.msra.mxu0 0.0
        %10630 = vmatprep.subr.mxu0 0.0
        %10631 = vmatpush1.xpose.msra.mxu0 0.0
        %10632 = vmatprep.subr.mxu0 0.0
        %10633 = vmatpush1.xpose.msra.mxu0 0.0
        %10634 = vmatprep.subr.mxu0 0.0
        %10635 = vmatpush1.xpose.msra.mxu0 0.0
        %10636 = vmatprep.subr.mxu0 0.0
        %10637 = vmatpush1.xpose.msra.mxu0 0.0
        %10638 = vmatprep.subr.mxu0 0.0
        %10639 = vmatpush1.xpose.msra.mxu0 0.0
        %10640 = vmatprep.subr.mxu0 0.0
        %10641 = vmatpush1.xpose.msra.mxu0 0.0
        %10642 = vmatprep.subr.mxu0 0.0
        %10643 = vmatpush1.xpose.msra.mxu0 0.0
        %10644 = vmatprep.subr.mxu0 0.0
        %10645 = vmatpush1.xpose.msra.mxu0 0.0
        %10646 = vmatprep.subr.mxu0 0.0
        %10647 = vmatpush1.xpose.msra.mxu0 0.0
        %10648 = vmatprep.subr.mxu0 0.0
        %10649 = vmatpush1.xpose.msra.mxu0 0.0
        %10650 = vmatprep.subr.mxu0 0.0
        %10651 = vmatpush1.xpose.msra.mxu0 0.0
        %10652 = vmatprep.subr.mxu0 0.0
        %10653 = vmatpush1.xpose.msra.mxu0 0.0
        %10654 = vmatprep.mubr.f32.mxu0 %v1935
        %10655 = vmatmul.mubr.f32.gmra.mrb[0].mxu0 %v1933
        %v10656 = vpop.f32.mrb[0].mxu0
        %v10657 = vadd.f32 %v10587, %v10656
        %v10658 = vpop.f32.mrb[0].mxu0
        %10659 = vdwg.mxu0
        %10660 = vmatprep.subr.mxu0 %v581
        %10661 = vmatpush1.xpose.msra.mxu0 %v580
        %10662 = vmatprep.subr.mxu0 %v837
        %10663 = vmatpush1.xpose.msra.mxu0 %v836
        %10664 = vmatprep.subr.mxu0 0.0
        %10665 = vmatpush1.xpose.msra.mxu0 0.0
        %10666 = vmatprep.subr.mxu0 0.0
        %10667 = vmatpush1.xpose.msra.mxu0 0.0
        %10668 = vmatprep.subr.mxu0 0.0
        %10669 = vmatpush1.xpose.msra.mxu0 0.0
        %10670 = vmatprep.subr.mxu0 0.0
        %10671 = vmatpush1.xpose.msra.mxu0 0.0
        %10672 = vmatprep.subr.mxu0 0.0
        %10673 = vmatpush1.xpose.msra.mxu0 0.0
        %10674 = vmatprep.subr.mxu0 0.0
        %10675 = vmatpush1.xpose.msra.mxu0 0.0
        %10676 = vmatprep.subr.mxu0 0.0
        %10677 = vmatpush1.xpose.msra.mxu0 0.0
        %10678 = vmatprep.subr.mxu0 0.0
        %10679 = vmatpush1.xpose.msra.mxu0 0.0
        %10680 = vmatprep.subr.mxu0 0.0
        %10681 = vmatpush1.xpose.msra.mxu0 0.0
        %10682 = vmatprep.subr.mxu0 0.0
        %10683 = vmatpush1.xpose.msra.mxu0 0.0
        %10684 = vmatprep.subr.mxu0 0.0
        %10685 = vmatpush1.xpose.msra.mxu0 0.0
        %10686 = vmatprep.subr.mxu0 0.0
        %10687 = vmatpush1.xpose.msra.mxu0 0.0
        %10688 = vmatprep.subr.mxu0 0.0
        %10689 = vmatpush1.xpose.msra.mxu0 0.0
        %10690 = vmatprep.subr.mxu0 0.0
        %10691 = vmatpush1.xpose.msra.mxu0 0.0
        %10692 = vmatprep.subr.mxu0 0.0
        %10693 = vmatpush1.xpose.msra.mxu0 0.0
        %10694 = vmatprep.subr.mxu0 0.0
        %10695 = vmatpush1.xpose.msra.mxu0 0.0
        %10696 = vmatprep.subr.mxu0 0.0
        %10697 = vmatpush1.xpose.msra.mxu0 0.0
        %10698 = vmatprep.subr.mxu0 0.0
        %10699 = vmatpush1.xpose.msra.mxu0 0.0
        %10700 = vmatprep.subr.mxu0 0.0
        %10701 = vmatpush1.xpose.msra.mxu0 0.0
        %10702 = vmatprep.subr.mxu0 0.0
        %10703 = vmatpush1.xpose.msra.mxu0 0.0
        %10704 = vmatprep.subr.mxu0 0.0
        %10705 = vmatpush1.xpose.msra.mxu0 0.0
        %10706 = vmatprep.subr.mxu0 0.0
        %10707 = vmatpush1.xpose.msra.mxu0 0.0
        %10708 = vmatprep.subr.mxu0 0.0
        %10709 = vmatpush1.xpose.msra.mxu0 0.0
        %10710 = vmatprep.subr.mxu0 0.0
        %10711 = vmatpush1.xpose.msra.mxu0 0.0
        %10712 = vmatprep.subr.mxu0 0.0
        %10713 = vmatpush1.xpose.msra.mxu0 0.0
        %10714 = vmatprep.subr.mxu0 0.0
        %10715 = vmatpush1.xpose.msra.mxu0 0.0
        %10716 = vmatprep.subr.mxu0 0.0
        %10717 = vmatpush1.xpose.msra.mxu0 0.0
        %10718 = vmatprep.subr.mxu0 0.0
        %10719 = vmatpush1.xpose.msra.mxu0 0.0
        %10720 = vmatprep.subr.mxu0 0.0
        %10721 = vmatpush1.xpose.msra.mxu0 0.0
        %10722 = vmatprep.subr.mxu0 0.0
        %10723 = vmatpush1.xpose.msra.mxu0 0.0
        %10724 = vmatprep.mubr.f32.mxu0 %v1951
        %10725 = vmatmul.mubr.f32.gmra.mrb[0].mxu0 %v1943
        %v10726 = vpop.f32.mrb[0].mxu0
        %v10727 = vadd.f32 %v10657, %v10726
        %v10728 = vpop.f32.mrb[0].mxu0
        %10729 = vdwg.mxu0
        %10730 = vmatprep.subr.mxu0 %v583
        %10731 = vmatpush1.xpose.msra.mxu0 %v582
        %10732 = vmatprep.subr.mxu0 %v839
        %10733 = vmatpush1.xpose.msra.mxu0 %v838
        %10734 = vmatprep.subr.mxu0 0.0
        %10735 = vmatpush1.xpose.msra.mxu0 0.0
        %10736 = vmatprep.subr.mxu0 0.0
        %10737 = vmatpush1.xpose.msra.mxu0 0.0
        %10738 = vmatprep.subr.mxu0 0.0
        %10739 = vmatpush1.xpose.msra.mxu0 0.0
        %10740 = vmatprep.subr.mxu0 0.0
        %10741 = vmatpush1.xpose.msra.mxu0 0.0
        %10742 = vmatprep.subr.mxu0 0.0
        %10743 = vmatpush1.xpose.msra.mxu0 0.0
        %10744 = vmatprep.subr.mxu0 0.0
        %10745 = vmatpush1.xpose.msra.mxu0 0.0
        %10746 = vmatprep.subr.mxu0 0.0
        %10747 = vmatpush1.xpose.msra.mxu0 0.0
        %10748 = vmatprep.subr.mxu0 0.0
        %10749 = vmatpush1.xpose.msra.mxu0 0.0
        %10750 = vmatprep.subr.mxu0 0.0
        %10751 = vmatpush1.xpose.msra.mxu0 0.0
        %10752 = vmatprep.subr.mxu0 0.0
        %10753 = vmatpush1.xpose.msra.mxu0 0.0
        %10754 = vmatprep.subr.mxu0 0.0
        %10755 = vmatpush1.xpose.msra.mxu0 0.0
        %10756 = vmatprep.subr.mxu0 0.0
        %10757 = vmatpush1.xpose.msra.mxu0 0.0
        %10758 = vmatprep.subr.mxu0 0.0
        %10759 = vmatpush1.xpose.msra.mxu0 0.0
        %10760 = vmatprep.subr.mxu0 0.0
        %10761 = vmatpush1.xpose.msra.mxu0 0.0
        %10762 = vmatprep.subr.mxu0 0.0
        %10763 = vmatpush1.xpose.msra.mxu0 0.0
        %10764 = vmatprep.subr.mxu0 0.0
        %10765 = vmatpush1.xpose.msra.mxu0 0.0
        %10766 = vmatprep.subr.mxu0 0.0
        %10767 = vmatpush1.xpose.msra.mxu0 0.0
        %10768 = vmatprep.subr.mxu0 0.0
        %10769 = vmatpush1.xpose.msra.mxu0 0.0
        %10770 = vmatprep.subr.mxu0 0.0
        %10771 = vmatpush1.xpose.msra.mxu0 0.0
        %10772 = vmatprep.subr.mxu0 0.0
        %10773 = vmatpush1.xpose.msra.mxu0 0.0
        %10774 = vmatprep.subr.mxu0 0.0
        %10775 = vmatpush1.xpose.msra.mxu0 0.0
        %10776 = vmatprep.subr.mxu0 0.0
        %10777 = vmatpush1.xpose.msra.mxu0 0.0
        %10778 = vmatprep.subr.mxu0 0.0
        %10779 = vmatpush1.xpose.msra.mxu0 0.0
        %10780 = vmatprep.subr.mxu0 0.0
        %10781 = vmatpush1.xpose.msra.mxu0 0.0
        %10782 = vmatprep.subr.mxu0 0.0
        %10783 = vmatpush1.xpose.msra.mxu0 0.0
        %10784 = vmatprep.subr.mxu0 0.0
        %10785 = vmatpush1.xpose.msra.mxu0 0.0
        %10786 = vmatprep.subr.mxu0 0.0
        %10787 = vmatpush1.xpose.msra.mxu0 0.0
        %10788 = vmatprep.subr.mxu0 0.0
        %10789 = vmatpush1.xpose.msra.mxu0 0.0
        %10790 = vmatprep.subr.mxu0 0.0
        %10791 = vmatpush1.xpose.msra.mxu0 0.0
        %10792 = vmatprep.subr.mxu0 0.0
        %10793 = vmatpush1.xpose.msra.mxu0 0.0
        %10794 = vmatprep.mubr.f32.mxu0 %v1952
        %10795 = vmatmul.mubr.f32.gmra.mrb[0].mxu0 %v1950
        %v10796 = vpop.f32.mrb[0].mxu0
        %v10797 = vadd.f32 %v10727, %v10796
        %v10798 = vpop.f32.mrb[0].mxu0
        %10799 = vdwg.mxu0
        %10800 = vmatprep.subr.mxu0 %v585
        %10801 = vmatpush1.xpose.msra.mxu0 %v584
        %10802 = vmatprep.subr.mxu0 %v841
        %10803 = vmatpush1.xpose.msra.mxu0 %v840
        %10804 = vmatprep.subr.mxu0 0.0
        %10805 = vmatpush1.xpose.msra.mxu0 0.0
        %10806 = vmatprep.subr.mxu0 0.0
        %10807 = vmatpush1.xpose.msra.mxu0 0.0
        %10808 = vmatprep.subr.mxu0 0.0
        %10809 = vmatpush1.xpose.msra.mxu0 0.0
        %10810 = vmatprep.subr.mxu0 0.0
        %10811 = vmatpush1.xpose.msra.mxu0 0.0
        %10812 = vmatprep.subr.mxu0 0.0
        %10813 = vmatpush1.xpose.msra.mxu0 0.0
        %10814 = vmatprep.subr.mxu0 0.0
        %10815 = vmatpush1.xpose.msra.mxu0 0.0
        %10816 = vmatprep.subr.mxu0 0.0
        %10817 = vmatpush1.xpose.msra.mxu0 0.0
        %10818 = vmatprep.subr.mxu0 0.0
        %10819 = vmatpush1.xpose.msra.mxu0 0.0
        %10820 = vmatprep.subr.mxu0 0.0
        %10821 = vmatpush1.xpose.msra.mxu0 0.0
        %10822 = vmatprep.subr.mxu0 0.0
        %10823 = vmatpush1.xpose.msra.mxu0 0.0
        %10824 = vmatprep.subr.mxu0 0.0
        %10825 = vmatpush1.xpose.msra.mxu0 0.0
        %10826 = vmatprep.subr.mxu0 0.0
        %10827 = vmatpush1.xpose.msra.mxu0 0.0
        %10828 = vmatprep.subr.mxu0 0.0
        %10829 = vmatpush1.xpose.msra.mxu0 0.0
        %10830 = vmatprep.subr.mxu0 0.0
        %10831 = vmatpush1.xpose.msra.mxu0 0.0
        %10832 = vmatprep.subr.mxu0 0.0
        %10833 = vmatpush1.xpose.msra.mxu0 0.0
        %10834 = vmatprep.subr.mxu0 0.0
        %10835 = vmatpush1.xpose.msra.mxu0 0.0
        %10836 = vmatprep.subr.mxu0 0.0
        %10837 = vmatpush1.xpose.msra.mxu0 0.0
        %10838 = vmatprep.subr.mxu0 0.0
        %10839 = vmatpush1.xpose.msra.mxu0 0.0
        %10840 = vmatprep.subr.mxu0 0.0
        %10841 = vmatpush1.xpose.msra.mxu0 0.0
        %10842 = vmatprep.subr.mxu0 0.0
        %10843 = vmatpush1.xpose.msra.mxu0 0.0
        %10844 = vmatprep.subr.mxu0 0.0
        %10845 = vmatpush1.xpose.msra.mxu0 0.0
        %10846 = vmatprep.subr.mxu0 0.0
        %10847 = vmatpush1.xpose.msra.mxu0 0.0
        %10848 = vmatprep.subr.mxu0 0.0
        %10849 = vmatpush1.xpose.msra.mxu0 0.0
        %10850 = vmatprep.subr.mxu0 0.0
        %10851 = vmatpush1.xpose.msra.mxu0 0.0
        %10852 = vmatprep.subr.mxu0 0.0
        %10853 = vmatpush1.xpose.msra.mxu0 0.0
        %10854 = vmatprep.subr.mxu0 0.0
        %10855 = vmatpush1.xpose.msra.mxu0 0.0
        %10856 = vmatprep.subr.mxu0 0.0
        %10857 = vmatpush1.xpose.msra.mxu0 0.0
        %10858 = vmatprep.subr.mxu0 0.0
        %10859 = vmatpush1.xpose.msra.mxu0 0.0
        %10860 = vmatprep.subr.mxu0 0.0
        %10861 = vmatpush1.xpose.msra.mxu0 0.0
        %10862 = vmatprep.subr.mxu0 0.0
        %10863 = vmatpush1.xpose.msra.mxu0 0.0
        %10864 = vmatprep.mubr.f32.mxu0 %v1968
        %10865 = vmatmul.mubr.f32.gmra.mrb[0].mxu0 %v1960
        %v10866 = vpop.f32.mrb[0].mxu0
        %v10867 = vadd.f32 %v10797, %v10866
        %v10868 = vpop.f32.mrb[0].mxu0
        %10869 = vdwg.mxu0
        %10870 = vmatprep.subr.mxu0 %v587
        %10871 = vmatpush1.xpose.msra.mxu0 %v586
        %10872 = vmatprep.subr.mxu0 %v843
        %10873 = vmatpush1.xpose.msra.mxu0 %v842
        %10874 = vmatprep.subr.mxu0 0.0
        %10875 = vmatpush1.xpose.msra.mxu0 0.0
        %10876 = vmatprep.subr.mxu0 0.0
        %10877 = vmatpush1.xpose.msra.mxu0 0.0
        %10878 = vmatprep.subr.mxu0 0.0
        %10879 = vmatpush1.xpose.msra.mxu0 0.0
        %10880 = vmatprep.subr.mxu0 0.0
        %10881 = vmatpush1.xpose.msra.mxu0 0.0
        %10882 = vmatprep.subr.mxu0 0.0
        %10883 = vmatpush1.xpose.msra.mxu0 0.0
        %10884 = vmatprep.subr.mxu0 0.0
        %10885 = vmatpush1.xpose.msra.mxu0 0.0
        %10886 = vmatprep.subr.mxu0 0.0
        %10887 = vmatpush1.xpose.msra.mxu0 0.0
        %10888 = vmatprep.subr.mxu0 0.0
        %10889 = vmatpush1.xpose.msra.mxu0 0.0
        %10890 = vmatprep.subr.mxu0 0.0
        %10891 = vmatpush1.xpose.msra.mxu0 0.0
        %10892 = vmatprep.subr.mxu0 0.0
        %10893 = vmatpush1.xpose.msra.mxu0 0.0
        %10894 = vmatprep.subr.mxu0 0.0
        %10895 = vmatpush1.xpose.msra.mxu0 0.0
        %10896 = vmatprep.subr.mxu0 0.0
        %10897 = vmatpush1.xpose.msra.mxu0 0.0
        %10898 = vmatprep.subr.mxu0 0.0
        %10899 = vmatpush1.xpose.msra.mxu0 0.0
        %10900 = vmatprep.subr.mxu0 0.0
        %10901 = vmatpush1.xpose.msra.mxu0 0.0
        %10902 = vmatprep.subr.mxu0 0.0
        %10903 = vmatpush1.xpose.msra.mxu0 0.0
        %10904 = vmatprep.subr.mxu0 0.0
        %10905 = vmatpush1.xpose.msra.mxu0 0.0
        %10906 = vmatprep.subr.mxu0 0.0
        %10907 = vmatpush1.xpose.msra.mxu0 0.0
        %10908 = vmatprep.subr.mxu0 0.0
        %10909 = vmatpush1.xpose.msra.mxu0 0.0
        %10910 = vmatprep.subr.mxu0 0.0
        %10911 = vmatpush1.xpose.msra.mxu0 0.0
        %10912 = vmatprep.subr.mxu0 0.0
        %10913 = vmatpush1.xpose.msra.mxu0 0.0
        %10914 = vmatprep.subr.mxu0 0.0
        %10915 = vmatpush1.xpose.msra.mxu0 0.0
        %10916 = vmatprep.subr.mxu0 0.0
        %10917 = vmatpush1.xpose.msra.mxu0 0.0
        %10918 = vmatprep.subr.mxu0 0.0
        %10919 = vmatpush1.xpose.msra.mxu0 0.0
        %10920 = vmatprep.subr.mxu0 0.0
        %10921 = vmatpush1.xpose.msra.mxu0 0.0
        %10922 = vmatprep.subr.mxu0 0.0
        %10923 = vmatpush1.xpose.msra.mxu0 0.0
        %10924 = vmatprep.subr.mxu0 0.0
        %10925 = vmatpush1.xpose.msra.mxu0 0.0
        %10926 = vmatprep.subr.mxu0 0.0
        %10927 = vmatpush1.xpose.msra.mxu0 0.0
        %10928 = vmatprep.subr.mxu0 0.0
        %10929 = vmatpush1.xpose.msra.mxu0 0.0
        %10930 = vmatprep.subr.mxu0 0.0
        %10931 = vmatpush1.xpose.msra.mxu0 0.0
        %10932 = vmatprep.subr.mxu0 0.0
        %10933 = vmatpush1.xpose.msra.mxu0 0.0
        %10934 = vmatprep.mubr.f32.mxu0 %v1969
        %10935 = vmatmul.mubr.f32.gmra.mrb[0].mxu0 %v1967
        %v10936 = vpop.f32.mrb[0].mxu0
        %v10937 = vadd.f32 %v10867, %v10936
        %v10938 = vpop.f32.mrb[0].mxu0
        %10939 = vdwg.mxu0
        %10940 = vmatprep.subr.mxu0 %v589
        %10941 = vmatpush1.xpose.msra.mxu0 %v588
        %10942 = vmatprep.subr.mxu0 %v845
        %10943 = vmatpush1.xpose.msra.mxu0 %v844
        %10944 = vmatprep.subr.mxu0 0.0
        %10945 = vmatpush1.xpose.msra.mxu0 0.0
        %10946 = vmatprep.subr.mxu0 0.0
        %10947 = vmatpush1.xpose.msra.mxu0 0.0
        %10948 = vmatprep.subr.mxu0 0.0
        %10949 = vmatpush1.xpose.msra.mxu0 0.0
        %10950 = vmatprep.subr.mxu0 0.0
        %10951 = vmatpush1.xpose.msra.mxu0 0.0
        %10952 = vmatprep.subr.mxu0 0.0
        %10953 = vmatpush1.xpose.msra.mxu0 0.0
        %10954 = vmatprep.subr.mxu0 0.0
        %10955 = vmatpush1.xpose.msra.mxu0 0.0
        %10956 = vmatprep.subr.mxu0 0.0
        %10957 = vmatpush1.xpose.msra.mxu0 0.0
        %10958 = vmatprep.subr.mxu0 0.0
        %10959 = vmatpush1.xpose.msra.mxu0 0.0
        %10960 = vmatprep.subr.mxu0 0.0
        %10961 = vmatpush1.xpose.msra.mxu0 0.0
        %10962 = vmatprep.subr.mxu0 0.0
        %10963 = vmatpush1.xpose.msra.mxu0 0.0
        %10964 = vmatprep.subr.mxu0 0.0
        %10965 = vmatpush1.xpose.msra.mxu0 0.0
        %10966 = vmatprep.subr.mxu0 0.0
        %10967 = vmatpush1.xpose.msra.mxu0 0.0
        %10968 = vmatprep.subr.mxu0 0.0
        %10969 = vmatpush1.xpose.msra.mxu0 0.0
        %10970 = vmatprep.subr.mxu0 0.0
        %10971 = vmatpush1.xpose.msra.mxu0 0.0
        %10972 = vmatprep.subr.mxu0 0.0
        %10973 = vmatpush1.xpose.msra.mxu0 0.0
        %10974 = vmatprep.subr.mxu0 0.0
        %10975 = vmatpush1.xpose.msra.mxu0 0.0
        %10976 = vmatprep.subr.mxu0 0.0
        %10977 = vmatpush1.xpose.msra.mxu0 0.0
        %10978 = vmatprep.subr.mxu0 0.0
        %10979 = vmatpush1.xpose.msra.mxu0 0.0
        %10980 = vmatprep.subr.mxu0 0.0
        %10981 = vmatpush1.xpose.msra.mxu0 0.0
        %10982 = vmatprep.subr.mxu0 0.0
        %10983 = vmatpush1.xpose.msra.mxu0 0.0
        %10984 = vmatprep.subr.mxu0 0.0
        %10985 = vmatpush1.xpose.msra.mxu0 0.0
        %10986 = vmatprep.subr.mxu0 0.0
        %10987 = vmatpush1.xpose.msra.mxu0 0.0
        %10988 = vmatprep.subr.mxu0 0.0
        %10989 = vmatpush1.xpose.msra.mxu0 0.0
        %10990 = vmatprep.subr.mxu0 0.0
        %10991 = vmatpush1.xpose.msra.mxu0 0.0
        %10992 = vmatprep.subr.mxu0 0.0
        %10993 = vmatpush1.xpose.msra.mxu0 0.0
        %10994 = vmatprep.subr.mxu0 0.0
        %10995 = vmatpush1.xpose.msra.mxu0 0.0
        %10996 = vmatprep.subr.mxu0 0.0
        %10997 = vmatpush1.xpose.msra.mxu0 0.0
        %10998 = vmatprep.subr.mxu0 0.0
        %10999 = vmatpush1.xpose.msra.mxu0 0.0
        %11000 = vmatprep.subr.mxu0 0.0
        %11001 = vmatpush1.xpose.msra.mxu0 0.0
        %11002 = vmatprep.subr.mxu0 0.0
        %11003 = vmatpush1.xpose.msra.mxu0 0.0
        %11004 = vmatprep.mubr.f32.mxu0 %v1985
        %11005 = vmatmul.mubr.f32.gmra.mrb[0].mxu0 %v1977
        %v11006 = vpop.f32.mrb[0].mxu0
        %v11007 = vadd.f32 %v10937, %v11006
        %v11008 = vpop.f32.mrb[0].mxu0
        %11009 = vdwg.mxu0
        %11010 = vmatprep.subr.mxu0 %v591
        %11011 = vmatpush1.xpose.msra.mxu0 %v590
        %11012 = vmatprep.subr.mxu0 %v847
        %11013 = vmatpush1.xpose.msra.mxu0 %v846
        %11014 = vmatprep.subr.mxu0 0.0
        %11015 = vmatpush1.xpose.msra.mxu0 0.0
        %11016 = vmatprep.subr.mxu0 0.0
        %11017 = vmatpush1.xpose.msra.mxu0 0.0
        %11018 = vmatprep.subr.mxu0 0.0
        %11019 = vmatpush1.xpose.msra.mxu0 0.0
        %11020 = vmatprep.subr.mxu0 0.0
        %11021 = vmatpush1.xpose.msra.mxu0 0.0
        %11022 = vmatprep.subr.mxu0 0.0
        %11023 = vmatpush1.xpose.msra.mxu0 0.0
        %11024 = vmatprep.subr.mxu0 0.0
        %11025 = vmatpush1.xpose.msra.mxu0 0.0
        %11026 = vmatprep.subr.mxu0 0.0
        %11027 = vmatpush1.xpose.msra.mxu0 0.0
        %11028 = vmatprep.subr.mxu0 0.0
        %11029 = vmatpush1.xpose.msra.mxu0 0.0
        %11030 = vmatprep.subr.mxu0 0.0
        %11031 = vmatpush1.xpose.msra.mxu0 0.0
        %11032 = vmatprep.subr.mxu0 0.0
        %11033 = vmatpush1.xpose.msra.mxu0 0.0
        %11034 = vmatprep.subr.mxu0 0.0
        %11035 = vmatpush1.xpose.msra.mxu0 0.0
        %11036 = vmatprep.subr.mxu0 0.0
        %11037 = vmatpush1.xpose.msra.mxu0 0.0
        %11038 = vmatprep.subr.mxu0 0.0
        %11039 = vmatpush1.xpose.msra.mxu0 0.0
        %11040 = vmatprep.subr.mxu0 0.0
        %11041 = vmatpush1.xpose.msra.mxu0 0.0
        %11042 = vmatprep.subr.mxu0 0.0
        %11043 = vmatpush1.xpose.msra.mxu0 0.0
        %11044 = vmatprep.subr.mxu0 0.0
        %11045 = vmatpush1.xpose.msra.mxu0 0.0
        %11046 = vmatprep.subr.mxu0 0.0
        %11047 = vmatpush1.xpose.msra.mxu0 0.0
        %11048 = vmatprep.subr.mxu0 0.0
        %11049 = vmatpush1.xpose.msra.mxu0 0.0
        %11050 = vmatprep.subr.mxu0 0.0
        %11051 = vmatpush1.xpose.msra.mxu0 0.0
        %11052 = vmatprep.subr.mxu0 0.0
        %11053 = vmatpush1.xpose.msra.mxu0 0.0
        %11054 = vmatprep.subr.mxu0 0.0
        %11055 = vmatpush1.xpose.msra.mxu0 0.0
        %11056 = vmatprep.subr.mxu0 0.0
        %11057 = vmatpush1.xpose.msra.mxu0 0.0
        %11058 = vmatprep.subr.mxu0 0.0
        %11059 = vmatpush1.xpose.msra.mxu0 0.0
        %11060 = vmatprep.subr.mxu0 0.0
        %11061 = vmatpush1.xpose.msra.mxu0 0.0
        %11062 = vmatprep.subr.mxu0 0.0
        %11063 = vmatpush1.xpose.msra.mxu0 0.0
        %11064 = vmatprep.subr.mxu0 0.0
        %11065 = vmatpush1.xpose.msra.mxu0 0.0
        %11066 = vmatprep.subr.mxu0 0.0
        %11067 = vmatpush1.xpose.msra.mxu0 0.0
        %11068 = vmatprep.subr.mxu0 0.0
        %11069 = vmatpush1.xpose.msra.mxu0 0.0
        %11070 = vmatprep.subr.mxu0 0.0
        %11071 = vmatpush1.xpose.msra.mxu0 0.0
        %11072 = vmatprep.subr.mxu0 0.0
        %11073 = vmatpush1.xpose.msra.mxu0 0.0
        %11074 = vmatprep.mubr.f32.mxu0 %v1986
        %11075 = vmatmul.mubr.f32.gmra.mrb[0].mxu0 %v1984
        %v11076 = vpop.f32.mrb[0].mxu0
        %v11077 = vadd.f32 %v11007, %v11076
        %v11078 = vpop.f32.mrb[0].mxu0
        %11079 = vdwg.mxu0
        %11080 = vmatprep.subr.mxu0 %v593
        %11081 = vmatpush1.xpose.msra.mxu0 %v592
        %11082 = vmatprep.subr.mxu0 %v849
        %11083 = vmatpush1.xpose.msra.mxu0 %v848
        %11084 = vmatprep.subr.mxu0 0.0
        %11085 = vmatpush1.xpose.msra.mxu0 0.0
        %11086 = vmatprep.subr.mxu0 0.0
        %11087 = vmatpush1.xpose.msra.mxu0 0.0
        %11088 = vmatprep.subr.mxu0 0.0
        %11089 = vmatpush1.xpose.msra.mxu0 0.0
        %11090 = vmatprep.subr.mxu0 0.0
        %11091 = vmatpush1.xpose.msra.mxu0 0.0
        %11092 = vmatprep.subr.mxu0 0.0
        %11093 = vmatpush1.xpose.msra.mxu0 0.0
        %11094 = vmatprep.subr.mxu0 0.0
        %11095 = vmatpush1.xpose.msra.mxu0 0.0
        %11096 = vmatprep.subr.mxu0 0.0
        %11097 = vmatpush1.xpose.msra.mxu0 0.0
        %11098 = vmatprep.subr.mxu0 0.0
        %11099 = vmatpush1.xpose.msra.mxu0 0.0
        %11100 = vmatprep.subr.mxu0 0.0
        %11101 = vmatpush1.xpose.msra.mxu0 0.0
        %11102 = vmatprep.subr.mxu0 0.0
        %11103 = vmatpush1.xpose.msra.mxu0 0.0
        %11104 = vmatprep.subr.mxu0 0.0
        %11105 = vmatpush1.xpose.msra.mxu0 0.0
        %11106 = vmatprep.subr.mxu0 0.0
        %11107 = vmatpush1.xpose.msra.mxu0 0.0
        %11108 = vmatprep.subr.mxu0 0.0
        %11109 = vmatpush1.xpose.msra.mxu0 0.0
        %11110 = vmatprep.subr.mxu0 0.0
        %11111 = vmatpush1.xpose.msra.mxu0 0.0
        %11112 = vmatprep.subr.mxu0 0.0
        %11113 = vmatpush1.xpose.msra.mxu0 0.0
        %11114 = vmatprep.subr.mxu0 0.0
        %11115 = vmatpush1.xpose.msra.mxu0 0.0
        %11116 = vmatprep.subr.mxu0 0.0
        %11117 = vmatpush1.xpose.msra.mxu0 0.0
        %11118 = vmatprep.subr.mxu0 0.0
        %11119 = vmatpush1.xpose.msra.mxu0 0.0
        %11120 = vmatprep.subr.mxu0 0.0
        %11121 = vmatpush1.xpose.msra.mxu0 0.0
        %11122 = vmatprep.subr.mxu0 0.0
        %11123 = vmatpush1.xpose.msra.mxu0 0.0
        %11124 = vmatprep.subr.mxu0 0.0
        %11125 = vmatpush1.xpose.msra.mxu0 0.0
        %11126 = vmatprep.subr.mxu0 0.0
        %11127 = vmatpush1.xpose.msra.mxu0 0.0
        %11128 = vmatprep.subr.mxu0 0.0
        %11129 = vmatpush1.xpose.msra.mxu0 0.0
        %11130 = vmatprep.subr.mxu0 0.0
        %11131 = vmatpush1.xpose.msra.mxu0 0.0
        %11132 = vmatprep.subr.mxu0 0.0
        %11133 = vmatpush1.xpose.msra.mxu0 0.0
        %11134 = vmatprep.subr.mxu0 0.0
        %11135 = vmatpush1.xpose.msra.mxu0 0.0
        %11136 = vmatprep.subr.mxu0 0.0
        %11137 = vmatpush1.xpose.msra.mxu0 0.0
        %11138 = vmatprep.subr.mxu0 0.0
        %11139 = vmatpush1.xpose.msra.mxu0 0.0
        %11140 = vmatprep.subr.mxu0 0.0
        %11141 = vmatpush1.xpose.msra.mxu0 0.0
        %11142 = vmatprep.subr.mxu0 0.0
        %11143 = vmatpush1.xpose.msra.mxu0 0.0
        %11144 = vmatprep.mubr.f32.mxu0 %v2002
        %11145 = vmatmul.mubr.f32.gmra.mrb[0].mxu0 %v1994
        %v11146 = vpop.f32.mrb[0].mxu0
        %v11147 = vadd.f32 %v11077, %v11146
        %v11148 = vpop.f32.mrb[0].mxu0
        %11149 = vdwg.mxu0
        %11150 = vmatprep.subr.mxu0 %v595
        %11151 = vmatpush1.xpose.msra.mxu0 %v594
        %11152 = vmatprep.subr.mxu0 %v851
        %11153 = vmatpush1.xpose.msra.mxu0 %v850
        %11154 = vmatprep.subr.mxu0 0.0
        %11155 = vmatpush1.xpose.msra.mxu0 0.0
        %11156 = vmatprep.subr.mxu0 0.0
        %11157 = vmatpush1.xpose.msra.mxu0 0.0
        %11158 = vmatprep.subr.mxu0 0.0
        %11159 = vmatpush1.xpose.msra.mxu0 0.0
        %11160 = vmatprep.subr.mxu0 0.0
        %11161 = vmatpush1.xpose.msra.mxu0 0.0
        %11162 = vmatprep.subr.mxu0 0.0
        %11163 = vmatpush1.xpose.msra.mxu0 0.0
        %11164 = vmatprep.subr.mxu0 0.0
        %11165 = vmatpush1.xpose.msra.mxu0 0.0
        %11166 = vmatprep.subr.mxu0 0.0
        %11167 = vmatpush1.xpose.msra.mxu0 0.0
        %11168 = vmatprep.subr.mxu0 0.0
        %11169 = vmatpush1.xpose.msra.mxu0 0.0
        %11170 = vmatprep.subr.mxu0 0.0
        %11171 = vmatpush1.xpose.msra.mxu0 0.0
        %11172 = vmatprep.subr.mxu0 0.0
        %11173 = vmatpush1.xpose.msra.mxu0 0.0
        %11174 = vmatprep.subr.mxu0 0.0
        %11175 = vmatpush1.xpose.msra.mxu0 0.0
        %11176 = vmatprep.subr.mxu0 0.0
        %11177 = vmatpush1.xpose.msra.mxu0 0.0
        %11178 = vmatprep.subr.mxu0 0.0
        %11179 = vmatpush1.xpose.msra.mxu0 0.0
        %11180 = vmatprep.subr.mxu0 0.0
        %11181 = vmatpush1.xpose.msra.mxu0 0.0
        %11182 = vmatprep.subr.mxu0 0.0
        %11183 = vmatpush1.xpose.msra.mxu0 0.0
        %11184 = vmatprep.subr.mxu0 0.0
        %11185 = vmatpush1.xpose.msra.mxu0 0.0
        %11186 = vmatprep.subr.mxu0 0.0
        %11187 = vmatpush1.xpose.msra.mxu0 0.0
        %11188 = vmatprep.subr.mxu0 0.0
        %11189 = vmatpush1.xpose.msra.mxu0 0.0
        %11190 = vmatprep.subr.mxu0 0.0
        %11191 = vmatpush1.xpose.msra.mxu0 0.0
        %11192 = vmatprep.subr.mxu0 0.0
        %11193 = vmatpush1.xpose.msra.mxu0 0.0
        %11194 = vmatprep.subr.mxu0 0.0
        %11195 = vmatpush1.xpose.msra.mxu0 0.0
        %11196 = vmatprep.subr.mxu0 0.0
        %11197 = vmatpush1.xpose.msra.mxu0 0.0
        %11198 = vmatprep.subr.mxu0 0.0
        %11199 = vmatpush1.xpose.msra.mxu0 0.0
        %11200 = vmatprep.subr.mxu0 0.0
        %11201 = vmatpush1.xpose.msra.mxu0 0.0
        %11202 = vmatprep.subr.mxu0 0.0
        %11203 = vmatpush1.xpose.msra.mxu0 0.0
        %11204 = vmatprep.subr.mxu0 0.0
        %11205 = vmatpush1.xpose.msra.mxu0 0.0
        %11206 = vmatprep.subr.mxu0 0.0
        %11207 = vmatpush1.xpose.msra.mxu0 0.0
        %11208 = vmatprep.subr.mxu0 0.0
        %11209 = vmatpush1.xpose.msra.mxu0 0.0
        %11210 = vmatprep.subr.mxu0 0.0
        %11211 = vmatpush1.xpose.msra.mxu0 0.0
        %11212 = vmatprep.subr.mxu0 0.0
        %11213 = vmatpush1.xpose.msra.mxu0 0.0
        %11214 = vmatprep.mubr.f32.mxu0 %v2003
        %11215 = vmatmul.mubr.f32.gmra.mrb[0].mxu0 %v2001
        %v11216 = vpop.f32.mrb[0].mxu0
        %v11217 = vadd.f32 %v11147, %v11216
        %v11218 = vpop.f32.mrb[0].mxu0
        %11219 = vdwg.mxu0
        %v11220 = vadd.f32 %v275, %v11217
        %vm11221 = vcmask 74752
        %11222 = vst.msk [vmem:[%s262] sm:$0x3] %vm11221, %v11220
        %p11223 = scmp.eq.s32.totalorder %s28, 2
        %p11224 = scmp.eq.s32.totalorder %s27, 0
        %p11225 = pnand %p11223, %p11224
        %p11226 = pneg %p11225
        // Predicated region
        $region49: #{tpu_custom_call.1} parent=31 // pred_check
          _
        $region50: #{tpu_custom_call.1} parent=31 // pred_check_branch
          %11228 = sbr.rel (%p11225) target = $region52
        $region51: #{tpu_custom_call.1} parent=31 // pred_region
          %v11229 = vld [vmem:[%s262] sm:$0x3]
          %v11230 = vld [vmem:[#allocation7] sm:$0x1]
          %v11232 = vlaneseq
          %v11233 = vshrl.u32 %v11232, 7
          %v11234 = vsub.s32 0, %v11233
          %v11235 = vrot.slane %v11230, %v11234
          %v11237 = vadd.f32 %v11229, %v11235
          %11238 = vst.msk [vmem:[%s262] sm:$0x3] %vm11221, %v11237
        $region52: #{tpu_custom_call.1} parent=31 // pred_fallthru
          _
        %s11239 = sand.u32 %s124, 1
        %s11240 = scalar_lea.sflag [#allocation4], %s11239
        %s11241 = sand.u32 %s124, 1
        %s11242 = smul.addr %s11241, 2
        %s11243 = scalar_lea.vmem [#allocation8], %s11242
        // Predicated region
        $region53: #{tpu_custom_call.1} parent=31 // pred_check
          %p11244 = pneg %p134
        $region54: #{tpu_custom_call.1} parent=31 // pred_check_branch
          %11246 = sbr.rel (%p11244) target = $region56
        $region55: #{tpu_custom_call.1} parent=31 // pred_region
          %s11248 = ssub.s32 32, 32
          %11249 = vsyncadd %s11240, %s11248
          %s11250 = smul.addr %s27, 32
          %s11251 = scalar_lea.hbm %s3, %s11250
          %s11253 = sshll.u32 %s11243, 4
          %s11254 = int_to_ptr.vmem [resolvable:$true] %s11253
          %11256 = dma.vmem_to_hbm [thread:$0]  %s11254, 32, %s11251, %s11240
        $region56: #{tpu_custom_call.1} parent=31 // pred_fallthru
          _
      $region32: #{tpu_custom_call.1} parent=5 // pred_fallthru
        _
      %p11257 = scmp.le.s32.totalorder 2, %s18
      // Predicated region
      $region57: #{tpu_custom_call.1} parent=5 // pred_check
        %p11258 = pneg %p11257
      $region58: #{tpu_custom_call.1} parent=5 // pred_check_branch
        %11260 = sbr.rel (%p11258) target = $region60
      $region59: #{tpu_custom_call.1} parent=5 // pred_region
        %s11261 = ssub.s32 %s18, 2
        // Predicated region
        $region61: #{tpu_custom_call.1} parent=59 // pred_check
          %p11262 = pneg %p140
        $region62: #{tpu_custom_call.1} parent=59 // pred_check_branch
          %11264 = sbr.rel (%p11262) target = $region64
        $region63: #{tpu_custom_call.1} parent=59 // pred_region
          %s11265 = sand.u32 %s125, 1
          %s11266 = scalar_lea.sflag [#allocation4], %s11265
          %s11267 = sand.u32 %s125, 1
          %s11268 = smul.addr %s11267, 2
          %s11269 = scalar_lea.vmem [#allocation8], %s11268
          %11270 = dma.done %s11266, 32
        $region64: #{tpu_custom_call.1} parent=59 // pred_fallthru
          _
      $region60: #{tpu_custom_call.1} parent=5 // pred_fallthru
        _
    $region6: #{tpu_custom_call.1} parent=1 // loop_footer
      %s22 = sadd.s32 1, %s18
    $region7: #{tpu_custom_call.1} parent=1 // loop_footer_branch
      %17 = sbr.rel target = $region3
    $region8: #{tpu_custom_call.1} parent=1 // loop_exit
      _
    %11271 = vsyncpa [#allocation3], 1
    %s11272 = scalar_lea.sflag [#allocation3], 1
    %11273 = vsyncpa %s11272, 1
    %11274 = vsyncpa [#allocation6], 1
    %s11275 = scalar_lea.sflag [#allocation6], 1
    %11276 = vsyncpa %s11275, 1
    %11277 = vsyncpa [#allocation4], 1
    %s11278 = scalar_lea.sflag [#allocation4], 1
    %11279 = vsyncpa %s11278, 1

</llo_original>
